<compile_context>
chip_gen: v6e
topology: v6e:2x2x1
jax: 0.10.0
libtpu: 0.0.40
codegen_flags: <defaults>
</compile_context>

<pallas_src>
import math
import functools

import jax
import jax.numpy as jnp
from jax.experimental import pallas as pl
from jax.experimental.pallas import tpu as pltpu

_VMEM_LIMIT = 32 * 1024 * 1024  # modest tiles -> fits v5e/v6e scoped VMEM and v7x 64 MiB


def _pick_tile(dim, candidates):
    """Largest candidate tile that evenly divides dim; else the full dim (always legal)."""
    for t in candidates:
        if dim % t == 0:
            return t
    return dim


# ----------------------------------------------------------------------------
# Tiled linear: matmul + bias (+ optional fused SquaredReLU)
# ----------------------------------------------------------------------------
def _linear_kernel(x_ref, w_ref, b_ref, o_ref, acc_ref, *, activation):
    @pl.when(pl.program_id(2) == 0)
    def _():
        acc_ref[...] = jnp.zeros_like(acc_ref)

    acc_ref[...] += jnp.dot(x_ref[...], w_ref[...],
                            preferred_element_type=jnp.float32)

    @pl.when(pl.program_id(2) == pl.num_programs(2) - 1)
    def _():
        y = acc_ref[...] + b_ref[...].astype(jnp.float32)
        if activation == "sq_relu":          # SquaredReLU: relu(x)**2
            y = jnp.maximum(y, 0.0)
            y = y * y
        o_ref[...] = y.astype(o_ref.dtype)


def linear2d(x2d, w, b2d, activation=None):
    N, Din = x2d.shape
    Dout = w.shape[1]
    tm = _pick_tile(N, (256, 128, 64, 32, 16, 8))
    tn = _pick_tile(Dout, (512, 256, 128))
    tk = _pick_tile(Din, (512, 256, 128))
    grid = (N // tm, Dout // tn, Din // tk)
    return pl.pallas_call(
        functools.partial(_linear_kernel, activation=activation),
        out_shape=jax.ShapeDtypeStruct((N, Dout), x2d.dtype),
        grid=grid,
        in_specs=[
            pl.BlockSpec((tm, tk), lambda i, j, k: (i, k)),
            pl.BlockSpec((tk, tn), lambda i, j, k: (k, j)),
            pl.BlockSpec((1, tn), lambda i, j, k: (0, j)),
        ],
        out_specs=pl.BlockSpec((tm, tn), lambda i, j, k: (i, j)),
        scratch_shapes=[pltpu.VMEM((tm, tn), jnp.float32)],
        compiler_params=pltpu.CompilerParams(
            dimension_semantics=("parallel", "parallel", "arbitrary"),
            vmem_limit_bytes=_VMEM_LIMIT,
        ),
    )(x2d, w, b2d)


# ----------------------------------------------------------------------------
# LayerNorm, tiled over rows
# ----------------------------------------------------------------------------
def _layernorm_kernel(x_ref, g_ref, b_ref, o_ref, *, eps):
    x = x_ref[...].astype(jnp.float32)
    mean = jnp.mean(x, axis=-1, keepdims=True)
    xc = x - mean
    var = jnp.mean(xc * xc, axis=-1, keepdims=True)
    y = xc * jax.lax.rsqrt(var + eps)
    o_ref[...] = (y * g_ref[...] + b_ref[...]).astype(o_ref.dtype)


def layernorm2d(x2d, gamma2d, beta2d, eps=1e-5):
    N, D = x2d.shape
    tr = _pick_tile(N, (1024, 512, 256, 128, 64, 32, 16, 8))
    return pl.pallas_call(
        functools.partial(_layernorm_kernel, eps=eps),
        out_shape=jax.ShapeDtypeStruct((N, D), x2d.dtype),
        grid=(N // tr,),
        in_specs=[
            pl.BlockSpec((tr, D), lambda i: (i, 0)),
            pl.BlockSpec((1, D), lambda i: (0, 0)),
            pl.BlockSpec((1, D), lambda i: (0, 0)),
        ],
        out_specs=pl.BlockSpec((tr, D), lambda i: (i, 0)),
        compiler_params=pltpu.CompilerParams(
            dimension_semantics=("parallel",),
            vmem_limit_bytes=_VMEM_LIMIT,
        ),
    )(x2d, gamma2d, beta2d)


# ----------------------------------------------------------------------------
# Fused depthwise-causal-conv + multi-head attention, gridded over batch.
# Input is the fused, lane-dense (B, S, 3*D) QKV slab.
# ----------------------------------------------------------------------------
def _dconv_attn_kernel(qkv_ref, wc_ref, bc_ref, o_ref, *, heads, d_k, scale):
    x = qkv_ref[0].astype(jnp.float32)            # (S, 3*D), lane-dense
    S = x.shape[0]
    D = heads * d_k
    wc = wc_ref[...].astype(jnp.float32)          # (3, 3*D) conv taps (tiled per head)
    bc = bc_ref[...].astype(jnp.float32)          # (1, 3*D)

    # Causal depthwise conv (kernel=3) along seq, entirely in-kernel (no host pad).
    # Shifted copies x[t-1], x[t-2] are produced with tiny banded shift matrices on
    # the MXU, which lowers robustly for arbitrary (unaligned) S.
    row = jax.lax.broadcasted_iota(jnp.int32, (S, S), 0)
    col = jax.lax.broadcasted_iota(jnp.int32, (S, S), 1)
    sh1 = (row == col + 1).astype(jnp.float32)
    sh2 = (row == col + 2).astype(jnp.float32)
    x1 = jnp.dot(sh1, x, preferred_element_type=jnp.float32)   # x[t-1] (0 at t=0)
    x2 = jnp.dot(sh2, x, preferred_element_type=jnp.float32)   # x[t-2] (0 at t<2)
    y = wc[2:3, :] * x + wc[1:2, :] * x1 + wc[0:1, :] * x2 + bc

    # Split the fused lane-dense slab into per-head q/k/v: (heads, S, d_k)
    q = jnp.stack([y[:, h * d_k:(h + 1) * d_k] for h in range(heads)], axis=0)
    k = jnp.stack([y[:, D + h * d_k:D + (h + 1) * d_k] for h in range(heads)], axis=0)
    v = jnp.stack([y[:, 2 * D + h * d_k:2 * D + (h + 1) * d_k] for h in range(heads)], axis=0)

    # Scaled dot-product attention over the full sequence, all heads batched.
    # Contraction over the trailing dim of both operands (no materialized k.T).
    s = jnp.einsum("hqd,hkd->hqk", q, k,
                   preferred_element_type=jnp.float32) * scale      # (H, S, S)
    m = jnp.max(s, axis=-1, keepdims=True)
    p = jnp.exp(s - m)
    denom = jnp.sum(p, axis=-1, keepdims=True)
    o = jnp.einsum("hqk,hkd->hqd", p, v, preferred_element_type=jnp.float32)
    o = o * pl.reciprocal(denom, approx=True)                       # (H, S, d_k)

    # Write back as a lane-dense (S, D) block.
    for h in range(heads):
        o_ref[0, :, h * d_k:(h + 1) * d_k] = o[h].astype(o_ref.dtype)


def dconv_attention(qkv, conv_w, conv_b, heads, d_k):
    B, S, D3 = qkv.shape
    D = heads * d_k
    scale = 1.0 / math.sqrt(d_k)
    return pl.pallas_call(
        functools.partial(_dconv_attn_kernel, heads=heads, d_k=d_k, scale=scale),
        out_shape=jax.ShapeDtypeStruct((B, S, D), qkv.dtype),
        grid=(B,),
        in_specs=[
            pl.BlockSpec((1, S, D3), lambda b: (b, 0, 0)),
            pl.BlockSpec((3, D3), lambda b: (0, 0)),
            pl.BlockSpec((1, D3), lambda b: (0, 0)),
        ],
        out_specs=pl.BlockSpec((1, S, D), lambda b: (b, 0, 0)),
        compiler_params=pltpu.CompilerParams(
            dimension_semantics=("parallel",),
            vmem_limit_bytes=_VMEM_LIMIT,
        ),
    )(qkv, conv_w, conv_b)


# ----------------------------------------------------------------------------
# Model glue (thin XLA reshapes / residual adds around the Pallas kernels)
# ----------------------------------------------------------------------------
def linear3(x, p, activation=None):
    *lead, d_in = x.shape
    y = linear2d(x.reshape(-1, d_in), p["w"], p["b"], activation)
    return y.reshape(*lead, p["w"].shape[1])


def ln3(x, p):
    *lead, d = x.shape
    return layernorm2d(x.reshape(-1, d), p["g"], p["b"]).reshape(*lead, d)


def mha_dconv(p, z, heads):
    # z: [S, B, D]. One fused QKV matmul -> fused conv+attention kernel -> out proj.
    S, B, D = z.shape
    d_k = D // heads
    zb = jnp.transpose(z, (1, 0, 2)).reshape(B * S, D)                 # batch-major rows
    qkv = linear2d(zb, p["qkv"]["w"], p["qkv"]["b"]).reshape(B, S, 3 * D)
    o = dconv_attention(qkv, p["conv"]["w"], p["conv"]["b"], heads, d_k)   # (B, S, D)
    o = linear2d(o.reshape(B * S, D), p["out"]["w"], p["out"]["b"]).reshape(B, S, D)
    return jnp.transpose(o, (1, 0, 2))                                  # back to [S, B, D]


def feed_forward(p, z):
    h = linear3(z, p["l1"], activation="sq_relu")   # SquaredReLU fused in the matmul epilogue
    return linear3(h, p["l2"])


def cross_attention_layer(p, x, memory, heads, has_ff_mem):
    z = ln3(x, p["ln_sa"])
    x = x + mha_dconv(p["sa"], z, heads)
    z = ln3(memory, p["ln_sam"])
    memory = memory + mha_dconv(p["sam"], z, heads)
    lx = x.shape[0]
    h = jnp.concatenate([x, memory], axis=0)
    z = ln3(h, p["ln_ca"])
    h = h + mha_dconv(p["ca"], z, heads)
    x, memory = h[:lx], h[lx:]
    z = ln3(x, p["ln_ff"])
    x = x + feed_forward(p["ff"], z)
    if has_ff_mem:
        z = ln3(memory, p["ln_ffm"])
        memory = memory + feed_forward(p["ffm"], z)
    return x, memory


def positional_encoding(d_model, length):
    pos = jnp.arange(length, dtype=jnp.float32)[:, None]
    two_i = jnp.arange(0, d_model, 2, dtype=jnp.float32)
    div = jnp.exp(two_i * -(math.log(10000.0) / d_model))
    pe = jnp.zeros((length, d_model), jnp.float32)
    pe = pe.at[:, 0::2].set(jnp.sin(pos * div))
    pe = pe.at[:, 1::2].set(jnp.cos(pos * div))
    return pe


def cross_attention_forward(params, x, memory, *, heads, n_layers):
    x = linear3(x, params["emb_x"])
    memory = linear3(memory, params["emb_mem"])
    lx = x.shape[0]
    h = jnp.concatenate([x, memory], axis=0)
    d_model = h.shape[-1]
    h = h + positional_encoding(d_model, h.shape[0])[:, None, :]   # data-independent; XLA const-folds
    x, memory = h[:lx], h[lx:]
    for i, lp in enumerate(params["layers"]):
        x, memory = cross_attention_layer(lp, x, memory, heads,
                                          has_ff_mem=(i < n_layers - 1))
    z = ln3(x, params["out_ln"])
    return linear3(z, params["out_lin"])


# ----------------------------------------------------------------------------
# Deterministic synthetic parameter initialization (no checkpoint)
# ----------------------------------------------------------------------------
def _xavier(key, d_in, d_out):
    limit = math.sqrt(6.0 / (d_in + d_out))              # xavier_uniform_
    return jax.random.uniform(key, (d_in, d_out), jnp.float32, -limit, limit)


def init_linear(key, d_in, d_out):
    kw, kb = jax.random.split(key)
    return {"w": _xavier(kw, d_in, d_out),
            "b": jax.random.uniform(kb, (1, d_out), jnp.float32, -0.05, 0.05)}


def init_ln(d):
    return {"g": jnp.ones((1, d), jnp.float32), "b": jnp.zeros((1, d), jnp.float32)}


def init_mha(key, d_model, heads):
    d_k = d_model // heads
    ks = jax.random.split(key, 9)
    wq, wk, wv = (_xavier(ks[i], d_model, d_model) for i in range(3))
    bq, bk, bv = (jax.random.uniform(ks[3 + i], (d_model,), jnp.float32, -0.05, 0.05)
                  for i in range(3))
    # Fused QKV projection == three separate linears concatenated (numerically identical).
    qkv_w = jnp.concatenate([wq, wk, wv], axis=1)                       # (D, 3D)
    qkv_b = jnp.concatenate([bq, bk, bv]).reshape(1, 3 * d_model)
    # Depthwise causal conv (kernel=3): one (3, d_k) filter per projection, shared
    # across heads (as in Primer-EZ). Tiled to lane-dense (3, 3D) channel layout.
    cw = jax.random.uniform(ks[6], (3, 3, d_k), jnp.float32, -0.5, 0.5)  # [proj, tap, d_k]
    cb = jax.random.uniform(ks[7], (3, d_k), jnp.float32, -0.05, 0.05)
    conv_w = jnp.concatenate([jnp.tile(cw[p], (1, heads)) for p in range(3)], axis=1)
    conv_b = jnp.concatenate([jnp.tile(cb[p], heads) for p in range(3)]).reshape(1, 3 * d_model)
    return {"qkv": {"w": qkv_w, "b": qkv_b},
            "conv": {"w": conv_w, "b": conv_b},
            "out": init_linear(ks[8], d_model, d_model)}


def init_ff(key, d_model, d_ff):
    k1, k2 = jax.random.split(key)
    return {"l1": init_linear(k1, d_model, d_ff), "l2": init_linear(k2, d_ff, d_model)}


def init_layer(key, d_model, heads, d_ff, with_ff_mem):
    ks = jax.random.split(key, 5)
    p = {
        "ln_sa": init_ln(d_model), "sa": init_mha(ks[0], d_model, heads),
        "ln_sam": init_ln(d_model), "sam": init_mha(ks[1], d_model, heads),
        "ln_ca": init_ln(d_model), "ca": init_mha(ks[2], d_model, heads),
        "ln_ff": init_ln(d_model), "ff": init_ff(ks[3], d_model, d_ff),
    }
    if with_ff_mem:
        p["ln_ffm"] = init_ln(d_model)
        p["ffm"] = init_ff(ks[4], d_model, d_ff)
    return p


def init_model(key, d_x, d_memory, d_model, heads, n_layers, d_out, d_ff):
    ks = jax.random.split(key, n_layers + 3)
    return {
        "emb_x": init_linear(ks[0], d_x, d_model),
        "emb_mem": init_linear(ks[1], d_memory, d_model),
        "layers": [
            init_layer(ks[2 + i], d_model, heads, d_ff, with_ff_mem=(i < n_layers - 1))
            for i in range(n_layers)
        ],
        "out_ln": init_ln(d_model),
        "out_lin": init_linear(ks[2 + n_layers], d_model, d_out),
    }


# ----------------------------------------------------------------------------
if __name__ == "__main__":
    d_x, d_memory = 4, 6
    d_model, heads, n_layers, d_out = 32, 4, 2, 16
    d_ff = 4 * d_model
    seq_x, seq_mem, batch = 6, 5, 2

    key = jax.random.PRNGKey(0)
    kp, kx, km = jax.random.split(key, 3)
    params = init_model(kp, d_x, d_memory, d_model, heads, n_layers, d_out, d_ff)

    x = jax.random.normal(kx, (seq_x, batch, d_x), jnp.float32)        # [seq, batch, d_x]
    memory = jax.random.normal(km, (seq_mem, batch, d_memory), jnp.float32)

    fwd = jax.jit(functools.partial(cross_attention_forward, heads=heads, n_layers=n_layers))
    out = jax.block_until_ready(fwd(params, x, memory))
    assert out.shape == (seq_x, batch, d_out), out.shape
    assert bool(jnp.all(jnp.isfinite(out)))
    print("KERNEL_OK")
</pallas_src>

<mosaic_0001>
module attributes {stable_mosaic.version = 11 : i64} {
  func.func @_linear_kernel(%arg0: i32, %arg1: i32, %arg2: i32, %arg3: memref<10x6xf32, #tpu.memory_space<vmem>>, %arg4: memref<6x32xf32, #tpu.memory_space<vmem>>, %arg5: memref<1x32xf32, #tpu.memory_space<vmem>>, %arg6: memref<10x32xf32, #tpu.memory_space<vmem>>, %arg7: memref<10x32xf32, #tpu.memory_space<vmem>>) attributes {dimension_semantics = [#tpu.dimension_semantics<parallel>, #tpu.dimension_semantics<parallel>, #tpu.dimension_semantics<arbitrary>], iteration_bounds = array<i64: 1, 1, 1>, scalar_prefetch = 0 : i64, scratch_operands = 1 : i64, tpu.core_type = #tpu.core_type<tc>, window_params = [{transform_indices = @transform_0, window_bounds = array<i64: 10, 6>}, {transform_indices = @transform_1, window_bounds = array<i64: 6, 32>}, {transform_indices = @transform_2, window_bounds = array<i64: 1, 32>}, {transform_indices = @transform_3, window_bounds = array<i64: 10, 32>}]} {
    %c0_i32 = arith.constant 0 : i32
    %0 = arith.cmpi eq, %arg2, %c0_i32 : i32
    %1 = arith.extui %0 : i1 to i32
    %c0_i32_0 = arith.constant 0 : i32
    %2 = arith.cmpi ne, %1, %c0_i32_0 : i32
    scf.if %2 {
      %cst_10 = arith.constant 0.000000e+00 : f32
      %12 = vector.broadcast %cst_10 : f32 to vector<10x32xf32>
      %c0_11 = arith.constant 0 : index
      %c0_12 = arith.constant 0 : index
      %13 = vector.load %arg7[%c0_11, %c0_12] : memref<10x32xf32, #tpu.memory_space<vmem>>, vector<10x32xf32>
      tpu.vector_store %arg7[%c0_11, %c0_12], %12 {strides = array<i32>} : memref<10x32xf32, #tpu.memory_space<vmem>>, vector<10x32xf32>,
    } else {
    }
    %c0 = arith.constant 0 : index
    %c0_1 = arith.constant 0 : index
    %3 = vector.load %arg7[%c0, %c0_1] : memref<10x32xf32, #tpu.memory_space<vmem>>, vector<10x32xf32>
    %c0_2 = arith.constant 0 : index
    %c0_3 = arith.constant 0 : index
    %4 = vector.load %arg3[%c0_2, %c0_3] : memref<10x6xf32, #tpu.memory_space<vmem>>, vector<10x6xf32>
    %c0_4 = arith.constant 0 : index
    %c0_5 = arith.constant 0 : index
    %5 = vector.load %arg4[%c0_4, %c0_5] : memref<6x32xf32, #tpu.memory_space<vmem>>, vector<6x32xf32>
    %cst = arith.constant dense<0.000000e+00> : vector<10x32xf32>
    %6 = tpu.matmul %4, %5, %cst {dimension_numbers = #tpu.dot_dimension_numbers<[1], [0], [0], [1], [0, 0, 1, 1], [], []>} : vector<10x6xf32>, vector<6x32xf32>, vector<10x32xf32> -> vector<10x32xf32>
    %7 = arith.addf %3, %6 : vector<10x32xf32>
    %c0_6 = arith.constant 0 : index
    %c0_7 = arith.constant 0 : index
    %8 = vector.load %arg7[%c0_6, %c0_7] : memref<10x32xf32, #tpu.memory_space<vmem>>, vector<10x32xf32>
    tpu.vector_store %arg7[%c0_6, %c0_7], %7 {strides = array<i32>} : memref<10x32xf32, #tpu.memory_space<vmem>>, vector<10x32xf32>,
    %c0_i32_8 = arith.constant 0 : i32
    %9 = arith.cmpi eq, %arg2, %c0_i32_8 : i32
    %10 = arith.extui %9 : i1 to i32
    %c0_i32_9 = arith.constant 0 : i32
    %11 = arith.cmpi ne, %10, %c0_i32_9 : i32
    scf.if %11 {
      %c0_10 = arith.constant 0 : index
      %c0_11 = arith.constant 0 : index
      %12 = vector.load %arg7[%c0_10, %c0_11] : memref<10x32xf32, #tpu.memory_space<vmem>>, vector<10x32xf32>
      %c0_12 = arith.constant 0 : index
      %c0_13 = arith.constant 0 : index
      %13 = vector.load %arg5[%c0_12, %c0_13] : memref<1x32xf32, #tpu.memory_space<vmem>>, vector<1x32xf32>
      %14 = vector.broadcast %13 : vector<1x32xf32> to vector<10x32xf32>
      %15 = arith.addf %12, %14 : vector<10x32xf32>
      %c0_14 = arith.constant 0 : index
      %c0_15 = arith.constant 0 : index
      %16 = vector.load %arg6[%c0_14, %c0_15] : memref<10x32xf32, #tpu.memory_space<vmem>>, vector<10x32xf32>
      tpu.vector_store %arg6[%c0_14, %c0_15], %15 {strides = array<i32>} : memref<10x32xf32, #tpu.memory_space<vmem>>, vector<10x32xf32>,
    } else {
    }
    return
  }
  func.func @transform_0(%arg0: i32, %arg1: i32, %arg2: i32) -> (i32, i32) {
    %c0_i32 = arith.constant 0 : i32
    return %arg0, %arg2 : i32, i32
  }
  func.func @transform_1(%arg0: i32, %arg1: i32, %arg2: i32) -> (i32, i32) {
    %c0_i32 = arith.constant 0 : i32
    return %arg2, %arg1 : i32, i32
  }
  func.func @transform_2(%arg0: i32, %arg1: i32, %arg2: i32) -> (i32, i32) {
    %c0_i32 = arith.constant 0 : i32
    %c0_i32_0 = arith.constant 0 : i32
    return %c0_i32, %arg1 : i32, i32
  }
  func.func @transform_3(%arg0: i32, %arg1: i32, %arg2: i32) -> (i32, i32) {
    %c0_i32 = arith.constant 0 : i32
    return %arg0, %arg1 : i32, i32
  }
}

module attributes {stable_mosaic.version = 11 : i64} {
  func.func @_linear_kernel(%arg0: i32, %arg1: i32, %arg2: i32, %arg3: memref<12x4xf32, #tpu.memory_space<vmem>>, %arg4: memref<4x32xf32, #tpu.memory_space<vmem>>, %arg5: memref<1x32xf32, #tpu.memory_space<vmem>>, %arg6: memref<12x32xf32, #tpu.memory_space<vmem>>, %arg7: memref<12x32xf32, #tpu.memory_space<vmem>>) attributes {dimension_semantics = [#tpu.dimension_semantics<parallel>, #tpu.dimension_semantics<parallel>, #tpu.dimension_semantics<arbitrary>], iteration_bounds = array<i64: 1, 1, 1>, scalar_prefetch = 0 : i64, scratch_operands = 1 : i64, tpu.core_type = #tpu.core_type<tc>, window_params = [{transform_indices = @transform_0, window_bounds = array<i64: 12, 4>}, {transform_indices = @transform_1, window_bounds = array<i64: 4, 32>}, {transform_indices = @transform_2, window_bounds = array<i64: 1, 32>}, {transform_indices = @transform_3, window_bounds = array<i64: 12, 32>}]} {
    %c0_i32 = arith.constant 0 : i32
    %0 = arith.cmpi eq, %arg2, %c0_i32 : i32
    %1 = arith.extui %0 : i1 to i32
    %c0_i32_0 = arith.constant 0 : i32
    %2 = arith.cmpi ne, %1, %c0_i32_0 : i32
    scf.if %2 {
      %cst_10 = arith.constant 0.000000e+00 : f32
      %12 = vector.broadcast %cst_10 : f32 to vector<12x32xf32>
      %c0_11 = arith.constant 0 : index
      %c0_12 = arith.constant 0 : index
      %13 = vector.load %arg7[%c0_11, %c0_12] : memref<12x32xf32, #tpu.memory_space<vmem>>, vector<12x32xf32>
      tpu.vector_store %arg7[%c0_11, %c0_12], %12 {strides = array<i32>} : memref<12x32xf32, #tpu.memory_space<vmem>>, vector<12x32xf32>,
    } else {
    }
    %c0 = arith.constant 0 : index
    %c0_1 = arith.constant 0 : index
    %3 = vector.load %arg7[%c0, %c0_1] : memref<12x32xf32, #tpu.memory_space<vmem>>, vector<12x32xf32>
    %c0_2 = arith.constant 0 : index
    %c0_3 = arith.constant 0 : index
    %4 = vector.load %arg3[%c0_2, %c0_3] : memref<12x4xf32, #tpu.memory_space<vmem>>, vector<12x4xf32>
    %c0_4 = arith.constant 0 : index
    %c0_5 = arith.constant 0 : index
    %5 = vector.load %arg4[%c0_4, %c0_5] : memref<4x32xf32, #tpu.memory_space<vmem>>, vector<4x32xf32>
    %cst = arith.constant dense<0.000000e+00> : vector<12x32xf32>
    %6 = tpu.matmul %4, %5, %cst {dimension_numbers = #tpu.dot_dimension_numbers<[1], [0], [0], [1], [0, 0, 1, 1], [], []>} : vector<12x4xf32>, vector<4x32xf32>, vector<12x32xf32> -> vector<12x32xf32>
    %7 = arith.addf %3, %6 : vector<12x32xf32>
    %c0_6 = arith.constant 0 : index
    %c0_7 = arith.constant 0 : index
    %8 = vector.load %arg7[%c0_6, %c0_7] : memref<12x32xf32, #tpu.memory_space<vmem>>, vector<12x32xf32>
    tpu.vector_store %arg7[%c0_6, %c0_7], %7 {strides = array<i32>} : memref<12x32xf32, #tpu.memory_space<vmem>>, vector<12x32xf32>,
    %c0_i32_8 = arith.constant 0 : i32
    %9 = arith.cmpi eq, %arg2, %c0_i32_8 : i32
    %10 = arith.extui %9 : i1 to i32
    %c0_i32_9 = arith.constant 0 : i32
    %11 = arith.cmpi ne, %10, %c0_i32_9 : i32
    scf.if %11 {
      %c0_10 = arith.constant 0 : index
      %c0_11 = arith.constant 0 : index
      %12 = vector.load %arg7[%c0_10, %c0_11] : memref<12x32xf32, #tpu.memory_space<vmem>>, vector<12x32xf32>
      %c0_12 = arith.constant 0 : index
      %c0_13 = arith.constant 0 : index
      %13 = vector.load %arg5[%c0_12, %c0_13] : memref<1x32xf32, #tpu.memory_space<vmem>>, vector<1x32xf32>
      %14 = vector.broadcast %13 : vector<1x32xf32> to vector<12x32xf32>
      %15 = arith.addf %12, %14 : vector<12x32xf32>
      %c0_14 = arith.constant 0 : index
      %c0_15 = arith.constant 0 : index
      %16 = vector.load %arg6[%c0_14, %c0_15] : memref<12x32xf32, #tpu.memory_space<vmem>>, vector<12x32xf32>
      tpu.vector_store %arg6[%c0_14, %c0_15], %15 {strides = array<i32>} : memref<12x32xf32, #tpu.memory_space<vmem>>, vector<12x32xf32>,
    } else {
    }
    return
  }
  func.func @transform_0(%arg0: i32, %arg1: i32, %arg2: i32) -> (i32, i32) {
    %c0_i32 = arith.constant 0 : i32
    return %arg0, %arg2 : i32, i32
  }
  func.func @transform_1(%arg0: i32, %arg1: i32, %arg2: i32) -> (i32, i32) {
    %c0_i32 = arith.constant 0 : i32
    return %arg2, %arg1 : i32, i32
  }
  func.func @transform_2(%arg0: i32, %arg1: i32, %arg2: i32) -> (i32, i32) {
    %c0_i32 = arith.constant 0 : i32
    %c0_i32_0 = arith.constant 0 : i32
    return %c0_i32, %arg1 : i32, i32
  }
  func.func @transform_3(%arg0: i32, %arg1: i32, %arg2: i32) -> (i32, i32) {
    %c0_i32 = arith.constant 0 : i32
    return %arg0, %arg1 : i32, i32
  }
}

module attributes {stable_mosaic.version = 11 : i64} {
  func.func @_layernorm_kernel(%arg0: i32, %arg1: memref<12x32xf32, #tpu.memory_space<vmem>>, %arg2: memref<1x32xf32, #tpu.memory_space<vmem>>, %arg3: memref<1x32xf32, #tpu.memory_space<vmem>>, %arg4: memref<12x32xf32, #tpu.memory_space<vmem>>) attributes {dimension_semantics = [#tpu.dimension_semantics<parallel>], iteration_bounds = array<i64: 1>, scalar_prefetch = 0 : i64, scratch_operands = 0 : i64, tpu.core_type = #tpu.core_type<tc>, window_params = [{transform_indices = @transform_0, window_bounds = array<i64: 12, 32>}, {pipeline_mode = #tpu.pipeline_mode<synchronous>, transform_indices = @transform_1, window_bounds = array<i64: 1, 32>}, {pipeline_mode = #tpu.pipeline_mode<synchronous>, transform_indices = @transform_2, window_bounds = array<i64: 1, 32>}, {transform_indices = @transform_3, window_bounds = array<i64: 12, 32>}]} {
    %c0 = arith.constant 0 : index
    %c0_0 = arith.constant 0 : index
    %0 = vector.load %arg1[%c0, %c0_0] : memref<12x32xf32, #tpu.memory_space<vmem>>, vector<12x32xf32>
    %cst = arith.constant dense<0.000000e+00> : vector<12xf32>
    %1 = vector.multi_reduction <add>, %0, %cst [1] : vector<12x32xf32> to vector<12xf32>
    %2 = vector.shape_cast %1 : vector<12xf32> to vector<12x1xf32>
    %cst_1 = arith.constant 3.200000e+01 : f32
    %3 = vector.broadcast %cst_1 : f32 to vector<12x1xf32>
    %4 = arith.divf %2, %3 : vector<12x1xf32>
    %5 = vector.broadcast %4 : vector<12x1xf32> to vector<12x32xf32>
    %6 = arith.subf %0, %5 : vector<12x32xf32>
    %7 = arith.mulf %6, %6 : vector<12x32xf32>
    %cst_2 = arith.constant dense<0.000000e+00> : vector<12xf32>
    %8 = vector.multi_reduction <add>, %7, %cst_2 [1] : vector<12x32xf32> to vector<12xf32>
    %9 = vector.shape_cast %8 : vector<12xf32> to vector<12x1xf32>
    %cst_3 = arith.constant 3.200000e+01 : f32
    %10 = vector.broadcast %cst_3 : f32 to vector<12x1xf32>
    %11 = arith.divf %9, %10 : vector<12x1xf32>
    %cst_4 = arith.constant 9.99999974E-6 : f32
    %12 = vector.broadcast %cst_4 : f32 to vector<12x1xf32>
    %13 = arith.addf %11, %12 : vector<12x1xf32>
    %14 = math.rsqrt %13 : vector<12x1xf32>
    %15 = vector.broadcast %14 : vector<12x1xf32> to vector<12x32xf32>
    %16 = arith.mulf %6, %15 : vector<12x32xf32>
    %c0_5 = arith.constant 0 : index
    %c0_6 = arith.constant 0 : index
    %17 = vector.load %arg2[%c0_5, %c0_6] : memref<1x32xf32, #tpu.memory_space<vmem>>, vector<1x32xf32>
    %18 = vector.broadcast %17 : vector<1x32xf32> to vector<12x32xf32>
    %19 = arith.mulf %16, %18 : vector<12x32xf32>
    %c0_7 = arith.constant 0 : index
    %c0_8 = arith.constant 0 : index
    %20 = vector.load %arg3[%c0_7, %c0_8] : memref<1x32xf32, #tpu.memory_space<vmem>>, vector<1x32xf32>
    %21 = vector.broadcast %20 : vector<1x32xf32> to vector<12x32xf32>
    %22 = arith.addf %19, %21 : vector<12x32xf32>
    %c0_9 = arith.constant 0 : index
    %c0_10 = arith.constant 0 : index
    %23 = vector.load %arg4[%c0_9, %c0_10] : memref<12x32xf32, #tpu.memory_space<vmem>>, vector<12x32xf32>
    tpu.vector_store %arg4[%c0_9, %c0_10], %22 {strides = array<i32>} : memref<12x32xf32, #tpu.memory_space<vmem>>, vector<12x32xf32>,
    return
  }
  func.func @transform_0(%arg0: i32) -> (i32, i32) {
    %c0_i32 = arith.constant 0 : i32
    %c0_i32_0 = arith.constant 0 : i32
    return %arg0, %c0_i32 : i32, i32
  }
  func.func @transform_1(%arg0: i32) -> (i32, i32) {
    %c0_i32 = arith.constant 0 : i32
    %c0_i32_0 = arith.constant 0 : i32
    %c0_i32_1 = arith.constant 0 : i32
    return %c0_i32, %c0_i32_0 : i32, i32
  }
  func.func @transform_2(%arg0: i32) -> (i32, i32) {
    %c0_i32 = arith.constant 0 : i32
    %c0_i32_0 = arith.constant 0 : i32
    %c0_i32_1 = arith.constant 0 : i32
    return %c0_i32, %c0_i32_0 : i32, i32
  }
  func.func @transform_3(%arg0: i32) -> (i32, i32) {
    %c0_i32 = arith.constant 0 : i32
    %c0_i32_0 = arith.constant 0 : i32
    return %arg0, %c0_i32 : i32, i32
  }
}

module attributes {stable_mosaic.version = 11 : i64} {
  func.func @_linear_kernel(%arg0: i32, %arg1: i32, %arg2: i32, %arg3: memref<12x32xf32, #tpu.memory_space<vmem>>, %arg4: memref<32x96xf32, #tpu.memory_space<vmem>>, %arg5: memref<1x96xf32, #tpu.memory_space<vmem>>, %arg6: memref<12x96xf32, #tpu.memory_space<vmem>>, %arg7: memref<12x96xf32, #tpu.memory_space<vmem>>) attributes {dimension_semantics = [#tpu.dimension_semantics<parallel>, #tpu.dimension_semantics<parallel>, #tpu.dimension_semantics<arbitrary>], iteration_bounds = array<i64: 1, 1, 1>, scalar_prefetch = 0 : i64, scratch_operands = 1 : i64, tpu.core_type = #tpu.core_type<tc>, window_params = [{transform_indices = @transform_0, window_bounds = array<i64: 12, 32>}, {transform_indices = @transform_1, window_bounds = array<i64: 32, 96>}, {transform_indices = @transform_2, window_bounds = array<i64: 1, 96>}, {transform_indices = @transform_3, window_bounds = array<i64: 12, 96>}]} {
    %c0_i32 = arith.constant 0 : i32
    %0 = arith.cmpi eq, %arg2, %c0_i32 : i32
    %1 = arith.extui %0 : i1 to i32
    %c0_i32_0 = arith.constant 0 : i32
    %2 = arith.cmpi ne, %1, %c0_i32_0 : i32
    scf.if %2 {
      %cst_10 = arith.constant 0.000000e+00 : f32
      %12 = vector.broadcast %cst_10 : f32 to vector<12x96xf32>
      %c0_11 = arith.constant 0 : index
      %c0_12 = arith.constant 0 : index
      %13 = vector.load %arg7[%c0_11, %c0_12] : memref<12x96xf32, #tpu.memory_space<vmem>>, vector<12x96xf32>
      tpu.vector_store %arg7[%c0_11, %c0_12], %12 {strides = array<i32>} : memref<12x96xf32, #tpu.memory_space<vmem>>, vector<12x96xf32>,
    } else {
    }
    %c0 = arith.constant 0 : index
    %c0_1 = arith.constant 0 : index
    %3 = vector.load %arg7[%c0, %c0_1] : memref<12x96xf32, #tpu.memory_space<vmem>>, vector<12x96xf32>
    %c0_2 = arith.constant 0 : index
    %c0_3 = arith.constant 0 : index
    %4 = vector.load %arg3[%c0_2, %c0_3] : memref<12x32xf32, #tpu.memory_space<vmem>>, vector<12x32xf32>
    %c0_4 = arith.constant 0 : index
    %c0_5 = arith.constant 0 : index
    %5 = vector.load %arg4[%c0_4, %c0_5] : memref<32x96xf32, #tpu.memory_space<vmem>>, vector<32x96xf32>
    %cst = arith.constant dense<0.000000e+00> : vector<12x96xf32>
    %6 = tpu.matmul %4, %5, %cst {dimension_numbers = #tpu.dot_dimension_numbers<[1], [0], [0], [1], [0, 0, 1, 1], [], []>} : vector<12x32xf32>, vector<32x96xf32>, vector<12x96xf32> -> vector<12x96xf32>
    %7 = arith.addf %3, %6 : vector<12x96xf32>
    %c0_6 = arith.constant 0 : index
    %c0_7 = arith.constant 0 : index
    %8 = vector.load %arg7[%c0_6, %c0_7] : memref<12x96xf32, #tpu.memory_space<vmem>>, vector<12x96xf32>
    tpu.vector_store %arg7[%c0_6, %c0_7], %7 {strides = array<i32>} : memref<12x96xf32, #tpu.memory_space<vmem>>, vector<12x96xf32>,
    %c0_i32_8 = arith.constant 0 : i32
    %9 = arith.cmpi eq, %arg2, %c0_i32_8 : i32
    %10 = arith.extui %9 : i1 to i32
    %c0_i32_9 = arith.constant 0 : i32
    %11 = arith.cmpi ne, %10, %c0_i32_9 : i32
    scf.if %11 {
      %c0_10 = arith.constant 0 : index
      %c0_11 = arith.constant 0 : index
      %12 = vector.load %arg7[%c0_10, %c0_11] : memref<12x96xf32, #tpu.memory_space<vmem>>, vector<12x96xf32>
      %c0_12 = arith.constant 0 : index
      %c0_13 = arith.constant 0 : index
      %13 = vector.load %arg5[%c0_12, %c0_13] : memref<1x96xf32, #tpu.memory_space<vmem>>, vector<1x96xf32>
      %14 = vector.broadcast %13 : vector<1x96xf32> to vector<12x96xf32>
      %15 = arith.addf %12, %14 : vector<12x96xf32>
      %c0_14 = arith.constant 0 : index
      %c0_15 = arith.constant 0 : index
      %16 = vector.load %arg6[%c0_14, %c0_15] : memref<12x96xf32, #tpu.memory_space<vmem>>, vector<12x96xf32>
      tpu.vector_store %arg6[%c0_14, %c0_15], %15 {strides = array<i32>} : memref<12x96xf32, #tpu.memory_space<vmem>>, vector<12x96xf32>,
    } else {
    }
    return
  }
  func.func @transform_0(%arg0: i32, %arg1: i32, %arg2: i32) -> (i32, i32) {
    %c0_i32 = arith.constant 0 : i32
    return %arg0, %arg2 : i32, i32
  }
  func.func @transform_1(%arg0: i32, %arg1: i32, %arg2: i32) -> (i32, i32) {
    %c0_i32 = arith.constant 0 : i32
    return %arg2, %arg1 : i32, i32
  }
  func.func @transform_2(%arg0: i32, %arg1: i32, %arg2: i32) -> (i32, i32) {
    %c0_i32 = arith.constant 0 : i32
    %c0_i32_0 = arith.constant 0 : i32
    return %c0_i32, %arg1 : i32, i32
  }
  func.func @transform_3(%arg0: i32, %arg1: i32, %arg2: i32) -> (i32, i32) {
    %c0_i32 = arith.constant 0 : i32
    return %arg0, %arg1 : i32, i32
  }
}

module attributes {stable_mosaic.version = 11 : i64} {
  func.func @_linear_kernel(%arg0: i32, %arg1: i32, %arg2: i32, %arg3: memref<12x32xf32, #tpu.memory_space<vmem>>, %arg4: memref<32x32xf32, #tpu.memory_space<vmem>>, %arg5: memref<1x32xf32, #tpu.memory_space<vmem>>, %arg6: memref<12x32xf32, #tpu.memory_space<vmem>>, %arg7: memref<12x32xf32, #tpu.memory_space<vmem>>) attributes {dimension_semantics = [#tpu.dimension_semantics<parallel>, #tpu.dimension_semantics<parallel>, #tpu.dimension_semantics<arbitrary>], iteration_bounds = array<i64: 1, 1, 1>, scalar_prefetch = 0 : i64, scratch_operands = 1 : i64, tpu.core_type = #tpu.core_type<tc>, window_params = [{transform_indices = @transform_0, window_bounds = array<i64: 12, 32>}, {transform_indices = @transform_1, window_bounds = array<i64: 32, 32>}, {transform_indices = @transform_2, window_bounds = array<i64: 1, 32>}, {transform_indices = @transform_3, window_bounds = array<i64: 12, 32>}]} {
    %c0_i32 = arith.constant 0 : i32
    %0 = arith.cmpi eq, %arg2, %c0_i32 : i32
    %1 = arith.extui %0 : i1 to i32
    %c0_i32_0 = arith.constant 0 : i32
    %2 = arith.cmpi ne, %1, %c0_i32_0 : i32
    scf.if %2 {
      %cst_10 = arith.constant 0.000000e+00 : f32
      %12 = vector.broadcast %cst_10 : f32 to vector<12x32xf32>
      %c0_11 = arith.constant 0 : index
      %c0_12 = arith.constant 0 : index
      %13 = vector.load %arg7[%c0_11, %c0_12] : memref<12x32xf32, #tpu.memory_space<vmem>>, vector<12x32xf32>
      tpu.vector_store %arg7[%c0_11, %c0_12], %12 {strides = array<i32>} : memref<12x32xf32, #tpu.memory_space<vmem>>, vector<12x32xf32>,
    } else {
    }
    %c0 = arith.constant 0 : index
    %c0_1 = arith.constant 0 : index
    %3 = vector.load %arg7[%c0, %c0_1] : memref<12x32xf32, #tpu.memory_space<vmem>>, vector<12x32xf32>
    %c0_2 = arith.constant 0 : index
    %c0_3 = arith.constant 0 : index
    %4 = vector.load %arg3[%c0_2, %c0_3] : memref<12x32xf32, #tpu.memory_space<vmem>>, vector<12x32xf32>
    %c0_4 = arith.constant 0 : index
    %c0_5 = arith.constant 0 : index
    %5 = vector.load %arg4[%c0_4, %c0_5] : memref<32x32xf32, #tpu.memory_space<vmem>>, vector<32x32xf32>
    %cst = arith.constant dense<0.000000e+00> : vector<12x32xf32>
    %6 = tpu.matmul %4, %5, %cst {dimension_numbers = #tpu.dot_dimension_numbers<[1], [0], [0], [1], [0, 0, 1, 1], [], []>} : vector<12x32xf32>, vector<32x32xf32>, vector<12x32xf32> -> vector<12x32xf32>
    %7 = arith.addf %3, %6 : vector<12x32xf32>
    %c0_6 = arith.constant 0 : index
    %c0_7 = arith.constant 0 : index
    %8 = vector.load %arg7[%c0_6, %c0_7] : memref<12x32xf32, #tpu.memory_space<vmem>>, vector<12x32xf32>
    tpu.vector_store %arg7[%c0_6, %c0_7], %7 {strides = array<i32>} : memref<12x32xf32, #tpu.memory_space<vmem>>, vector<12x32xf32>,
    %c0_i32_8 = arith.constant 0 : i32
    %9 = arith.cmpi eq, %arg2, %c0_i32_8 : i32
    %10 = arith.extui %9 : i1 to i32
    %c0_i32_9 = arith.constant 0 : i32
    %11 = arith.cmpi ne, %10, %c0_i32_9 : i32
    scf.if %11 {
      %c0_10 = arith.constant 0 : index
      %c0_11 = arith.constant 0 : index
      %12 = vector.load %arg7[%c0_10, %c0_11] : memref<12x32xf32, #tpu.memory_space<vmem>>, vector<12x32xf32>
      %c0_12 = arith.constant 0 : index
      %c0_13 = arith.constant 0 : index
      %13 = vector.load %arg5[%c0_12, %c0_13] : memref<1x32xf32, #tpu.memory_space<vmem>>, vector<1x32xf32>
      %14 = vector.broadcast %13 : vector<1x32xf32> to vector<12x32xf32>
      %15 = arith.addf %12, %14 : vector<12x32xf32>
      %c0_14 = arith.constant 0 : index
      %c0_15 = arith.constant 0 : index
      %16 = vector.load %arg6[%c0_14, %c0_15] : memref<12x32xf32, #tpu.memory_space<vmem>>, vector<12x32xf32>
      tpu.vector_store %arg6[%c0_14, %c0_15], %15 {strides = array<i32>} : memref<12x32xf32, #tpu.memory_space<vmem>>, vector<12x32xf32>,
    } else {
    }
    return
  }
  func.func @transform_0(%arg0: i32, %arg1: i32, %arg2: i32) -> (i32, i32) {
    %c0_i32 = arith.constant 0 : i32
    return %arg0, %arg2 : i32, i32
  }
  func.func @transform_1(%arg0: i32, %arg1: i32, %arg2: i32) -> (i32, i32) {
    %c0_i32 = arith.constant 0 : i32
    return %arg2, %arg1 : i32, i32
  }
  func.func @transform_2(%arg0: i32, %arg1: i32, %arg2: i32) -> (i32, i32) {
    %c0_i32 = arith.constant 0 : i32
    %c0_i32_0 = arith.constant 0 : i32
    return %c0_i32, %arg1 : i32, i32
  }
  func.func @transform_3(%arg0: i32, %arg1: i32, %arg2: i32) -> (i32, i32) {
    %c0_i32 = arith.constant 0 : i32
    return %arg0, %arg1 : i32, i32
  }
}

module attributes {stable_mosaic.version = 11 : i64} {
  func.func @_dconv_attn_kernel(%arg0: i32, %arg1: memref<1x6x96xf32, #tpu.memory_space<vmem>>, %arg2: memref<3x96xf32, #tpu.memory_space<vmem>>, %arg3: memref<1x96xf32, #tpu.memory_space<vmem>>, %arg4: memref<1x6x32xf32, #tpu.memory_space<vmem>>) attributes {dimension_semantics = [#tpu.dimension_semantics<parallel>], iteration_bounds = array<i64: 2>, scalar_prefetch = 0 : i64, scratch_operands = 0 : i64, tpu.core_type = #tpu.core_type<tc>, window_params = [{transform_indices = @transform_0, window_bounds = array<i64: 1, 6, 96>}, {pipeline_mode = #tpu.pipeline_mode<synchronous>, transform_indices = @transform_1, window_bounds = array<i64: 3, 96>}, {pipeline_mode = #tpu.pipeline_mode<synchronous>, transform_indices = @transform_2, window_bounds = array<i64: 1, 96>}, {transform_indices = @transform_3, window_bounds = array<i64: 1, 6, 32>}]} {
    %c0 = arith.constant 0 : index
    %c0_0 = arith.constant 0 : index
    %c0_1 = arith.constant 0 : index
    %0 = vector.load %arg1[%c0, %c0_0, %c0_1] : memref<1x6x96xf32, #tpu.memory_space<vmem>>, vector<1x6x96xf32>
    %1 = vector.shape_cast %0 : vector<1x6x96xf32> to vector<6x96xf32>
    %c0_2 = arith.constant 0 : index
    %c0_3 = arith.constant 0 : index
    %2 = vector.load %arg2[%c0_2, %c0_3] : memref<3x96xf32, #tpu.memory_space<vmem>>, vector<3x96xf32>
    %c0_4 = arith.constant 0 : index
    %c0_5 = arith.constant 0 : index
    %3 = vector.load %arg3[%c0_4, %c0_5] : memref<1x96xf32, #tpu.memory_space<vmem>>, vector<1x96xf32>
    %4 = tpu.iota {dimensions = array<i32: 0>} : vector<6x6xi32>
    %5 = tpu.iota {dimensions = array<i32: 1>} : vector<6x6xi32>
    %c1_i32 = arith.constant 1 : i32
    %6 = vector.broadcast %c1_i32 : i32 to vector<6x6xi32>
    %7 = arith.addi %5, %6 : vector<6x6xi32>
    %8 = arith.cmpi eq, %4, %7 : vector<6x6xi32>
    %9 = arith.extui %8 : vector<6x6xi1> to vector<6x6xi32>
    %10 = arith.sitofp %9 : vector<6x6xi32> to vector<6x6xf32>
    %c2_i32 = arith.constant 2 : i32
    %11 = vector.broadcast %c2_i32 : i32 to vector<6x6xi32>
    %12 = arith.addi %5, %11 : vector<6x6xi32>
    %13 = arith.cmpi eq, %4, %12 : vector<6x6xi32>
    %14 = arith.extui %13 : vector<6x6xi1> to vector<6x6xi32>
    %15 = arith.sitofp %14 : vector<6x6xi32> to vector<6x6xf32>
    %cst = arith.constant dense<0.000000e+00> : vector<6x96xf32>
    %16 = tpu.matmul %10, %1, %cst {dimension_numbers = #tpu.dot_dimension_numbers<[1], [0], [0], [1], [0, 0, 1, 1], [], []>} : vector<6x6xf32>, vector<6x96xf32>, vector<6x96xf32> -> vector<6x96xf32>
    %cst_6 = arith.constant dense<0.000000e+00> : vector<6x96xf32>
    %17 = tpu.matmul %15, %1, %cst_6 {dimension_numbers = #tpu.dot_dimension_numbers<[1], [0], [0], [1], [0, 0, 1, 1], [], []>} : vector<6x6xf32>, vector<6x96xf32>, vector<6x96xf32> -> vector<6x96xf32>
    %18 = vector.extract_strided_slice %2 {offsets = [2, 0], sizes = [1, 96], strides = [1, 1]} : vector<3x96xf32> to vector<1x96xf32>
    %19 = vector.broadcast %18 : vector<1x96xf32> to vector<6x96xf32>
    %20 = arith.mulf %19, %1 : vector<6x96xf32>
    %21 = vector.extract_strided_slice %2 {offsets = [1, 0], sizes = [1, 96], strides = [1, 1]} : vector<3x96xf32> to vector<1x96xf32>
    %22 = vector.broadcast %21 : vector<1x96xf32> to vector<6x96xf32>
    %23 = arith.mulf %22, %16 : vector<6x96xf32>
    %24 = arith.addf %20, %23 : vector<6x96xf32>
    %25 = vector.extract_strided_slice %2 {offsets = [0, 0], sizes = [1, 96], strides = [1, 1]} : vector<3x96xf32> to vector<1x96xf32>
    %26 = vector.broadcast %25 : vector<1x96xf32> to vector<6x96xf32>
    %27 = arith.mulf %26, %17 : vector<6x96xf32>
    %28 = arith.addf %24, %27 : vector<6x96xf32>
    %29 = vector.broadcast %3 : vector<1x96xf32> to vector<6x96xf32>
    %30 = arith.addf %28, %29 : vector<6x96xf32>
    %31 = vector.extract_strided_slice %30 {offsets = [0, 0], sizes = [6, 8], strides = [1, 1]} : vector<6x96xf32> to vector<6x8xf32>
    %32 = vector.extract_strided_slice %30 {offsets = [0, 8], sizes = [6, 8], strides = [1, 1]} : vector<6x96xf32> to vector<6x8xf32>
    %33 = vector.extract_strided_slice %30 {offsets = [0, 16], sizes = [6, 8], strides = [1, 1]} : vector<6x96xf32> to vector<6x8xf32>
    %34 = vector.extract_strided_slice %30 {offsets = [0, 24], sizes = [6, 8], strides = [1, 1]} : vector<6x96xf32> to vector<6x8xf32>
    %35 = vector.shape_cast %31 : vector<6x8xf32> to vector<1x6x8xf32>
    %36 = vector.shape_cast %32 : vector<6x8xf32> to vector<1x6x8xf32>
    %37 = vector.shape_cast %33 : vector<6x8xf32> to vector<1x6x8xf32>
    %38 = vector.shape_cast %34 : vector<6x8xf32> to vector<1x6x8xf32>
    %39 = tpu.concatenate %35, %36, %37, %38 in 0 : vector<1x6x8xf32>, vector<1x6x8xf32>, vector<1x6x8xf32>, vector<1x6x8xf32> -> vector<4x6x8xf32>
    %40 = vector.extract_strided_slice %30 {offsets = [0, 32], sizes = [6, 8], strides = [1, 1]} : vector<6x96xf32> to vector<6x8xf32>
    %41 = vector.extract_strided_slice %30 {offsets = [0, 40], sizes = [6, 8], strides = [1, 1]} : vector<6x96xf32> to vector<6x8xf32>
    %42 = vector.extract_strided_slice %30 {offsets = [0, 48], sizes = [6, 8], strides = [1, 1]} : vector<6x96xf32> to vector<6x8xf32>
    %43 = vector.extract_strided_slice %30 {offsets = [0, 56], sizes = [6, 8], strides = [1, 1]} : vector<6x96xf32> to vector<6x8xf32>
    %44 = vector.shape_cast %40 : vector<6x8xf32> to vector<1x6x8xf32>
    %45 = vector.shape_cast %41 : vector<6x8xf32> to vector<1x6x8xf32>
    %46 = vector.shape_cast %42 : vector<6x8xf32> to vector<1x6x8xf32>
    %47 = vector.shape_cast %43 : vector<6x8xf32> to vector<1x6x8xf32>
    %48 = tpu.concatenate %44, %45, %46, %47 in 0 : vector<1x6x8xf32>, vector<1x6x8xf32>, vector<1x6x8xf32>, vector<1x6x8xf32> -> vector<4x6x8xf32>
    %49 = vector.extract_strided_slice %30 {offsets = [0, 64], sizes = [6, 8], strides = [1, 1]} : vector<6x96xf32> to vector<6x8xf32>
    %50 = vector.extract_strided_slice %30 {offsets = [0, 72], sizes = [6, 8], strides = [1, 1]} : vector<6x96xf32> to vector<6x8xf32>
    %51 = vector.extract_strided_slice %30 {offsets = [0, 80], sizes = [6, 8], strides = [1, 1]} : vector<6x96xf32> to vector<6x8xf32>
    %52 = vector.extract_strided_slice %30 {offsets = [0, 88], sizes = [6, 8], strides = [1, 1]} : vector<6x96xf32> to vector<6x8xf32>
    %53 = vector.shape_cast %49 : vector<6x8xf32> to vector<1x6x8xf32>
    %54 = vector.shape_cast %50 : vector<6x8xf32> to vector<1x6x8xf32>
    %55 = vector.shape_cast %51 : vector<6x8xf32> to vector<1x6x8xf32>
    %56 = vector.shape_cast %52 : vector<6x8xf32> to vector<1x6x8xf32>
    %57 = tpu.concatenate %53, %54, %55, %56 in 0 : vector<1x6x8xf32>, vector<1x6x8xf32>, vector<1x6x8xf32>, vector<1x6x8xf32> -> vector<4x6x8xf32>
    "tpu.trace_start"() <{level = 10 : i32, message = "hqd,hkd->hqk"}> : () -> ()
    %cst_7 = arith.constant dense<0.000000e+00> : vector<4x6x6xf32>
    %58 = tpu.matmul %39, %48, %cst_7 {dimension_numbers = #tpu.dot_dimension_numbers<[2], [2], [1], [1], [0, 0, 0, 1, 1, 1], [0], [0]>} : vector<4x6x8xf32>, vector<4x6x8xf32>, vector<4x6x6xf32> -> vector<4x6x6xf32>
    "tpu.trace_stop"() : () -> ()
    %cst_8 = arith.constant 0.353553385 : f32
    %59 = vector.broadcast %cst_8 : f32 to vector<4x6x6xf32>
    %60 = arith.mulf %58, %59 : vector<4x6x6xf32>
    %cst_9 = arith.constant dense<0xFF800000> : vector<4x6xf32>
    %61 = vector.multi_reduction <maximumf>, %60, %cst_9 [2] : vector<4x6x6xf32> to vector<4x6xf32>
    %62 = vector.shape_cast %61 : vector<4x6xf32> to vector<4x6x1xf32>
    %63 = vector.broadcast %62 : vector<4x6x1xf32> to vector<4x6x6xf32>
    %64 = arith.subf %60, %63 : vector<4x6x6xf32>
    %65 = math.exp %64 : vector<4x6x6xf32>
    %cst_10 = arith.constant dense<0.000000e+00> : vector<4x6xf32>
    %66 = vector.multi_reduction <add>, %65, %cst_10 [2] : vector<4x6x6xf32> to vector<4x6xf32>
    %67 = vector.shape_cast %66 : vector<4x6xf32> to vector<4x6x1xf32>
    "tpu.trace_start"() <{level = 10 : i32, message = "hqk,hkd->hqd"}> : () -> ()
    %cst_11 = arith.constant dense<0.000000e+00> : vector<4x6x8xf32>
    %68 = tpu.matmul %65, %57, %cst_11 {dimension_numbers = #tpu.dot_dimension_numbers<[2], [1], [1], [2], [0, 0, 0, 1, 1, 2], [0], [0]>} : vector<4x6x6xf32>, vector<4x6x8xf32>, vector<4x6x8xf32> -> vector<4x6x8xf32>
    "tpu.trace_stop"() : () -> ()
    %69 = tpu.reciprocal %67 {approx = true} : vector<4x6x1xf32> -> vector<4x6x1xf32>
    %70 = vector.broadcast %69 : vector<4x6x1xf32> to vector<4x6x8xf32>
    %71 = arith.mulf %68, %70 : vector<4x6x8xf32>
    %72 = vector.extract_strided_slice %71 {offsets = [0, 0, 0], sizes = [1, 6, 8], strides = [1, 1, 1]} : vector<4x6x8xf32> to vector<1x6x8xf32>
    %73 = vector.shape_cast %72 : vector<1x6x8xf32> to vector<6x8xf32>
    %c0_12 = arith.constant 0 : index
    %c0_13 = arith.constant 0 : index
    %c0_14 = arith.constant 0 : index
    %74 = vector.load %arg4[%c0_12, %c0_13, %c0_14] : memref<1x6x32xf32, #tpu.memory_space<vmem>>, vector<1x6x8xf32>
    %75 = vector.shape_cast %74 : vector<1x6x8xf32> to vector<6x8xf32>
    %76 = vector.shape_cast %73 : vector<6x8xf32> to vector<1x6x8xf32>
    tpu.vector_store %arg4[%c0_12, %c0_13, %c0_14], %76 {strides = array<i32>} : memref<1x6x32xf32, #tpu.memory_space<vmem>>, vector<1x6x8xf32>,
    %77 = vector.extract_strided_slice %71 {offsets = [1, 0, 0], sizes = [1, 6, 8], strides = [1, 1, 1]} : vector<4x6x8xf32> to vector<1x6x8xf32>
    %78 = vector.shape_cast %77 : vector<1x6x8xf32> to vector<6x8xf32>
    %c0_15 = arith.constant 0 : index
    %c0_16 = arith.constant 0 : index
    %c8 = arith.constant 8 : index
    %79 = vector.load %arg4[%c0_15, %c0_16, %c8] : memref<1x6x32xf32, #tpu.memory_space<vmem>>, vector<1x6x8xf32>
    %80 = vector.shape_cast %79 : vector<1x6x8xf32> to vector<6x8xf32>
    %81 = vector.shape_cast %78 : vector<6x8xf32> to vector<1x6x8xf32>
    tpu.vector_store %arg4[%c0_15, %c0_16, %c8], %81 {strides = array<i32>} : memref<1x6x32xf32, #tpu.memory_space<vmem>>, vector<1x6x8xf32>,
    %82 = vector.extract_strided_slice %71 {offsets = [2, 0, 0], sizes = [1, 6, 8], strides = [1, 1, 1]} : vector<4x6x8xf32> to vector<1x6x8xf32>
    %83 = vector.shape_cast %82 : vector<1x6x8xf32> to vector<6x8xf32>
    %c0_17 = arith.constant 0 : index
    %c0_18 = arith.constant 0 : index
    %c16 = arith.constant 16 : index
    %84 = vector.load %arg4[%c0_17, %c0_18, %c16] : memref<1x6x32xf32, #tpu.memory_space<vmem>>, vector<1x6x8xf32>
    %85 = vector.shape_cast %84 : vector<1x6x8xf32> to vector<6x8xf32>
    %86 = vector.shape_cast %83 : vector<6x8xf32> to vector<1x6x8xf32>
    tpu.vector_store %arg4[%c0_17, %c0_18, %c16], %86 {strides = array<i32>} : memref<1x6x32xf32, #tpu.memory_space<vmem>>, vector<1x6x8xf32>,
    %87 = vector.extract_strided_slice %71 {offsets = [3, 0, 0], sizes = [1, 6, 8], strides = [1, 1, 1]} : vector<4x6x8xf32> to vector<1x6x8xf32>
    %88 = vector.shape_cast %87 : vector<1x6x8xf32> to vector<6x8xf32>
    %c0_19 = arith.constant 0 : index
    %c0_20 = arith.constant 0 : index
    %c24 = arith.constant 24 : index
    %89 = vector.load %arg4[%c0_19, %c0_20, %c24] : memref<1x6x32xf32, #tpu.memory_space<vmem>>, vector<1x6x8xf32>
    %90 = vector.shape_cast %89 : vector<1x6x8xf32> to vector<6x8xf32>
    %91 = vector.shape_cast %88 : vector<6x8xf32> to vector<1x6x8xf32>
    tpu.vector_store %arg4[%c0_19, %c0_20, %c24], %91 {strides = array<i32>} : memref<1x6x32xf32, #tpu.memory_space<vmem>>, vector<1x6x8xf32>,
    return
  }
  func.func @transform_0(%arg0: i32) -> (i32, i32, i32) {
    %c0_i32 = arith.constant 0 : i32
    %c0_i32_0 = arith.constant 0 : i32
    %c0_i32_1 = arith.constant 0 : i32
    return %arg0, %c0_i32, %c0_i32_0 : i32, i32, i32
  }
  func.func @transform_1(%arg0: i32) -> (i32, i32) {
    %c0_i32 = arith.constant 0 : i32
    %c0_i32_0 = arith.constant 0 : i32
    %c0_i32_1 = arith.constant 0 : i32
    return %c0_i32, %c0_i32_0 : i32, i32
  }
  func.func @transform_2(%arg0: i32) -> (i32, i32) {
    %c0_i32 = arith.constant 0 : i32
    %c0_i32_0 = arith.constant 0 : i32
    %c0_i32_1 = arith.constant 0 : i32
    return %c0_i32, %c0_i32_0 : i32, i32
  }
  func.func @transform_3(%arg0: i32) -> (i32, i32, i32) {
    %c0_i32 = arith.constant 0 : i32
    %c0_i32_0 = arith.constant 0 : i32
    %c0_i32_1 = arith.constant 0 : i32
    return %arg0, %c0_i32, %c0_i32_0 : i32, i32, i32
  }
}

module attributes {stable_mosaic.version = 11 : i64} {
  func.func @_layernorm_kernel(%arg0: i32, %arg1: memref<10x32xf32, #tpu.memory_space<vmem>>, %arg2: memref<1x32xf32, #tpu.memory_space<vmem>>, %arg3: memref<1x32xf32, #tpu.memory_space<vmem>>, %arg4: memref<10x32xf32, #tpu.memory_space<vmem>>) attributes {dimension_semantics = [#tpu.dimension_semantics<parallel>], iteration_bounds = array<i64: 1>, scalar_prefetch = 0 : i64, scratch_operands = 0 : i64, tpu.core_type = #tpu.core_type<tc>, window_params = [{transform_indices = @transform_0, window_bounds = array<i64: 10, 32>}, {pipeline_mode = #tpu.pipeline_mode<synchronous>, transform_indices = @transform_1, window_bounds = array<i64: 1, 32>}, {pipeline_mode = #tpu.pipeline_mode<synchronous>, transform_indices = @transform_2, window_bounds = array<i64: 1, 32>}, {transform_indices = @transform_3, window_bounds = array<i64: 10, 32>}]} {
    %c0 = arith.constant 0 : index
    %c0_0 = arith.constant 0 : index
    %0 = vector.load %arg1[%c0, %c0_0] : memref<10x32xf32, #tpu.memory_space<vmem>>, vector<10x32xf32>
    %cst = arith.constant dense<0.000000e+00> : vector<10xf32>
    %1 = vector.multi_reduction <add>, %0, %cst [1] : vector<10x32xf32> to vector<10xf32>
    %2 = vector.shape_cast %1 : vector<10xf32> to vector<10x1xf32>
    %cst_1 = arith.constant 3.200000e+01 : f32
    %3 = vector.broadcast %cst_1 : f32 to vector<10x1xf32>
    %4 = arith.divf %2, %3 : vector<10x1xf32>
    %5 = vector.broadcast %4 : vector<10x1xf32> to vector<10x32xf32>
    %6 = arith.subf %0, %5 : vector<10x32xf32>
    %7 = arith.mulf %6, %6 : vector<10x32xf32>
    %cst_2 = arith.constant dense<0.000000e+00> : vector<10xf32>
    %8 = vector.multi_reduction <add>, %7, %cst_2 [1] : vector<10x32xf32> to vector<10xf32>
    %9 = vector.shape_cast %8 : vector<10xf32> to vector<10x1xf32>
    %cst_3 = arith.constant 3.200000e+01 : f32
    %10 = vector.broadcast %cst_3 : f32 to vector<10x1xf32>
    %11 = arith.divf %9, %10 : vector<10x1xf32>
    %cst_4 = arith.constant 9.99999974E-6 : f32
    %12 = vector.broadcast %cst_4 : f32 to vector<10x1xf32>
    %13 = arith.addf %11, %12 : vector<10x1xf32>
    %14 = math.rsqrt %13 : vector<10x1xf32>
    %15 = vector.broadcast %14 : vector<10x1xf32> to vector<10x32xf32>
    %16 = arith.mulf %6, %15 : vector<10x32xf32>
    %c0_5 = arith.constant 0 : index
    %c0_6 = arith.constant 0 : index
    %17 = vector.load %arg2[%c0_5, %c0_6] : memref<1x32xf32, #tpu.memory_space<vmem>>, vector<1x32xf32>
    %18 = vector.broadcast %17 : vector<1x32xf32> to vector<10x32xf32>
    %19 = arith.mulf %16, %18 : vector<10x32xf32>
    %c0_7 = arith.constant 0 : index
    %c0_8 = arith.constant 0 : index
    %20 = vector.load %arg3[%c0_7, %c0_8] : memref<1x32xf32, #tpu.memory_space<vmem>>, vector<1x32xf32>
    %21 = vector.broadcast %20 : vector<1x32xf32> to vector<10x32xf32>
    %22 = arith.addf %19, %21 : vector<10x32xf32>
    %c0_9 = arith.constant 0 : index
    %c0_10 = arith.constant 0 : index
    %23 = vector.load %arg4[%c0_9, %c0_10] : memref<10x32xf32, #tpu.memory_space<vmem>>, vector<10x32xf32>
    tpu.vector_store %arg4[%c0_9, %c0_10], %22 {strides = array<i32>} : memref<10x32xf32, #tpu.memory_space<vmem>>, vector<10x32xf32>,
    return
  }
  func.func @transform_0(%arg0: i32) -> (i32, i32) {
    %c0_i32 = arith.constant 0 : i32
    %c0_i32_0 = arith.constant 0 : i32
    return %arg0, %c0_i32 : i32, i32
  }
  func.func @transform_1(%arg0: i32) -> (i32, i32) {
    %c0_i32 = arith.constant 0 : i32
    %c0_i32_0 = arith.constant 0 : i32
    %c0_i32_1 = arith.constant 0 : i32
    return %c0_i32, %c0_i32_0 : i32, i32
  }
  func.func @transform_2(%arg0: i32) -> (i32, i32) {
    %c0_i32 = arith.constant 0 : i32
    %c0_i32_0 = arith.constant 0 : i32
    %c0_i32_1 = arith.constant 0 : i32
    return %c0_i32, %c0_i32_0 : i32, i32
  }
  func.func @transform_3(%arg0: i32) -> (i32, i32) {
    %c0_i32 = arith.constant 0 : i32
    %c0_i32_0 = arith.constant 0 : i32
    return %arg0, %c0_i32 : i32, i32
  }
}

module attributes {stable_mosaic.version = 11 : i64} {
  func.func @_dconv_attn_kernel(%arg0: i32, %arg1: memref<1x5x96xf32, #tpu.memory_space<vmem>>, %arg2: memref<3x96xf32, #tpu.memory_space<vmem>>, %arg3: memref<1x96xf32, #tpu.memory_space<vmem>>, %arg4: memref<1x5x32xf32, #tpu.memory_space<vmem>>) attributes {dimension_semantics = [#tpu.dimension_semantics<parallel>], iteration_bounds = array<i64: 2>, scalar_prefetch = 0 : i64, scratch_operands = 0 : i64, tpu.core_type = #tpu.core_type<tc>, window_params = [{transform_indices = @transform_0, window_bounds = array<i64: 1, 5, 96>}, {pipeline_mode = #tpu.pipeline_mode<synchronous>, transform_indices = @transform_1, window_bounds = array<i64: 3, 96>}, {pipeline_mode = #tpu.pipeline_mode<synchronous>, transform_indices = @transform_2, window_bounds = array<i64: 1, 96>}, {transform_indices = @transform_3, window_bounds = array<i64: 1, 5, 32>}]} {
    %c0 = arith.constant 0 : index
    %c0_0 = arith.constant 0 : index
    %c0_1 = arith.constant 0 : index
    %0 = vector.load %arg1[%c0, %c0_0, %c0_1] : memref<1x5x96xf32, #tpu.memory_space<vmem>>, vector<1x5x96xf32>
    %1 = vector.shape_cast %0 : vector<1x5x96xf32> to vector<5x96xf32>
    %c0_2 = arith.constant 0 : index
    %c0_3 = arith.constant 0 : index
    %2 = vector.load %arg2[%c0_2, %c0_3] : memref<3x96xf32, #tpu.memory_space<vmem>>, vector<3x96xf32>
    %c0_4 = arith.constant 0 : index
    %c0_5 = arith.constant 0 : index
    %3 = vector.load %arg3[%c0_4, %c0_5] : memref<1x96xf32, #tpu.memory_space<vmem>>, vector<1x96xf32>
    %4 = tpu.iota {dimensions = array<i32: 0>} : vector<5x5xi32>
    %5 = tpu.iota {dimensions = array<i32: 1>} : vector<5x5xi32>
    %c1_i32 = arith.constant 1 : i32
    %6 = vector.broadcast %c1_i32 : i32 to vector<5x5xi32>
    %7 = arith.addi %5, %6 : vector<5x5xi32>
    %8 = arith.cmpi eq, %4, %7 : vector<5x5xi32>
    %9 = arith.extui %8 : vector<5x5xi1> to vector<5x5xi32>
    %10 = arith.sitofp %9 : vector<5x5xi32> to vector<5x5xf32>
    %c2_i32 = arith.constant 2 : i32
    %11 = vector.broadcast %c2_i32 : i32 to vector<5x5xi32>
    %12 = arith.addi %5, %11 : vector<5x5xi32>
    %13 = arith.cmpi eq, %4, %12 : vector<5x5xi32>
    %14 = arith.extui %13 : vector<5x5xi1> to vector<5x5xi32>
    %15 = arith.sitofp %14 : vector<5x5xi32> to vector<5x5xf32>
    %cst = arith.constant dense<0.000000e+00> : vector<5x96xf32>
    %16 = tpu.matmul %10, %1, %cst {dimension_numbers = #tpu.dot_dimension_numbers<[1], [0], [0], [1], [0, 0, 1, 1], [], []>} : vector<5x5xf32>, vector<5x96xf32>, vector<5x96xf32> -> vector<5x96xf32>
    %cst_6 = arith.constant dense<0.000000e+00> : vector<5x96xf32>
    %17 = tpu.matmul %15, %1, %cst_6 {dimension_numbers = #tpu.dot_dimension_numbers<[1], [0], [0], [1], [0, 0, 1, 1], [], []>} : vector<5x5xf32>, vector<5x96xf32>, vector<5x96xf32> -> vector<5x96xf32>
    %18 = vector.extract_strided_slice %2 {offsets = [2, 0], sizes = [1, 96], strides = [1, 1]} : vector<3x96xf32> to vector<1x96xf32>
    %19 = vector.broadcast %18 : vector<1x96xf32> to vector<5x96xf32>
    %20 = arith.mulf %19, %1 : vector<5x96xf32>
    %21 = vector.extract_strided_slice %2 {offsets = [1, 0], sizes = [1, 96], strides = [1, 1]} : vector<3x96xf32> to vector<1x96xf32>
    %22 = vector.broadcast %21 : vector<1x96xf32> to vector<5x96xf32>
    %23 = arith.mulf %22, %16 : vector<5x96xf32>
    %24 = arith.addf %20, %23 : vector<5x96xf32>
    %25 = vector.extract_strided_slice %2 {offsets = [0, 0], sizes = [1, 96], strides = [1, 1]} : vector<3x96xf32> to vector<1x96xf32>
    %26 = vector.broadcast %25 : vector<1x96xf32> to vector<5x96xf32>
    %27 = arith.mulf %26, %17 : vector<5x96xf32>
    %28 = arith.addf %24, %27 : vector<5x96xf32>
    %29 = vector.broadcast %3 : vector<1x96xf32> to vector<5x96xf32>
    %30 = arith.addf %28, %29 : vector<5x96xf32>
    %31 = vector.extract_strided_slice %30 {offsets = [0, 0], sizes = [5, 8], strides = [1, 1]} : vector<5x96xf32> to vector<5x8xf32>
    %32 = vector.extract_strided_slice %30 {offsets = [0, 8], sizes = [5, 8], strides = [1, 1]} : vector<5x96xf32> to vector<5x8xf32>
    %33 = vector.extract_strided_slice %30 {offsets = [0, 16], sizes = [5, 8], strides = [1, 1]} : vector<5x96xf32> to vector<5x8xf32>
    %34 = vector.extract_strided_slice %30 {offsets = [0, 24], sizes = [5, 8], strides = [1, 1]} : vector<5x96xf32> to vector<5x8xf32>
    %35 = vector.shape_cast %31 : vector<5x8xf32> to vector<1x5x8xf32>
    %36 = vector.shape_cast %32 : vector<5x8xf32> to vector<1x5x8xf32>
    %37 = vector.shape_cast %33 : vector<5x8xf32> to vector<1x5x8xf32>
    %38 = vector.shape_cast %34 : vector<5x8xf32> to vector<1x5x8xf32>
    %39 = tpu.concatenate %35, %36, %37, %38 in 0 : vector<1x5x8xf32>, vector<1x5x8xf32>, vector<1x5x8xf32>, vector<1x5x8xf32> -> vector<4x5x8xf32>
    %40 = vector.extract_strided_slice %30 {offsets = [0, 32], sizes = [5, 8], strides = [1, 1]} : vector<5x96xf32> to vector<5x8xf32>
    %41 = vector.extract_strided_slice %30 {offsets = [0, 40], sizes = [5, 8], strides = [1, 1]} : vector<5x96xf32> to vector<5x8xf32>
    %42 = vector.extract_strided_slice %30 {offsets = [0, 48], sizes = [5, 8], strides = [1, 1]} : vector<5x96xf32> to vector<5x8xf32>
    %43 = vector.extract_strided_slice %30 {offsets = [0, 56], sizes = [5, 8], strides = [1, 1]} : vector<5x96xf32> to vector<5x8xf32>
    %44 = vector.shape_cast %40 : vector<5x8xf32> to vector<1x5x8xf32>
    %45 = vector.shape_cast %41 : vector<5x8xf32> to vector<1x5x8xf32>
    %46 = vector.shape_cast %42 : vector<5x8xf32> to vector<1x5x8xf32>
    %47 = vector.shape_cast %43 : vector<5x8xf32> to vector<1x5x8xf32>
    %48 = tpu.concatenate %44, %45, %46, %47 in 0 : vector<1x5x8xf32>, vector<1x5x8xf32>, vector<1x5x8xf32>, vector<1x5x8xf32> -> vector<4x5x8xf32>
    %49 = vector.extract_strided_slice %30 {offsets = [0, 64], sizes = [5, 8], strides = [1, 1]} : vector<5x96xf32> to vector<5x8xf32>
    %50 = vector.extract_strided_slice %30 {offsets = [0, 72], sizes = [5, 8], strides = [1, 1]} : vector<5x96xf32> to vector<5x8xf32>
    %51 = vector.extract_strided_slice %30 {offsets = [0, 80], sizes = [5, 8], strides = [1, 1]} : vector<5x96xf32> to vector<5x8xf32>
    %52 = vector.extract_strided_slice %30 {offsets = [0, 88], sizes = [5, 8], strides = [1, 1]} : vector<5x96xf32> to vector<5x8xf32>
    %53 = vector.shape_cast %49 : vector<5x8xf32> to vector<1x5x8xf32>
    %54 = vector.shape_cast %50 : vector<5x8xf32> to vector<1x5x8xf32>
    %55 = vector.shape_cast %51 : vector<5x8xf32> to vector<1x5x8xf32>
    %56 = vector.shape_cast %52 : vector<5x8xf32> to vector<1x5x8xf32>
    %57 = tpu.concatenate %53, %54, %55, %56 in 0 : vector<1x5x8xf32>, vector<1x5x8xf32>, vector<1x5x8xf32>, vector<1x5x8xf32> -> vector<4x5x8xf32>
    "tpu.trace_start"() <{level = 10 : i32, message = "hqd,hkd->hqk"}> : () -> ()
    %cst_7 = arith.constant dense<0.000000e+00> : vector<4x5x5xf32>
    %58 = tpu.matmul %39, %48, %cst_7 {dimension_numbers = #tpu.dot_dimension_numbers<[2], [2], [1], [1], [0, 0, 0, 1, 1, 1], [0], [0]>} : vector<4x5x8xf32>, vector<4x5x8xf32>, vector<4x5x5xf32> -> vector<4x5x5xf32>
    "tpu.trace_stop"() : () -> ()
    %cst_8 = arith.constant 0.353553385 : f32
    %59 = vector.broadcast %cst_8 : f32 to vector<4x5x5xf32>
    %60 = arith.mulf %58, %59 : vector<4x5x5xf32>
    %cst_9 = arith.constant dense<0xFF800000> : vector<4x5xf32>
    %61 = vector.multi_reduction <maximumf>, %60, %cst_9 [2] : vector<4x5x5xf32> to vector<4x5xf32>
    %62 = vector.shape_cast %61 : vector<4x5xf32> to vector<4x5x1xf32>
    %63 = vector.broadcast %62 : vector<4x5x1xf32> to vector<4x5x5xf32>
    %64 = arith.subf %60, %63 : vector<4x5x5xf32>
    %65 = math.exp %64 : vector<4x5x5xf32>
    %cst_10 = arith.constant dense<0.000000e+00> : vector<4x5xf32>
    %66 = vector.multi_reduction <add>, %65, %cst_10 [2] : vector<4x5x5xf32> to vector<4x5xf32>
    %67 = vector.shape_cast %66 : vector<4x5xf32> to vector<4x5x1xf32>
    "tpu.trace_start"() <{level = 10 : i32, message = "hqk,hkd->hqd"}> : () -> ()
    %cst_11 = arith.constant dense<0.000000e+00> : vector<4x5x8xf32>
    %68 = tpu.matmul %65, %57, %cst_11 {dimension_numbers = #tpu.dot_dimension_numbers<[2], [1], [1], [2], [0, 0, 0, 1, 1, 2], [0], [0]>} : vector<4x5x5xf32>, vector<4x5x8xf32>, vector<4x5x8xf32> -> vector<4x5x8xf32>
    "tpu.trace_stop"() : () -> ()
    %69 = tpu.reciprocal %67 {approx = true} : vector<4x5x1xf32> -> vector<4x5x1xf32>
    %70 = vector.broadcast %69 : vector<4x5x1xf32> to vector<4x5x8xf32>
    %71 = arith.mulf %68, %70 : vector<4x5x8xf32>
    %72 = vector.extract_strided_slice %71 {offsets = [0, 0, 0], sizes = [1, 5, 8], strides = [1, 1, 1]} : vector<4x5x8xf32> to vector<1x5x8xf32>
    %73 = vector.shape_cast %72 : vector<1x5x8xf32> to vector<5x8xf32>
    %c0_12 = arith.constant 0 : index
    %c0_13 = arith.constant 0 : index
    %c0_14 = arith.constant 0 : index
    %74 = vector.load %arg4[%c0_12, %c0_13, %c0_14] : memref<1x5x32xf32, #tpu.memory_space<vmem>>, vector<1x5x8xf32>
    %75 = vector.shape_cast %74 : vector<1x5x8xf32> to vector<5x8xf32>
    %76 = vector.shape_cast %73 : vector<5x8xf32> to vector<1x5x8xf32>
    tpu.vector_store %arg4[%c0_12, %c0_13, %c0_14], %76 {strides = array<i32>} : memref<1x5x32xf32, #tpu.memory_space<vmem>>, vector<1x5x8xf32>,
    %77 = vector.extract_strided_slice %71 {offsets = [1, 0, 0], sizes = [1, 5, 8], strides = [1, 1, 1]} : vector<4x5x8xf32> to vector<1x5x8xf32>
    %78 = vector.shape_cast %77 : vector<1x5x8xf32> to vector<5x8xf32>
    %c0_15 = arith.constant 0 : index
    %c0_16 = arith.constant 0 : index
    %c8 = arith.constant 8 : index
    %79 = vector.load %arg4[%c0_15, %c0_16, %c8] : memref<1x5x32xf32, #tpu.memory_space<vmem>>, vector<1x5x8xf32>
    %80 = vector.shape_cast %79 : vector<1x5x8xf32> to vector<5x8xf32>
    %81 = vector.shape_cast %78 : vector<5x8xf32> to vector<1x5x8xf32>
    tpu.vector_store %arg4[%c0_15, %c0_16, %c8], %81 {strides = array<i32>} : memref<1x5x32xf32, #tpu.memory_space<vmem>>, vector<1x5x8xf32>,
    %82 = vector.extract_strided_slice %71 {offsets = [2, 0, 0], sizes = [1, 5, 8], strides = [1, 1, 1]} : vector<4x5x8xf32> to vector<1x5x8xf32>
    %83 = vector.shape_cast %82 : vector<1x5x8xf32> to vector<5x8xf32>
    %c0_17 = arith.constant 0 : index
    %c0_18 = arith.constant 0 : index
    %c16 = arith.constant 16 : index
    %84 = vector.load %arg4[%c0_17, %c0_18, %c16] : memref<1x5x32xf32, #tpu.memory_space<vmem>>, vector<1x5x8xf32>
    %85 = vector.shape_cast %84 : vector<1x5x8xf32> to vector<5x8xf32>
    %86 = vector.shape_cast %83 : vector<5x8xf32> to vector<1x5x8xf32>
    tpu.vector_store %arg4[%c0_17, %c0_18, %c16], %86 {strides = array<i32>} : memref<1x5x32xf32, #tpu.memory_space<vmem>>, vector<1x5x8xf32>,
    %87 = vector.extract_strided_slice %71 {offsets = [3, 0, 0], sizes = [1, 5, 8], strides = [1, 1, 1]} : vector<4x5x8xf32> to vector<1x5x8xf32>
    %88 = vector.shape_cast %87 : vector<1x5x8xf32> to vector<5x8xf32>
    %c0_19 = arith.constant 0 : index
    %c0_20 = arith.constant 0 : index
    %c24 = arith.constant 24 : index
    %89 = vector.load %arg4[%c0_19, %c0_20, %c24] : memref<1x5x32xf32, #tpu.memory_space<vmem>>, vector<1x5x8xf32>
    %90 = vector.shape_cast %89 : vector<1x5x8xf32> to vector<5x8xf32>
    %91 = vector.shape_cast %88 : vector<5x8xf32> to vector<1x5x8xf32>
    tpu.vector_store %arg4[%c0_19, %c0_20, %c24], %91 {strides = array<i32>} : memref<1x5x32xf32, #tpu.memory_space<vmem>>, vector<1x5x8xf32>,
    return
  }
  func.func @transform_0(%arg0: i32) -> (i32, i32, i32) {
    %c0_i32 = arith.constant 0 : i32
    %c0_i32_0 = arith.constant 0 : i32
    %c0_i32_1 = arith.constant 0 : i32
    return %arg0, %c0_i32, %c0_i32_0 : i32, i32, i32
  }
  func.func @transform_1(%arg0: i32) -> (i32, i32) {
    %c0_i32 = arith.constant 0 : i32
    %c0_i32_0 = arith.constant 0 : i32
    %c0_i32_1 = arith.constant 0 : i32
    return %c0_i32, %c0_i32_0 : i32, i32
  }
  func.func @transform_2(%arg0: i32) -> (i32, i32) {
    %c0_i32 = arith.constant 0 : i32
    %c0_i32_0 = arith.constant 0 : i32
    %c0_i32_1 = arith.constant 0 : i32
    return %c0_i32, %c0_i32_0 : i32, i32
  }
  func.func @transform_3(%arg0: i32) -> (i32, i32, i32) {
    %c0_i32 = arith.constant 0 : i32
    %c0_i32_0 = arith.constant 0 : i32
    %c0_i32_1 = arith.constant 0 : i32
    return %arg0, %c0_i32, %c0_i32_0 : i32, i32, i32
  }
}

module attributes {stable_mosaic.version = 11 : i64} {
  func.func @_linear_kernel(%arg0: i32, %arg1: i32, %arg2: i32, %arg3: memref<10x32xf32, #tpu.memory_space<vmem>>, %arg4: memref<32x32xf32, #tpu.memory_space<vmem>>, %arg5: memref<1x32xf32, #tpu.memory_space<vmem>>, %arg6: memref<10x32xf32, #tpu.memory_space<vmem>>, %arg7: memref<10x32xf32, #tpu.memory_space<vmem>>) attributes {dimension_semantics = [#tpu.dimension_semantics<parallel>, #tpu.dimension_semantics<parallel>, #tpu.dimension_semantics<arbitrary>], iteration_bounds = array<i64: 1, 1, 1>, scalar_prefetch = 0 : i64, scratch_operands = 1 : i64, tpu.core_type = #tpu.core_type<tc>, window_params = [{transform_indices = @transform_0, window_bounds = array<i64: 10, 32>}, {transform_indices = @transform_1, window_bounds = array<i64: 32, 32>}, {transform_indices = @transform_2, window_bounds = array<i64: 1, 32>}, {transform_indices = @transform_3, window_bounds = array<i64: 10, 32>}]} {
    %c0_i32 = arith.constant 0 : i32
    %0 = arith.cmpi eq, %arg2, %c0_i32 : i32
    %1 = arith.extui %0 : i1 to i32
    %c0_i32_0 = arith.constant 0 : i32
    %2 = arith.cmpi ne, %1, %c0_i32_0 : i32
    scf.if %2 {
      %cst_10 = arith.constant 0.000000e+00 : f32
      %12 = vector.broadcast %cst_10 : f32 to vector<10x32xf32>
      %c0_11 = arith.constant 0 : index
      %c0_12 = arith.constant 0 : index
      %13 = vector.load %arg7[%c0_11, %c0_12] : memref<10x32xf32, #tpu.memory_space<vmem>>, vector<10x32xf32>
      tpu.vector_store %arg7[%c0_11, %c0_12], %12 {strides = array<i32>} : memref<10x32xf32, #tpu.memory_space<vmem>>, vector<10x32xf32>,
    } else {
    }
    %c0 = arith.constant 0 : index
    %c0_1 = arith.constant 0 : index
    %3 = vector.load %arg7[%c0, %c0_1] : memref<10x32xf32, #tpu.memory_space<vmem>>, vector<10x32xf32>
    %c0_2 = arith.constant 0 : index
    %c0_3 = arith.constant 0 : index
    %4 = vector.load %arg3[%c0_2, %c0_3] : memref<10x32xf32, #tpu.memory_space<vmem>>, vector<10x32xf32>
    %c0_4 = arith.constant 0 : index
    %c0_5 = arith.constant 0 : index
    %5 = vector.load %arg4[%c0_4, %c0_5] : memref<32x32xf32, #tpu.memory_space<vmem>>, vector<32x32xf32>
    %cst = arith.constant dense<0.000000e+00> : vector<10x32xf32>
    %6 = tpu.matmul %4, %5, %cst {dimension_numbers = #tpu.dot_dimension_numbers<[1], [0], [0], [1], [0, 0, 1, 1], [], []>} : vector<10x32xf32>, vector<32x32xf32>, vector<10x32xf32> -> vector<10x32xf32>
    %7 = arith.addf %3, %6 : vector<10x32xf32>
    %c0_6 = arith.constant 0 : index
    %c0_7 = arith.constant 0 : index
    %8 = vector.load %arg7[%c0_6, %c0_7] : memref<10x32xf32, #tpu.memory_space<vmem>>, vector<10x32xf32>
    tpu.vector_store %arg7[%c0_6, %c0_7], %7 {strides = array<i32>} : memref<10x32xf32, #tpu.memory_space<vmem>>, vector<10x32xf32>,
    %c0_i32_8 = arith.constant 0 : i32
    %9 = arith.cmpi eq, %arg2, %c0_i32_8 : i32
    %10 = arith.extui %9 : i1 to i32
    %c0_i32_9 = arith.constant 0 : i32
    %11 = arith.cmpi ne, %10, %c0_i32_9 : i32
    scf.if %11 {
      %c0_10 = arith.constant 0 : index
      %c0_11 = arith.constant 0 : index
      %12 = vector.load %arg7[%c0_10, %c0_11] : memref<10x32xf32, #tpu.memory_space<vmem>>, vector<10x32xf32>
      %c0_12 = arith.constant 0 : index
      %c0_13 = arith.constant 0 : index
      %13 = vector.load %arg5[%c0_12, %c0_13] : memref<1x32xf32, #tpu.memory_space<vmem>>, vector<1x32xf32>
      %14 = vector.broadcast %13 : vector<1x32xf32> to vector<10x32xf32>
      %15 = arith.addf %12, %14 : vector<10x32xf32>
      %c0_14 = arith.constant 0 : index
      %c0_15 = arith.constant 0 : index
      %16 = vector.load %arg6[%c0_14, %c0_15] : memref<10x32xf32, #tpu.memory_space<vmem>>, vector<10x32xf32>
      tpu.vector_store %arg6[%c0_14, %c0_15], %15 {strides = array<i32>} : memref<10x32xf32, #tpu.memory_space<vmem>>, vector<10x32xf32>,
    } else {
    }
    return
  }
  func.func @transform_0(%arg0: i32, %arg1: i32, %arg2: i32) -> (i32, i32) {
    %c0_i32 = arith.constant 0 : i32
    return %arg0, %arg2 : i32, i32
  }
  func.func @transform_1(%arg0: i32, %arg1: i32, %arg2: i32) -> (i32, i32) {
    %c0_i32 = arith.constant 0 : i32
    return %arg2, %arg1 : i32, i32
  }
  func.func @transform_2(%arg0: i32, %arg1: i32, %arg2: i32) -> (i32, i32) {
    %c0_i32 = arith.constant 0 : i32
    %c0_i32_0 = arith.constant 0 : i32
    return %c0_i32, %arg1 : i32, i32
  }
  func.func @transform_3(%arg0: i32, %arg1: i32, %arg2: i32) -> (i32, i32) {
    %c0_i32 = arith.constant 0 : i32
    return %arg0, %arg1 : i32, i32
  }
}

module attributes {stable_mosaic.version = 11 : i64} {
  func.func @_linear_kernel(%arg0: i32, %arg1: i32, %arg2: i32, %arg3: memref<10x32xf32, #tpu.memory_space<vmem>>, %arg4: memref<32x96xf32, #tpu.memory_space<vmem>>, %arg5: memref<1x96xf32, #tpu.memory_space<vmem>>, %arg6: memref<10x96xf32, #tpu.memory_space<vmem>>, %arg7: memref<10x96xf32, #tpu.memory_space<vmem>>) attributes {dimension_semantics = [#tpu.dimension_semantics<parallel>, #tpu.dimension_semantics<parallel>, #tpu.dimension_semantics<arbitrary>], iteration_bounds = array<i64: 1, 1, 1>, scalar_prefetch = 0 : i64, scratch_operands = 1 : i64, tpu.core_type = #tpu.core_type<tc>, window_params = [{transform_indices = @transform_0, window_bounds = array<i64: 10, 32>}, {transform_indices = @transform_1, window_bounds = array<i64: 32, 96>}, {transform_indices = @transform_2, window_bounds = array<i64: 1, 96>}, {transform_indices = @transform_3, window_bounds = array<i64: 10, 96>}]} {
    %c0_i32 = arith.constant 0 : i32
    %0 = arith.cmpi eq, %arg2, %c0_i32 : i32
    %1 = arith.extui %0 : i1 to i32
    %c0_i32_0 = arith.constant 0 : i32
    %2 = arith.cmpi ne, %1, %c0_i32_0 : i32
    scf.if %2 {
      %cst_10 = arith.constant 0.000000e+00 : f32
      %12 = vector.broadcast %cst_10 : f32 to vector<10x96xf32>
      %c0_11 = arith.constant 0 : index
      %c0_12 = arith.constant 0 : index
      %13 = vector.load %arg7[%c0_11, %c0_12] : memref<10x96xf32, #tpu.memory_space<vmem>>, vector<10x96xf32>
      tpu.vector_store %arg7[%c0_11, %c0_12], %12 {strides = array<i32>} : memref<10x96xf32, #tpu.memory_space<vmem>>, vector<10x96xf32>,
    } else {
    }
    %c0 = arith.constant 0 : index
    %c0_1 = arith.constant 0 : index
    %3 = vector.load %arg7[%c0, %c0_1] : memref<10x96xf32, #tpu.memory_space<vmem>>, vector<10x96xf32>
    %c0_2 = arith.constant 0 : index
    %c0_3 = arith.constant 0 : index
    %4 = vector.load %arg3[%c0_2, %c0_3] : memref<10x32xf32, #tpu.memory_space<vmem>>, vector<10x32xf32>
    %c0_4 = arith.constant 0 : index
    %c0_5 = arith.constant 0 : index
    %5 = vector.load %arg4[%c0_4, %c0_5] : memref<32x96xf32, #tpu.memory_space<vmem>>, vector<32x96xf32>
    %cst = arith.constant dense<0.000000e+00> : vector<10x96xf32>
    %6 = tpu.matmul %4, %5, %cst {dimension_numbers = #tpu.dot_dimension_numbers<[1], [0], [0], [1], [0, 0, 1, 1], [], []>} : vector<10x32xf32>, vector<32x96xf32>, vector<10x96xf32> -> vector<10x96xf32>
    %7 = arith.addf %3, %6 : vector<10x96xf32>
    %c0_6 = arith.constant 0 : index
    %c0_7 = arith.constant 0 : index
    %8 = vector.load %arg7[%c0_6, %c0_7] : memref<10x96xf32, #tpu.memory_space<vmem>>, vector<10x96xf32>
    tpu.vector_store %arg7[%c0_6, %c0_7], %7 {strides = array<i32>} : memref<10x96xf32, #tpu.memory_space<vmem>>, vector<10x96xf32>,
    %c0_i32_8 = arith.constant 0 : i32
    %9 = arith.cmpi eq, %arg2, %c0_i32_8 : i32
    %10 = arith.extui %9 : i1 to i32
    %c0_i32_9 = arith.constant 0 : i32
    %11 = arith.cmpi ne, %10, %c0_i32_9 : i32
    scf.if %11 {
      %c0_10 = arith.constant 0 : index
      %c0_11 = arith.constant 0 : index
      %12 = vector.load %arg7[%c0_10, %c0_11] : memref<10x96xf32, #tpu.memory_space<vmem>>, vector<10x96xf32>
      %c0_12 = arith.constant 0 : index
      %c0_13 = arith.constant 0 : index
      %13 = vector.load %arg5[%c0_12, %c0_13] : memref<1x96xf32, #tpu.memory_space<vmem>>, vector<1x96xf32>
      %14 = vector.broadcast %13 : vector<1x96xf32> to vector<10x96xf32>
      %15 = arith.addf %12, %14 : vector<10x96xf32>
      %c0_14 = arith.constant 0 : index
      %c0_15 = arith.constant 0 : index
      %16 = vector.load %arg6[%c0_14, %c0_15] : memref<10x96xf32, #tpu.memory_space<vmem>>, vector<10x96xf32>
      tpu.vector_store %arg6[%c0_14, %c0_15], %15 {strides = array<i32>} : memref<10x96xf32, #tpu.memory_space<vmem>>, vector<10x96xf32>,
    } else {
    }
    return
  }
  func.func @transform_0(%arg0: i32, %arg1: i32, %arg2: i32) -> (i32, i32) {
    %c0_i32 = arith.constant 0 : i32
    return %arg0, %arg2 : i32, i32
  }
  func.func @transform_1(%arg0: i32, %arg1: i32, %arg2: i32) -> (i32, i32) {
    %c0_i32 = arith.constant 0 : i32
    return %arg2, %arg1 : i32, i32
  }
  func.func @transform_2(%arg0: i32, %arg1: i32, %arg2: i32) -> (i32, i32) {
    %c0_i32 = arith.constant 0 : i32
    %c0_i32_0 = arith.constant 0 : i32
    return %c0_i32, %arg1 : i32, i32
  }
  func.func @transform_3(%arg0: i32, %arg1: i32, %arg2: i32) -> (i32, i32) {
    %c0_i32 = arith.constant 0 : i32
    return %arg0, %arg1 : i32, i32
  }
}

module attributes {stable_mosaic.version = 11 : i64} {
  func.func @_layernorm_kernel(%arg0: i32, %arg1: memref<22x32xf32, #tpu.memory_space<vmem>>, %arg2: memref<1x32xf32, #tpu.memory_space<vmem>>, %arg3: memref<1x32xf32, #tpu.memory_space<vmem>>, %arg4: memref<22x32xf32, #tpu.memory_space<vmem>>) attributes {dimension_semantics = [#tpu.dimension_semantics<parallel>], iteration_bounds = array<i64: 1>, scalar_prefetch = 0 : i64, scratch_operands = 0 : i64, tpu.core_type = #tpu.core_type<tc>, window_params = [{transform_indices = @transform_0, window_bounds = array<i64: 22, 32>}, {pipeline_mode = #tpu.pipeline_mode<synchronous>, transform_indices = @transform_1, window_bounds = array<i64: 1, 32>}, {pipeline_mode = #tpu.pipeline_mode<synchronous>, transform_indices = @transform_2, window_bounds = array<i64: 1, 32>}, {transform_indices = @transform_3, window_bounds = array<i64: 22, 32>}]} {
    %c0 = arith.constant 0 : index
    %c0_0 = arith.constant 0 : index
    %0 = vector.load %arg1[%c0, %c0_0] : memref<22x32xf32, #tpu.memory_space<vmem>>, vector<22x32xf32>
    %cst = arith.constant dense<0.000000e+00> : vector<22xf32>
    %1 = vector.multi_reduction <add>, %0, %cst [1] : vector<22x32xf32> to vector<22xf32>
    %2 = vector.shape_cast %1 : vector<22xf32> to vector<22x1xf32>
    %cst_1 = arith.constant 3.200000e+01 : f32
    %3 = vector.broadcast %cst_1 : f32 to vector<22x1xf32>
    %4 = arith.divf %2, %3 : vector<22x1xf32>
    %5 = vector.broadcast %4 : vector<22x1xf32> to vector<22x32xf32>
    %6 = arith.subf %0, %5 : vector<22x32xf32>
    %7 = arith.mulf %6, %6 : vector<22x32xf32>
    %cst_2 = arith.constant dense<0.000000e+00> : vector<22xf32>
    %8 = vector.multi_reduction <add>, %7, %cst_2 [1] : vector<22x32xf32> to vector<22xf32>
    %9 = vector.shape_cast %8 : vector<22xf32> to vector<22x1xf32>
    %cst_3 = arith.constant 3.200000e+01 : f32
    %10 = vector.broadcast %cst_3 : f32 to vector<22x1xf32>
    %11 = arith.divf %9, %10 : vector<22x1xf32>
    %cst_4 = arith.constant 9.99999974E-6 : f32
    %12 = vector.broadcast %cst_4 : f32 to vector<22x1xf32>
    %13 = arith.addf %11, %12 : vector<22x1xf32>
    %14 = math.rsqrt %13 : vector<22x1xf32>
    %15 = vector.broadcast %14 : vector<22x1xf32> to vector<22x32xf32>
    %16 = arith.mulf %6, %15 : vector<22x32xf32>
    %c0_5 = arith.constant 0 : index
    %c0_6 = arith.constant 0 : index
    %17 = vector.load %arg2[%c0_5, %c0_6] : memref<1x32xf32, #tpu.memory_space<vmem>>, vector<1x32xf32>
    %18 = vector.broadcast %17 : vector<1x32xf32> to vector<22x32xf32>
    %19 = arith.mulf %16, %18 : vector<22x32xf32>
    %c0_7 = arith.constant 0 : index
    %c0_8 = arith.constant 0 : index
    %20 = vector.load %arg3[%c0_7, %c0_8] : memref<1x32xf32, #tpu.memory_space<vmem>>, vector<1x32xf32>
    %21 = vector.broadcast %20 : vector<1x32xf32> to vector<22x32xf32>
    %22 = arith.addf %19, %21 : vector<22x32xf32>
    %c0_9 = arith.constant 0 : index
    %c0_10 = arith.constant 0 : index
    %23 = vector.load %arg4[%c0_9, %c0_10] : memref<22x32xf32, #tpu.memory_space<vmem>>, vector<22x32xf32>
    tpu.vector_store %arg4[%c0_9, %c0_10], %22 {strides = array<i32>} : memref<22x32xf32, #tpu.memory_space<vmem>>, vector<22x32xf32>,
    return
  }
  func.func @transform_0(%arg0: i32) -> (i32, i32) {
    %c0_i32 = arith.constant 0 : i32
    %c0_i32_0 = arith.constant 0 : i32
    return %arg0, %c0_i32 : i32, i32
  }
  func.func @transform_1(%arg0: i32) -> (i32, i32) {
    %c0_i32 = arith.constant 0 : i32
    %c0_i32_0 = arith.constant 0 : i32
    %c0_i32_1 = arith.constant 0 : i32
    return %c0_i32, %c0_i32_0 : i32, i32
  }
  func.func @transform_2(%arg0: i32) -> (i32, i32) {
    %c0_i32 = arith.constant 0 : i32
    %c0_i32_0 = arith.constant 0 : i32
    %c0_i32_1 = arith.constant 0 : i32
    return %c0_i32, %c0_i32_0 : i32, i32
  }
  func.func @transform_3(%arg0: i32) -> (i32, i32) {
    %c0_i32 = arith.constant 0 : i32
    %c0_i32_0 = arith.constant 0 : i32
    return %arg0, %c0_i32 : i32, i32
  }
}

module attributes {stable_mosaic.version = 11 : i64} {
  func.func @_linear_kernel(%arg0: i32, %arg1: i32, %arg2: i32, %arg3: memref<22x32xf32, #tpu.memory_space<vmem>>, %arg4: memref<32x96xf32, #tpu.memory_space<vmem>>, %arg5: memref<1x96xf32, #tpu.memory_space<vmem>>, %arg6: memref<22x96xf32, #tpu.memory_space<vmem>>, %arg7: memref<22x96xf32, #tpu.memory_space<vmem>>) attributes {dimension_semantics = [#tpu.dimension_semantics<parallel>, #tpu.dimension_semantics<parallel>, #tpu.dimension_semantics<arbitrary>], iteration_bounds = array<i64: 1, 1, 1>, scalar_prefetch = 0 : i64, scratch_operands = 1 : i64, tpu.core_type = #tpu.core_type<tc>, window_params = [{transform_indices = @transform_0, window_bounds = array<i64: 22, 32>}, {transform_indices = @transform_1, window_bounds = array<i64: 32, 96>}, {transform_indices = @transform_2, window_bounds = array<i64: 1, 96>}, {transform_indices = @transform_3, window_bounds = array<i64: 22, 96>}]} {
    %c0_i32 = arith.constant 0 : i32
    %0 = arith.cmpi eq, %arg2, %c0_i32 : i32
    %1 = arith.extui %0 : i1 to i32
    %c0_i32_0 = arith.constant 0 : i32
    %2 = arith.cmpi ne, %1, %c0_i32_0 : i32
    scf.if %2 {
      %cst_10 = arith.constant 0.000000e+00 : f32
      %12 = vector.broadcast %cst_10 : f32 to vector<22x96xf32>
      %c0_11 = arith.constant 0 : index
      %c0_12 = arith.constant 0 : index
      %13 = vector.load %arg7[%c0_11, %c0_12] : memref<22x96xf32, #tpu.memory_space<vmem>>, vector<22x96xf32>
      tpu.vector_store %arg7[%c0_11, %c0_12], %12 {strides = array<i32>} : memref<22x96xf32, #tpu.memory_space<vmem>>, vector<22x96xf32>,
    } else {
    }
    %c0 = arith.constant 0 : index
    %c0_1 = arith.constant 0 : index
    %3 = vector.load %arg7[%c0, %c0_1] : memref<22x96xf32, #tpu.memory_space<vmem>>, vector<22x96xf32>
    %c0_2 = arith.constant 0 : index
    %c0_3 = arith.constant 0 : index
    %4 = vector.load %arg3[%c0_2, %c0_3] : memref<22x32xf32, #tpu.memory_space<vmem>>, vector<22x32xf32>
    %c0_4 = arith.constant 0 : index
    %c0_5 = arith.constant 0 : index
    %5 = vector.load %arg4[%c0_4, %c0_5] : memref<32x96xf32, #tpu.memory_space<vmem>>, vector<32x96xf32>
    %cst = arith.constant dense<0.000000e+00> : vector<22x96xf32>
    %6 = tpu.matmul %4, %5, %cst {dimension_numbers = #tpu.dot_dimension_numbers<[1], [0], [0], [1], [0, 0, 1, 1], [], []>} : vector<22x32xf32>, vector<32x96xf32>, vector<22x96xf32> -> vector<22x96xf32>
    %7 = arith.addf %3, %6 : vector<22x96xf32>
    %c0_6 = arith.constant 0 : index
    %c0_7 = arith.constant 0 : index
    %8 = vector.load %arg7[%c0_6, %c0_7] : memref<22x96xf32, #tpu.memory_space<vmem>>, vector<22x96xf32>
    tpu.vector_store %arg7[%c0_6, %c0_7], %7 {strides = array<i32>} : memref<22x96xf32, #tpu.memory_space<vmem>>, vector<22x96xf32>,
    %c0_i32_8 = arith.constant 0 : i32
    %9 = arith.cmpi eq, %arg2, %c0_i32_8 : i32
    %10 = arith.extui %9 : i1 to i32
    %c0_i32_9 = arith.constant 0 : i32
    %11 = arith.cmpi ne, %10, %c0_i32_9 : i32
    scf.if %11 {
      %c0_10 = arith.constant 0 : index
      %c0_11 = arith.constant 0 : index
      %12 = vector.load %arg7[%c0_10, %c0_11] : memref<22x96xf32, #tpu.memory_space<vmem>>, vector<22x96xf32>
      %c0_12 = arith.constant 0 : index
      %c0_13 = arith.constant 0 : index
      %13 = vector.load %arg5[%c0_12, %c0_13] : memref<1x96xf32, #tpu.memory_space<vmem>>, vector<1x96xf32>
      %14 = vector.broadcast %13 : vector<1x96xf32> to vector<22x96xf32>
      %15 = arith.addf %12, %14 : vector<22x96xf32>
      %c0_14 = arith.constant 0 : index
      %c0_15 = arith.constant 0 : index
      %16 = vector.load %arg6[%c0_14, %c0_15] : memref<22x96xf32, #tpu.memory_space<vmem>>, vector<22x96xf32>
      tpu.vector_store %arg6[%c0_14, %c0_15], %15 {strides = array<i32>} : memref<22x96xf32, #tpu.memory_space<vmem>>, vector<22x96xf32>,
    } else {
    }
    return
  }
  func.func @transform_0(%arg0: i32, %arg1: i32, %arg2: i32) -> (i32, i32) {
    %c0_i32 = arith.constant 0 : i32
    return %arg0, %arg2 : i32, i32
  }
  func.func @transform_1(%arg0: i32, %arg1: i32, %arg2: i32) -> (i32, i32) {
    %c0_i32 = arith.constant 0 : i32
    return %arg2, %arg1 : i32, i32
  }
  func.func @transform_2(%arg0: i32, %arg1: i32, %arg2: i32) -> (i32, i32) {
    %c0_i32 = arith.constant 0 : i32
    %c0_i32_0 = arith.constant 0 : i32
    return %c0_i32, %arg1 : i32, i32
  }
  func.func @transform_3(%arg0: i32, %arg1: i32, %arg2: i32) -> (i32, i32) {
    %c0_i32 = arith.constant 0 : i32
    return %arg0, %arg1 : i32, i32
  }
}

module attributes {stable_mosaic.version = 11 : i64} {
  func.func @_linear_kernel(%arg0: i32, %arg1: i32, %arg2: i32, %arg3: memref<22x32xf32, #tpu.memory_space<vmem>>, %arg4: memref<32x32xf32, #tpu.memory_space<vmem>>, %arg5: memref<1x32xf32, #tpu.memory_space<vmem>>, %arg6: memref<22x32xf32, #tpu.memory_space<vmem>>, %arg7: memref<22x32xf32, #tpu.memory_space<vmem>>) attributes {dimension_semantics = [#tpu.dimension_semantics<parallel>, #tpu.dimension_semantics<parallel>, #tpu.dimension_semantics<arbitrary>], iteration_bounds = array<i64: 1, 1, 1>, scalar_prefetch = 0 : i64, scratch_operands = 1 : i64, tpu.core_type = #tpu.core_type<tc>, window_params = [{transform_indices = @transform_0, window_bounds = array<i64: 22, 32>}, {transform_indices = @transform_1, window_bounds = array<i64: 32, 32>}, {transform_indices = @transform_2, window_bounds = array<i64: 1, 32>}, {transform_indices = @transform_3, window_bounds = array<i64: 22, 32>}]} {
    %c0_i32 = arith.constant 0 : i32
    %0 = arith.cmpi eq, %arg2, %c0_i32 : i32
    %1 = arith.extui %0 : i1 to i32
    %c0_i32_0 = arith.constant 0 : i32
    %2 = arith.cmpi ne, %1, %c0_i32_0 : i32
    scf.if %2 {
      %cst_10 = arith.constant 0.000000e+00 : f32
      %12 = vector.broadcast %cst_10 : f32 to vector<22x32xf32>
      %c0_11 = arith.constant 0 : index
      %c0_12 = arith.constant 0 : index
      %13 = vector.load %arg7[%c0_11, %c0_12] : memref<22x32xf32, #tpu.memory_space<vmem>>, vector<22x32xf32>
      tpu.vector_store %arg7[%c0_11, %c0_12], %12 {strides = array<i32>} : memref<22x32xf32, #tpu.memory_space<vmem>>, vector<22x32xf32>,
    } else {
    }
    %c0 = arith.constant 0 : index
    %c0_1 = arith.constant 0 : index
    %3 = vector.load %arg7[%c0, %c0_1] : memref<22x32xf32, #tpu.memory_space<vmem>>, vector<22x32xf32>
    %c0_2 = arith.constant 0 : index
    %c0_3 = arith.constant 0 : index
    %4 = vector.load %arg3[%c0_2, %c0_3] : memref<22x32xf32, #tpu.memory_space<vmem>>, vector<22x32xf32>
    %c0_4 = arith.constant 0 : index
    %c0_5 = arith.constant 0 : index
    %5 = vector.load %arg4[%c0_4, %c0_5] : memref<32x32xf32, #tpu.memory_space<vmem>>, vector<32x32xf32>
    %cst = arith.constant dense<0.000000e+00> : vector<22x32xf32>
    %6 = tpu.matmul %4, %5, %cst {dimension_numbers = #tpu.dot_dimension_numbers<[1], [0], [0], [1], [0, 0, 1, 1], [], []>} : vector<22x32xf32>, vector<32x32xf32>, vector<22x32xf32> -> vector<22x32xf32>
    %7 = arith.addf %3, %6 : vector<22x32xf32>
    %c0_6 = arith.constant 0 : index
    %c0_7 = arith.constant 0 : index
    %8 = vector.load %arg7[%c0_6, %c0_7] : memref<22x32xf32, #tpu.memory_space<vmem>>, vector<22x32xf32>
    tpu.vector_store %arg7[%c0_6, %c0_7], %7 {strides = array<i32>} : memref<22x32xf32, #tpu.memory_space<vmem>>, vector<22x32xf32>,
    %c0_i32_8 = arith.constant 0 : i32
    %9 = arith.cmpi eq, %arg2, %c0_i32_8 : i32
    %10 = arith.extui %9 : i1 to i32
    %c0_i32_9 = arith.constant 0 : i32
    %11 = arith.cmpi ne, %10, %c0_i32_9 : i32
    scf.if %11 {
      %c0_10 = arith.constant 0 : index
      %c0_11 = arith.constant 0 : index
      %12 = vector.load %arg7[%c0_10, %c0_11] : memref<22x32xf32, #tpu.memory_space<vmem>>, vector<22x32xf32>
      %c0_12 = arith.constant 0 : index
      %c0_13 = arith.constant 0 : index
      %13 = vector.load %arg5[%c0_12, %c0_13] : memref<1x32xf32, #tpu.memory_space<vmem>>, vector<1x32xf32>
      %14 = vector.broadcast %13 : vector<1x32xf32> to vector<22x32xf32>
      %15 = arith.addf %12, %14 : vector<22x32xf32>
      %c0_14 = arith.constant 0 : index
      %c0_15 = arith.constant 0 : index
      %16 = vector.load %arg6[%c0_14, %c0_15] : memref<22x32xf32, #tpu.memory_space<vmem>>, vector<22x32xf32>
      tpu.vector_store %arg6[%c0_14, %c0_15], %15 {strides = array<i32>} : memref<22x32xf32, #tpu.memory_space<vmem>>, vector<22x32xf32>,
    } else {
    }
    return
  }
  func.func @transform_0(%arg0: i32, %arg1: i32, %arg2: i32) -> (i32, i32) {
    %c0_i32 = arith.constant 0 : i32
    return %arg0, %arg2 : i32, i32
  }
  func.func @transform_1(%arg0: i32, %arg1: i32, %arg2: i32) -> (i32, i32) {
    %c0_i32 = arith.constant 0 : i32
    return %arg2, %arg1 : i32, i32
  }
  func.func @transform_2(%arg0: i32, %arg1: i32, %arg2: i32) -> (i32, i32) {
    %c0_i32 = arith.constant 0 : i32
    %c0_i32_0 = arith.constant 0 : i32
    return %c0_i32, %arg1 : i32, i32
  }
  func.func @transform_3(%arg0: i32, %arg1: i32, %arg2: i32) -> (i32, i32) {
    %c0_i32 = arith.constant 0 : i32
    return %arg0, %arg1 : i32, i32
  }
}

module attributes {stable_mosaic.version = 11 : i64} {
  func.func @_dconv_attn_kernel(%arg0: i32, %arg1: memref<1x11x96xf32, #tpu.memory_space<vmem>>, %arg2: memref<3x96xf32, #tpu.memory_space<vmem>>, %arg3: memref<1x96xf32, #tpu.memory_space<vmem>>, %arg4: memref<1x11x32xf32, #tpu.memory_space<vmem>>) attributes {dimension_semantics = [#tpu.dimension_semantics<parallel>], iteration_bounds = array<i64: 2>, scalar_prefetch = 0 : i64, scratch_operands = 0 : i64, tpu.core_type = #tpu.core_type<tc>, window_params = [{transform_indices = @transform_0, window_bounds = array<i64: 1, 11, 96>}, {pipeline_mode = #tpu.pipeline_mode<synchronous>, transform_indices = @transform_1, window_bounds = array<i64: 3, 96>}, {pipeline_mode = #tpu.pipeline_mode<synchronous>, transform_indices = @transform_2, window_bounds = array<i64: 1, 96>}, {transform_indices = @transform_3, window_bounds = array<i64: 1, 11, 32>}]} {
    %c0 = arith.constant 0 : index
    %c0_0 = arith.constant 0 : index
    %c0_1 = arith.constant 0 : index
    %0 = vector.load %arg1[%c0, %c0_0, %c0_1] : memref<1x11x96xf32, #tpu.memory_space<vmem>>, vector<1x11x96xf32>
    %1 = vector.shape_cast %0 : vector<1x11x96xf32> to vector<11x96xf32>
    %c0_2 = arith.constant 0 : index
    %c0_3 = arith.constant 0 : index
    %2 = vector.load %arg2[%c0_2, %c0_3] : memref<3x96xf32, #tpu.memory_space<vmem>>, vector<3x96xf32>
    %c0_4 = arith.constant 0 : index
    %c0_5 = arith.constant 0 : index
    %3 = vector.load %arg3[%c0_4, %c0_5] : memref<1x96xf32, #tpu.memory_space<vmem>>, vector<1x96xf32>
    %4 = tpu.iota {dimensions = array<i32: 0>} : vector<11x11xi32>
    %5 = tpu.iota {dimensions = array<i32: 1>} : vector<11x11xi32>
    %c1_i32 = arith.constant 1 : i32
    %6 = vector.broadcast %c1_i32 : i32 to vector<11x11xi32>
    %7 = arith.addi %5, %6 : vector<11x11xi32>
    %8 = arith.cmpi eq, %4, %7 : vector<11x11xi32>
    %9 = arith.extui %8 : vector<11x11xi1> to vector<11x11xi32>
    %10 = arith.sitofp %9 : vector<11x11xi32> to vector<11x11xf32>
    %c2_i32 = arith.constant 2 : i32
    %11 = vector.broadcast %c2_i32 : i32 to vector<11x11xi32>
    %12 = arith.addi %5, %11 : vector<11x11xi32>
    %13 = arith.cmpi eq, %4, %12 : vector<11x11xi32>
    %14 = arith.extui %13 : vector<11x11xi1> to vector<11x11xi32>
    %15 = arith.sitofp %14 : vector<11x11xi32> to vector<11x11xf32>
    %cst = arith.constant dense<0.000000e+00> : vector<11x96xf32>
    %16 = tpu.matmul %10, %1, %cst {dimension_numbers = #tpu.dot_dimension_numbers<[1], [0], [0], [1], [0, 0, 1, 1], [], []>} : vector<11x11xf32>, vector<11x96xf32>, vector<11x96xf32> -> vector<11x96xf32>
    %cst_6 = arith.constant dense<0.000000e+00> : vector<11x96xf32>
    %17 = tpu.matmul %15, %1, %cst_6 {dimension_numbers = #tpu.dot_dimension_numbers<[1], [0], [0], [1], [0, 0, 1, 1], [], []>} : vector<11x11xf32>, vector<11x96xf32>, vector<11x96xf32> -> vector<11x96xf32>
    %18 = vector.extract_strided_slice %2 {offsets = [2, 0], sizes = [1, 96], strides = [1, 1]} : vector<3x96xf32> to vector<1x96xf32>
    %19 = vector.broadcast %18 : vector<1x96xf32> to vector<11x96xf32>
    %20 = arith.mulf %19, %1 : vector<11x96xf32>
    %21 = vector.extract_strided_slice %2 {offsets = [1, 0], sizes = [1, 96], strides = [1, 1]} : vector<3x96xf32> to vector<1x96xf32>
    %22 = vector.broadcast %21 : vector<1x96xf32> to vector<11x96xf32>
    %23 = arith.mulf %22, %16 : vector<11x96xf32>
    %24 = arith.addf %20, %23 : vector<11x96xf32>
    %25 = vector.extract_strided_slice %2 {offsets = [0, 0], sizes = [1, 96], strides = [1, 1]} : vector<3x96xf32> to vector<1x96xf32>
    %26 = vector.broadcast %25 : vector<1x96xf32> to vector<11x96xf32>
    %27 = arith.mulf %26, %17 : vector<11x96xf32>
    %28 = arith.addf %24, %27 : vector<11x96xf32>
    %29 = vector.broadcast %3 : vector<1x96xf32> to vector<11x96xf32>
    %30 = arith.addf %28, %29 : vector<11x96xf32>
    %31 = vector.extract_strided_slice %30 {offsets = [0, 0], sizes = [11, 8], strides = [1, 1]} : vector<11x96xf32> to vector<11x8xf32>
    %32 = vector.extract_strided_slice %30 {offsets = [0, 8], sizes = [11, 8], strides = [1, 1]} : vector<11x96xf32> to vector<11x8xf32>
    %33 = vector.extract_strided_slice %30 {offsets = [0, 16], sizes = [11, 8], strides = [1, 1]} : vector<11x96xf32> to vector<11x8xf32>
    %34 = vector.extract_strided_slice %30 {offsets = [0, 24], sizes = [11, 8], strides = [1, 1]} : vector<11x96xf32> to vector<11x8xf32>
    %35 = vector.shape_cast %31 : vector<11x8xf32> to vector<1x11x8xf32>
    %36 = vector.shape_cast %32 : vector<11x8xf32> to vector<1x11x8xf32>
    %37 = vector.shape_cast %33 : vector<11x8xf32> to vector<1x11x8xf32>
    %38 = vector.shape_cast %34 : vector<11x8xf32> to vector<1x11x8xf32>
    %39 = tpu.concatenate %35, %36, %37, %38 in 0 : vector<1x11x8xf32>, vector<1x11x8xf32>, vector<1x11x8xf32>, vector<1x11x8xf32> -> vector<4x11x8xf32>
    %40 = vector.extract_strided_slice %30 {offsets = [0, 32], sizes = [11, 8], strides = [1, 1]} : vector<11x96xf32> to vector<11x8xf32>
    %41 = vector.extract_strided_slice %30 {offsets = [0, 40], sizes = [11, 8], strides = [1, 1]} : vector<11x96xf32> to vector<11x8xf32>
    %42 = vector.extract_strided_slice %30 {offsets = [0, 48], sizes = [11, 8], strides = [1, 1]} : vector<11x96xf32> to vector<11x8xf32>
    %43 = vector.extract_strided_slice %30 {offsets = [0, 56], sizes = [11, 8], strides = [1, 1]} : vector<11x96xf32> to vector<11x8xf32>
    %44 = vector.shape_cast %40 : vector<11x8xf32> to vector<1x11x8xf32>
    %45 = vector.shape_cast %41 : vector<11x8xf32> to vector<1x11x8xf32>
    %46 = vector.shape_cast %42 : vector<11x8xf32> to vector<1x11x8xf32>
    %47 = vector.shape_cast %43 : vector<11x8xf32> to vector<1x11x8xf32>
    %48 = tpu.concatenate %44, %45, %46, %47 in 0 : vector<1x11x8xf32>, vector<1x11x8xf32>, vector<1x11x8xf32>, vector<1x11x8xf32> -> vector<4x11x8xf32>
    %49 = vector.extract_strided_slice %30 {offsets = [0, 64], sizes = [11, 8], strides = [1, 1]} : vector<11x96xf32> to vector<11x8xf32>
    %50 = vector.extract_strided_slice %30 {offsets = [0, 72], sizes = [11, 8], strides = [1, 1]} : vector<11x96xf32> to vector<11x8xf32>
    %51 = vector.extract_strided_slice %30 {offsets = [0, 80], sizes = [11, 8], strides = [1, 1]} : vector<11x96xf32> to vector<11x8xf32>
    %52 = vector.extract_strided_slice %30 {offsets = [0, 88], sizes = [11, 8], strides = [1, 1]} : vector<11x96xf32> to vector<11x8xf32>
    %53 = vector.shape_cast %49 : vector<11x8xf32> to vector<1x11x8xf32>
    %54 = vector.shape_cast %50 : vector<11x8xf32> to vector<1x11x8xf32>
    %55 = vector.shape_cast %51 : vector<11x8xf32> to vector<1x11x8xf32>
    %56 = vector.shape_cast %52 : vector<11x8xf32> to vector<1x11x8xf32>
    %57 = tpu.concatenate %53, %54, %55, %56 in 0 : vector<1x11x8xf32>, vector<1x11x8xf32>, vector<1x11x8xf32>, vector<1x11x8xf32> -> vector<4x11x8xf32>
    "tpu.trace_start"() <{level = 10 : i32, message = "hqd,hkd->hqk"}> : () -> ()
    %cst_7 = arith.constant dense<0.000000e+00> : vector<4x11x11xf32>
    %58 = tpu.matmul %39, %48, %cst_7 {dimension_numbers = #tpu.dot_dimension_numbers<[2], [2], [1], [1], [0, 0, 0, 1, 1, 1], [0], [0]>} : vector<4x11x8xf32>, vector<4x11x8xf32>, vector<4x11x11xf32> -> vector<4x11x11xf32>
    "tpu.trace_stop"() : () -> ()
    %cst_8 = arith.constant 0.353553385 : f32
    %59 = vector.broadcast %cst_8 : f32 to vector<4x11x11xf32>
    %60 = arith.mulf %58, %59 : vector<4x11x11xf32>
    %cst_9 = arith.constant dense<0xFF800000> : vector<4x11xf32>
    %61 = vector.multi_reduction <maximumf>, %60, %cst_9 [2] : vector<4x11x11xf32> to vector<4x11xf32>
    %62 = vector.shape_cast %61 : vector<4x11xf32> to vector<4x11x1xf32>
    %63 = vector.broadcast %62 : vector<4x11x1xf32> to vector<4x11x11xf32>
    %64 = arith.subf %60, %63 : vector<4x11x11xf32>
    %65 = math.exp %64 : vector<4x11x11xf32>
    %cst_10 = arith.constant dense<0.000000e+00> : vector<4x11xf32>
    %66 = vector.multi_reduction <add>, %65, %cst_10 [2] : vector<4x11x11xf32> to vector<4x11xf32>
    %67 = vector.shape_cast %66 : vector<4x11xf32> to vector<4x11x1xf32>
    "tpu.trace_start"() <{level = 10 : i32, message = "hqk,hkd->hqd"}> : () -> ()
    %cst_11 = arith.constant dense<0.000000e+00> : vector<4x11x8xf32>
    %68 = tpu.matmul %65, %57, %cst_11 {dimension_numbers = #tpu.dot_dimension_numbers<[2], [1], [1], [2], [0, 0, 0, 1, 1, 2], [0], [0]>} : vector<4x11x11xf32>, vector<4x11x8xf32>, vector<4x11x8xf32> -> vector<4x11x8xf32>
    "tpu.trace_stop"() : () -> ()
    %69 = tpu.reciprocal %67 {approx = true} : vector<4x11x1xf32> -> vector<4x11x1xf32>
    %70 = vector.broadcast %69 : vector<4x11x1xf32> to vector<4x11x8xf32>
    %71 = arith.mulf %68, %70 : vector<4x11x8xf32>
    %72 = vector.extract_strided_slice %71 {offsets = [0, 0, 0], sizes = [1, 11, 8], strides = [1, 1, 1]} : vector<4x11x8xf32> to vector<1x11x8xf32>
    %73 = vector.shape_cast %72 : vector<1x11x8xf32> to vector<11x8xf32>
    %c0_12 = arith.constant 0 : index
    %c0_13 = arith.constant 0 : index
    %c0_14 = arith.constant 0 : index
    %74 = vector.load %arg4[%c0_12, %c0_13, %c0_14] : memref<1x11x32xf32, #tpu.memory_space<vmem>>, vector<1x11x8xf32>
    %75 = vector.shape_cast %74 : vector<1x11x8xf32> to vector<11x8xf32>
    %76 = vector.shape_cast %73 : vector<11x8xf32> to vector<1x11x8xf32>
    tpu.vector_store %arg4[%c0_12, %c0_13, %c0_14], %76 {strides = array<i32>} : memref<1x11x32xf32, #tpu.memory_space<vmem>>, vector<1x11x8xf32>,
    %77 = vector.extract_strided_slice %71 {offsets = [1, 0, 0], sizes = [1, 11, 8], strides = [1, 1, 1]} : vector<4x11x8xf32> to vector<1x11x8xf32>
    %78 = vector.shape_cast %77 : vector<1x11x8xf32> to vector<11x8xf32>
    %c0_15 = arith.constant 0 : index
    %c0_16 = arith.constant 0 : index
    %c8 = arith.constant 8 : index
    %79 = vector.load %arg4[%c0_15, %c0_16, %c8] : memref<1x11x32xf32, #tpu.memory_space<vmem>>, vector<1x11x8xf32>
    %80 = vector.shape_cast %79 : vector<1x11x8xf32> to vector<11x8xf32>
    %81 = vector.shape_cast %78 : vector<11x8xf32> to vector<1x11x8xf32>
    tpu.vector_store %arg4[%c0_15, %c0_16, %c8], %81 {strides = array<i32>} : memref<1x11x32xf32, #tpu.memory_space<vmem>>, vector<1x11x8xf32>,
    %82 = vector.extract_strided_slice %71 {offsets = [2, 0, 0], sizes = [1, 11, 8], strides = [1, 1, 1]} : vector<4x11x8xf32> to vector<1x11x8xf32>
    %83 = vector.shape_cast %82 : vector<1x11x8xf32> to vector<11x8xf32>
    %c0_17 = arith.constant 0 : index
    %c0_18 = arith.constant 0 : index
    %c16 = arith.constant 16 : index
    %84 = vector.load %arg4[%c0_17, %c0_18, %c16] : memref<1x11x32xf32, #tpu.memory_space<vmem>>, vector<1x11x8xf32>
    %85 = vector.shape_cast %84 : vector<1x11x8xf32> to vector<11x8xf32>
    %86 = vector.shape_cast %83 : vector<11x8xf32> to vector<1x11x8xf32>
    tpu.vector_store %arg4[%c0_17, %c0_18, %c16], %86 {strides = array<i32>} : memref<1x11x32xf32, #tpu.memory_space<vmem>>, vector<1x11x8xf32>,
    %87 = vector.extract_strided_slice %71 {offsets = [3, 0, 0], sizes = [1, 11, 8], strides = [1, 1, 1]} : vector<4x11x8xf32> to vector<1x11x8xf32>
    %88 = vector.shape_cast %87 : vector<1x11x8xf32> to vector<11x8xf32>
    %c0_19 = arith.constant 0 : index
    %c0_20 = arith.constant 0 : index
    %c24 = arith.constant 24 : index
    %89 = vector.load %arg4[%c0_19, %c0_20, %c24] : memref<1x11x32xf32, #tpu.memory_space<vmem>>, vector<1x11x8xf32>
    %90 = vector.shape_cast %89 : vector<1x11x8xf32> to vector<11x8xf32>
    %91 = vector.shape_cast %88 : vector<11x8xf32> to vector<1x11x8xf32>
    tpu.vector_store %arg4[%c0_19, %c0_20, %c24], %91 {strides = array<i32>} : memref<1x11x32xf32, #tpu.memory_space<vmem>>, vector<1x11x8xf32>,
    return
  }
  func.func @transform_0(%arg0: i32) -> (i32, i32, i32) {
    %c0_i32 = arith.constant 0 : i32
    %c0_i32_0 = arith.constant 0 : i32
    %c0_i32_1 = arith.constant 0 : i32
    return %arg0, %c0_i32, %c0_i32_0 : i32, i32, i32
  }
  func.func @transform_1(%arg0: i32) -> (i32, i32) {
    %c0_i32 = arith.constant 0 : i32
    %c0_i32_0 = arith.constant 0 : i32
    %c0_i32_1 = arith.constant 0 : i32
    return %c0_i32, %c0_i32_0 : i32, i32
  }
  func.func @transform_2(%arg0: i32) -> (i32, i32) {
    %c0_i32 = arith.constant 0 : i32
    %c0_i32_0 = arith.constant 0 : i32
    %c0_i32_1 = arith.constant 0 : i32
    return %c0_i32, %c0_i32_0 : i32, i32
  }
  func.func @transform_3(%arg0: i32) -> (i32, i32, i32) {
    %c0_i32 = arith.constant 0 : i32
    %c0_i32_0 = arith.constant 0 : i32
    %c0_i32_1 = arith.constant 0 : i32
    return %arg0, %c0_i32, %c0_i32_0 : i32, i32, i32
  }
}

module attributes {stable_mosaic.version = 11 : i64} {
  func.func @_linear_kernel(%arg0: i32, %arg1: i32, %arg2: i32, %arg3: memref<10x32xf32, #tpu.memory_space<vmem>>, %arg4: memref<32x128xf32, #tpu.memory_space<vmem>>, %arg5: memref<1x128xf32, #tpu.memory_space<vmem>>, %arg6: memref<10x128xf32, #tpu.memory_space<vmem>>, %arg7: memref<10x128xf32, #tpu.memory_space<vmem>>) attributes {dimension_semantics = [#tpu.dimension_semantics<parallel>, #tpu.dimension_semantics<parallel>, #tpu.dimension_semantics<arbitrary>], iteration_bounds = array<i64: 1, 1, 1>, scalar_prefetch = 0 : i64, scratch_operands = 1 : i64, tpu.core_type = #tpu.core_type<tc>, window_params = [{transform_indices = @transform_0, window_bounds = array<i64: 10, 32>}, {transform_indices = @transform_1, window_bounds = array<i64: 32, 128>}, {transform_indices = @transform_2, window_bounds = array<i64: 1, 128>}, {transform_indices = @transform_3, window_bounds = array<i64: 10, 128>}]} {
    %c0_i32 = arith.constant 0 : i32
    %0 = arith.cmpi eq, %arg2, %c0_i32 : i32
    %1 = arith.extui %0 : i1 to i32
    %c0_i32_0 = arith.constant 0 : i32
    %2 = arith.cmpi ne, %1, %c0_i32_0 : i32
    scf.if %2 {
      %cst_10 = arith.constant 0.000000e+00 : f32
      %12 = vector.broadcast %cst_10 : f32 to vector<10x128xf32>
      %c0_11 = arith.constant 0 : index
      %c0_12 = arith.constant 0 : index
      %13 = vector.load %arg7[%c0_11, %c0_12] : memref<10x128xf32, #tpu.memory_space<vmem>>, vector<10x128xf32>
      tpu.vector_store %arg7[%c0_11, %c0_12], %12 {strides = array<i32>} : memref<10x128xf32, #tpu.memory_space<vmem>>, vector<10x128xf32>,
    } else {
    }
    %c0 = arith.constant 0 : index
    %c0_1 = arith.constant 0 : index
    %3 = vector.load %arg7[%c0, %c0_1] : memref<10x128xf32, #tpu.memory_space<vmem>>, vector<10x128xf32>
    %c0_2 = arith.constant 0 : index
    %c0_3 = arith.constant 0 : index
    %4 = vector.load %arg3[%c0_2, %c0_3] : memref<10x32xf32, #tpu.memory_space<vmem>>, vector<10x32xf32>
    %c0_4 = arith.constant 0 : index
    %c0_5 = arith.constant 0 : index
    %5 = vector.load %arg4[%c0_4, %c0_5] : memref<32x128xf32, #tpu.memory_space<vmem>>, vector<32x128xf32>
    %cst = arith.constant dense<0.000000e+00> : vector<10x128xf32>
    %6 = tpu.matmul %4, %5, %cst {dimension_numbers = #tpu.dot_dimension_numbers<[1], [0], [0], [1], [0, 0, 1, 1], [], []>} : vector<10x32xf32>, vector<32x128xf32>, vector<10x128xf32> -> vector<10x128xf32>
    %7 = arith.addf %3, %6 : vector<10x128xf32>
    %c0_6 = arith.constant 0 : index
    %c0_7 = arith.constant 0 : index
    %8 = vector.load %arg7[%c0_6, %c0_7] : memref<10x128xf32, #tpu.memory_space<vmem>>, vector<10x128xf32>
    tpu.vector_store %arg7[%c0_6, %c0_7], %7 {strides = array<i32>} : memref<10x128xf32, #tpu.memory_space<vmem>>, vector<10x128xf32>,
    %c0_i32_8 = arith.constant 0 : i32
    %9 = arith.cmpi eq, %arg2, %c0_i32_8 : i32
    %10 = arith.extui %9 : i1 to i32
    %c0_i32_9 = arith.constant 0 : i32
    %11 = arith.cmpi ne, %10, %c0_i32_9 : i32
    scf.if %11 {
      %c0_10 = arith.constant 0 : index
      %c0_11 = arith.constant 0 : index
      %12 = vector.load %arg7[%c0_10, %c0_11] : memref<10x128xf32, #tpu.memory_space<vmem>>, vector<10x128xf32>
      %c0_12 = arith.constant 0 : index
      %c0_13 = arith.constant 0 : index
      %13 = vector.load %arg5[%c0_12, %c0_13] : memref<1x128xf32, #tpu.memory_space<vmem>>, vector<1x128xf32>
      %14 = vector.broadcast %13 : vector<1x128xf32> to vector<10x128xf32>
      %15 = arith.addf %12, %14 : vector<10x128xf32>
      %cst_14 = arith.constant 0.000000e+00 : f32
      %16 = vector.broadcast %cst_14 : f32 to vector<10x128xf32>
      %17 = arith.maximumf %15, %16 : vector<10x128xf32>
      %18 = arith.mulf %17, %17 : vector<10x128xf32>
      %c0_15 = arith.constant 0 : index
      %c0_16 = arith.constant 0 : index
      %19 = vector.load %arg6[%c0_15, %c0_16] : memref<10x128xf32, #tpu.memory_space<vmem>>, vector<10x128xf32>
      tpu.vector_store %arg6[%c0_15, %c0_16], %18 {strides = array<i32>} : memref<10x128xf32, #tpu.memory_space<vmem>>, vector<10x128xf32>,
    } else {
    }
    return
  }
  func.func @transform_0(%arg0: i32, %arg1: i32, %arg2: i32) -> (i32, i32) {
    %c0_i32 = arith.constant 0 : i32
    return %arg0, %arg2 : i32, i32
  }
  func.func @transform_1(%arg0: i32, %arg1: i32, %arg2: i32) -> (i32, i32) {
    %c0_i32 = arith.constant 0 : i32
    return %arg2, %arg1 : i32, i32
  }
  func.func @transform_2(%arg0: i32, %arg1: i32, %arg2: i32) -> (i32, i32) {
    %c0_i32 = arith.constant 0 : i32
    %c0_i32_0 = arith.constant 0 : i32
    return %c0_i32, %arg1 : i32, i32
  }
  func.func @transform_3(%arg0: i32, %arg1: i32, %arg2: i32) -> (i32, i32) {
    %c0_i32 = arith.constant 0 : i32
    return %arg0, %arg1 : i32, i32
  }
}

module attributes {stable_mosaic.version = 11 : i64} {
  func.func @_linear_kernel(%arg0: i32, %arg1: i32, %arg2: i32, %arg3: memref<10x128xf32, #tpu.memory_space<vmem>>, %arg4: memref<128x32xf32, #tpu.memory_space<vmem>>, %arg5: memref<1x32xf32, #tpu.memory_space<vmem>>, %arg6: memref<10x32xf32, #tpu.memory_space<vmem>>, %arg7: memref<10x32xf32, #tpu.memory_space<vmem>>) attributes {dimension_semantics = [#tpu.dimension_semantics<parallel>, #tpu.dimension_semantics<parallel>, #tpu.dimension_semantics<arbitrary>], iteration_bounds = array<i64: 1, 1, 1>, scalar_prefetch = 0 : i64, scratch_operands = 1 : i64, tpu.core_type = #tpu.core_type<tc>, window_params = [{transform_indices = @transform_0, window_bounds = array<i64: 10, 128>}, {transform_indices = @transform_1, window_bounds = array<i64: 128, 32>}, {transform_indices = @transform_2, window_bounds = array<i64: 1, 32>}, {transform_indices = @transform_3, window_bounds = array<i64: 10, 32>}]} {
    %c0_i32 = arith.constant 0 : i32
    %0 = arith.cmpi eq, %arg2, %c0_i32 : i32
    %1 = arith.extui %0 : i1 to i32
    %c0_i32_0 = arith.constant 0 : i32
    %2 = arith.cmpi ne, %1, %c0_i32_0 : i32
    scf.if %2 {
      %cst_10 = arith.constant 0.000000e+00 : f32
      %12 = vector.broadcast %cst_10 : f32 to vector<10x32xf32>
      %c0_11 = arith.constant 0 : index
      %c0_12 = arith.constant 0 : index
      %13 = vector.load %arg7[%c0_11, %c0_12] : memref<10x32xf32, #tpu.memory_space<vmem>>, vector<10x32xf32>
      tpu.vector_store %arg7[%c0_11, %c0_12], %12 {strides = array<i32>} : memref<10x32xf32, #tpu.memory_space<vmem>>, vector<10x32xf32>,
    } else {
    }
    %c0 = arith.constant 0 : index
    %c0_1 = arith.constant 0 : index
    %3 = vector.load %arg7[%c0, %c0_1] : memref<10x32xf32, #tpu.memory_space<vmem>>, vector<10x32xf32>
    %c0_2 = arith.constant 0 : index
    %c0_3 = arith.constant 0 : index
    %4 = vector.load %arg3[%c0_2, %c0_3] : memref<10x128xf32, #tpu.memory_space<vmem>>, vector<10x128xf32>
    %c0_4 = arith.constant 0 : index
    %c0_5 = arith.constant 0 : index
    %5 = vector.load %arg4[%c0_4, %c0_5] : memref<128x32xf32, #tpu.memory_space<vmem>>, vector<128x32xf32>
    %cst = arith.constant dense<0.000000e+00> : vector<10x32xf32>
    %6 = tpu.matmul %4, %5, %cst {dimension_numbers = #tpu.dot_dimension_numbers<[1], [0], [0], [1], [0, 0, 1, 1], [], []>} : vector<10x128xf32>, vector<128x32xf32>, vector<10x32xf32> -> vector<10x32xf32>
    %7 = arith.addf %3, %6 : vector<10x32xf32>
    %c0_6 = arith.constant 0 : index
    %c0_7 = arith.constant 0 : index
    %8 = vector.load %arg7[%c0_6, %c0_7] : memref<10x32xf32, #tpu.memory_space<vmem>>, vector<10x32xf32>
    tpu.vector_store %arg7[%c0_6, %c0_7], %7 {strides = array<i32>} : memref<10x32xf32, #tpu.memory_space<vmem>>, vector<10x32xf32>,
    %c0_i32_8 = arith.constant 0 : i32
    %9 = arith.cmpi eq, %arg2, %c0_i32_8 : i32
    %10 = arith.extui %9 : i1 to i32
    %c0_i32_9 = arith.constant 0 : i32
    %11 = arith.cmpi ne, %10, %c0_i32_9 : i32
    scf.if %11 {
      %c0_10 = arith.constant 0 : index
      %c0_11 = arith.constant 0 : index
      %12 = vector.load %arg7[%c0_10, %c0_11] : memref<10x32xf32, #tpu.memory_space<vmem>>, vector<10x32xf32>
      %c0_12 = arith.constant 0 : index
      %c0_13 = arith.constant 0 : index
      %13 = vector.load %arg5[%c0_12, %c0_13] : memref<1x32xf32, #tpu.memory_space<vmem>>, vector<1x32xf32>
      %14 = vector.broadcast %13 : vector<1x32xf32> to vector<10x32xf32>
      %15 = arith.addf %12, %14 : vector<10x32xf32>
      %c0_14 = arith.constant 0 : index
      %c0_15 = arith.constant 0 : index
      %16 = vector.load %arg6[%c0_14, %c0_15] : memref<10x32xf32, #tpu.memory_space<vmem>>, vector<10x32xf32>
      tpu.vector_store %arg6[%c0_14, %c0_15], %15 {strides = array<i32>} : memref<10x32xf32, #tpu.memory_space<vmem>>, vector<10x32xf32>,
    } else {
    }
    return
  }
  func.func @transform_0(%arg0: i32, %arg1: i32, %arg2: i32) -> (i32, i32) {
    %c0_i32 = arith.constant 0 : i32
    return %arg0, %arg2 : i32, i32
  }
  func.func @transform_1(%arg0: i32, %arg1: i32, %arg2: i32) -> (i32, i32) {
    %c0_i32 = arith.constant 0 : i32
    return %arg2, %arg1 : i32, i32
  }
  func.func @transform_2(%arg0: i32, %arg1: i32, %arg2: i32) -> (i32, i32) {
    %c0_i32 = arith.constant 0 : i32
    %c0_i32_0 = arith.constant 0 : i32
    return %c0_i32, %arg1 : i32, i32
  }
  func.func @transform_3(%arg0: i32, %arg1: i32, %arg2: i32) -> (i32, i32) {
    %c0_i32 = arith.constant 0 : i32
    return %arg0, %arg1 : i32, i32
  }
}

module attributes {stable_mosaic.version = 11 : i64} {
  func.func @_linear_kernel(%arg0: i32, %arg1: i32, %arg2: i32, %arg3: memref<12x32xf32, #tpu.memory_space<vmem>>, %arg4: memref<32x128xf32, #tpu.memory_space<vmem>>, %arg5: memref<1x128xf32, #tpu.memory_space<vmem>>, %arg6: memref<12x128xf32, #tpu.memory_space<vmem>>, %arg7: memref<12x128xf32, #tpu.memory_space<vmem>>) attributes {dimension_semantics = [#tpu.dimension_semantics<parallel>, #tpu.dimension_semantics<parallel>, #tpu.dimension_semantics<arbitrary>], iteration_bounds = array<i64: 1, 1, 1>, scalar_prefetch = 0 : i64, scratch_operands = 1 : i64, tpu.core_type = #tpu.core_type<tc>, window_params = [{transform_indices = @transform_0, window_bounds = array<i64: 12, 32>}, {transform_indices = @transform_1, window_bounds = array<i64: 32, 128>}, {transform_indices = @transform_2, window_bounds = array<i64: 1, 128>}, {transform_indices = @transform_3, window_bounds = array<i64: 12, 128>}]} {
    %c0_i32 = arith.constant 0 : i32
    %0 = arith.cmpi eq, %arg2, %c0_i32 : i32
    %1 = arith.extui %0 : i1 to i32
    %c0_i32_0 = arith.constant 0 : i32
    %2 = arith.cmpi ne, %1, %c0_i32_0 : i32
    scf.if %2 {
      %cst_10 = arith.constant 0.000000e+00 : f32
      %12 = vector.broadcast %cst_10 : f32 to vector<12x128xf32>
      %c0_11 = arith.constant 0 : index
      %c0_12 = arith.constant 0 : index
      %13 = vector.load %arg7[%c0_11, %c0_12] : memref<12x128xf32, #tpu.memory_space<vmem>>, vector<12x128xf32>
      tpu.vector_store %arg7[%c0_11, %c0_12], %12 {strides = array<i32>} : memref<12x128xf32, #tpu.memory_space<vmem>>, vector<12x128xf32>,
    } else {
    }
    %c0 = arith.constant 0 : index
    %c0_1 = arith.constant 0 : index
    %3 = vector.load %arg7[%c0, %c0_1] : memref<12x128xf32, #tpu.memory_space<vmem>>, vector<12x128xf32>
    %c0_2 = arith.constant 0 : index
    %c0_3 = arith.constant 0 : index
    %4 = vector.load %arg3[%c0_2, %c0_3] : memref<12x32xf32, #tpu.memory_space<vmem>>, vector<12x32xf32>
    %c0_4 = arith.constant 0 : index
    %c0_5 = arith.constant 0 : index
    %5 = vector.load %arg4[%c0_4, %c0_5] : memref<32x128xf32, #tpu.memory_space<vmem>>, vector<32x128xf32>
    %cst = arith.constant dense<0.000000e+00> : vector<12x128xf32>
    %6 = tpu.matmul %4, %5, %cst {dimension_numbers = #tpu.dot_dimension_numbers<[1], [0], [0], [1], [0, 0, 1, 1], [], []>} : vector<12x32xf32>, vector<32x128xf32>, vector<12x128xf32> -> vector<12x128xf32>
    %7 = arith.addf %3, %6 : vector<12x128xf32>
    %c0_6 = arith.constant 0 : index
    %c0_7 = arith.constant 0 : index
    %8 = vector.load %arg7[%c0_6, %c0_7] : memref<12x128xf32, #tpu.memory_space<vmem>>, vector<12x128xf32>
    tpu.vector_store %arg7[%c0_6, %c0_7], %7 {strides = array<i32>} : memref<12x128xf32, #tpu.memory_space<vmem>>, vector<12x128xf32>,
    %c0_i32_8 = arith.constant 0 : i32
    %9 = arith.cmpi eq, %arg2, %c0_i32_8 : i32
    %10 = arith.extui %9 : i1 to i32
    %c0_i32_9 = arith.constant 0 : i32
    %11 = arith.cmpi ne, %10, %c0_i32_9 : i32
    scf.if %11 {
      %c0_10 = arith.constant 0 : index
      %c0_11 = arith.constant 0 : index
      %12 = vector.load %arg7[%c0_10, %c0_11] : memref<12x128xf32, #tpu.memory_space<vmem>>, vector<12x128xf32>
      %c0_12 = arith.constant 0 : index
      %c0_13 = arith.constant 0 : index
      %13 = vector.load %arg5[%c0_12, %c0_13] : memref<1x128xf32, #tpu.memory_space<vmem>>, vector<1x128xf32>
      %14 = vector.broadcast %13 : vector<1x128xf32> to vector<12x128xf32>
      %15 = arith.addf %12, %14 : vector<12x128xf32>
      %cst_14 = arith.constant 0.000000e+00 : f32
      %16 = vector.broadcast %cst_14 : f32 to vector<12x128xf32>
      %17 = arith.maximumf %15, %16 : vector<12x128xf32>
      %18 = arith.mulf %17, %17 : vector<12x128xf32>
      %c0_15 = arith.constant 0 : index
      %c0_16 = arith.constant 0 : index
      %19 = vector.load %arg6[%c0_15, %c0_16] : memref<12x128xf32, #tpu.memory_space<vmem>>, vector<12x128xf32>
      tpu.vector_store %arg6[%c0_15, %c0_16], %18 {strides = array<i32>} : memref<12x128xf32, #tpu.memory_space<vmem>>, vector<12x128xf32>,
    } else {
    }
    return
  }
  func.func @transform_0(%arg0: i32, %arg1: i32, %arg2: i32) -> (i32, i32) {
    %c0_i32 = arith.constant 0 : i32
    return %arg0, %arg2 : i32, i32
  }
  func.func @transform_1(%arg0: i32, %arg1: i32, %arg2: i32) -> (i32, i32) {
    %c0_i32 = arith.constant 0 : i32
    return %arg2, %arg1 : i32, i32
  }
  func.func @transform_2(%arg0: i32, %arg1: i32, %arg2: i32) -> (i32, i32) {
    %c0_i32 = arith.constant 0 : i32
    %c0_i32_0 = arith.constant 0 : i32
    return %c0_i32, %arg1 : i32, i32
  }
  func.func @transform_3(%arg0: i32, %arg1: i32, %arg2: i32) -> (i32, i32) {
    %c0_i32 = arith.constant 0 : i32
    return %arg0, %arg1 : i32, i32
  }
}

module attributes {stable_mosaic.version = 11 : i64} {
  func.func @_linear_kernel(%arg0: i32, %arg1: i32, %arg2: i32, %arg3: memref<12x128xf32, #tpu.memory_space<vmem>>, %arg4: memref<128x32xf32, #tpu.memory_space<vmem>>, %arg5: memref<1x32xf32, #tpu.memory_space<vmem>>, %arg6: memref<12x32xf32, #tpu.memory_space<vmem>>, %arg7: memref<12x32xf32, #tpu.memory_space<vmem>>) attributes {dimension_semantics = [#tpu.dimension_semantics<parallel>, #tpu.dimension_semantics<parallel>, #tpu.dimension_semantics<arbitrary>], iteration_bounds = array<i64: 1, 1, 1>, scalar_prefetch = 0 : i64, scratch_operands = 1 : i64, tpu.core_type = #tpu.core_type<tc>, window_params = [{transform_indices = @transform_0, window_bounds = array<i64: 12, 128>}, {transform_indices = @transform_1, window_bounds = array<i64: 128, 32>}, {transform_indices = @transform_2, window_bounds = array<i64: 1, 32>}, {transform_indices = @transform_3, window_bounds = array<i64: 12, 32>}]} {
    %c0_i32 = arith.constant 0 : i32
    %0 = arith.cmpi eq, %arg2, %c0_i32 : i32
    %1 = arith.extui %0 : i1 to i32
    %c0_i32_0 = arith.constant 0 : i32
    %2 = arith.cmpi ne, %1, %c0_i32_0 : i32
    scf.if %2 {
      %cst_10 = arith.constant 0.000000e+00 : f32
      %12 = vector.broadcast %cst_10 : f32 to vector<12x32xf32>
      %c0_11 = arith.constant 0 : index
      %c0_12 = arith.constant 0 : index
      %13 = vector.load %arg7[%c0_11, %c0_12] : memref<12x32xf32, #tpu.memory_space<vmem>>, vector<12x32xf32>
      tpu.vector_store %arg7[%c0_11, %c0_12], %12 {strides = array<i32>} : memref<12x32xf32, #tpu.memory_space<vmem>>, vector<12x32xf32>,
    } else {
    }
    %c0 = arith.constant 0 : index
    %c0_1 = arith.constant 0 : index
    %3 = vector.load %arg7[%c0, %c0_1] : memref<12x32xf32, #tpu.memory_space<vmem>>, vector<12x32xf32>
    %c0_2 = arith.constant 0 : index
    %c0_3 = arith.constant 0 : index
    %4 = vector.load %arg3[%c0_2, %c0_3] : memref<12x128xf32, #tpu.memory_space<vmem>>, vector<12x128xf32>
    %c0_4 = arith.constant 0 : index
    %c0_5 = arith.constant 0 : index
    %5 = vector.load %arg4[%c0_4, %c0_5] : memref<128x32xf32, #tpu.memory_space<vmem>>, vector<128x32xf32>
    %cst = arith.constant dense<0.000000e+00> : vector<12x32xf32>
    %6 = tpu.matmul %4, %5, %cst {dimension_numbers = #tpu.dot_dimension_numbers<[1], [0], [0], [1], [0, 0, 1, 1], [], []>} : vector<12x128xf32>, vector<128x32xf32>, vector<12x32xf32> -> vector<12x32xf32>
    %7 = arith.addf %3, %6 : vector<12x32xf32>
    %c0_6 = arith.constant 0 : index
    %c0_7 = arith.constant 0 : index
    %8 = vector.load %arg7[%c0_6, %c0_7] : memref<12x32xf32, #tpu.memory_space<vmem>>, vector<12x32xf32>
    tpu.vector_store %arg7[%c0_6, %c0_7], %7 {strides = array<i32>} : memref<12x32xf32, #tpu.memory_space<vmem>>, vector<12x32xf32>,
    %c0_i32_8 = arith.constant 0 : i32
    %9 = arith.cmpi eq, %arg2, %c0_i32_8 : i32
    %10 = arith.extui %9 : i1 to i32
    %c0_i32_9 = arith.constant 0 : i32
    %11 = arith.cmpi ne, %10, %c0_i32_9 : i32
    scf.if %11 {
      %c0_10 = arith.constant 0 : index
      %c0_11 = arith.constant 0 : index
      %12 = vector.load %arg7[%c0_10, %c0_11] : memref<12x32xf32, #tpu.memory_space<vmem>>, vector<12x32xf32>
      %c0_12 = arith.constant 0 : index
      %c0_13 = arith.constant 0 : index
      %13 = vector.load %arg5[%c0_12, %c0_13] : memref<1x32xf32, #tpu.memory_space<vmem>>, vector<1x32xf32>
      %14 = vector.broadcast %13 : vector<1x32xf32> to vector<12x32xf32>
      %15 = arith.addf %12, %14 : vector<12x32xf32>
      %c0_14 = arith.constant 0 : index
      %c0_15 = arith.constant 0 : index
      %16 = vector.load %arg6[%c0_14, %c0_15] : memref<12x32xf32, #tpu.memory_space<vmem>>, vector<12x32xf32>
      tpu.vector_store %arg6[%c0_14, %c0_15], %15 {strides = array<i32>} : memref<12x32xf32, #tpu.memory_space<vmem>>, vector<12x32xf32>,
    } else {
    }
    return
  }
  func.func @transform_0(%arg0: i32, %arg1: i32, %arg2: i32) -> (i32, i32) {
    %c0_i32 = arith.constant 0 : i32
    return %arg0, %arg2 : i32, i32
  }
  func.func @transform_1(%arg0: i32, %arg1: i32, %arg2: i32) -> (i32, i32) {
    %c0_i32 = arith.constant 0 : i32
    return %arg2, %arg1 : i32, i32
  }
  func.func @transform_2(%arg0: i32, %arg1: i32, %arg2: i32) -> (i32, i32) {
    %c0_i32 = arith.constant 0 : i32
    %c0_i32_0 = arith.constant 0 : i32
    return %c0_i32, %arg1 : i32, i32
  }
  func.func @transform_3(%arg0: i32, %arg1: i32, %arg2: i32) -> (i32, i32) {
    %c0_i32 = arith.constant 0 : i32
    return %arg0, %arg1 : i32, i32
  }
}

module attributes {stable_mosaic.version = 11 : i64} {
  func.func @_linear_kernel(%arg0: i32, %arg1: i32, %arg2: i32, %arg3: memref<12x32xf32, #tpu.memory_space<vmem>>, %arg4: memref<32x16xf32, #tpu.memory_space<vmem>>, %arg5: memref<1x16xf32, #tpu.memory_space<vmem>>, %arg6: memref<12x16xf32, #tpu.memory_space<vmem>>, %arg7: memref<12x16xf32, #tpu.memory_space<vmem>>) attributes {dimension_semantics = [#tpu.dimension_semantics<parallel>, #tpu.dimension_semantics<parallel>, #tpu.dimension_semantics<arbitrary>], iteration_bounds = array<i64: 1, 1, 1>, scalar_prefetch = 0 : i64, scratch_operands = 1 : i64, tpu.core_type = #tpu.core_type<tc>, window_params = [{transform_indices = @transform_0, window_bounds = array<i64: 12, 32>}, {transform_indices = @transform_1, window_bounds = array<i64: 32, 16>}, {transform_indices = @transform_2, window_bounds = array<i64: 1, 16>}, {transform_indices = @transform_3, window_bounds = array<i64: 12, 16>}]} {
    %c0_i32 = arith.constant 0 : i32
    %0 = arith.cmpi eq, %arg2, %c0_i32 : i32
    %1 = arith.extui %0 : i1 to i32
    %c0_i32_0 = arith.constant 0 : i32
    %2 = arith.cmpi ne, %1, %c0_i32_0 : i32
    scf.if %2 {
      %cst_10 = arith.constant 0.000000e+00 : f32
      %12 = vector.broadcast %cst_10 : f32 to vector<12x16xf32>
      %c0_11 = arith.constant 0 : index
      %c0_12 = arith.constant 0 : index
      %13 = vector.load %arg7[%c0_11, %c0_12] : memref<12x16xf32, #tpu.memory_space<vmem>>, vector<12x16xf32>
      tpu.vector_store %arg7[%c0_11, %c0_12], %12 {strides = array<i32>} : memref<12x16xf32, #tpu.memory_space<vmem>>, vector<12x16xf32>,
    } else {
    }
    %c0 = arith.constant 0 : index
    %c0_1 = arith.constant 0 : index
    %3 = vector.load %arg7[%c0, %c0_1] : memref<12x16xf32, #tpu.memory_space<vmem>>, vector<12x16xf32>
    %c0_2 = arith.constant 0 : index
    %c0_3 = arith.constant 0 : index
    %4 = vector.load %arg3[%c0_2, %c0_3] : memref<12x32xf32, #tpu.memory_space<vmem>>, vector<12x32xf32>
    %c0_4 = arith.constant 0 : index
    %c0_5 = arith.constant 0 : index
    %5 = vector.load %arg4[%c0_4, %c0_5] : memref<32x16xf32, #tpu.memory_space<vmem>>, vector<32x16xf32>
    %cst = arith.constant dense<0.000000e+00> : vector<12x16xf32>
    %6 = tpu.matmul %4, %5, %cst {dimension_numbers = #tpu.dot_dimension_numbers<[1], [0], [0], [1], [0, 0, 1, 1], [], []>} : vector<12x32xf32>, vector<32x16xf32>, vector<12x16xf32> -> vector<12x16xf32>
    %7 = arith.addf %3, %6 : vector<12x16xf32>
    %c0_6 = arith.constant 0 : index
    %c0_7 = arith.constant 0 : index
    %8 = vector.load %arg7[%c0_6, %c0_7] : memref<12x16xf32, #tpu.memory_space<vmem>>, vector<12x16xf32>
    tpu.vector_store %arg7[%c0_6, %c0_7], %7 {strides = array<i32>} : memref<12x16xf32, #tpu.memory_space<vmem>>, vector<12x16xf32>,
    %c0_i32_8 = arith.constant 0 : i32
    %9 = arith.cmpi eq, %arg2, %c0_i32_8 : i32
    %10 = arith.extui %9 : i1 to i32
    %c0_i32_9 = arith.constant 0 : i32
    %11 = arith.cmpi ne, %10, %c0_i32_9 : i32
    scf.if %11 {
      %c0_10 = arith.constant 0 : index
      %c0_11 = arith.constant 0 : index
      %12 = vector.load %arg7[%c0_10, %c0_11] : memref<12x16xf32, #tpu.memory_space<vmem>>, vector<12x16xf32>
      %c0_12 = arith.constant 0 : index
      %c0_13 = arith.constant 0 : index
      %13 = vector.load %arg5[%c0_12, %c0_13] : memref<1x16xf32, #tpu.memory_space<vmem>>, vector<1x16xf32>
      %14 = vector.broadcast %13 : vector<1x16xf32> to vector<12x16xf32>
      %15 = arith.addf %12, %14 : vector<12x16xf32>
      %c0_14 = arith.constant 0 : index
      %c0_15 = arith.constant 0 : index
      %16 = vector.load %arg6[%c0_14, %c0_15] : memref<12x16xf32, #tpu.memory_space<vmem>>, vector<12x16xf32>
      tpu.vector_store %arg6[%c0_14, %c0_15], %15 {strides = array<i32>} : memref<12x16xf32, #tpu.memory_space<vmem>>, vector<12x16xf32>,
    } else {
    }
    return
  }
  func.func @transform_0(%arg0: i32, %arg1: i32, %arg2: i32) -> (i32, i32) {
    %c0_i32 = arith.constant 0 : i32
    return %arg0, %arg2 : i32, i32
  }
  func.func @transform_1(%arg0: i32, %arg1: i32, %arg2: i32) -> (i32, i32) {
    %c0_i32 = arith.constant 0 : i32
    return %arg2, %arg1 : i32, i32
  }
  func.func @transform_2(%arg0: i32, %arg1: i32, %arg2: i32) -> (i32, i32) {
    %c0_i32 = arith.constant 0 : i32
    %c0_i32_0 = arith.constant 0 : i32
    return %c0_i32, %arg1 : i32, i32
  }
  func.func @transform_3(%arg0: i32, %arg1: i32, %arg2: i32) -> (i32, i32) {
    %c0_i32 = arith.constant 0 : i32
    return %arg0, %arg1 : i32, i32
  }
}

</mosaic_0001>

<llo_original>
// kernel: cross_attention_forward.37
$region0: #{cross_attention_forward.37}
  #allocation0 [shape = 'u32[]', space=smem, size = 0x4, offset = 0x4, fixed_abs, tag = 'smem constant byte address 0x4 - core index']
  #allocation1 [shape = 'u32[144,128]{1,0:T(1,128)}', space=vmem, size = 0x12000, scoped, tag = 'internal scratch']
  #allocation2 [shape = 'f32[12,32]{1,0:T(8,128)}', space=vmem, size = 0x2000, scoped, tag = 'scratch operand']
  %s0 = inlined_call_operand.vmem [shape: f32[12,4], index: 0, kind: input, shape index: {}]
  %s1 = inlined_call_operand.vmem [shape: f32[4,32], index: 1, kind: input, shape index: {}]
  %s2 = inlined_call_operand.vmem [shape: f32[1,32], index: 2, kind: input, shape index: {}]
  %s3 = inlined_call_operand.vmem [shape: f32[12,32], index: 3, kind: output, shape index: {}]
  %s4 = sld [smem:[#allocation0]]
  $region30: #{cross_attention_forward.37} parent=0
    _
  %s6 = ssub.s32 1, %s4
  %s7 = scalar_select 0, %s6, %s4
  // Predicated region
  $region2: #{cross_attention_forward.37} parent=0 // pred_check
    _
  $region3: #{cross_attention_forward.37} parent=0 // pred_check_branch
    %9 = sbr.rel (0) target = $region5
  $region4: #{cross_attention_forward.37} parent=0 // pred_region
    _
  $region5: #{cross_attention_forward.37} parent=0 // pred_fallthru
    _
  // Predicated region
  $region6: #{cross_attention_forward.37} parent=0 // pred_check
    _
  $region7: #{cross_attention_forward.37} parent=0 // pred_check_branch
    %11 = sbr.rel (0) target = $region9
  $region8: #{cross_attention_forward.37} parent=0 // pred_region
    _
  $region9: #{cross_attention_forward.37} parent=0 // pred_fallthru
    _
  // Predicated region
  $region10: #{cross_attention_forward.37} parent=0 // pred_check
    _
  $region11: #{cross_attention_forward.37} parent=0 // pred_check_branch
    %13 = sbr.rel (0) target = $region13
  $region12: #{cross_attention_forward.37} parent=0 // pred_region
    _
  $region13: #{cross_attention_forward.37} parent=0 // pred_fallthru
    _
  %p14 = scmp.eq.s32.totalorder 0, 0
  // Predicated region
  $region14: #{cross_attention_forward.37} parent=0 // pred_check
    %p15 = pneg %p14
  $region15: #{cross_attention_forward.37} parent=0 // pred_check_branch
    %17 = sbr.rel (%p15) target = $region17
  $region16: #{cross_attention_forward.37} parent=0 // pred_region
    %vm18 = vcmask 261120
    %19 = vst.msk [vmem:[#allocation2] sm:$0xff] %vm18, 0.0
    %vm20 = vcmask 257024
    %21 = vst.msk [vmem:[#allocation2 + $0x8] sm:$0xf] %vm20, 0.0
  $region17: #{cross_attention_forward.37} parent=0 // pred_fallthru
    _
  %v22 = vld [vmem:[#allocation2] sm:$0xff]
  %v23 = vld [vmem:[#allocation2 + $0x8] sm:$0xf]
  %v24 = vld [vmem:[%s0] sm:$0xff]
  %v25 = vld [vmem:[%s0 + $0x8] sm:$0xf]
  %v26 = vld [vmem:[%s1] sm:$0xf]
  %vm27 = vcmask 31744
  %v29 = vsel %vm27, %v24, 0
  %v32 = vsel %vm27, %v25, 0
  %vm34 = vcmask 1043456
  %v36 = vsel %vm34, %v26, 0
  %38 = vmatprep.subr.mxu0 0.0
  %39 = vmatpush1.msra.mxu0 0.0
  %40 = vmatprep.subr.mxu0 0.0
  %41 = vmatpush1.msra.mxu0 0.0
  %42 = vmatprep.subr.mxu0 0.0
  %43 = vmatpush1.msra.mxu0 0.0
  %44 = vmatprep.subr.mxu0 0.0
  %45 = vmatpush1.msra.mxu0 0.0
  %46 = vmatprep.subr.mxu0 0.0
  %47 = vmatpush1.msra.mxu0 0.0
  %48 = vmatprep.subr.mxu0 0.0
  %49 = vmatpush1.msra.mxu0 0.0
  %50 = vmatprep.subr.mxu0 0.0
  %51 = vmatpush1.msra.mxu0 0.0
  %52 = vmatprep.subr.mxu0 0.0
  %53 = vmatpush1.msra.mxu0 0.0
  %54 = vmatprep.subr.mxu0 0.0
  %55 = vmatpush1.msra.mxu0 0.0
  %56 = vmatprep.subr.mxu0 0.0
  %57 = vmatpush1.msra.mxu0 0.0
  %58 = vmatprep.subr.mxu0 0.0
  %59 = vmatpush1.msra.mxu0 0.0
  %60 = vmatprep.subr.mxu0 0.0
  %61 = vmatpush1.msra.mxu0 0.0
  %62 = vmatprep.subr.mxu0 0.0
  %63 = vmatpush1.msra.mxu0 0.0
  %64 = vmatprep.subr.mxu0 0.0
  %65 = vmatpush1.msra.mxu0 0.0
  %66 = vmatprep.subr.mxu0 0.0
  %67 = vmatpush1.msra.mxu0 0.0
  %68 = vmatprep.subr.mxu0 0.0
  %69 = vmatpush1.msra.mxu0 %v36
  %70 = vmatprep.subr.mxu0 0.0
  %71 = vmatpush2.msra.mxu0 0.0
  %72 = vmatprep.subr.mxu0 0.0
  %73 = vmatpush2.msra.mxu0 0.0
  %74 = vmatprep.subr.mxu0 0.0
  %75 = vmatpush2.msra.mxu0 0.0
  %76 = vmatprep.subr.mxu0 0.0
  %77 = vmatpush2.msra.mxu0 0.0
  %78 = vmatprep.subr.mxu0 0.0
  %79 = vmatpush2.msra.mxu0 0.0
  %80 = vmatprep.subr.mxu0 0.0
  %81 = vmatpush2.msra.mxu0 0.0
  %82 = vmatprep.subr.mxu0 0.0
  %83 = vmatpush2.msra.mxu0 0.0
  %84 = vmatprep.subr.mxu0 0.0
  %85 = vmatpush2.msra.mxu0 0.0
  %86 = vmatprep.subr.mxu0 0.0
  %87 = vmatpush2.msra.mxu0 0.0
  %88 = vmatprep.subr.mxu0 0.0
  %89 = vmatpush2.msra.mxu0 0.0
  %90 = vmatprep.subr.mxu0 0.0
  %91 = vmatpush2.msra.mxu0 0.0
  %92 = vmatprep.subr.mxu0 0.0
  %93 = vmatpush2.msra.mxu0 0.0
  %94 = vmatprep.subr.mxu0 0.0
  %95 = vmatpush2.msra.mxu0 0.0
  %96 = vmatprep.subr.mxu0 0.0
  %97 = vmatpush2.msra.mxu0 0.0
  %98 = vmatprep.subr.mxu0 0.0
  %99 = vmatpush2.msra.mxu0 0.0
  %100 = vmatprep.subr.mxu0 0.0
  %101 = vmatpush2.msra.mxu0 0.0
  %102 = vmatprep.mubr.f32.mxu0 0.0
  %103 = vmatmul.mubr.f32.gmra.mxu0 %v29
  %v104 = vpop.f32.mrf.mxu0
  %v105 = vadd.f32 0.0, %v104
  %v106 = vpop.f32.mrf.mxu0
  %107 = vmatprep.mubr.f32.mxu0 0.0
  %108 = vmatmul.mubr.f32.gmra.mxu0 %v32
  %v109 = vpop.f32.mrf.mxu0
  %v110 = vadd.f32 0.0, %v109
  %v111 = vpop.f32.mrf.mxu0
  %112 = vdwg.mxu0
  %v113 = vadd.f32 %v22, %v105
  %v114 = vadd.f32 %v23, %v110
  %vm115 = vcmask 261120
  %116 = vst.msk [vmem:[#allocation2] sm:$0xff] %vm115, %v113
  %vm117 = vcmask 257024
  %118 = vst.msk [vmem:[#allocation2 + $0x8] sm:$0xf] %vm117, %v114
  // Predicated region
  $region18: #{cross_attention_forward.37} parent=0 // pred_check
    %p119 = pneg %p14
  $region19: #{cross_attention_forward.37} parent=0 // pred_check_branch
    %121 = sbr.rel (%p119) target = $region21
  $region20: #{cross_attention_forward.37} parent=0 // pred_region
    %v122 = vld [vmem:[#allocation2] sm:$0xff]
    %v123 = vld [vmem:[#allocation2 + $0x8] sm:$0xf]
    %v124 = vld [vmem:[%s2] sm:$0x1]
    %v126 = vlaneseq
    %v127 = vshrl.u32 %v126, 7
    %v128 = vsub.s32 0, %v127
    %v129 = vrot.slane %v124, %v128
    %v131 = vadd.f32 %v122, %v129
    %v132 = vadd.f32 %v123, %v129
    %133 = vst.msk [vmem:[%s3] sm:$0xff] %vm115, %v131
    %134 = vst.msk [vmem:[%s3 + $0x8] sm:$0xf] %vm117, %v132
  $region21: #{cross_attention_forward.37} parent=0 // pred_fallthru
    _
  // Predicated region
  $region22: #{cross_attention_forward.37} parent=0 // pred_check
    _
  $region23: #{cross_attention_forward.37} parent=0 // pred_check_branch
    %136 = sbr.rel (0) target = $region25
  $region24: #{cross_attention_forward.37} parent=0 // pred_region
    _
  $region25: #{cross_attention_forward.37} parent=0 // pred_fallthru
    _
  // Predicated region
  $region26: #{cross_attention_forward.37} parent=0 // pred_check
    _
  $region27: #{cross_attention_forward.37} parent=0 // pred_check_branch
    %138 = sbr.rel (0) target = $region29
  $region28: #{cross_attention_forward.37} parent=0 // pred_region
    _
  $region29: #{cross_attention_forward.37} parent=0 // pred_fallthru
    _

// kernel: cross_attention_forward.38
$region0: #{cross_attention_forward.38}
  #allocation0 [shape = 'u32[]', space=smem, size = 0x4, offset = 0x4, fixed_abs, tag = 'smem constant byte address 0x4 - core index']
  #allocation1 [shape = 'u32[144,128]{1,0:T(1,128)}', space=vmem, size = 0x12000, scoped, tag = 'internal scratch']
  #allocation2 [shape = 'f32[10,32]{1,0:T(8,128)}', space=vmem, size = 0x2000, scoped, tag = 'scratch operand']
  %s0 = inlined_call_operand.vmem [shape: f32[10,6], index: 0, kind: input, shape index: {}]
  %s1 = inlined_call_operand.vmem [shape: f32[6,32], index: 1, kind: input, shape index: {}]
  %s2 = inlined_call_operand.vmem [shape: f32[1,32], index: 2, kind: input, shape index: {}]
  %s3 = inlined_call_operand.vmem [shape: f32[10,32], index: 3, kind: output, shape index: {}]
  %s4 = sld [smem:[#allocation0]]
  $region30: #{cross_attention_forward.38} parent=0
    _
  %s6 = ssub.s32 1, %s4
  %s7 = scalar_select 0, %s6, %s4
  // Predicated region
  $region2: #{cross_attention_forward.38} parent=0 // pred_check
    _
  $region3: #{cross_attention_forward.38} parent=0 // pred_check_branch
    %9 = sbr.rel (0) target = $region5
  $region4: #{cross_attention_forward.38} parent=0 // pred_region
    _
  $region5: #{cross_attention_forward.38} parent=0 // pred_fallthru
    _
  // Predicated region
  $region6: #{cross_attention_forward.38} parent=0 // pred_check
    _
  $region7: #{cross_attention_forward.38} parent=0 // pred_check_branch
    %11 = sbr.rel (0) target = $region9
  $region8: #{cross_attention_forward.38} parent=0 // pred_region
    _
  $region9: #{cross_attention_forward.38} parent=0 // pred_fallthru
    _
  // Predicated region
  $region10: #{cross_attention_forward.38} parent=0 // pred_check
    _
  $region11: #{cross_attention_forward.38} parent=0 // pred_check_branch
    %13 = sbr.rel (0) target = $region13
  $region12: #{cross_attention_forward.38} parent=0 // pred_region
    _
  $region13: #{cross_attention_forward.38} parent=0 // pred_fallthru
    _
  %p14 = scmp.eq.s32.totalorder 0, 0
  // Predicated region
  $region14: #{cross_attention_forward.38} parent=0 // pred_check
    %p15 = pneg %p14
  $region15: #{cross_attention_forward.38} parent=0 // pred_check_branch
    %17 = sbr.rel (%p15) target = $region17
  $region16: #{cross_attention_forward.38} parent=0 // pred_region
    %vm18 = vcmask 261120
    %19 = vst.msk [vmem:[#allocation2] sm:$0xff] %vm18, 0.0
    %vm20 = vcmask 254976
    %21 = vst.msk [vmem:[#allocation2 + $0x8] sm:$0x3] %vm20, 0.0
  $region17: #{cross_attention_forward.38} parent=0 // pred_fallthru
    _
  %v22 = vld [vmem:[#allocation2] sm:$0xff]
  %v23 = vld [vmem:[#allocation2 + $0x8] sm:$0x3]
  %v24 = vld [vmem:[%s0] sm:$0xff]
  %v25 = vld [vmem:[%s0 + $0x8] sm:$0x3]
  %v26 = vld [vmem:[%s1] sm:$0x3f]
  %vm27 = vcmask 48128
  %v29 = vsel %vm27, %v24, 0
  %v32 = vsel %vm27, %v25, 0
  %vm34 = vcmask 1045504
  %v36 = vsel %vm34, %v26, 0
  %38 = vmatprep.subr.mxu0 0.0
  %39 = vmatpush1.msra.mxu0 0.0
  %40 = vmatprep.subr.mxu0 0.0
  %41 = vmatpush1.msra.mxu0 0.0
  %42 = vmatprep.subr.mxu0 0.0
  %43 = vmatpush1.msra.mxu0 0.0
  %44 = vmatprep.subr.mxu0 0.0
  %45 = vmatpush1.msra.mxu0 0.0
  %46 = vmatprep.subr.mxu0 0.0
  %47 = vmatpush1.msra.mxu0 0.0
  %48 = vmatprep.subr.mxu0 0.0
  %49 = vmatpush1.msra.mxu0 0.0
  %50 = vmatprep.subr.mxu0 0.0
  %51 = vmatpush1.msra.mxu0 0.0
  %52 = vmatprep.subr.mxu0 0.0
  %53 = vmatpush1.msra.mxu0 0.0
  %54 = vmatprep.subr.mxu0 0.0
  %55 = vmatpush1.msra.mxu0 0.0
  %56 = vmatprep.subr.mxu0 0.0
  %57 = vmatpush1.msra.mxu0 0.0
  %58 = vmatprep.subr.mxu0 0.0
  %59 = vmatpush1.msra.mxu0 0.0
  %60 = vmatprep.subr.mxu0 0.0
  %61 = vmatpush1.msra.mxu0 0.0
  %62 = vmatprep.subr.mxu0 0.0
  %63 = vmatpush1.msra.mxu0 0.0
  %64 = vmatprep.subr.mxu0 0.0
  %65 = vmatpush1.msra.mxu0 0.0
  %66 = vmatprep.subr.mxu0 0.0
  %67 = vmatpush1.msra.mxu0 0.0
  %68 = vmatprep.subr.mxu0 0.0
  %69 = vmatpush1.msra.mxu0 %v36
  %70 = vmatprep.subr.mxu0 0.0
  %71 = vmatpush2.msra.mxu0 0.0
  %72 = vmatprep.subr.mxu0 0.0
  %73 = vmatpush2.msra.mxu0 0.0
  %74 = vmatprep.subr.mxu0 0.0
  %75 = vmatpush2.msra.mxu0 0.0
  %76 = vmatprep.subr.mxu0 0.0
  %77 = vmatpush2.msra.mxu0 0.0
  %78 = vmatprep.subr.mxu0 0.0
  %79 = vmatpush2.msra.mxu0 0.0
  %80 = vmatprep.subr.mxu0 0.0
  %81 = vmatpush2.msra.mxu0 0.0
  %82 = vmatprep.subr.mxu0 0.0
  %83 = vmatpush2.msra.mxu0 0.0
  %84 = vmatprep.subr.mxu0 0.0
  %85 = vmatpush2.msra.mxu0 0.0
  %86 = vmatprep.subr.mxu0 0.0
  %87 = vmatpush2.msra.mxu0 0.0
  %88 = vmatprep.subr.mxu0 0.0
  %89 = vmatpush2.msra.mxu0 0.0
  %90 = vmatprep.subr.mxu0 0.0
  %91 = vmatpush2.msra.mxu0 0.0
  %92 = vmatprep.subr.mxu0 0.0
  %93 = vmatpush2.msra.mxu0 0.0
  %94 = vmatprep.subr.mxu0 0.0
  %95 = vmatpush2.msra.mxu0 0.0
  %96 = vmatprep.subr.mxu0 0.0
  %97 = vmatpush2.msra.mxu0 0.0
  %98 = vmatprep.subr.mxu0 0.0
  %99 = vmatpush2.msra.mxu0 0.0
  %100 = vmatprep.subr.mxu0 0.0
  %101 = vmatpush2.msra.mxu0 0.0
  %102 = vmatprep.mubr.f32.mxu0 0.0
  %103 = vmatmul.mubr.f32.gmra.mxu0 %v29
  %v104 = vpop.f32.mrf.mxu0
  %v105 = vadd.f32 0.0, %v104
  %v106 = vpop.f32.mrf.mxu0
  %107 = vmatprep.mubr.f32.mxu0 0.0
  %108 = vmatmul.mubr.f32.gmra.mxu0 %v32
  %v109 = vpop.f32.mrf.mxu0
  %v110 = vadd.f32 0.0, %v109
  %v111 = vpop.f32.mrf.mxu0
  %112 = vdwg.mxu0
  %v113 = vadd.f32 %v22, %v105
  %v114 = vadd.f32 %v23, %v110
  %vm115 = vcmask 261120
  %116 = vst.msk [vmem:[#allocation2] sm:$0xff] %vm115, %v113
  %vm117 = vcmask 254976
  %118 = vst.msk [vmem:[#allocation2 + $0x8] sm:$0x3] %vm117, %v114
  // Predicated region
  $region18: #{cross_attention_forward.38} parent=0 // pred_check
    %p119 = pneg %p14
  $region19: #{cross_attention_forward.38} parent=0 // pred_check_branch
    %121 = sbr.rel (%p119) target = $region21
  $region20: #{cross_attention_forward.38} parent=0 // pred_region
    %v122 = vld [vmem:[#allocation2] sm:$0xff]
    %v123 = vld [vmem:[#allocation2 + $0x8] sm:$0x3]
    %v124 = vld [vmem:[%s2] sm:$0x1]
    %v126 = vlaneseq
    %v127 = vshrl.u32 %v126, 7
    %v128 = vsub.s32 0, %v127
    %v129 = vrot.slane %v124, %v128
    %v131 = vadd.f32 %v122, %v129
    %v132 = vadd.f32 %v123, %v129
    %133 = vst.msk [vmem:[%s3] sm:$0xff] %vm115, %v131
    %134 = vst.msk [vmem:[%s3 + $0x8] sm:$0x3] %vm117, %v132
  $region21: #{cross_attention_forward.38} parent=0 // pred_fallthru
    _
  // Predicated region
  $region22: #{cross_attention_forward.38} parent=0 // pred_check
    _
  $region23: #{cross_attention_forward.38} parent=0 // pred_check_branch
    %136 = sbr.rel (0) target = $region25
  $region24: #{cross_attention_forward.38} parent=0 // pred_region
    _
  $region25: #{cross_attention_forward.38} parent=0 // pred_fallthru
    _
  // Predicated region
  $region26: #{cross_attention_forward.38} parent=0 // pred_check
    _
  $region27: #{cross_attention_forward.38} parent=0 // pred_check_branch
    %138 = sbr.rel (0) target = $region29
  $region28: #{cross_attention_forward.38} parent=0 // pred_region
    _
  $region29: #{cross_attention_forward.38} parent=0 // pred_fallthru
    _

// kernel: cross_attention_forward.39
$region0: #{cross_attention_forward.39}
  #allocation0 [shape = 'u32[]', space=smem, size = 0x4, offset = 0x4, fixed_abs, tag = 'smem constant byte address 0x4 - core index']
  #allocation1 [shape = 'u32[144,128]{1,0:T(1,128)}', space=vmem, size = 0x12000, scoped, tag = 'internal scratch']
  %s0 = inlined_call_operand.vmem [shape: f32[12,32], index: 0, kind: input, shape index: {}]
  %s1 = inlined_call_operand.vmem [shape: f32[1,32], index: 1, kind: input, shape index: {}]
  %s2 = inlined_call_operand.vmem [shape: f32[1,32], index: 2, kind: input, shape index: {}]
  %s3 = inlined_call_operand.vmem [shape: f32[12,32], index: 3, kind: output, shape index: {}]
  %s4 = sld [smem:[#allocation0]]
  $region22: #{cross_attention_forward.39} parent=0
    _
  %s6 = ssub.s32 1, %s4
  %s7 = scalar_select 0, %s6, %s4
  // Predicated region
  $region2: #{cross_attention_forward.39} parent=0 // pred_check
    _
  $region3: #{cross_attention_forward.39} parent=0 // pred_check_branch
    %9 = sbr.rel (0) target = $region5
  $region4: #{cross_attention_forward.39} parent=0 // pred_region
    _
  $region5: #{cross_attention_forward.39} parent=0 // pred_fallthru
    _
  // Predicated region
  $region6: #{cross_attention_forward.39} parent=0 // pred_check
    _
  $region7: #{cross_attention_forward.39} parent=0 // pred_check_branch
    %11 = sbr.rel (0) target = $region9
  $region8: #{cross_attention_forward.39} parent=0 // pred_region
    _
  $region9: #{cross_attention_forward.39} parent=0 // pred_fallthru
    _
  // Predicated region
  $region10: #{cross_attention_forward.39} parent=0 // pred_check
    _
  $region11: #{cross_attention_forward.39} parent=0 // pred_check_branch
    %13 = sbr.rel (0) target = $region13
  $region12: #{cross_attention_forward.39} parent=0 // pred_region
    _
  $region13: #{cross_attention_forward.39} parent=0 // pred_fallthru
    _
  %v14 = vld [vmem:[%s0] sm:$0xff]
  %v15 = vld [vmem:[%s0 + $0x8] sm:$0xf]
  %vm16 = vcmask 261120
  %v17 = vsel %vm16, %v14, 0.0
  %18 = vadd.xlane.f32.xlu0 %v17
  %v19 = vpop.xlane.xlu0 %18
  %vm20 = vcmask 257024
  %v21 = vsel %vm20, %v15, 0.0
  %22 = vadd.xlane.f32.xlu0 %v21
  %v23 = vpop.xlane.xlu0 %22
  %v24 = vrcp.pop 32.0
  %v25 = vmul.f32 %v19, %v24
  %v26 = vmul.f32 %v23, %v24
  %v27 = vsub.f32 %v14, %v25
  %v28 = vsub.f32 %v15, %v26
  %v29 = vmul.f32 %v27, %v27
  %v30 = vmul.f32 %v28, %v28
  %v31 = vsel %vm16, %v29, 0.0
  %32 = vadd.xlane.f32.xlu0 %v31
  %v33 = vpop.xlane.xlu0 %32
  %v34 = vsel %vm20, %v30, 0.0
  %35 = vadd.xlane.f32.xlu0 %v34
  %v36 = vpop.xlane.xlu0 %35
  %v37 = vmul.f32 %v33, %v24
  %v38 = vmul.f32 %v36, %v24
  %v39 = vadd.f32 %v37, 1e-05
  %v40 = vadd.f32 %v38, 1e-05
  %v41 = vrsqrt.pop %v39
  %v42 = vrsqrt.pop %v40
  %v43 = vmul.f32 %v27, %v41
  %v44 = vmul.f32 %v28, %v42
  %v45 = vld [vmem:[%s1] sm:$0x1]
  %v47 = vlaneseq
  %v48 = vshrl.u32 %v47, 7
  %v49 = vsub.s32 0, %v48
  %v50 = vrot.slane %v45, %v49
  %v52 = vmul.f32 %v43, %v50
  %v53 = vmul.f32 %v44, %v50
  %v54 = vld [vmem:[%s2] sm:$0x1]
  %v56 = vlaneseq
  %v57 = vshrl.u32 %v56, 7
  %v58 = vsub.s32 0, %v57
  %v59 = vrot.slane %v54, %v58
  %v61 = vadd.f32 %v52, %v59
  %v62 = vadd.f32 %v53, %v59
  %63 = vst.msk [vmem:[%s3] sm:$0xff] %vm16, %v61
  %64 = vst.msk [vmem:[%s3 + $0x8] sm:$0xf] %vm20, %v62
  // Predicated region
  $region14: #{cross_attention_forward.39} parent=0 // pred_check
    _
  $region15: #{cross_attention_forward.39} parent=0 // pred_check_branch
    %66 = sbr.rel (0) target = $region17
  $region16: #{cross_attention_forward.39} parent=0 // pred_region
    _
  $region17: #{cross_attention_forward.39} parent=0 // pred_fallthru
    _
  // Predicated region
  $region18: #{cross_attention_forward.39} parent=0 // pred_check
    _
  $region19: #{cross_attention_forward.39} parent=0 // pred_check_branch
    %68 = sbr.rel (0) target = $region21
  $region20: #{cross_attention_forward.39} parent=0 // pred_region
    _
  $region21: #{cross_attention_forward.39} parent=0 // pred_fallthru
    _

// kernel: cross_attention_forward.40
$region0: #{cross_attention_forward.40}
  #allocation0 [shape = 'u32[]', space=smem, size = 0x4, offset = 0x4, fixed_abs, tag = 'smem constant byte address 0x4 - core index']
  #allocation1 [shape = 'u32[144,128]{1,0:T(1,128)}', space=vmem, size = 0x12000, scoped, tag = 'internal scratch']
  #allocation2 [shape = 'f32[12,96]{1,0:T(8,128)}', space=vmem, size = 0x2000, scoped, tag = 'scratch operand']
  %s0 = inlined_call_operand.vmem [shape: f32[12,32], index: 0, kind: input, shape index: {}]
  %s1 = inlined_call_operand.vmem [shape: f32[32,96], index: 1, kind: input, shape index: {}]
  %s2 = inlined_call_operand.vmem [shape: f32[1,96], index: 2, kind: input, shape index: {}]
  %s3 = inlined_call_operand.vmem [shape: f32[12,96], index: 3, kind: output, shape index: {}]
  %s4 = sld [smem:[#allocation0]]
  $region30: #{cross_attention_forward.40} parent=0
    _
  %s6 = ssub.s32 1, %s4
  %s7 = scalar_select 0, %s6, %s4
  // Predicated region
  $region2: #{cross_attention_forward.40} parent=0 // pred_check
    _
  $region3: #{cross_attention_forward.40} parent=0 // pred_check_branch
    %9 = sbr.rel (0) target = $region5
  $region4: #{cross_attention_forward.40} parent=0 // pred_region
    _
  $region5: #{cross_attention_forward.40} parent=0 // pred_fallthru
    _
  // Predicated region
  $region6: #{cross_attention_forward.40} parent=0 // pred_check
    _
  $region7: #{cross_attention_forward.40} parent=0 // pred_check_branch
    %11 = sbr.rel (0) target = $region9
  $region8: #{cross_attention_forward.40} parent=0 // pred_region
    _
  $region9: #{cross_attention_forward.40} parent=0 // pred_fallthru
    _
  // Predicated region
  $region10: #{cross_attention_forward.40} parent=0 // pred_check
    _
  $region11: #{cross_attention_forward.40} parent=0 // pred_check_branch
    %13 = sbr.rel (0) target = $region13
  $region12: #{cross_attention_forward.40} parent=0 // pred_region
    _
  $region13: #{cross_attention_forward.40} parent=0 // pred_fallthru
    _
  %p14 = scmp.eq.s32.totalorder 0, 0
  // Predicated region
  $region14: #{cross_attention_forward.40} parent=0 // pred_check
    %p15 = pneg %p14
  $region15: #{cross_attention_forward.40} parent=0 // pred_check_branch
    %17 = sbr.rel (%p15) target = $region17
  $region16: #{cross_attention_forward.40} parent=0 // pred_region
    %vm18 = vcmask 785408
    %19 = vst.msk [vmem:[#allocation2] sm:$0xff] %vm18, 0.0
    %vm20 = vcmask 781312
    %21 = vst.msk [vmem:[#allocation2 + $0x8] sm:$0xf] %vm20, 0.0
  $region17: #{cross_attention_forward.40} parent=0 // pred_fallthru
    _
  %v22 = vld [vmem:[#allocation2] sm:$0xff]
  %v23 = vld [vmem:[#allocation2 + $0x8] sm:$0xf]
  %v24 = vld [vmem:[%s0] sm:$0xff]
  %v25 = vld [vmem:[%s0 + $0x8] sm:$0xf]
  %v26 = vld [vmem:[%s1] sm:$0xff]
  %v27 = vld [vmem:[%s1 + $0x8] sm:$0xff]
  %v28 = vld [vmem:[%s1 + $0x10] sm:$0xff]
  %v29 = vld [vmem:[%s1 + $0x18] sm:$0xff]
  %vm30 = vcmask 261120
  %v32 = vsel %vm30, %v24, 0
  %v35 = vsel %vm30, %v25, 0
  %37 = vmatprep.subr.mxu0 0.0
  %38 = vmatpush1.msra.mxu0 0.0
  %39 = vmatprep.subr.mxu0 0.0
  %40 = vmatpush1.msra.mxu0 0.0
  %41 = vmatprep.subr.mxu0 0.0
  %42 = vmatpush1.msra.mxu0 0.0
  %43 = vmatprep.subr.mxu0 0.0
  %44 = vmatpush1.msra.mxu0 0.0
  %45 = vmatprep.subr.mxu0 0.0
  %46 = vmatpush1.msra.mxu0 0.0
  %47 = vmatprep.subr.mxu0 0.0
  %48 = vmatpush1.msra.mxu0 0.0
  %49 = vmatprep.subr.mxu0 0.0
  %50 = vmatpush1.msra.mxu0 0.0
  %51 = vmatprep.subr.mxu0 0.0
  %52 = vmatpush1.msra.mxu0 0.0
  %53 = vmatprep.subr.mxu0 0.0
  %54 = vmatpush1.msra.mxu0 0.0
  %55 = vmatprep.subr.mxu0 0.0
  %56 = vmatpush1.msra.mxu0 0.0
  %57 = vmatprep.subr.mxu0 0.0
  %58 = vmatpush1.msra.mxu0 0.0
  %59 = vmatprep.subr.mxu0 0.0
  %60 = vmatpush1.msra.mxu0 0.0
  %61 = vmatprep.subr.mxu0 0.0
  %62 = vmatpush1.msra.mxu0 %v29
  %63 = vmatprep.subr.mxu0 0.0
  %64 = vmatpush1.msra.mxu0 %v28
  %65 = vmatprep.subr.mxu0 0.0
  %66 = vmatpush1.msra.mxu0 %v27
  %67 = vmatprep.subr.mxu0 0.0
  %68 = vmatpush1.msra.mxu0 %v26
  %69 = vmatprep.subr.mxu0 0.0
  %70 = vmatpush2.msra.mxu0 0.0
  %71 = vmatprep.subr.mxu0 0.0
  %72 = vmatpush2.msra.mxu0 0.0
  %73 = vmatprep.subr.mxu0 0.0
  %74 = vmatpush2.msra.mxu0 0.0
  %75 = vmatprep.subr.mxu0 0.0
  %76 = vmatpush2.msra.mxu0 0.0
  %77 = vmatprep.subr.mxu0 0.0
  %78 = vmatpush2.msra.mxu0 0.0
  %79 = vmatprep.subr.mxu0 0.0
  %80 = vmatpush2.msra.mxu0 0.0
  %81 = vmatprep.subr.mxu0 0.0
  %82 = vmatpush2.msra.mxu0 0.0
  %83 = vmatprep.subr.mxu0 0.0
  %84 = vmatpush2.msra.mxu0 0.0
  %85 = vmatprep.subr.mxu0 0.0
  %86 = vmatpush2.msra.mxu0 0.0
  %87 = vmatprep.subr.mxu0 0.0
  %88 = vmatpush2.msra.mxu0 0.0
  %89 = vmatprep.subr.mxu0 0.0
  %90 = vmatpush2.msra.mxu0 0.0
  %91 = vmatprep.subr.mxu0 0.0
  %92 = vmatpush2.msra.mxu0 0.0
  %93 = vmatprep.subr.mxu0 0.0
  %94 = vmatpush2.msra.mxu0 0.0
  %95 = vmatprep.subr.mxu0 0.0
  %96 = vmatpush2.msra.mxu0 0.0
  %97 = vmatprep.subr.mxu0 0.0
  %98 = vmatpush2.msra.mxu0 0.0
  %99 = vmatprep.subr.mxu0 0.0
  %100 = vmatpush2.msra.mxu0 0.0
  %101 = vmatprep.mubr.f32.mxu0 0.0
  %102 = vmatmul.mubr.f32.gmra.mxu0 %v32
  %v103 = vpop.f32.mrf.mxu0
  %v104 = vadd.f32 0.0, %v103
  %v105 = vpop.f32.mrf.mxu0
  %106 = vmatprep.mubr.f32.mxu0 0.0
  %107 = vmatmul.mubr.f32.gmra.mxu0 %v35
  %v108 = vpop.f32.mrf.mxu0
  %v109 = vadd.f32 0.0, %v108
  %v110 = vpop.f32.mrf.mxu0
  %111 = vdwg.mxu0
  %v112 = vadd.f32 %v22, %v104
  %v113 = vadd.f32 %v23, %v109
  %vm114 = vcmask 785408
  %115 = vst.msk [vmem:[#allocation2] sm:$0xff] %vm114, %v112
  %vm116 = vcmask 781312
  %117 = vst.msk [vmem:[#allocation2 + $0x8] sm:$0xf] %vm116, %v113
  // Predicated region
  $region18: #{cross_attention_forward.40} parent=0 // pred_check
    %p118 = pneg %p14
  $region19: #{cross_attention_forward.40} parent=0 // pred_check_branch
    %120 = sbr.rel (%p118) target = $region21
  $region20: #{cross_attention_forward.40} parent=0 // pred_region
    %v121 = vld [vmem:[#allocation2] sm:$0xff]
    %v122 = vld [vmem:[#allocation2 + $0x8] sm:$0xf]
    %v123 = vld [vmem:[%s2] sm:$0x1]
    %v125 = vlaneseq
    %v126 = vshrl.u32 %v125, 7
    %v127 = vsub.s32 0, %v126
    %v128 = vrot.slane %v123, %v127
    %v130 = vadd.f32 %v121, %v128
    %v131 = vadd.f32 %v122, %v128
    %132 = vst.msk [vmem:[%s3] sm:$0xff] %vm114, %v130
    %133 = vst.msk [vmem:[%s3 + $0x8] sm:$0xf] %vm116, %v131
  $region21: #{cross_attention_forward.40} parent=0 // pred_fallthru
    _
  // Predicated region
  $region22: #{cross_attention_forward.40} parent=0 // pred_check
    _
  $region23: #{cross_attention_forward.40} parent=0 // pred_check_branch
    %135 = sbr.rel (0) target = $region25
  $region24: #{cross_attention_forward.40} parent=0 // pred_region
    _
  $region25: #{cross_attention_forward.40} parent=0 // pred_fallthru
    _
  // Predicated region
  $region26: #{cross_attention_forward.40} parent=0 // pred_check
    _
  $region27: #{cross_attention_forward.40} parent=0 // pred_check_branch
    %137 = sbr.rel (0) target = $region29
  $region28: #{cross_attention_forward.40} parent=0 // pred_region
    _
  $region29: #{cross_attention_forward.40} parent=0 // pred_fallthru
    _

// kernel: cross_attention_forward.42
$region0: #{cross_attention_forward.42}
  #allocation0 [shape = 'u32[]', space=smem, size = 0x4, offset = 0x4, fixed_abs, tag = 'smem constant byte address 0x4 - core index']
  #allocation1 [shape = 'u32[144,128]{1,0:T(1,128)}', space=vmem, size = 0x12000, scoped, tag = 'internal scratch']
  #allocation2 [shape = 'f32[12,32]{1,0:T(8,128)}', space=vmem, size = 0x2000, scoped, tag = 'scratch operand']
  %s0 = inlined_call_operand.vmem [shape: f32[12,32], index: 0, kind: input, shape index: {}]
  %s1 = inlined_call_operand.vmem [shape: f32[32,32], index: 1, kind: input, shape index: {}]
  %s2 = inlined_call_operand.vmem [shape: f32[1,32], index: 2, kind: input, shape index: {}]
  %s3 = inlined_call_operand.vmem [shape: f32[12,32], index: 3, kind: output, shape index: {}]
  %s4 = sld [smem:[#allocation0]]
  $region30: #{cross_attention_forward.42} parent=0
    _
  %s6 = ssub.s32 1, %s4
  %s7 = scalar_select 0, %s6, %s4
  // Predicated region
  $region2: #{cross_attention_forward.42} parent=0 // pred_check
    _
  $region3: #{cross_attention_forward.42} parent=0 // pred_check_branch
    %9 = sbr.rel (0) target = $region5
  $region4: #{cross_attention_forward.42} parent=0 // pred_region
    _
  $region5: #{cross_attention_forward.42} parent=0 // pred_fallthru
    _
  // Predicated region
  $region6: #{cross_attention_forward.42} parent=0 // pred_check
    _
  $region7: #{cross_attention_forward.42} parent=0 // pred_check_branch
    %11 = sbr.rel (0) target = $region9
  $region8: #{cross_attention_forward.42} parent=0 // pred_region
    _
  $region9: #{cross_attention_forward.42} parent=0 // pred_fallthru
    _
  // Predicated region
  $region10: #{cross_attention_forward.42} parent=0 // pred_check
    _
  $region11: #{cross_attention_forward.42} parent=0 // pred_check_branch
    %13 = sbr.rel (0) target = $region13
  $region12: #{cross_attention_forward.42} parent=0 // pred_region
    _
  $region13: #{cross_attention_forward.42} parent=0 // pred_fallthru
    _
  %p14 = scmp.eq.s32.totalorder 0, 0
  // Predicated region
  $region14: #{cross_attention_forward.42} parent=0 // pred_check
    %p15 = pneg %p14
  $region15: #{cross_attention_forward.42} parent=0 // pred_check_branch
    %17 = sbr.rel (%p15) target = $region17
  $region16: #{cross_attention_forward.42} parent=0 // pred_region
    %vm18 = vcmask 261120
    %19 = vst.msk [vmem:[#allocation2] sm:$0xff] %vm18, 0.0
    %vm20 = vcmask 257024
    %21 = vst.msk [vmem:[#allocation2 + $0x8] sm:$0xf] %vm20, 0.0
  $region17: #{cross_attention_forward.42} parent=0 // pred_fallthru
    _
  %v22 = vld [vmem:[#allocation2] sm:$0xff]
  %v23 = vld [vmem:[#allocation2 + $0x8] sm:$0xf]
  %v24 = vld [vmem:[%s0] sm:$0xff]
  %v25 = vld [vmem:[%s0 + $0x8] sm:$0xf]
  %v26 = vld [vmem:[%s1] sm:$0xff]
  %v27 = vld [vmem:[%s1 + $0x8] sm:$0xff]
  %v28 = vld [vmem:[%s1 + $0x10] sm:$0xff]
  %v29 = vld [vmem:[%s1 + $0x18] sm:$0xff]
  %vm30 = vcmask 261120
  %v32 = vsel %vm30, %v24, 0
  %v35 = vsel %vm30, %v25, 0
  %37 = vmatprep.subr.mxu0 0.0
  %38 = vmatpush1.msra.mxu0 0.0
  %39 = vmatprep.subr.mxu0 0.0
  %40 = vmatpush1.msra.mxu0 0.0
  %41 = vmatprep.subr.mxu0 0.0
  %42 = vmatpush1.msra.mxu0 0.0
  %43 = vmatprep.subr.mxu0 0.0
  %44 = vmatpush1.msra.mxu0 0.0
  %45 = vmatprep.subr.mxu0 0.0
  %46 = vmatpush1.msra.mxu0 0.0
  %47 = vmatprep.subr.mxu0 0.0
  %48 = vmatpush1.msra.mxu0 0.0
  %49 = vmatprep.subr.mxu0 0.0
  %50 = vmatpush1.msra.mxu0 0.0
  %51 = vmatprep.subr.mxu0 0.0
  %52 = vmatpush1.msra.mxu0 0.0
  %53 = vmatprep.subr.mxu0 0.0
  %54 = vmatpush1.msra.mxu0 0.0
  %55 = vmatprep.subr.mxu0 0.0
  %56 = vmatpush1.msra.mxu0 0.0
  %57 = vmatprep.subr.mxu0 0.0
  %58 = vmatpush1.msra.mxu0 0.0
  %59 = vmatprep.subr.mxu0 0.0
  %60 = vmatpush1.msra.mxu0 0.0
  %61 = vmatprep.subr.mxu0 0.0
  %62 = vmatpush1.msra.mxu0 %v29
  %63 = vmatprep.subr.mxu0 0.0
  %64 = vmatpush1.msra.mxu0 %v28
  %65 = vmatprep.subr.mxu0 0.0
  %66 = vmatpush1.msra.mxu0 %v27
  %67 = vmatprep.subr.mxu0 0.0
  %68 = vmatpush1.msra.mxu0 %v26
  %69 = vmatprep.subr.mxu0 0.0
  %70 = vmatpush2.msra.mxu0 0.0
  %71 = vmatprep.subr.mxu0 0.0
  %72 = vmatpush2.msra.mxu0 0.0
  %73 = vmatprep.subr.mxu0 0.0
  %74 = vmatpush2.msra.mxu0 0.0
  %75 = vmatprep.subr.mxu0 0.0
  %76 = vmatpush2.msra.mxu0 0.0
  %77 = vmatprep.subr.mxu0 0.0
  %78 = vmatpush2.msra.mxu0 0.0
  %79 = vmatprep.subr.mxu0 0.0
  %80 = vmatpush2.msra.mxu0 0.0
  %81 = vmatprep.subr.mxu0 0.0
  %82 = vmatpush2.msra.mxu0 0.0
  %83 = vmatprep.subr.mxu0 0.0
  %84 = vmatpush2.msra.mxu0 0.0
  %85 = vmatprep.subr.mxu0 0.0
  %86 = vmatpush2.msra.mxu0 0.0
  %87 = vmatprep.subr.mxu0 0.0
  %88 = vmatpush2.msra.mxu0 0.0
  %89 = vmatprep.subr.mxu0 0.0
  %90 = vmatpush2.msra.mxu0 0.0
  %91 = vmatprep.subr.mxu0 0.0
  %92 = vmatpush2.msra.mxu0 0.0
  %93 = vmatprep.subr.mxu0 0.0
  %94 = vmatpush2.msra.mxu0 0.0
  %95 = vmatprep.subr.mxu0 0.0
  %96 = vmatpush2.msra.mxu0 0.0
  %97 = vmatprep.subr.mxu0 0.0
  %98 = vmatpush2.msra.mxu0 0.0
  %99 = vmatprep.subr.mxu0 0.0
  %100 = vmatpush2.msra.mxu0 0.0
  %101 = vmatprep.mubr.f32.mxu0 0.0
  %102 = vmatmul.mubr.f32.gmra.mxu0 %v32
  %v103 = vpop.f32.mrf.mxu0
  %v104 = vadd.f32 0.0, %v103
  %v105 = vpop.f32.mrf.mxu0
  %106 = vmatprep.mubr.f32.mxu0 0.0
  %107 = vmatmul.mubr.f32.gmra.mxu0 %v35
  %v108 = vpop.f32.mrf.mxu0
  %v109 = vadd.f32 0.0, %v108
  %v110 = vpop.f32.mrf.mxu0
  %111 = vdwg.mxu0
  %v112 = vadd.f32 %v22, %v104
  %v113 = vadd.f32 %v23, %v109
  %114 = vst.msk [vmem:[#allocation2] sm:$0xff] %vm30, %v112
  %vm115 = vcmask 257024
  %116 = vst.msk [vmem:[#allocation2 + $0x8] sm:$0xf] %vm115, %v113
  // Predicated region
  $region18: #{cross_attention_forward.42} parent=0 // pred_check
    %p117 = pneg %p14
  $region19: #{cross_attention_forward.42} parent=0 // pred_check_branch
    %119 = sbr.rel (%p117) target = $region21
  $region20: #{cross_attention_forward.42} parent=0 // pred_region
    %v120 = vld [vmem:[#allocation2] sm:$0xff]
    %v121 = vld [vmem:[#allocation2 + $0x8] sm:$0xf]
    %v122 = vld [vmem:[%s2] sm:$0x1]
    %v124 = vlaneseq
    %v125 = vshrl.u32 %v124, 7
    %v126 = vsub.s32 0, %v125
    %v127 = vrot.slane %v122, %v126
    %v129 = vadd.f32 %v120, %v127
    %v130 = vadd.f32 %v121, %v127
    %131 = vst.msk [vmem:[%s3] sm:$0xff] %vm30, %v129
    %132 = vst.msk [vmem:[%s3 + $0x8] sm:$0xf] %vm115, %v130
  $region21: #{cross_attention_forward.42} parent=0 // pred_fallthru
    _
  // Predicated region
  $region22: #{cross_attention_forward.42} parent=0 // pred_check
    _
  $region23: #{cross_attention_forward.42} parent=0 // pred_check_branch
    %134 = sbr.rel (0) target = $region25
  $region24: #{cross_attention_forward.42} parent=0 // pred_region
    _
  $region25: #{cross_attention_forward.42} parent=0 // pred_fallthru
    _
  // Predicated region
  $region26: #{cross_attention_forward.42} parent=0 // pred_check
    _
  $region27: #{cross_attention_forward.42} parent=0 // pred_check_branch
    %136 = sbr.rel (0) target = $region29
  $region28: #{cross_attention_forward.42} parent=0 // pred_region
    _
  $region29: #{cross_attention_forward.42} parent=0 // pred_fallthru
    _

// kernel: cross_attention_forward.41
$region0: #{cross_attention_forward.41}
  #allocation0 [shape = 'u32[]', space=smem, size = 0x4, offset = 0x4, fixed_abs, tag = 'smem constant byte address 0x4 - core index']
  #allocation1 [shape = 'u32[144,128]{1,0:T(1,128)}', space=vmem, size = 0x12000, scoped, tag = 'internal scratch']
  %s0 = inlined_call_operand.vmem [shape: f32[2,6,96], index: 0, kind: input, shape index: {}]
  %s1 = inlined_call_operand.vmem [shape: f32[3,96], index: 1, kind: input, shape index: {}]
  %s2 = inlined_call_operand.vmem [shape: f32[1,96], index: 2, kind: input, shape index: {}]
  %s3 = inlined_call_operand.vmem [shape: f32[2,6,32], index: 3, kind: output, shape index: {}]
  %s4 = sld [smem:[#allocation0]]
  $region45: #{cross_attention_forward.41} parent=0
    _
  %s6 = ssub.s32 1, %s4
  %s7 = scalar_select 0, %s6, %s4
  loop: start=0, step=1, limit=4
  $region2: #{cross_attention_forward.41} parent=0 // loop_pre_header
    _
  $region3: #{cross_attention_forward.41} parent=0 // loop_header
    %s9 = sphi 0, %s13
    %p10 = scmp.ge.s32.totalorder %s9, 4
    %s19 = sphi 0, %s21
    %s22 = sphi 0, %s19
    %s23 = sphi 0, %s22
    %s39 = sphi 0, %s23
    %s43 = sphi 0, %s43
    %s45 = sphi 0, %s43
    %s46 = sphi 0, %s45
    %s60 = sphi 0, %s46
    %s64 = sphi 0, %s64
    %s66 = sphi 0, %s64
    %s67 = sphi 0, %s66
    %s81 = sphi 0, %s67
    %s87 = sphi 0, %s89
    %s90 = sphi 0, %s87
    %s91 = sphi 0, %s90
    %s107 = sphi 0, %s91
  $region4: #{cross_attention_forward.41} parent=0 // loop_header_branch
    %12 = sbr.rel (%p10) target = $region8
  $region5: #{cross_attention_forward.41} parent=0 // loop_body
    %s14 = ssub.s32 %s9, 1
    %s15 = ssub.s32 %s9, 2
    %s16 = sadd.s32 %s9, 1
    %s17 = ssub.s32 %s9, %s16
    %p18 = scmp.eq.s32.totalorder %s17, 0
    %s20 = sadd.s32 %s19, 1
    %s21 = scalar_select %p18, %s19, %s20
    %p24 = pneg %p18
    %p25 = scmp.eq.s32.totalorder %s9, 1
    %p26 = por %p24, %p25
    %p27 = scmp.ne.s32.totalorder %s19, %s22
    %p28 = scmp.eq.s32.totalorder %s9, 0
    %p29 = por %p27, %p28
    %p30 = scmp.ne.s32.totalorder %s19, %s22
    %p31 = scmp.eq.s32.totalorder %s14, 1
    %p32 = por %p30, %p31
    %p33 = scmp.ne.s32.totalorder %s22, %s23
    %p34 = scmp.eq.s32.totalorder %s14, 0
    %p35 = por %p33, %p34
    %p36 = scmp.ne.s32.totalorder %s22, %s23
    %p37 = scmp.eq.s32.totalorder %s15, 1
    %p38 = por %p36, %p37
    %p40 = scmp.ne.s32.totalorder %s23, %s39
    %p41 = scmp.eq.s32.totalorder %s15, 0
    %p42 = por %p40, %p41
    %s44 = sadd.s32 %s43, 1
    %p47 = scmp.eq.s32.totalorder %s9, 1
    %p48 = scmp.ne.s32.totalorder %s43, %s45
    %p49 = scmp.eq.s32.totalorder %s9, 0
    %p50 = por %p48, %p49
    %p51 = scmp.ne.s32.totalorder %s43, %s45
    %p52 = scmp.eq.s32.totalorder %s14, 1
    %p53 = por %p51, %p52
    %p54 = scmp.ne.s32.totalorder %s45, %s46
    %p55 = scmp.eq.s32.totalorder %s14, 0
    %p56 = por %p54, %p55
    %p57 = scmp.ne.s32.totalorder %s45, %s46
    %p58 = scmp.eq.s32.totalorder %s15, 1
    %p59 = por %p57, %p58
    %p61 = scmp.ne.s32.totalorder %s46, %s60
    %p62 = scmp.eq.s32.totalorder %s15, 0
    %p63 = por %p61, %p62
    %s65 = sadd.s32 %s64, 1
    %p68 = scmp.eq.s32.totalorder %s9, 1
    %p69 = scmp.ne.s32.totalorder %s64, %s66
    %p70 = scmp.eq.s32.totalorder %s9, 0
    %p71 = por %p69, %p70
    %p72 = scmp.ne.s32.totalorder %s64, %s66
    %p73 = scmp.eq.s32.totalorder %s14, 1
    %p74 = por %p72, %p73
    %p75 = scmp.ne.s32.totalorder %s66, %s67
    %p76 = scmp.eq.s32.totalorder %s14, 0
    %p77 = por %p75, %p76
    %p78 = scmp.ne.s32.totalorder %s66, %s67
    %p79 = scmp.eq.s32.totalorder %s15, 1
    %p80 = por %p78, %p79
    %p82 = scmp.ne.s32.totalorder %s67, %s81
    %p83 = scmp.eq.s32.totalorder %s15, 0
    %p84 = por %p82, %p83
    %s85 = ssub.s32 %s9, %s16
    %p86 = scmp.eq.s32.totalorder %s85, 0
    %s88 = sadd.s32 %s87, 1
    %s89 = scalar_select %p86, %s87, %s88
    %p92 = pneg %p86
    %p93 = scmp.eq.s32.totalorder %s9, 1
    %p94 = por %p92, %p93
    %p95 = scmp.ne.s32.totalorder %s87, %s90
    %p96 = scmp.eq.s32.totalorder %s9, 0
    %p97 = por %p95, %p96
    %p98 = scmp.ne.s32.totalorder %s87, %s90
    %p99 = scmp.eq.s32.totalorder %s14, 1
    %p100 = por %p98, %p99
    %p101 = scmp.ne.s32.totalorder %s90, %s91
    %p102 = scmp.eq.s32.totalorder %s14, 0
    %p103 = por %p101, %p102
    %p104 = scmp.ne.s32.totalorder %s90, %s91
    %p105 = scmp.eq.s32.totalorder %s15, 1
    %p106 = por %p104, %p105
    %p108 = scmp.ne.s32.totalorder %s91, %s107
    %p109 = scmp.eq.s32.totalorder %s15, 0
    %p110 = por %p108, %p109
    %p111 = scmp.le.s32.totalorder 1, %s9
    %p112 = scmp.lt.s32.totalorder %s9, 3
    %p113 = pnand %p111, %p112
    %p114 = pneg %p113
    // Predicated region
    $region9: #{cross_attention_forward.41} parent=5 // pred_check
      _
    $region10: #{cross_attention_forward.41} parent=5 // pred_check_branch
      %116 = sbr.rel (%p113) target = $region12
    $region11: #{cross_attention_forward.41} parent=5 // pred_region
      %s117 = ssub.s32 %s9, 1
      // Predicated region
      $region13: #{cross_attention_forward.41} parent=11 // pred_check
        %p118 = pneg %p56
      $region14: #{cross_attention_forward.41} parent=11 // pred_check_branch
        %120 = sbr.rel (%p118) target = $region16
      $region15: #{cross_attention_forward.41} parent=11 // pred_region
        _
      $region16: #{cross_attention_forward.41} parent=11 // pred_fallthru
        _
      // Predicated region
      $region17: #{cross_attention_forward.41} parent=11 // pred_check
        %p121 = pneg %p77
      $region18: #{cross_attention_forward.41} parent=11 // pred_check_branch
        %123 = sbr.rel (%p121) target = $region20
      $region19: #{cross_attention_forward.41} parent=11 // pred_region
        _
      $region20: #{cross_attention_forward.41} parent=11 // pred_fallthru
        _
    $region12: #{cross_attention_forward.41} parent=5 // pred_fallthru
      _
    %p124 = scmp.lt.s32.totalorder %s9, 2
    // Predicated region
    $region21: #{cross_attention_forward.41} parent=5 // pred_check
      %p125 = pneg %p124
    $region22: #{cross_attention_forward.41} parent=5 // pred_check_branch
      %127 = sbr.rel (%p125) target = $region24
    $region23: #{cross_attention_forward.41} parent=5 // pred_region
      // Predicated region
      $region25: #{cross_attention_forward.41} parent=23 // pred_check
        %p128 = pneg %p29
      $region26: #{cross_attention_forward.41} parent=23 // pred_check_branch
        %130 = sbr.rel (%p128) target = $region28
      $region27: #{cross_attention_forward.41} parent=23 // pred_region
        %p131 = scmp.lt.s32.totalorder %s9, 1
        %s132 = scalar_select %p131, %s9, 1
        %s133 = smul.addr %s132, 8
        %s134 = scalar_lea.vmem %s0, %s133
      $region28: #{cross_attention_forward.41} parent=23 // pred_fallthru
        _
    $region24: #{cross_attention_forward.41} parent=5 // pred_fallthru
      _
    %p135 = scmp.le.s32.totalorder 1, %s9
    %p136 = scmp.lt.s32.totalorder %s9, 3
    %p137 = pnand %p135, %p136
    %p138 = pneg %p137
    // Predicated region
    $region29: #{cross_attention_forward.41} parent=5 // pred_check
      _
    $region30: #{cross_attention_forward.41} parent=5 // pred_check_branch
      %140 = sbr.rel (%p137) target = $region32
    $region31: #{cross_attention_forward.41} parent=5 // pred_region
      %s141 = ssub.s32 %s9, 1
      %p142 = scmp.lt.s32.totalorder %s14, 1
      %s143 = scalar_select %p142, %s14, 1
      %s144 = smul.addr %s143, 8
      %s145 = scalar_lea.vmem %s0, %s144
      %p146 = pneg %p35
      %p147 = pneg %p32
      %p148 = pneg %p56
      %p149 = pneg %p53
      %p150 = pneg %p77
      %p151 = pneg %p74
      %p152 = pneg %p103
      %p153 = pneg %p100
      %p154 = scmp.lt.s32.totalorder %s14, 1
      %s155 = scalar_select %p154, %s14, 1
      %s156 = smul.addr %s155, 8
      %s157 = scalar_lea.vmem %s3, %s156
      %p158 = scmp.lt.s32.totalorder %s14, 1
      %s159 = scalar_select %p158, %s14, 1
      %s160 = smul.addr %s159, 8
      %s161 = scalar_lea.vmem %s0, %s160
      %p162 = scmp.lt.s32.totalorder %s14, 1
      %s163 = scalar_select %p162, %s14, 1
      %s164 = smul.addr %s163, 8
      %s165 = scalar_lea.vmem %s3, %s164
      %v166 = vld [vmem:[%s161] sm:$0x3f]
      %v167 = vld [vmem:[%s1] sm:$0x7]
      %v168 = vld [vmem:[%s2] sm:$0x1]
      %v169 = vlaneseq
      %v170 = vshrl.u32 %v169, 7
      %v171 = vlaneseq
      %v172 = vand.u32 %v171, 127
      %v173 = vadd.s32 %v172, 1
      %vm174 = vcmp.eq.s32.totalorder %v170, %v173
      %v175 = vsel %vm174, 1, 0
      %v176 = vcvt.s32.f32 %v175
      %v177 = vadd.s32 %v172, 2
      %vm178 = vcmp.eq.s32.totalorder %v170, %v177
      %v179 = vsel %vm178, 1, 0
      %v180 = vcvt.s32.f32 %v179
      %vm181 = vcmask 48128
      %v183 = vsel %vm181, %v176, 0
      %vm185 = vcmask 1045504
      %v187 = vsel %vm185, %v166, 0
      %189 = vmatprep.subr.mxu0 0.0
      %190 = vmatpush1.msra.mxu0 0.0
      %191 = vmatprep.subr.mxu0 0.0
      %192 = vmatpush1.msra.mxu0 0.0
      %193 = vmatprep.subr.mxu0 0.0
      %194 = vmatpush1.msra.mxu0 0.0
      %195 = vmatprep.subr.mxu0 0.0
      %196 = vmatpush1.msra.mxu0 0.0
      %197 = vmatprep.subr.mxu0 0.0
      %198 = vmatpush1.msra.mxu0 0.0
      %199 = vmatprep.subr.mxu0 0.0
      %200 = vmatpush1.msra.mxu0 0.0
      %201 = vmatprep.subr.mxu0 0.0
      %202 = vmatpush1.msra.mxu0 0.0
      %203 = vmatprep.subr.mxu0 0.0
      %204 = vmatpush1.msra.mxu0 0.0
      %205 = vmatprep.subr.mxu0 0.0
      %206 = vmatpush1.msra.mxu0 0.0
      %207 = vmatprep.subr.mxu0 0.0
      %208 = vmatpush1.msra.mxu0 0.0
      %209 = vmatprep.subr.mxu0 0.0
      %210 = vmatpush1.msra.mxu0 0.0
      %211 = vmatprep.subr.mxu0 0.0
      %212 = vmatpush1.msra.mxu0 0.0
      %213 = vmatprep.subr.mxu0 0.0
      %214 = vmatpush1.msra.mxu0 0.0
      %215 = vmatprep.subr.mxu0 0.0
      %216 = vmatpush1.msra.mxu0 0.0
      %217 = vmatprep.subr.mxu0 0.0
      %218 = vmatpush1.msra.mxu0 0.0
      %219 = vmatprep.subr.mxu0 0.0
      %220 = vmatpush1.msra.mxu0 %v187
      %221 = vmatprep.subr.mxu0 0.0
      %222 = vmatpush2.msra.mxu0 0.0
      %223 = vmatprep.subr.mxu0 0.0
      %224 = vmatpush2.msra.mxu0 0.0
      %225 = vmatprep.subr.mxu0 0.0
      %226 = vmatpush2.msra.mxu0 0.0
      %227 = vmatprep.subr.mxu0 0.0
      %228 = vmatpush2.msra.mxu0 0.0
      %229 = vmatprep.subr.mxu0 0.0
      %230 = vmatpush2.msra.mxu0 0.0
      %231 = vmatprep.subr.mxu0 0.0
      %232 = vmatpush2.msra.mxu0 0.0
      %233 = vmatprep.subr.mxu0 0.0
      %234 = vmatpush2.msra.mxu0 0.0
      %235 = vmatprep.subr.mxu0 0.0
      %236 = vmatpush2.msra.mxu0 0.0
      %237 = vmatprep.subr.mxu0 0.0
      %238 = vmatpush2.msra.mxu0 0.0
      %239 = vmatprep.subr.mxu0 0.0
      %240 = vmatpush2.msra.mxu0 0.0
      %241 = vmatprep.subr.mxu0 0.0
      %242 = vmatpush2.msra.mxu0 0.0
      %243 = vmatprep.subr.mxu0 0.0
      %244 = vmatpush2.msra.mxu0 0.0
      %245 = vmatprep.subr.mxu0 0.0
      %246 = vmatpush2.msra.mxu0 0.0
      %247 = vmatprep.subr.mxu0 0.0
      %248 = vmatpush2.msra.mxu0 0.0
      %249 = vmatprep.subr.mxu0 0.0
      %250 = vmatpush2.msra.mxu0 0.0
      %251 = vmatprep.subr.mxu0 0.0
      %252 = vmatpush2.msra.mxu0 0.0
      %253 = vmatprep.mubr.f32.mxu0 0.0
      %254 = vmatmul.mubr.f32.gmra.mxu0 %v183
      %v255 = vpop.f32.mrf.mxu0
      %v256 = vadd.f32 0.0, %v255
      %v257 = vpop.f32.mrf.mxu0
      %258 = vdwg.mxu0
      %v260 = vsel %vm181, %v180, 0
      %262 = vmatprep.subr.mxu0 0.0
      %263 = vmatpush1.msra.mxu0 0.0
      %264 = vmatprep.subr.mxu0 0.0
      %265 = vmatpush1.msra.mxu0 0.0
      %266 = vmatprep.subr.mxu0 0.0
      %267 = vmatpush1.msra.mxu0 0.0
      %268 = vmatprep.subr.mxu0 0.0
      %269 = vmatpush1.msra.mxu0 0.0
      %270 = vmatprep.subr.mxu0 0.0
      %271 = vmatpush1.msra.mxu0 0.0
      %272 = vmatprep.subr.mxu0 0.0
      %273 = vmatpush1.msra.mxu0 0.0
      %274 = vmatprep.subr.mxu0 0.0
      %275 = vmatpush1.msra.mxu0 0.0
      %276 = vmatprep.subr.mxu0 0.0
      %277 = vmatpush1.msra.mxu0 0.0
      %278 = vmatprep.subr.mxu0 0.0
      %279 = vmatpush1.msra.mxu0 0.0
      %280 = vmatprep.subr.mxu0 0.0
      %281 = vmatpush1.msra.mxu0 0.0
      %282 = vmatprep.subr.mxu0 0.0
      %283 = vmatpush1.msra.mxu0 0.0
      %284 = vmatprep.subr.mxu0 0.0
      %285 = vmatpush1.msra.mxu0 0.0
      %286 = vmatprep.subr.mxu0 0.0
      %287 = vmatpush1.msra.mxu0 0.0
      %288 = vmatprep.subr.mxu0 0.0
      %289 = vmatpush1.msra.mxu0 0.0
      %290 = vmatprep.subr.mxu0 0.0
      %291 = vmatpush1.msra.mxu0 0.0
      %292 = vmatprep.subr.mxu0 0.0
      %293 = vmatpush1.msra.mxu0 %v187
      %294 = vmatprep.subr.mxu0 0.0
      %295 = vmatpush2.msra.mxu0 0.0
      %296 = vmatprep.subr.mxu0 0.0
      %297 = vmatpush2.msra.mxu0 0.0
      %298 = vmatprep.subr.mxu0 0.0
      %299 = vmatpush2.msra.mxu0 0.0
      %300 = vmatprep.subr.mxu0 0.0
      %301 = vmatpush2.msra.mxu0 0.0
      %302 = vmatprep.subr.mxu0 0.0
      %303 = vmatpush2.msra.mxu0 0.0
      %304 = vmatprep.subr.mxu0 0.0
      %305 = vmatpush2.msra.mxu0 0.0
      %306 = vmatprep.subr.mxu0 0.0
      %307 = vmatpush2.msra.mxu0 0.0
      %308 = vmatprep.subr.mxu0 0.0
      %309 = vmatpush2.msra.mxu0 0.0
      %310 = vmatprep.subr.mxu0 0.0
      %311 = vmatpush2.msra.mxu0 0.0
      %312 = vmatprep.subr.mxu0 0.0
      %313 = vmatpush2.msra.mxu0 0.0
      %314 = vmatprep.subr.mxu0 0.0
      %315 = vmatpush2.msra.mxu0 0.0
      %316 = vmatprep.subr.mxu0 0.0
      %317 = vmatpush2.msra.mxu0 0.0
      %318 = vmatprep.subr.mxu0 0.0
      %319 = vmatpush2.msra.mxu0 0.0
      %320 = vmatprep.subr.mxu0 0.0
      %321 = vmatpush2.msra.mxu0 0.0
      %322 = vmatprep.subr.mxu0 0.0
      %323 = vmatpush2.msra.mxu0 0.0
      %324 = vmatprep.subr.mxu0 0.0
      %325 = vmatpush2.msra.mxu0 0.0
      %326 = vmatprep.mubr.f32.mxu0 0.0
      %327 = vmatmul.mubr.f32.gmra.mxu0 %v260
      %v328 = vpop.f32.mrf.mxu0
      %v329 = vadd.f32 0.0, %v328
      %v330 = vpop.f32.mrf.mxu0
      %331 = vdwg.mxu0
      %v332 = vlaneseq
      %v333 = vshrl.u32 %v332, 7
      %v334 = vsub.s32 2, %v333
      %v335 = vrot.slane %v167, %v334
      %v336 = vmul.f32 %v335, %v166
      %v337 = vlaneseq
      %v338 = vshrl.u32 %v337, 7
      %v339 = vsub.s32 1, %v338
      %v340 = vrot.slane %v167, %v339
      %v341 = vmul.f32 %v340, %v256
      %v342 = vadd.f32 %v336, %v341
      %v343 = vlaneseq
      %v344 = vshrl.u32 %v343, 7
      %v345 = vsub.s32 0, %v344
      %v346 = vrot.slane %v167, %v345
      %v347 = vmul.f32 %v346, %v329
      %v348 = vadd.f32 %v342, %v347
      %v350 = vlaneseq
      %v351 = vshrl.u32 %v350, 7
      %v352 = vsub.s32 0, %v351
      %v353 = vrot.slane %v168, %v352
      %v355 = vadd.f32 %v348, %v353
      %357 = vrot.lane.b32.xlu0 %v355, 120
      %v358 = vpop.permute.xlu0 %357
      %359 = vrot.lane.b32.xlu0 %v355, 112
      %v360 = vpop.permute.xlu0 %359
      %361 = vrot.lane.b32.xlu0 %v355, 104
      %v362 = vpop.permute.xlu0 %361
      %363 = vrot.lane.b32.xlu0 %v355, 96
      %v364 = vpop.permute.xlu0 %363
      %vm365 = vcmask 64512
      %v366 = vsel %vm365, %v355, 0
      %v368 = vsel %vm365, %v364, 0
      %370 = vmatprep.subr.mxu0 0.0
      %371 = vmatpush1.xpose.msra.mxu0 0.0
      %372 = vmatprep.subr.mxu0 0.0
      %373 = vmatpush1.xpose.msra.mxu0 0.0
      %374 = vmatprep.subr.mxu0 0.0
      %375 = vmatpush1.xpose.msra.mxu0 0.0
      %376 = vmatprep.subr.mxu0 0.0
      %377 = vmatpush1.xpose.msra.mxu0 0.0
      %378 = vmatprep.subr.mxu0 0.0
      %379 = vmatpush1.xpose.msra.mxu0 0.0
      %380 = vmatprep.subr.mxu0 0.0
      %381 = vmatpush1.xpose.msra.mxu0 0.0
      %382 = vmatprep.subr.mxu0 0.0
      %383 = vmatpush1.xpose.msra.mxu0 0.0
      %384 = vmatprep.subr.mxu0 0.0
      %385 = vmatpush1.xpose.msra.mxu0 0.0
      %386 = vmatprep.subr.mxu0 0.0
      %387 = vmatpush1.xpose.msra.mxu0 0.0
      %388 = vmatprep.subr.mxu0 0.0
      %389 = vmatpush1.xpose.msra.mxu0 0.0
      %390 = vmatprep.subr.mxu0 0.0
      %391 = vmatpush1.xpose.msra.mxu0 0.0
      %392 = vmatprep.subr.mxu0 0.0
      %393 = vmatpush1.xpose.msra.mxu0 0.0
      %394 = vmatprep.subr.mxu0 0.0
      %395 = vmatpush1.xpose.msra.mxu0 0.0
      %396 = vmatprep.subr.mxu0 0.0
      %397 = vmatpush1.xpose.msra.mxu0 0.0
      %398 = vmatprep.subr.mxu0 0.0
      %399 = vmatpush1.xpose.msra.mxu0 0.0
      %400 = vmatprep.subr.mxu0 0.0
      %401 = vmatpush1.xpose.msra.mxu0 %v368
      %402 = vmatprep.subr.mxu0 0.0
      %403 = vmatpush2.xpose.msra.mxu0 0.0
      %404 = vmatprep.subr.mxu0 0.0
      %405 = vmatpush2.xpose.msra.mxu0 0.0
      %406 = vmatprep.subr.mxu0 0.0
      %407 = vmatpush2.xpose.msra.mxu0 0.0
      %408 = vmatprep.subr.mxu0 0.0
      %409 = vmatpush2.xpose.msra.mxu0 0.0
      %410 = vmatprep.subr.mxu0 0.0
      %411 = vmatpush2.xpose.msra.mxu0 0.0
      %412 = vmatprep.subr.mxu0 0.0
      %413 = vmatpush2.xpose.msra.mxu0 0.0
      %414 = vmatprep.subr.mxu0 0.0
      %415 = vmatpush2.xpose.msra.mxu0 0.0
      %416 = vmatprep.subr.mxu0 0.0
      %417 = vmatpush2.xpose.msra.mxu0 0.0
      %418 = vmatprep.subr.mxu0 0.0
      %419 = vmatpush2.xpose.msra.mxu0 0.0
      %420 = vmatprep.subr.mxu0 0.0
      %421 = vmatpush2.xpose.msra.mxu0 0.0
      %422 = vmatprep.subr.mxu0 0.0
      %423 = vmatpush2.xpose.msra.mxu0 0.0
      %424 = vmatprep.subr.mxu0 0.0
      %425 = vmatpush2.xpose.msra.mxu0 0.0
      %426 = vmatprep.subr.mxu0 0.0
      %427 = vmatpush2.xpose.msra.mxu0 0.0
      %428 = vmatprep.subr.mxu0 0.0
      %429 = vmatpush2.xpose.msra.mxu0 0.0
      %430 = vmatprep.subr.mxu0 0.0
      %431 = vmatpush2.xpose.msra.mxu0 0.0
      %432 = vmatprep.subr.mxu0 0.0
      %433 = vmatpush2.xpose.msra.mxu0 0.0
      %434 = vmatprep.mubr.f32.mxu0 0.0
      %435 = vmatmul.mubr.f32.gmra.mxu0 %v366
      %v436 = vpop.f32.mrf.mxu0
      %v437 = vadd.f32 0.0, %v436
      %v438 = vpop.f32.mrf.mxu0
      %439 = vdwg.mxu0
      %440 = vrot.lane.b32.xlu0 %v358, 96
      %v441 = vpop.permute.xlu0 %440
      %v442 = vsel %vm365, %v358, 0
      %v444 = vsel %vm365, %v441, 0
      %446 = vmatprep.subr.mxu0 0.0
      %447 = vmatpush1.xpose.msra.mxu0 0.0
      %448 = vmatprep.subr.mxu0 0.0
      %449 = vmatpush1.xpose.msra.mxu0 0.0
      %450 = vmatprep.subr.mxu0 0.0
      %451 = vmatpush1.xpose.msra.mxu0 0.0
      %452 = vmatprep.subr.mxu0 0.0
      %453 = vmatpush1.xpose.msra.mxu0 0.0
      %454 = vmatprep.subr.mxu0 0.0
      %455 = vmatpush1.xpose.msra.mxu0 0.0
      %456 = vmatprep.subr.mxu0 0.0
      %457 = vmatpush1.xpose.msra.mxu0 0.0
      %458 = vmatprep.subr.mxu0 0.0
      %459 = vmatpush1.xpose.msra.mxu0 0.0
      %460 = vmatprep.subr.mxu0 0.0
      %461 = vmatpush1.xpose.msra.mxu0 0.0
      %462 = vmatprep.subr.mxu0 0.0
      %463 = vmatpush1.xpose.msra.mxu0 0.0
      %464 = vmatprep.subr.mxu0 0.0
      %465 = vmatpush1.xpose.msra.mxu0 0.0
      %466 = vmatprep.subr.mxu0 0.0
      %467 = vmatpush1.xpose.msra.mxu0 0.0
      %468 = vmatprep.subr.mxu0 0.0
      %469 = vmatpush1.xpose.msra.mxu0 0.0
      %470 = vmatprep.subr.mxu0 0.0
      %471 = vmatpush1.xpose.msra.mxu0 0.0
      %472 = vmatprep.subr.mxu0 0.0
      %473 = vmatpush1.xpose.msra.mxu0 0.0
      %474 = vmatprep.subr.mxu0 0.0
      %475 = vmatpush1.xpose.msra.mxu0 0.0
      %476 = vmatprep.subr.mxu0 0.0
      %477 = vmatpush1.xpose.msra.mxu0 %v444
      %478 = vmatprep.subr.mxu0 0.0
      %479 = vmatpush2.xpose.msra.mxu0 0.0
      %480 = vmatprep.subr.mxu0 0.0
      %481 = vmatpush2.xpose.msra.mxu0 0.0
      %482 = vmatprep.subr.mxu0 0.0
      %483 = vmatpush2.xpose.msra.mxu0 0.0
      %484 = vmatprep.subr.mxu0 0.0
      %485 = vmatpush2.xpose.msra.mxu0 0.0
      %486 = vmatprep.subr.mxu0 0.0
      %487 = vmatpush2.xpose.msra.mxu0 0.0
      %488 = vmatprep.subr.mxu0 0.0
      %489 = vmatpush2.xpose.msra.mxu0 0.0
      %490 = vmatprep.subr.mxu0 0.0
      %491 = vmatpush2.xpose.msra.mxu0 0.0
      %492 = vmatprep.subr.mxu0 0.0
      %493 = vmatpush2.xpose.msra.mxu0 0.0
      %494 = vmatprep.subr.mxu0 0.0
      %495 = vmatpush2.xpose.msra.mxu0 0.0
      %496 = vmatprep.subr.mxu0 0.0
      %497 = vmatpush2.xpose.msra.mxu0 0.0
      %498 = vmatprep.subr.mxu0 0.0
      %499 = vmatpush2.xpose.msra.mxu0 0.0
      %500 = vmatprep.subr.mxu0 0.0
      %501 = vmatpush2.xpose.msra.mxu0 0.0
      %502 = vmatprep.subr.mxu0 0.0
      %503 = vmatpush2.xpose.msra.mxu0 0.0
      %504 = vmatprep.subr.mxu0 0.0
      %505 = vmatpush2.xpose.msra.mxu0 0.0
      %506 = vmatprep.subr.mxu0 0.0
      %507 = vmatpush2.xpose.msra.mxu0 0.0
      %508 = vmatprep.subr.mxu0 0.0
      %509 = vmatpush2.xpose.msra.mxu0 0.0
      %510 = vmatprep.mubr.f32.mxu0 0.0
      %511 = vmatmul.mubr.f32.gmra.mxu0 %v442
      %v512 = vpop.f32.mrf.mxu0
      %v513 = vadd.f32 0.0, %v512
      %v514 = vpop.f32.mrf.mxu0
      %515 = vdwg.mxu0
      %516 = vrot.lane.b32.xlu0 %v360, 96
      %v517 = vpop.permute.xlu0 %516
      %v518 = vsel %vm365, %v360, 0
      %v520 = vsel %vm365, %v517, 0
      %522 = vmatprep.subr.mxu0 0.0
      %523 = vmatpush1.xpose.msra.mxu0 0.0
      %524 = vmatprep.subr.mxu0 0.0
      %525 = vmatpush1.xpose.msra.mxu0 0.0
      %526 = vmatprep.subr.mxu0 0.0
      %527 = vmatpush1.xpose.msra.mxu0 0.0
      %528 = vmatprep.subr.mxu0 0.0
      %529 = vmatpush1.xpose.msra.mxu0 0.0
      %530 = vmatprep.subr.mxu0 0.0
      %531 = vmatpush1.xpose.msra.mxu0 0.0
      %532 = vmatprep.subr.mxu0 0.0
      %533 = vmatpush1.xpose.msra.mxu0 0.0
      %534 = vmatprep.subr.mxu0 0.0
      %535 = vmatpush1.xpose.msra.mxu0 0.0
      %536 = vmatprep.subr.mxu0 0.0
      %537 = vmatpush1.xpose.msra.mxu0 0.0
      %538 = vmatprep.subr.mxu0 0.0
      %539 = vmatpush1.xpose.msra.mxu0 0.0
      %540 = vmatprep.subr.mxu0 0.0
      %541 = vmatpush1.xpose.msra.mxu0 0.0
      %542 = vmatprep.subr.mxu0 0.0
      %543 = vmatpush1.xpose.msra.mxu0 0.0
      %544 = vmatprep.subr.mxu0 0.0
      %545 = vmatpush1.xpose.msra.mxu0 0.0
      %546 = vmatprep.subr.mxu0 0.0
      %547 = vmatpush1.xpose.msra.mxu0 0.0
      %548 = vmatprep.subr.mxu0 0.0
      %549 = vmatpush1.xpose.msra.mxu0 0.0
      %550 = vmatprep.subr.mxu0 0.0
      %551 = vmatpush1.xpose.msra.mxu0 0.0
      %552 = vmatprep.subr.mxu0 0.0
      %553 = vmatpush1.xpose.msra.mxu0 %v520
      %554 = vmatprep.subr.mxu0 0.0
      %555 = vmatpush2.xpose.msra.mxu0 0.0
      %556 = vmatprep.subr.mxu0 0.0
      %557 = vmatpush2.xpose.msra.mxu0 0.0
      %558 = vmatprep.subr.mxu0 0.0
      %559 = vmatpush2.xpose.msra.mxu0 0.0
      %560 = vmatprep.subr.mxu0 0.0
      %561 = vmatpush2.xpose.msra.mxu0 0.0
      %562 = vmatprep.subr.mxu0 0.0
      %563 = vmatpush2.xpose.msra.mxu0 0.0
      %564 = vmatprep.subr.mxu0 0.0
      %565 = vmatpush2.xpose.msra.mxu0 0.0
      %566 = vmatprep.subr.mxu0 0.0
      %567 = vmatpush2.xpose.msra.mxu0 0.0
      %568 = vmatprep.subr.mxu0 0.0
      %569 = vmatpush2.xpose.msra.mxu0 0.0
      %570 = vmatprep.subr.mxu0 0.0
      %571 = vmatpush2.xpose.msra.mxu0 0.0
      %572 = vmatprep.subr.mxu0 0.0
      %573 = vmatpush2.xpose.msra.mxu0 0.0
      %574 = vmatprep.subr.mxu0 0.0
      %575 = vmatpush2.xpose.msra.mxu0 0.0
      %576 = vmatprep.subr.mxu0 0.0
      %577 = vmatpush2.xpose.msra.mxu0 0.0
      %578 = vmatprep.subr.mxu0 0.0
      %579 = vmatpush2.xpose.msra.mxu0 0.0
      %580 = vmatprep.subr.mxu0 0.0
      %581 = vmatpush2.xpose.msra.mxu0 0.0
      %582 = vmatprep.subr.mxu0 0.0
      %583 = vmatpush2.xpose.msra.mxu0 0.0
      %584 = vmatprep.subr.mxu0 0.0
      %585 = vmatpush2.xpose.msra.mxu0 0.0
      %586 = vmatprep.mubr.f32.mxu0 0.0
      %587 = vmatmul.mubr.f32.gmra.mxu0 %v518
      %v588 = vpop.f32.mrf.mxu0
      %v589 = vadd.f32 0.0, %v588
      %v590 = vpop.f32.mrf.mxu0
      %591 = vdwg.mxu0
      %592 = vrot.lane.b32.xlu0 %v362, 96
      %v593 = vpop.permute.xlu0 %592
      %v594 = vsel %vm365, %v362, 0
      %v596 = vsel %vm365, %v593, 0
      %598 = vmatprep.subr.mxu0 0.0
      %599 = vmatpush1.xpose.msra.mxu0 0.0
      %600 = vmatprep.subr.mxu0 0.0
      %601 = vmatpush1.xpose.msra.mxu0 0.0
      %602 = vmatprep.subr.mxu0 0.0
      %603 = vmatpush1.xpose.msra.mxu0 0.0
      %604 = vmatprep.subr.mxu0 0.0
      %605 = vmatpush1.xpose.msra.mxu0 0.0
      %606 = vmatprep.subr.mxu0 0.0
      %607 = vmatpush1.xpose.msra.mxu0 0.0
      %608 = vmatprep.subr.mxu0 0.0
      %609 = vmatpush1.xpose.msra.mxu0 0.0
      %610 = vmatprep.subr.mxu0 0.0
      %611 = vmatpush1.xpose.msra.mxu0 0.0
      %612 = vmatprep.subr.mxu0 0.0
      %613 = vmatpush1.xpose.msra.mxu0 0.0
      %614 = vmatprep.subr.mxu0 0.0
      %615 = vmatpush1.xpose.msra.mxu0 0.0
      %616 = vmatprep.subr.mxu0 0.0
      %617 = vmatpush1.xpose.msra.mxu0 0.0
      %618 = vmatprep.subr.mxu0 0.0
      %619 = vmatpush1.xpose.msra.mxu0 0.0
      %620 = vmatprep.subr.mxu0 0.0
      %621 = vmatpush1.xpose.msra.mxu0 0.0
      %622 = vmatprep.subr.mxu0 0.0
      %623 = vmatpush1.xpose.msra.mxu0 0.0
      %624 = vmatprep.subr.mxu0 0.0
      %625 = vmatpush1.xpose.msra.mxu0 0.0
      %626 = vmatprep.subr.mxu0 0.0
      %627 = vmatpush1.xpose.msra.mxu0 0.0
      %628 = vmatprep.subr.mxu0 0.0
      %629 = vmatpush1.xpose.msra.mxu0 %v596
      %630 = vmatprep.subr.mxu0 0.0
      %631 = vmatpush2.xpose.msra.mxu0 0.0
      %632 = vmatprep.subr.mxu0 0.0
      %633 = vmatpush2.xpose.msra.mxu0 0.0
      %634 = vmatprep.subr.mxu0 0.0
      %635 = vmatpush2.xpose.msra.mxu0 0.0
      %636 = vmatprep.subr.mxu0 0.0
      %637 = vmatpush2.xpose.msra.mxu0 0.0
      %638 = vmatprep.subr.mxu0 0.0
      %639 = vmatpush2.xpose.msra.mxu0 0.0
      %640 = vmatprep.subr.mxu0 0.0
      %641 = vmatpush2.xpose.msra.mxu0 0.0
      %642 = vmatprep.subr.mxu0 0.0
      %643 = vmatpush2.xpose.msra.mxu0 0.0
      %644 = vmatprep.subr.mxu0 0.0
      %645 = vmatpush2.xpose.msra.mxu0 0.0
      %646 = vmatprep.subr.mxu0 0.0
      %647 = vmatpush2.xpose.msra.mxu0 0.0
      %648 = vmatprep.subr.mxu0 0.0
      %649 = vmatpush2.xpose.msra.mxu0 0.0
      %650 = vmatprep.subr.mxu0 0.0
      %651 = vmatpush2.xpose.msra.mxu0 0.0
      %652 = vmatprep.subr.mxu0 0.0
      %653 = vmatpush2.xpose.msra.mxu0 0.0
      %654 = vmatprep.subr.mxu0 0.0
      %655 = vmatpush2.xpose.msra.mxu0 0.0
      %656 = vmatprep.subr.mxu0 0.0
      %657 = vmatpush2.xpose.msra.mxu0 0.0
      %658 = vmatprep.subr.mxu0 0.0
      %659 = vmatpush2.xpose.msra.mxu0 0.0
      %660 = vmatprep.subr.mxu0 0.0
      %661 = vmatpush2.xpose.msra.mxu0 0.0
      %662 = vmatprep.mubr.f32.mxu0 0.0
      %663 = vmatmul.mubr.f32.gmra.mxu0 %v594
      %v664 = vpop.f32.mrf.mxu0
      %v665 = vadd.f32 0.0, %v664
      %v666 = vpop.f32.mrf.mxu0
      %667 = vdwg.mxu0
      %v668 = vmul.f32 %v437, 0.35355338
      %v669 = vmul.f32 %v513, 0.35355338
      %v670 = vmul.f32 %v589, 0.35355338
      %v671 = vmul.f32 %v665, 0.35355338
      %vm672 = vcmask 46080
      %v673 = vsel %vm672, %v668, -inf
      %674 = vmax.xlane.f32.xlu0 %v673
      %v675 = vpop.xlane.xlu0 %674
      %v676 = vsel %vm672, %v669, -inf
      %677 = vmax.xlane.f32.xlu0 %v676
      %v678 = vpop.xlane.xlu0 %677
      %v679 = vsel %vm672, %v670, -inf
      %680 = vmax.xlane.f32.xlu0 %v679
      %v681 = vpop.xlane.xlu0 %680
      %v682 = vsel %vm672, %v671, -inf
      %683 = vmax.xlane.f32.xlu0 %v682
      %v684 = vpop.xlane.xlu0 %683
      %v685 = vsub.f32 %v668, %v675
      %v686 = vsub.f32 %v669, %v678
      %v687 = vsub.f32 %v670, %v681
      %v688 = vsub.f32 %v671, %v684
      %v689 = vmul.f32 %v685, 1.442695
      %v690 = vpow.pop %v689
      %v691 = vmul.f32 %v686, 1.442695
      %v692 = vpow.pop %v691
      %v693 = vmul.f32 %v687, 1.442695
      %v694 = vpow.pop %v693
      %v695 = vmul.f32 %v688, 1.442695
      %v696 = vpow.pop %v695
      %v697 = vsel %vm672, %v690, 0.0
      %698 = vadd.xlane.f32.xlu0 %v697
      %v699 = vpop.xlane.xlu0 %698
      %v700 = vsel %vm672, %v692, 0.0
      %701 = vadd.xlane.f32.xlu0 %v700
      %v702 = vpop.xlane.xlu0 %701
      %v703 = vsel %vm672, %v694, 0.0
      %704 = vadd.xlane.f32.xlu0 %v703
      %v705 = vpop.xlane.xlu0 %704
      %v706 = vsel %vm672, %v696, 0.0
      %707 = vadd.xlane.f32.xlu0 %v706
      %v708 = vpop.xlane.xlu0 %707
      %709 = vrot.lane.b32.xlu0 %v355, 64
      %v710 = vpop.permute.xlu0 %709
      %v712 = vsel %vm181, %v690, 0
      %v714 = vsel %vm185, %v710, 0
      %716 = vmatprep.subr.mxu0 0.0
      %717 = vmatpush1.msra.mxu0 0.0
      %718 = vmatprep.subr.mxu0 0.0
      %719 = vmatpush1.msra.mxu0 0.0
      %720 = vmatprep.subr.mxu0 0.0
      %721 = vmatpush1.msra.mxu0 0.0
      %722 = vmatprep.subr.mxu0 0.0
      %723 = vmatpush1.msra.mxu0 0.0
      %724 = vmatprep.subr.mxu0 0.0
      %725 = vmatpush1.msra.mxu0 0.0
      %726 = vmatprep.subr.mxu0 0.0
      %727 = vmatpush1.msra.mxu0 0.0
      %728 = vmatprep.subr.mxu0 0.0
      %729 = vmatpush1.msra.mxu0 0.0
      %730 = vmatprep.subr.mxu0 0.0
      %731 = vmatpush1.msra.mxu0 0.0
      %732 = vmatprep.subr.mxu0 0.0
      %733 = vmatpush1.msra.mxu0 0.0
      %734 = vmatprep.subr.mxu0 0.0
      %735 = vmatpush1.msra.mxu0 0.0
      %736 = vmatprep.subr.mxu0 0.0
      %737 = vmatpush1.msra.mxu0 0.0
      %738 = vmatprep.subr.mxu0 0.0
      %739 = vmatpush1.msra.mxu0 0.0
      %740 = vmatprep.subr.mxu0 0.0
      %741 = vmatpush1.msra.mxu0 0.0
      %742 = vmatprep.subr.mxu0 0.0
      %743 = vmatpush1.msra.mxu0 0.0
      %744 = vmatprep.subr.mxu0 0.0
      %745 = vmatpush1.msra.mxu0 0.0
      %746 = vmatprep.subr.mxu0 0.0
      %747 = vmatpush1.msra.mxu0 %v714
      %748 = vmatprep.subr.mxu0 0.0
      %749 = vmatpush2.msra.mxu0 0.0
      %750 = vmatprep.subr.mxu0 0.0
      %751 = vmatpush2.msra.mxu0 0.0
      %752 = vmatprep.subr.mxu0 0.0
      %753 = vmatpush2.msra.mxu0 0.0
      %754 = vmatprep.subr.mxu0 0.0
      %755 = vmatpush2.msra.mxu0 0.0
      %756 = vmatprep.subr.mxu0 0.0
      %757 = vmatpush2.msra.mxu0 0.0
      %758 = vmatprep.subr.mxu0 0.0
      %759 = vmatpush2.msra.mxu0 0.0
      %760 = vmatprep.subr.mxu0 0.0
      %761 = vmatpush2.msra.mxu0 0.0
      %762 = vmatprep.subr.mxu0 0.0
      %763 = vmatpush2.msra.mxu0 0.0
      %764 = vmatprep.subr.mxu0 0.0
      %765 = vmatpush2.msra.mxu0 0.0
      %766 = vmatprep.subr.mxu0 0.0
      %767 = vmatpush2.msra.mxu0 0.0
      %768 = vmatprep.subr.mxu0 0.0
      %769 = vmatpush2.msra.mxu0 0.0
      %770 = vmatprep.subr.mxu0 0.0
      %771 = vmatpush2.msra.mxu0 0.0
      %772 = vmatprep.subr.mxu0 0.0
      %773 = vmatpush2.msra.mxu0 0.0
      %774 = vmatprep.subr.mxu0 0.0
      %775 = vmatpush2.msra.mxu0 0.0
      %776 = vmatprep.subr.mxu0 0.0
      %777 = vmatpush2.msra.mxu0 0.0
      %778 = vmatprep.subr.mxu0 0.0
      %779 = vmatpush2.msra.mxu0 0.0
      %780 = vmatprep.mubr.f32.mxu0 0.0
      %781 = vmatmul.mubr.f32.gmra.mxu0 %v712
      %v782 = vpop.f32.mrf.mxu0
      %v783 = vadd.f32 0.0, %v782
      %v784 = vpop.f32.mrf.mxu0
      %785 = vdwg.mxu0
      %786 = vrot.lane.b32.xlu0 %v358, 64
      %v787 = vpop.permute.xlu0 %786
      %v789 = vsel %vm181, %v692, 0
      %v791 = vsel %vm185, %v787, 0
      %793 = vmatprep.subr.mxu0 0.0
      %794 = vmatpush1.msra.mxu0 0.0
      %795 = vmatprep.subr.mxu0 0.0
      %796 = vmatpush1.msra.mxu0 0.0
      %797 = vmatprep.subr.mxu0 0.0
      %798 = vmatpush1.msra.mxu0 0.0
      %799 = vmatprep.subr.mxu0 0.0
      %800 = vmatpush1.msra.mxu0 0.0
      %801 = vmatprep.subr.mxu0 0.0
      %802 = vmatpush1.msra.mxu0 0.0
      %803 = vmatprep.subr.mxu0 0.0
      %804 = vmatpush1.msra.mxu0 0.0
      %805 = vmatprep.subr.mxu0 0.0
      %806 = vmatpush1.msra.mxu0 0.0
      %807 = vmatprep.subr.mxu0 0.0
      %808 = vmatpush1.msra.mxu0 0.0
      %809 = vmatprep.subr.mxu0 0.0
      %810 = vmatpush1.msra.mxu0 0.0
      %811 = vmatprep.subr.mxu0 0.0
      %812 = vmatpush1.msra.mxu0 0.0
      %813 = vmatprep.subr.mxu0 0.0
      %814 = vmatpush1.msra.mxu0 0.0
      %815 = vmatprep.subr.mxu0 0.0
      %816 = vmatpush1.msra.mxu0 0.0
      %817 = vmatprep.subr.mxu0 0.0
      %818 = vmatpush1.msra.mxu0 0.0
      %819 = vmatprep.subr.mxu0 0.0
      %820 = vmatpush1.msra.mxu0 0.0
      %821 = vmatprep.subr.mxu0 0.0
      %822 = vmatpush1.msra.mxu0 0.0
      %823 = vmatprep.subr.mxu0 0.0
      %824 = vmatpush1.msra.mxu0 %v791
      %825 = vmatprep.subr.mxu0 0.0
      %826 = vmatpush2.msra.mxu0 0.0
      %827 = vmatprep.subr.mxu0 0.0
      %828 = vmatpush2.msra.mxu0 0.0
      %829 = vmatprep.subr.mxu0 0.0
      %830 = vmatpush2.msra.mxu0 0.0
      %831 = vmatprep.subr.mxu0 0.0
      %832 = vmatpush2.msra.mxu0 0.0
      %833 = vmatprep.subr.mxu0 0.0
      %834 = vmatpush2.msra.mxu0 0.0
      %835 = vmatprep.subr.mxu0 0.0
      %836 = vmatpush2.msra.mxu0 0.0
      %837 = vmatprep.subr.mxu0 0.0
      %838 = vmatpush2.msra.mxu0 0.0
      %839 = vmatprep.subr.mxu0 0.0
      %840 = vmatpush2.msra.mxu0 0.0
      %841 = vmatprep.subr.mxu0 0.0
      %842 = vmatpush2.msra.mxu0 0.0
      %843 = vmatprep.subr.mxu0 0.0
      %844 = vmatpush2.msra.mxu0 0.0
      %845 = vmatprep.subr.mxu0 0.0
      %846 = vmatpush2.msra.mxu0 0.0
      %847 = vmatprep.subr.mxu0 0.0
      %848 = vmatpush2.msra.mxu0 0.0
      %849 = vmatprep.subr.mxu0 0.0
      %850 = vmatpush2.msra.mxu0 0.0
      %851 = vmatprep.subr.mxu0 0.0
      %852 = vmatpush2.msra.mxu0 0.0
      %853 = vmatprep.subr.mxu0 0.0
      %854 = vmatpush2.msra.mxu0 0.0
      %855 = vmatprep.subr.mxu0 0.0
      %856 = vmatpush2.msra.mxu0 0.0
      %857 = vmatprep.mubr.f32.mxu0 0.0
      %858 = vmatmul.mubr.f32.gmra.mxu0 %v789
      %v859 = vpop.f32.mrf.mxu0
      %v860 = vadd.f32 0.0, %v859
      %v861 = vpop.f32.mrf.mxu0
      %862 = vdwg.mxu0
      %863 = vrot.lane.b32.xlu0 %v360, 64
      %v864 = vpop.permute.xlu0 %863
      %v866 = vsel %vm181, %v694, 0
      %v868 = vsel %vm185, %v864, 0
      %870 = vmatprep.subr.mxu0 0.0
      %871 = vmatpush1.msra.mxu0 0.0
      %872 = vmatprep.subr.mxu0 0.0
      %873 = vmatpush1.msra.mxu0 0.0
      %874 = vmatprep.subr.mxu0 0.0
      %875 = vmatpush1.msra.mxu0 0.0
      %876 = vmatprep.subr.mxu0 0.0
      %877 = vmatpush1.msra.mxu0 0.0
      %878 = vmatprep.subr.mxu0 0.0
      %879 = vmatpush1.msra.mxu0 0.0
      %880 = vmatprep.subr.mxu0 0.0
      %881 = vmatpush1.msra.mxu0 0.0
      %882 = vmatprep.subr.mxu0 0.0
      %883 = vmatpush1.msra.mxu0 0.0
      %884 = vmatprep.subr.mxu0 0.0
      %885 = vmatpush1.msra.mxu0 0.0
      %886 = vmatprep.subr.mxu0 0.0
      %887 = vmatpush1.msra.mxu0 0.0
      %888 = vmatprep.subr.mxu0 0.0
      %889 = vmatpush1.msra.mxu0 0.0
      %890 = vmatprep.subr.mxu0 0.0
      %891 = vmatpush1.msra.mxu0 0.0
      %892 = vmatprep.subr.mxu0 0.0
      %893 = vmatpush1.msra.mxu0 0.0
      %894 = vmatprep.subr.mxu0 0.0
      %895 = vmatpush1.msra.mxu0 0.0
      %896 = vmatprep.subr.mxu0 0.0
      %897 = vmatpush1.msra.mxu0 0.0
      %898 = vmatprep.subr.mxu0 0.0
      %899 = vmatpush1.msra.mxu0 0.0
      %900 = vmatprep.subr.mxu0 0.0
      %901 = vmatpush1.msra.mxu0 %v868
      %902 = vmatprep.subr.mxu0 0.0
      %903 = vmatpush2.msra.mxu0 0.0
      %904 = vmatprep.subr.mxu0 0.0
      %905 = vmatpush2.msra.mxu0 0.0
      %906 = vmatprep.subr.mxu0 0.0
      %907 = vmatpush2.msra.mxu0 0.0
      %908 = vmatprep.subr.mxu0 0.0
      %909 = vmatpush2.msra.mxu0 0.0
      %910 = vmatprep.subr.mxu0 0.0
      %911 = vmatpush2.msra.mxu0 0.0
      %912 = vmatprep.subr.mxu0 0.0
      %913 = vmatpush2.msra.mxu0 0.0
      %914 = vmatprep.subr.mxu0 0.0
      %915 = vmatpush2.msra.mxu0 0.0
      %916 = vmatprep.subr.mxu0 0.0
      %917 = vmatpush2.msra.mxu0 0.0
      %918 = vmatprep.subr.mxu0 0.0
      %919 = vmatpush2.msra.mxu0 0.0
      %920 = vmatprep.subr.mxu0 0.0
      %921 = vmatpush2.msra.mxu0 0.0
      %922 = vmatprep.subr.mxu0 0.0
      %923 = vmatpush2.msra.mxu0 0.0
      %924 = vmatprep.subr.mxu0 0.0
      %925 = vmatpush2.msra.mxu0 0.0
      %926 = vmatprep.subr.mxu0 0.0
      %927 = vmatpush2.msra.mxu0 0.0
      %928 = vmatprep.subr.mxu0 0.0
      %929 = vmatpush2.msra.mxu0 0.0
      %930 = vmatprep.subr.mxu0 0.0
      %931 = vmatpush2.msra.mxu0 0.0
      %932 = vmatprep.subr.mxu0 0.0
      %933 = vmatpush2.msra.mxu0 0.0
      %934 = vmatprep.mubr.f32.mxu0 0.0
      %935 = vmatmul.mubr.f32.gmra.mxu0 %v866
      %v936 = vpop.f32.mrf.mxu0
      %v937 = vadd.f32 0.0, %v936
      %v938 = vpop.f32.mrf.mxu0
      %939 = vdwg.mxu0
      %940 = vrot.lane.b32.xlu0 %v362, 64
      %v941 = vpop.permute.xlu0 %940
      %v943 = vsel %vm181, %v696, 0
      %v945 = vsel %vm185, %v941, 0
      %947 = vmatprep.subr.mxu0 0.0
      %948 = vmatpush1.msra.mxu0 0.0
      %949 = vmatprep.subr.mxu0 0.0
      %950 = vmatpush1.msra.mxu0 0.0
      %951 = vmatprep.subr.mxu0 0.0
      %952 = vmatpush1.msra.mxu0 0.0
      %953 = vmatprep.subr.mxu0 0.0
      %954 = vmatpush1.msra.mxu0 0.0
      %955 = vmatprep.subr.mxu0 0.0
      %956 = vmatpush1.msra.mxu0 0.0
      %957 = vmatprep.subr.mxu0 0.0
      %958 = vmatpush1.msra.mxu0 0.0
      %959 = vmatprep.subr.mxu0 0.0
      %960 = vmatpush1.msra.mxu0 0.0
      %961 = vmatprep.subr.mxu0 0.0
      %962 = vmatpush1.msra.mxu0 0.0
      %963 = vmatprep.subr.mxu0 0.0
      %964 = vmatpush1.msra.mxu0 0.0
      %965 = vmatprep.subr.mxu0 0.0
      %966 = vmatpush1.msra.mxu0 0.0
      %967 = vmatprep.subr.mxu0 0.0
      %968 = vmatpush1.msra.mxu0 0.0
      %969 = vmatprep.subr.mxu0 0.0
      %970 = vmatpush1.msra.mxu0 0.0
      %971 = vmatprep.subr.mxu0 0.0
      %972 = vmatpush1.msra.mxu0 0.0
      %973 = vmatprep.subr.mxu0 0.0
      %974 = vmatpush1.msra.mxu0 0.0
      %975 = vmatprep.subr.mxu0 0.0
      %976 = vmatpush1.msra.mxu0 0.0
      %977 = vmatprep.subr.mxu0 0.0
      %978 = vmatpush1.msra.mxu0 %v945
      %979 = vmatprep.subr.mxu0 0.0
      %980 = vmatpush2.msra.mxu0 0.0
      %981 = vmatprep.subr.mxu0 0.0
      %982 = vmatpush2.msra.mxu0 0.0
      %983 = vmatprep.subr.mxu0 0.0
      %984 = vmatpush2.msra.mxu0 0.0
      %985 = vmatprep.subr.mxu0 0.0
      %986 = vmatpush2.msra.mxu0 0.0
      %987 = vmatprep.subr.mxu0 0.0
      %988 = vmatpush2.msra.mxu0 0.0
      %989 = vmatprep.subr.mxu0 0.0
      %990 = vmatpush2.msra.mxu0 0.0
      %991 = vmatprep.subr.mxu0 0.0
      %992 = vmatpush2.msra.mxu0 0.0
      %993 = vmatprep.subr.mxu0 0.0
      %994 = vmatpush2.msra.mxu0 0.0
      %995 = vmatprep.subr.mxu0 0.0
      %996 = vmatpush2.msra.mxu0 0.0
      %997 = vmatprep.subr.mxu0 0.0
      %998 = vmatpush2.msra.mxu0 0.0
      %999 = vmatprep.subr.mxu0 0.0
      %1000 = vmatpush2.msra.mxu0 0.0
      %1001 = vmatprep.subr.mxu0 0.0
      %1002 = vmatpush2.msra.mxu0 0.0
      %1003 = vmatprep.subr.mxu0 0.0
      %1004 = vmatpush2.msra.mxu0 0.0
      %1005 = vmatprep.subr.mxu0 0.0
      %1006 = vmatpush2.msra.mxu0 0.0
      %1007 = vmatprep.subr.mxu0 0.0
      %1008 = vmatpush2.msra.mxu0 0.0
      %1009 = vmatprep.subr.mxu0 0.0
      %1010 = vmatpush2.msra.mxu0 0.0
      %1011 = vmatprep.mubr.f32.mxu0 0.0
      %1012 = vmatmul.mubr.f32.gmra.mxu0 %v943
      %v1013 = vpop.f32.mrf.mxu0
      %v1014 = vadd.f32 0.0, %v1013
      %v1015 = vpop.f32.mrf.mxu0
      %1016 = vdwg.mxu0
      %v1017 = vrcp.pop %v699
      %v1018 = vrcp.pop %v702
      %v1019 = vrcp.pop %v705
      %v1020 = vrcp.pop %v708
      %v1021 = vmul.f32 %v783, %v1017
      %v1022 = vmul.f32 %v860, %v1018
      %v1023 = vmul.f32 %v937, %v1019
      %v1024 = vmul.f32 %v1014, %v1020
      %vm1025 = vcmask 62464
      %1026 = vst.msk [vmem:[%s165] sm:$0x3f] %vm1025, %v1021
      %1028 = vrot.lane.b32.xlu0 %v1022, 8
      %v1029 = vpop.permute.xlu0 %1028
      %vm1031 = vcmask 128064
      %1032 = vst.msk [vmem:[%s165] sm:$0x3f] %vm1031, %v1029
      %1034 = vrot.lane.b32.xlu0 %v1023, 16
      %v1035 = vpop.permute.xlu0 %1034
      %vm1037 = vcmask 193664
      %1038 = vst.msk [vmem:[%s165] sm:$0x3f] %vm1037, %v1035
      %1040 = vrot.lane.b32.xlu0 %v1024, 24
      %v1041 = vpop.permute.xlu0 %1040
      %vm1043 = vcmask 259264
      %1044 = vst.msk [vmem:[%s165] sm:$0x3f] %vm1043, %v1041
      %p1045 = scmp.lt.s32.totalorder %s14, 1
      %s1046 = scalar_select %p1045, %s14, 1
      %s1047 = smul.addr %s1046, 8
      %s1048 = scalar_lea.vmem %s3, %s1047
      // Predicated region
      $region33: #{cross_attention_forward.41} parent=31 // pred_check
        %p1049 = pneg %p100
      $region34: #{cross_attention_forward.41} parent=31 // pred_check_branch
        %1051 = sbr.rel (%p1049) target = $region36
      $region35: #{cross_attention_forward.41} parent=31 // pred_region
        _
      $region36: #{cross_attention_forward.41} parent=31 // pred_fallthru
        _
    $region32: #{cross_attention_forward.41} parent=5 // pred_fallthru
      _
    %p1052 = scmp.le.s32.totalorder 2, %s9
    // Predicated region
    $region37: #{cross_attention_forward.41} parent=5 // pred_check
      %p1053 = pneg %p1052
    $region38: #{cross_attention_forward.41} parent=5 // pred_check_branch
      %1055 = sbr.rel (%p1053) target = $region40
    $region39: #{cross_attention_forward.41} parent=5 // pred_region
      %s1056 = ssub.s32 %s9, 2
      // Predicated region
      $region41: #{cross_attention_forward.41} parent=39 // pred_check
        %p1057 = pneg %p106
      $region42: #{cross_attention_forward.41} parent=39 // pred_check_branch
        %1059 = sbr.rel (%p1057) target = $region44
      $region43: #{cross_attention_forward.41} parent=39 // pred_region
        %p1060 = scmp.lt.s32.totalorder %s15, 1
        %s1061 = scalar_select %p1060, %s15, 1
        %s1062 = smul.addr %s1061, 8
        %s1063 = scalar_lea.vmem %s3, %s1062
      $region44: #{cross_attention_forward.41} parent=39 // pred_fallthru
        _
    $region40: #{cross_attention_forward.41} parent=5 // pred_fallthru
      _
  $region6: #{cross_attention_forward.41} parent=0 // loop_footer
    %s13 = sadd.s32 1, %s9
  $region7: #{cross_attention_forward.41} parent=0 // loop_footer_branch
    %8 = sbr.rel target = $region3
  $region8: #{cross_attention_forward.41} parent=0 // loop_exit
    _

// kernel: cross_attention_forward.43
$region0: #{cross_attention_forward.43}
  #allocation0 [shape = 'u32[]', space=smem, size = 0x4, offset = 0x4, fixed_abs, tag = 'smem constant byte address 0x4 - core index']
  #allocation1 [shape = 'u32[144,128]{1,0:T(1,128)}', space=vmem, size = 0x12000, scoped, tag = 'internal scratch']
  %s0 = inlined_call_operand.vmem [shape: f32[10,32], index: 0, kind: input, shape index: {}]
  %s1 = inlined_call_operand.vmem [shape: f32[1,32], index: 1, kind: input, shape index: {}]
  %s2 = inlined_call_operand.vmem [shape: f32[1,32], index: 2, kind: input, shape index: {}]
  %s3 = inlined_call_operand.vmem [shape: f32[10,32], index: 3, kind: output, shape index: {}]
  %s4 = sld [smem:[#allocation0]]
  $region22: #{cross_attention_forward.43} parent=0
    _
  %s6 = ssub.s32 1, %s4
  %s7 = scalar_select 0, %s6, %s4
  // Predicated region
  $region2: #{cross_attention_forward.43} parent=0 // pred_check
    _
  $region3: #{cross_attention_forward.43} parent=0 // pred_check_branch
    %9 = sbr.rel (0) target = $region5
  $region4: #{cross_attention_forward.43} parent=0 // pred_region
    _
  $region5: #{cross_attention_forward.43} parent=0 // pred_fallthru
    _
  // Predicated region
  $region6: #{cross_attention_forward.43} parent=0 // pred_check
    _
  $region7: #{cross_attention_forward.43} parent=0 // pred_check_branch
    %11 = sbr.rel (0) target = $region9
  $region8: #{cross_attention_forward.43} parent=0 // pred_region
    _
  $region9: #{cross_attention_forward.43} parent=0 // pred_fallthru
    _
  // Predicated region
  $region10: #{cross_attention_forward.43} parent=0 // pred_check
    _
  $region11: #{cross_attention_forward.43} parent=0 // pred_check_branch
    %13 = sbr.rel (0) target = $region13
  $region12: #{cross_attention_forward.43} parent=0 // pred_region
    _
  $region13: #{cross_attention_forward.43} parent=0 // pred_fallthru
    _
  %v14 = vld [vmem:[%s0] sm:$0xff]
  %v15 = vld [vmem:[%s0 + $0x8] sm:$0x3]
  %vm16 = vcmask 261120
  %v17 = vsel %vm16, %v14, 0.0
  %18 = vadd.xlane.f32.xlu0 %v17
  %v19 = vpop.xlane.xlu0 %18
  %vm20 = vcmask 254976
  %v21 = vsel %vm20, %v15, 0.0
  %22 = vadd.xlane.f32.xlu0 %v21
  %v23 = vpop.xlane.xlu0 %22
  %v24 = vrcp.pop 32.0
  %v25 = vmul.f32 %v19, %v24
  %v26 = vmul.f32 %v23, %v24
  %v27 = vsub.f32 %v14, %v25
  %v28 = vsub.f32 %v15, %v26
  %v29 = vmul.f32 %v27, %v27
  %v30 = vmul.f32 %v28, %v28
  %v31 = vsel %vm16, %v29, 0.0
  %32 = vadd.xlane.f32.xlu0 %v31
  %v33 = vpop.xlane.xlu0 %32
  %v34 = vsel %vm20, %v30, 0.0
  %35 = vadd.xlane.f32.xlu0 %v34
  %v36 = vpop.xlane.xlu0 %35
  %v37 = vmul.f32 %v33, %v24
  %v38 = vmul.f32 %v36, %v24
  %v39 = vadd.f32 %v37, 1e-05
  %v40 = vadd.f32 %v38, 1e-05
  %v41 = vrsqrt.pop %v39
  %v42 = vrsqrt.pop %v40
  %v43 = vmul.f32 %v27, %v41
  %v44 = vmul.f32 %v28, %v42
  %v45 = vld [vmem:[%s1] sm:$0x1]
  %v47 = vlaneseq
  %v48 = vshrl.u32 %v47, 7
  %v49 = vsub.s32 0, %v48
  %v50 = vrot.slane %v45, %v49
  %v52 = vmul.f32 %v43, %v50
  %v53 = vmul.f32 %v44, %v50
  %v54 = vld [vmem:[%s2] sm:$0x1]
  %v56 = vlaneseq
  %v57 = vshrl.u32 %v56, 7
  %v58 = vsub.s32 0, %v57
  %v59 = vrot.slane %v54, %v58
  %v61 = vadd.f32 %v52, %v59
  %v62 = vadd.f32 %v53, %v59
  %63 = vst.msk [vmem:[%s3] sm:$0xff] %vm16, %v61
  %64 = vst.msk [vmem:[%s3 + $0x8] sm:$0x3] %vm20, %v62
  // Predicated region
  $region14: #{cross_attention_forward.43} parent=0 // pred_check
    _
  $region15: #{cross_attention_forward.43} parent=0 // pred_check_branch
    %66 = sbr.rel (0) target = $region17
  $region16: #{cross_attention_forward.43} parent=0 // pred_region
    _
  $region17: #{cross_attention_forward.43} parent=0 // pred_fallthru
    _
  // Predicated region
  $region18: #{cross_attention_forward.43} parent=0 // pred_check
    _
  $region19: #{cross_attention_forward.43} parent=0 // pred_check_branch
    %68 = sbr.rel (0) target = $region21
  $region20: #{cross_attention_forward.43} parent=0 // pred_region
    _
  $region21: #{cross_attention_forward.43} parent=0 // pred_fallthru
    _

// kernel: cross_attention_forward.46
$region0: #{cross_attention_forward.46}
  #allocation0 [shape = 'u32[]', space=smem, size = 0x4, offset = 0x4, fixed_abs, tag = 'smem constant byte address 0x4 - core index']
  #allocation1 [shape = 'u32[144,128]{1,0:T(1,128)}', space=vmem, size = 0x12000, scoped, tag = 'internal scratch']
  #allocation2 [shape = 'f32[10,32]{1,0:T(8,128)}', space=vmem, size = 0x2000, scoped, tag = 'scratch operand']
  %s0 = inlined_call_operand.vmem [shape: f32[10,32], index: 0, kind: input, shape index: {}]
  %s1 = inlined_call_operand.vmem [shape: f32[32,32], index: 1, kind: input, shape index: {}]
  %s2 = inlined_call_operand.vmem [shape: f32[1,32], index: 2, kind: input, shape index: {}]
  %s3 = inlined_call_operand.vmem [shape: f32[10,32], index: 3, kind: output, shape index: {}]
  %s4 = sld [smem:[#allocation0]]
  $region30: #{cross_attention_forward.46} parent=0
    _
  %s6 = ssub.s32 1, %s4
  %s7 = scalar_select 0, %s6, %s4
  // Predicated region
  $region2: #{cross_attention_forward.46} parent=0 // pred_check
    _
  $region3: #{cross_attention_forward.46} parent=0 // pred_check_branch
    %9 = sbr.rel (0) target = $region5
  $region4: #{cross_attention_forward.46} parent=0 // pred_region
    _
  $region5: #{cross_attention_forward.46} parent=0 // pred_fallthru
    _
  // Predicated region
  $region6: #{cross_attention_forward.46} parent=0 // pred_check
    _
  $region7: #{cross_attention_forward.46} parent=0 // pred_check_branch
    %11 = sbr.rel (0) target = $region9
  $region8: #{cross_attention_forward.46} parent=0 // pred_region
    _
  $region9: #{cross_attention_forward.46} parent=0 // pred_fallthru
    _
  // Predicated region
  $region10: #{cross_attention_forward.46} parent=0 // pred_check
    _
  $region11: #{cross_attention_forward.46} parent=0 // pred_check_branch
    %13 = sbr.rel (0) target = $region13
  $region12: #{cross_attention_forward.46} parent=0 // pred_region
    _
  $region13: #{cross_attention_forward.46} parent=0 // pred_fallthru
    _
  %p14 = scmp.eq.s32.totalorder 0, 0
  // Predicated region
  $region14: #{cross_attention_forward.46} parent=0 // pred_check
    %p15 = pneg %p14
  $region15: #{cross_attention_forward.46} parent=0 // pred_check_branch
    %17 = sbr.rel (%p15) target = $region17
  $region16: #{cross_attention_forward.46} parent=0 // pred_region
    %vm18 = vcmask 261120
    %19 = vst.msk [vmem:[#allocation2] sm:$0xff] %vm18, 0.0
    %vm20 = vcmask 254976
    %21 = vst.msk [vmem:[#allocation2 + $0x8] sm:$0x3] %vm20, 0.0
  $region17: #{cross_attention_forward.46} parent=0 // pred_fallthru
    _
  %v22 = vld [vmem:[#allocation2] sm:$0xff]
  %v23 = vld [vmem:[#allocation2 + $0x8] sm:$0x3]
  %v24 = vld [vmem:[%s0] sm:$0xff]
  %v25 = vld [vmem:[%s0 + $0x8] sm:$0x3]
  %v26 = vld [vmem:[%s1] sm:$0xff]
  %v27 = vld [vmem:[%s1 + $0x8] sm:$0xff]
  %v28 = vld [vmem:[%s1 + $0x10] sm:$0xff]
  %v29 = vld [vmem:[%s1 + $0x18] sm:$0xff]
  %vm30 = vcmask 261120
  %v32 = vsel %vm30, %v24, 0
  %v35 = vsel %vm30, %v25, 0
  %37 = vmatprep.subr.mxu0 0.0
  %38 = vmatpush1.msra.mxu0 0.0
  %39 = vmatprep.subr.mxu0 0.0
  %40 = vmatpush1.msra.mxu0 0.0
  %41 = vmatprep.subr.mxu0 0.0
  %42 = vmatpush1.msra.mxu0 0.0
  %43 = vmatprep.subr.mxu0 0.0
  %44 = vmatpush1.msra.mxu0 0.0
  %45 = vmatprep.subr.mxu0 0.0
  %46 = vmatpush1.msra.mxu0 0.0
  %47 = vmatprep.subr.mxu0 0.0
  %48 = vmatpush1.msra.mxu0 0.0
  %49 = vmatprep.subr.mxu0 0.0
  %50 = vmatpush1.msra.mxu0 0.0
  %51 = vmatprep.subr.mxu0 0.0
  %52 = vmatpush1.msra.mxu0 0.0
  %53 = vmatprep.subr.mxu0 0.0
  %54 = vmatpush1.msra.mxu0 0.0
  %55 = vmatprep.subr.mxu0 0.0
  %56 = vmatpush1.msra.mxu0 0.0
  %57 = vmatprep.subr.mxu0 0.0
  %58 = vmatpush1.msra.mxu0 0.0
  %59 = vmatprep.subr.mxu0 0.0
  %60 = vmatpush1.msra.mxu0 0.0
  %61 = vmatprep.subr.mxu0 0.0
  %62 = vmatpush1.msra.mxu0 %v29
  %63 = vmatprep.subr.mxu0 0.0
  %64 = vmatpush1.msra.mxu0 %v28
  %65 = vmatprep.subr.mxu0 0.0
  %66 = vmatpush1.msra.mxu0 %v27
  %67 = vmatprep.subr.mxu0 0.0
  %68 = vmatpush1.msra.mxu0 %v26
  %69 = vmatprep.subr.mxu0 0.0
  %70 = vmatpush2.msra.mxu0 0.0
  %71 = vmatprep.subr.mxu0 0.0
  %72 = vmatpush2.msra.mxu0 0.0
  %73 = vmatprep.subr.mxu0 0.0
  %74 = vmatpush2.msra.mxu0 0.0
  %75 = vmatprep.subr.mxu0 0.0
  %76 = vmatpush2.msra.mxu0 0.0
  %77 = vmatprep.subr.mxu0 0.0
  %78 = vmatpush2.msra.mxu0 0.0
  %79 = vmatprep.subr.mxu0 0.0
  %80 = vmatpush2.msra.mxu0 0.0
  %81 = vmatprep.subr.mxu0 0.0
  %82 = vmatpush2.msra.mxu0 0.0
  %83 = vmatprep.subr.mxu0 0.0
  %84 = vmatpush2.msra.mxu0 0.0
  %85 = vmatprep.subr.mxu0 0.0
  %86 = vmatpush2.msra.mxu0 0.0
  %87 = vmatprep.subr.mxu0 0.0
  %88 = vmatpush2.msra.mxu0 0.0
  %89 = vmatprep.subr.mxu0 0.0
  %90 = vmatpush2.msra.mxu0 0.0
  %91 = vmatprep.subr.mxu0 0.0
  %92 = vmatpush2.msra.mxu0 0.0
  %93 = vmatprep.subr.mxu0 0.0
  %94 = vmatpush2.msra.mxu0 0.0
  %95 = vmatprep.subr.mxu0 0.0
  %96 = vmatpush2.msra.mxu0 0.0
  %97 = vmatprep.subr.mxu0 0.0
  %98 = vmatpush2.msra.mxu0 0.0
  %99 = vmatprep.subr.mxu0 0.0
  %100 = vmatpush2.msra.mxu0 0.0
  %101 = vmatprep.mubr.f32.mxu0 0.0
  %102 = vmatmul.mubr.f32.gmra.mxu0 %v32
  %v103 = vpop.f32.mrf.mxu0
  %v104 = vadd.f32 0.0, %v103
  %v105 = vpop.f32.mrf.mxu0
  %106 = vmatprep.mubr.f32.mxu0 0.0
  %107 = vmatmul.mubr.f32.gmra.mxu0 %v35
  %v108 = vpop.f32.mrf.mxu0
  %v109 = vadd.f32 0.0, %v108
  %v110 = vpop.f32.mrf.mxu0
  %111 = vdwg.mxu0
  %v112 = vadd.f32 %v22, %v104
  %v113 = vadd.f32 %v23, %v109
  %114 = vst.msk [vmem:[#allocation2] sm:$0xff] %vm30, %v112
  %vm115 = vcmask 254976
  %116 = vst.msk [vmem:[#allocation2 + $0x8] sm:$0x3] %vm115, %v113
  // Predicated region
  $region18: #{cross_attention_forward.46} parent=0 // pred_check
    %p117 = pneg %p14
  $region19: #{cross_attention_forward.46} parent=0 // pred_check_branch
    %119 = sbr.rel (%p117) target = $region21
  $region20: #{cross_attention_forward.46} parent=0 // pred_region
    %v120 = vld [vmem:[#allocation2] sm:$0xff]
    %v121 = vld [vmem:[#allocation2 + $0x8] sm:$0x3]
    %v122 = vld [vmem:[%s2] sm:$0x1]
    %v124 = vlaneseq
    %v125 = vshrl.u32 %v124, 7
    %v126 = vsub.s32 0, %v125
    %v127 = vrot.slane %v122, %v126
    %v129 = vadd.f32 %v120, %v127
    %v130 = vadd.f32 %v121, %v127
    %131 = vst.msk [vmem:[%s3] sm:$0xff] %vm30, %v129
    %132 = vst.msk [vmem:[%s3 + $0x8] sm:$0x3] %vm115, %v130
  $region21: #{cross_attention_forward.46} parent=0 // pred_fallthru
    _
  // Predicated region
  $region22: #{cross_attention_forward.46} parent=0 // pred_check
    _
  $region23: #{cross_attention_forward.46} parent=0 // pred_check_branch
    %134 = sbr.rel (0) target = $region25
  $region24: #{cross_attention_forward.46} parent=0 // pred_region
    _
  $region25: #{cross_attention_forward.46} parent=0 // pred_fallthru
    _
  // Predicated region
  $region26: #{cross_attention_forward.46} parent=0 // pred_check
    _
  $region27: #{cross_attention_forward.46} parent=0 // pred_check_branch
    %136 = sbr.rel (0) target = $region29
  $region28: #{cross_attention_forward.46} parent=0 // pred_region
    _
  $region29: #{cross_attention_forward.46} parent=0 // pred_fallthru
    _

// kernel: cross_attention_forward.45
$region0: #{cross_attention_forward.45}
  #allocation0 [shape = 'u32[]', space=smem, size = 0x4, offset = 0x4, fixed_abs, tag = 'smem constant byte address 0x4 - core index']
  #allocation1 [shape = 'u32[144,128]{1,0:T(1,128)}', space=vmem, size = 0x12000, scoped, tag = 'internal scratch']
  %s0 = inlined_call_operand.vmem [shape: f32[2,5,96], index: 0, kind: input, shape index: {}]
  %s1 = inlined_call_operand.vmem [shape: f32[3,96], index: 1, kind: input, shape index: {}]
  %s2 = inlined_call_operand.vmem [shape: f32[1,96], index: 2, kind: input, shape index: {}]
  %s3 = inlined_call_operand.vmem [shape: f32[2,5,32], index: 3, kind: output, shape index: {}]
  %s4 = sld [smem:[#allocation0]]
  $region45: #{cross_attention_forward.45} parent=0
    _
  %s6 = ssub.s32 1, %s4
  %s7 = scalar_select 0, %s6, %s4
  loop: start=0, step=1, limit=4
  $region2: #{cross_attention_forward.45} parent=0 // loop_pre_header
    _
  $region3: #{cross_attention_forward.45} parent=0 // loop_header
    %s9 = sphi 0, %s13
    %p10 = scmp.ge.s32.totalorder %s9, 4
    %s19 = sphi 0, %s21
    %s22 = sphi 0, %s19
    %s23 = sphi 0, %s22
    %s39 = sphi 0, %s23
    %s43 = sphi 0, %s43
    %s45 = sphi 0, %s43
    %s46 = sphi 0, %s45
    %s60 = sphi 0, %s46
    %s64 = sphi 0, %s64
    %s66 = sphi 0, %s64
    %s67 = sphi 0, %s66
    %s81 = sphi 0, %s67
    %s87 = sphi 0, %s89
    %s90 = sphi 0, %s87
    %s91 = sphi 0, %s90
    %s107 = sphi 0, %s91
  $region4: #{cross_attention_forward.45} parent=0 // loop_header_branch
    %12 = sbr.rel (%p10) target = $region8
  $region5: #{cross_attention_forward.45} parent=0 // loop_body
    %s14 = ssub.s32 %s9, 1
    %s15 = ssub.s32 %s9, 2
    %s16 = sadd.s32 %s9, 1
    %s17 = ssub.s32 %s9, %s16
    %p18 = scmp.eq.s32.totalorder %s17, 0
    %s20 = sadd.s32 %s19, 1
    %s21 = scalar_select %p18, %s19, %s20
    %p24 = pneg %p18
    %p25 = scmp.eq.s32.totalorder %s9, 1
    %p26 = por %p24, %p25
    %p27 = scmp.ne.s32.totalorder %s19, %s22
    %p28 = scmp.eq.s32.totalorder %s9, 0
    %p29 = por %p27, %p28
    %p30 = scmp.ne.s32.totalorder %s19, %s22
    %p31 = scmp.eq.s32.totalorder %s14, 1
    %p32 = por %p30, %p31
    %p33 = scmp.ne.s32.totalorder %s22, %s23
    %p34 = scmp.eq.s32.totalorder %s14, 0
    %p35 = por %p33, %p34
    %p36 = scmp.ne.s32.totalorder %s22, %s23
    %p37 = scmp.eq.s32.totalorder %s15, 1
    %p38 = por %p36, %p37
    %p40 = scmp.ne.s32.totalorder %s23, %s39
    %p41 = scmp.eq.s32.totalorder %s15, 0
    %p42 = por %p40, %p41
    %s44 = sadd.s32 %s43, 1
    %p47 = scmp.eq.s32.totalorder %s9, 1
    %p48 = scmp.ne.s32.totalorder %s43, %s45
    %p49 = scmp.eq.s32.totalorder %s9, 0
    %p50 = por %p48, %p49
    %p51 = scmp.ne.s32.totalorder %s43, %s45
    %p52 = scmp.eq.s32.totalorder %s14, 1
    %p53 = por %p51, %p52
    %p54 = scmp.ne.s32.totalorder %s45, %s46
    %p55 = scmp.eq.s32.totalorder %s14, 0
    %p56 = por %p54, %p55
    %p57 = scmp.ne.s32.totalorder %s45, %s46
    %p58 = scmp.eq.s32.totalorder %s15, 1
    %p59 = por %p57, %p58
    %p61 = scmp.ne.s32.totalorder %s46, %s60
    %p62 = scmp.eq.s32.totalorder %s15, 0
    %p63 = por %p61, %p62
    %s65 = sadd.s32 %s64, 1
    %p68 = scmp.eq.s32.totalorder %s9, 1
    %p69 = scmp.ne.s32.totalorder %s64, %s66
    %p70 = scmp.eq.s32.totalorder %s9, 0
    %p71 = por %p69, %p70
    %p72 = scmp.ne.s32.totalorder %s64, %s66
    %p73 = scmp.eq.s32.totalorder %s14, 1
    %p74 = por %p72, %p73
    %p75 = scmp.ne.s32.totalorder %s66, %s67
    %p76 = scmp.eq.s32.totalorder %s14, 0
    %p77 = por %p75, %p76
    %p78 = scmp.ne.s32.totalorder %s66, %s67
    %p79 = scmp.eq.s32.totalorder %s15, 1
    %p80 = por %p78, %p79
    %p82 = scmp.ne.s32.totalorder %s67, %s81
    %p83 = scmp.eq.s32.totalorder %s15, 0
    %p84 = por %p82, %p83
    %s85 = ssub.s32 %s9, %s16
    %p86 = scmp.eq.s32.totalorder %s85, 0
    %s88 = sadd.s32 %s87, 1
    %s89 = scalar_select %p86, %s87, %s88
    %p92 = pneg %p86
    %p93 = scmp.eq.s32.totalorder %s9, 1
    %p94 = por %p92, %p93
    %p95 = scmp.ne.s32.totalorder %s87, %s90
    %p96 = scmp.eq.s32.totalorder %s9, 0
    %p97 = por %p95, %p96
    %p98 = scmp.ne.s32.totalorder %s87, %s90
    %p99 = scmp.eq.s32.totalorder %s14, 1
    %p100 = por %p98, %p99
    %p101 = scmp.ne.s32.totalorder %s90, %s91
    %p102 = scmp.eq.s32.totalorder %s14, 0
    %p103 = por %p101, %p102
    %p104 = scmp.ne.s32.totalorder %s90, %s91
    %p105 = scmp.eq.s32.totalorder %s15, 1
    %p106 = por %p104, %p105
    %p108 = scmp.ne.s32.totalorder %s91, %s107
    %p109 = scmp.eq.s32.totalorder %s15, 0
    %p110 = por %p108, %p109
    %p111 = scmp.le.s32.totalorder 1, %s9
    %p112 = scmp.lt.s32.totalorder %s9, 3
    %p113 = pnand %p111, %p112
    %p114 = pneg %p113
    // Predicated region
    $region9: #{cross_attention_forward.45} parent=5 // pred_check
      _
    $region10: #{cross_attention_forward.45} parent=5 // pred_check_branch
      %116 = sbr.rel (%p113) target = $region12
    $region11: #{cross_attention_forward.45} parent=5 // pred_region
      %s117 = ssub.s32 %s9, 1
      // Predicated region
      $region13: #{cross_attention_forward.45} parent=11 // pred_check
        %p118 = pneg %p56
      $region14: #{cross_attention_forward.45} parent=11 // pred_check_branch
        %120 = sbr.rel (%p118) target = $region16
      $region15: #{cross_attention_forward.45} parent=11 // pred_region
        _
      $region16: #{cross_attention_forward.45} parent=11 // pred_fallthru
        _
      // Predicated region
      $region17: #{cross_attention_forward.45} parent=11 // pred_check
        %p121 = pneg %p77
      $region18: #{cross_attention_forward.45} parent=11 // pred_check_branch
        %123 = sbr.rel (%p121) target = $region20
      $region19: #{cross_attention_forward.45} parent=11 // pred_region
        _
      $region20: #{cross_attention_forward.45} parent=11 // pred_fallthru
        _
    $region12: #{cross_attention_forward.45} parent=5 // pred_fallthru
      _
    %p124 = scmp.lt.s32.totalorder %s9, 2
    // Predicated region
    $region21: #{cross_attention_forward.45} parent=5 // pred_check
      %p125 = pneg %p124
    $region22: #{cross_attention_forward.45} parent=5 // pred_check_branch
      %127 = sbr.rel (%p125) target = $region24
    $region23: #{cross_attention_forward.45} parent=5 // pred_region
      // Predicated region
      $region25: #{cross_attention_forward.45} parent=23 // pred_check
        %p128 = pneg %p29
      $region26: #{cross_attention_forward.45} parent=23 // pred_check_branch
        %130 = sbr.rel (%p128) target = $region28
      $region27: #{cross_attention_forward.45} parent=23 // pred_region
        %p131 = scmp.lt.s32.totalorder %s9, 1
        %s132 = scalar_select %p131, %s9, 1
        %s133 = smul.addr %s132, 8
        %s134 = scalar_lea.vmem %s0, %s133
      $region28: #{cross_attention_forward.45} parent=23 // pred_fallthru
        _
    $region24: #{cross_attention_forward.45} parent=5 // pred_fallthru
      _
    %p135 = scmp.le.s32.totalorder 1, %s9
    %p136 = scmp.lt.s32.totalorder %s9, 3
    %p137 = pnand %p135, %p136
    %p138 = pneg %p137
    // Predicated region
    $region29: #{cross_attention_forward.45} parent=5 // pred_check
      _
    $region30: #{cross_attention_forward.45} parent=5 // pred_check_branch
      %140 = sbr.rel (%p137) target = $region32
    $region31: #{cross_attention_forward.45} parent=5 // pred_region
      %s141 = ssub.s32 %s9, 1
      %p142 = scmp.lt.s32.totalorder %s14, 1
      %s143 = scalar_select %p142, %s14, 1
      %s144 = smul.addr %s143, 8
      %s145 = scalar_lea.vmem %s0, %s144
      %p146 = pneg %p35
      %p147 = pneg %p32
      %p148 = pneg %p56
      %p149 = pneg %p53
      %p150 = pneg %p77
      %p151 = pneg %p74
      %p152 = pneg %p103
      %p153 = pneg %p100
      %p154 = scmp.lt.s32.totalorder %s14, 1
      %s155 = scalar_select %p154, %s14, 1
      %s156 = smul.addr %s155, 8
      %s157 = scalar_lea.vmem %s3, %s156
      %p158 = scmp.lt.s32.totalorder %s14, 1
      %s159 = scalar_select %p158, %s14, 1
      %s160 = smul.addr %s159, 8
      %s161 = scalar_lea.vmem %s0, %s160
      %p162 = scmp.lt.s32.totalorder %s14, 1
      %s163 = scalar_select %p162, %s14, 1
      %s164 = smul.addr %s163, 8
      %s165 = scalar_lea.vmem %s3, %s164
      %v166 = vld [vmem:[%s161] sm:$0x1f]
      %v167 = vld [vmem:[%s1] sm:$0x7]
      %v168 = vld [vmem:[%s2] sm:$0x1]
      %v169 = vlaneseq
      %v170 = vshrl.u32 %v169, 7
      %v171 = vlaneseq
      %v172 = vand.u32 %v171, 127
      %v173 = vadd.s32 %v172, 1
      %vm174 = vcmp.eq.s32.totalorder %v170, %v173
      %v175 = vsel %vm174, 1, 0
      %v176 = vcvt.s32.f32 %v175
      %v177 = vadd.s32 %v172, 2
      %vm178 = vcmp.eq.s32.totalorder %v170, %v177
      %v179 = vsel %vm178, 1, 0
      %v180 = vcvt.s32.f32 %v179
      %vm181 = vcmask 39936
      %v183 = vsel %vm181, %v176, 0
      %vm185 = vcmask 1044480
      %v187 = vsel %vm185, %v166, 0
      %189 = vmatprep.subr.mxu0 0.0
      %190 = vmatpush1.msra.mxu0 0.0
      %191 = vmatprep.subr.mxu0 0.0
      %192 = vmatpush1.msra.mxu0 0.0
      %193 = vmatprep.subr.mxu0 0.0
      %194 = vmatpush1.msra.mxu0 0.0
      %195 = vmatprep.subr.mxu0 0.0
      %196 = vmatpush1.msra.mxu0 0.0
      %197 = vmatprep.subr.mxu0 0.0
      %198 = vmatpush1.msra.mxu0 0.0
      %199 = vmatprep.subr.mxu0 0.0
      %200 = vmatpush1.msra.mxu0 0.0
      %201 = vmatprep.subr.mxu0 0.0
      %202 = vmatpush1.msra.mxu0 0.0
      %203 = vmatprep.subr.mxu0 0.0
      %204 = vmatpush1.msra.mxu0 0.0
      %205 = vmatprep.subr.mxu0 0.0
      %206 = vmatpush1.msra.mxu0 0.0
      %207 = vmatprep.subr.mxu0 0.0
      %208 = vmatpush1.msra.mxu0 0.0
      %209 = vmatprep.subr.mxu0 0.0
      %210 = vmatpush1.msra.mxu0 0.0
      %211 = vmatprep.subr.mxu0 0.0
      %212 = vmatpush1.msra.mxu0 0.0
      %213 = vmatprep.subr.mxu0 0.0
      %214 = vmatpush1.msra.mxu0 0.0
      %215 = vmatprep.subr.mxu0 0.0
      %216 = vmatpush1.msra.mxu0 0.0
      %217 = vmatprep.subr.mxu0 0.0
      %218 = vmatpush1.msra.mxu0 0.0
      %219 = vmatprep.subr.mxu0 0.0
      %220 = vmatpush1.msra.mxu0 %v187
      %221 = vmatprep.subr.mxu0 0.0
      %222 = vmatpush2.msra.mxu0 0.0
      %223 = vmatprep.subr.mxu0 0.0
      %224 = vmatpush2.msra.mxu0 0.0
      %225 = vmatprep.subr.mxu0 0.0
      %226 = vmatpush2.msra.mxu0 0.0
      %227 = vmatprep.subr.mxu0 0.0
      %228 = vmatpush2.msra.mxu0 0.0
      %229 = vmatprep.subr.mxu0 0.0
      %230 = vmatpush2.msra.mxu0 0.0
      %231 = vmatprep.subr.mxu0 0.0
      %232 = vmatpush2.msra.mxu0 0.0
      %233 = vmatprep.subr.mxu0 0.0
      %234 = vmatpush2.msra.mxu0 0.0
      %235 = vmatprep.subr.mxu0 0.0
      %236 = vmatpush2.msra.mxu0 0.0
      %237 = vmatprep.subr.mxu0 0.0
      %238 = vmatpush2.msra.mxu0 0.0
      %239 = vmatprep.subr.mxu0 0.0
      %240 = vmatpush2.msra.mxu0 0.0
      %241 = vmatprep.subr.mxu0 0.0
      %242 = vmatpush2.msra.mxu0 0.0
      %243 = vmatprep.subr.mxu0 0.0
      %244 = vmatpush2.msra.mxu0 0.0
      %245 = vmatprep.subr.mxu0 0.0
      %246 = vmatpush2.msra.mxu0 0.0
      %247 = vmatprep.subr.mxu0 0.0
      %248 = vmatpush2.msra.mxu0 0.0
      %249 = vmatprep.subr.mxu0 0.0
      %250 = vmatpush2.msra.mxu0 0.0
      %251 = vmatprep.subr.mxu0 0.0
      %252 = vmatpush2.msra.mxu0 0.0
      %253 = vmatprep.mubr.f32.mxu0 0.0
      %254 = vmatmul.mubr.f32.gmra.mxu0 %v183
      %v255 = vpop.f32.mrf.mxu0
      %v256 = vadd.f32 0.0, %v255
      %v257 = vpop.f32.mrf.mxu0
      %258 = vdwg.mxu0
      %v260 = vsel %vm181, %v180, 0
      %262 = vmatprep.subr.mxu0 0.0
      %263 = vmatpush1.msra.mxu0 0.0
      %264 = vmatprep.subr.mxu0 0.0
      %265 = vmatpush1.msra.mxu0 0.0
      %266 = vmatprep.subr.mxu0 0.0
      %267 = vmatpush1.msra.mxu0 0.0
      %268 = vmatprep.subr.mxu0 0.0
      %269 = vmatpush1.msra.mxu0 0.0
      %270 = vmatprep.subr.mxu0 0.0
      %271 = vmatpush1.msra.mxu0 0.0
      %272 = vmatprep.subr.mxu0 0.0
      %273 = vmatpush1.msra.mxu0 0.0
      %274 = vmatprep.subr.mxu0 0.0
      %275 = vmatpush1.msra.mxu0 0.0
      %276 = vmatprep.subr.mxu0 0.0
      %277 = vmatpush1.msra.mxu0 0.0
      %278 = vmatprep.subr.mxu0 0.0
      %279 = vmatpush1.msra.mxu0 0.0
      %280 = vmatprep.subr.mxu0 0.0
      %281 = vmatpush1.msra.mxu0 0.0
      %282 = vmatprep.subr.mxu0 0.0
      %283 = vmatpush1.msra.mxu0 0.0
      %284 = vmatprep.subr.mxu0 0.0
      %285 = vmatpush1.msra.mxu0 0.0
      %286 = vmatprep.subr.mxu0 0.0
      %287 = vmatpush1.msra.mxu0 0.0
      %288 = vmatprep.subr.mxu0 0.0
      %289 = vmatpush1.msra.mxu0 0.0
      %290 = vmatprep.subr.mxu0 0.0
      %291 = vmatpush1.msra.mxu0 0.0
      %292 = vmatprep.subr.mxu0 0.0
      %293 = vmatpush1.msra.mxu0 %v187
      %294 = vmatprep.subr.mxu0 0.0
      %295 = vmatpush2.msra.mxu0 0.0
      %296 = vmatprep.subr.mxu0 0.0
      %297 = vmatpush2.msra.mxu0 0.0
      %298 = vmatprep.subr.mxu0 0.0
      %299 = vmatpush2.msra.mxu0 0.0
      %300 = vmatprep.subr.mxu0 0.0
      %301 = vmatpush2.msra.mxu0 0.0
      %302 = vmatprep.subr.mxu0 0.0
      %303 = vmatpush2.msra.mxu0 0.0
      %304 = vmatprep.subr.mxu0 0.0
      %305 = vmatpush2.msra.mxu0 0.0
      %306 = vmatprep.subr.mxu0 0.0
      %307 = vmatpush2.msra.mxu0 0.0
      %308 = vmatprep.subr.mxu0 0.0
      %309 = vmatpush2.msra.mxu0 0.0
      %310 = vmatprep.subr.mxu0 0.0
      %311 = vmatpush2.msra.mxu0 0.0
      %312 = vmatprep.subr.mxu0 0.0
      %313 = vmatpush2.msra.mxu0 0.0
      %314 = vmatprep.subr.mxu0 0.0
      %315 = vmatpush2.msra.mxu0 0.0
      %316 = vmatprep.subr.mxu0 0.0
      %317 = vmatpush2.msra.mxu0 0.0
      %318 = vmatprep.subr.mxu0 0.0
      %319 = vmatpush2.msra.mxu0 0.0
      %320 = vmatprep.subr.mxu0 0.0
      %321 = vmatpush2.msra.mxu0 0.0
      %322 = vmatprep.subr.mxu0 0.0
      %323 = vmatpush2.msra.mxu0 0.0
      %324 = vmatprep.subr.mxu0 0.0
      %325 = vmatpush2.msra.mxu0 0.0
      %326 = vmatprep.mubr.f32.mxu0 0.0
      %327 = vmatmul.mubr.f32.gmra.mxu0 %v260
      %v328 = vpop.f32.mrf.mxu0
      %v329 = vadd.f32 0.0, %v328
      %v330 = vpop.f32.mrf.mxu0
      %331 = vdwg.mxu0
      %v332 = vlaneseq
      %v333 = vshrl.u32 %v332, 7
      %v334 = vsub.s32 2, %v333
      %v335 = vrot.slane %v167, %v334
      %v336 = vmul.f32 %v335, %v166
      %v337 = vlaneseq
      %v338 = vshrl.u32 %v337, 7
      %v339 = vsub.s32 1, %v338
      %v340 = vrot.slane %v167, %v339
      %v341 = vmul.f32 %v340, %v256
      %v342 = vadd.f32 %v336, %v341
      %v343 = vlaneseq
      %v344 = vshrl.u32 %v343, 7
      %v345 = vsub.s32 0, %v344
      %v346 = vrot.slane %v167, %v345
      %v347 = vmul.f32 %v346, %v329
      %v348 = vadd.f32 %v342, %v347
      %v350 = vlaneseq
      %v351 = vshrl.u32 %v350, 7
      %v352 = vsub.s32 0, %v351
      %v353 = vrot.slane %v168, %v352
      %v355 = vadd.f32 %v348, %v353
      %357 = vrot.lane.b32.xlu0 %v355, 120
      %v358 = vpop.permute.xlu0 %357
      %359 = vrot.lane.b32.xlu0 %v355, 112
      %v360 = vpop.permute.xlu0 %359
      %361 = vrot.lane.b32.xlu0 %v355, 104
      %v362 = vpop.permute.xlu0 %361
      %363 = vrot.lane.b32.xlu0 %v355, 96
      %v364 = vpop.permute.xlu0 %363
      %vm365 = vcmask 64512
      %v366 = vsel %vm365, %v355, 0
      %v368 = vsel %vm365, %v364, 0
      %370 = vmatprep.subr.mxu0 0.0
      %371 = vmatpush1.xpose.msra.mxu0 0.0
      %372 = vmatprep.subr.mxu0 0.0
      %373 = vmatpush1.xpose.msra.mxu0 0.0
      %374 = vmatprep.subr.mxu0 0.0
      %375 = vmatpush1.xpose.msra.mxu0 0.0
      %376 = vmatprep.subr.mxu0 0.0
      %377 = vmatpush1.xpose.msra.mxu0 0.0
      %378 = vmatprep.subr.mxu0 0.0
      %379 = vmatpush1.xpose.msra.mxu0 0.0
      %380 = vmatprep.subr.mxu0 0.0
      %381 = vmatpush1.xpose.msra.mxu0 0.0
      %382 = vmatprep.subr.mxu0 0.0
      %383 = vmatpush1.xpose.msra.mxu0 0.0
      %384 = vmatprep.subr.mxu0 0.0
      %385 = vmatpush1.xpose.msra.mxu0 0.0
      %386 = vmatprep.subr.mxu0 0.0
      %387 = vmatpush1.xpose.msra.mxu0 0.0
      %388 = vmatprep.subr.mxu0 0.0
      %389 = vmatpush1.xpose.msra.mxu0 0.0
      %390 = vmatprep.subr.mxu0 0.0
      %391 = vmatpush1.xpose.msra.mxu0 0.0
      %392 = vmatprep.subr.mxu0 0.0
      %393 = vmatpush1.xpose.msra.mxu0 0.0
      %394 = vmatprep.subr.mxu0 0.0
      %395 = vmatpush1.xpose.msra.mxu0 0.0
      %396 = vmatprep.subr.mxu0 0.0
      %397 = vmatpush1.xpose.msra.mxu0 0.0
      %398 = vmatprep.subr.mxu0 0.0
      %399 = vmatpush1.xpose.msra.mxu0 0.0
      %400 = vmatprep.subr.mxu0 0.0
      %401 = vmatpush1.xpose.msra.mxu0 %v368
      %402 = vmatprep.subr.mxu0 0.0
      %403 = vmatpush2.xpose.msra.mxu0 0.0
      %404 = vmatprep.subr.mxu0 0.0
      %405 = vmatpush2.xpose.msra.mxu0 0.0
      %406 = vmatprep.subr.mxu0 0.0
      %407 = vmatpush2.xpose.msra.mxu0 0.0
      %408 = vmatprep.subr.mxu0 0.0
      %409 = vmatpush2.xpose.msra.mxu0 0.0
      %410 = vmatprep.subr.mxu0 0.0
      %411 = vmatpush2.xpose.msra.mxu0 0.0
      %412 = vmatprep.subr.mxu0 0.0
      %413 = vmatpush2.xpose.msra.mxu0 0.0
      %414 = vmatprep.subr.mxu0 0.0
      %415 = vmatpush2.xpose.msra.mxu0 0.0
      %416 = vmatprep.subr.mxu0 0.0
      %417 = vmatpush2.xpose.msra.mxu0 0.0
      %418 = vmatprep.subr.mxu0 0.0
      %419 = vmatpush2.xpose.msra.mxu0 0.0
      %420 = vmatprep.subr.mxu0 0.0
      %421 = vmatpush2.xpose.msra.mxu0 0.0
      %422 = vmatprep.subr.mxu0 0.0
      %423 = vmatpush2.xpose.msra.mxu0 0.0
      %424 = vmatprep.subr.mxu0 0.0
      %425 = vmatpush2.xpose.msra.mxu0 0.0
      %426 = vmatprep.subr.mxu0 0.0
      %427 = vmatpush2.xpose.msra.mxu0 0.0
      %428 = vmatprep.subr.mxu0 0.0
      %429 = vmatpush2.xpose.msra.mxu0 0.0
      %430 = vmatprep.subr.mxu0 0.0
      %431 = vmatpush2.xpose.msra.mxu0 0.0
      %432 = vmatprep.subr.mxu0 0.0
      %433 = vmatpush2.xpose.msra.mxu0 0.0
      %434 = vmatprep.mubr.f32.mxu0 0.0
      %435 = vmatmul.mubr.f32.gmra.mxu0 %v366
      %v436 = vpop.f32.mrf.mxu0
      %v437 = vadd.f32 0.0, %v436
      %v438 = vpop.f32.mrf.mxu0
      %439 = vdwg.mxu0
      %440 = vrot.lane.b32.xlu0 %v358, 96
      %v441 = vpop.permute.xlu0 %440
      %v442 = vsel %vm365, %v358, 0
      %v444 = vsel %vm365, %v441, 0
      %446 = vmatprep.subr.mxu0 0.0
      %447 = vmatpush1.xpose.msra.mxu0 0.0
      %448 = vmatprep.subr.mxu0 0.0
      %449 = vmatpush1.xpose.msra.mxu0 0.0
      %450 = vmatprep.subr.mxu0 0.0
      %451 = vmatpush1.xpose.msra.mxu0 0.0
      %452 = vmatprep.subr.mxu0 0.0
      %453 = vmatpush1.xpose.msra.mxu0 0.0
      %454 = vmatprep.subr.mxu0 0.0
      %455 = vmatpush1.xpose.msra.mxu0 0.0
      %456 = vmatprep.subr.mxu0 0.0
      %457 = vmatpush1.xpose.msra.mxu0 0.0
      %458 = vmatprep.subr.mxu0 0.0
      %459 = vmatpush1.xpose.msra.mxu0 0.0
      %460 = vmatprep.subr.mxu0 0.0
      %461 = vmatpush1.xpose.msra.mxu0 0.0
      %462 = vmatprep.subr.mxu0 0.0
      %463 = vmatpush1.xpose.msra.mxu0 0.0
      %464 = vmatprep.subr.mxu0 0.0
      %465 = vmatpush1.xpose.msra.mxu0 0.0
      %466 = vmatprep.subr.mxu0 0.0
      %467 = vmatpush1.xpose.msra.mxu0 0.0
      %468 = vmatprep.subr.mxu0 0.0
      %469 = vmatpush1.xpose.msra.mxu0 0.0
      %470 = vmatprep.subr.mxu0 0.0
      %471 = vmatpush1.xpose.msra.mxu0 0.0
      %472 = vmatprep.subr.mxu0 0.0
      %473 = vmatpush1.xpose.msra.mxu0 0.0
      %474 = vmatprep.subr.mxu0 0.0
      %475 = vmatpush1.xpose.msra.mxu0 0.0
      %476 = vmatprep.subr.mxu0 0.0
      %477 = vmatpush1.xpose.msra.mxu0 %v444
      %478 = vmatprep.subr.mxu0 0.0
      %479 = vmatpush2.xpose.msra.mxu0 0.0
      %480 = vmatprep.subr.mxu0 0.0
      %481 = vmatpush2.xpose.msra.mxu0 0.0
      %482 = vmatprep.subr.mxu0 0.0
      %483 = vmatpush2.xpose.msra.mxu0 0.0
      %484 = vmatprep.subr.mxu0 0.0
      %485 = vmatpush2.xpose.msra.mxu0 0.0
      %486 = vmatprep.subr.mxu0 0.0
      %487 = vmatpush2.xpose.msra.mxu0 0.0
      %488 = vmatprep.subr.mxu0 0.0
      %489 = vmatpush2.xpose.msra.mxu0 0.0
      %490 = vmatprep.subr.mxu0 0.0
      %491 = vmatpush2.xpose.msra.mxu0 0.0
      %492 = vmatprep.subr.mxu0 0.0
      %493 = vmatpush2.xpose.msra.mxu0 0.0
      %494 = vmatprep.subr.mxu0 0.0
      %495 = vmatpush2.xpose.msra.mxu0 0.0
      %496 = vmatprep.subr.mxu0 0.0
      %497 = vmatpush2.xpose.msra.mxu0 0.0
      %498 = vmatprep.subr.mxu0 0.0
      %499 = vmatpush2.xpose.msra.mxu0 0.0
      %500 = vmatprep.subr.mxu0 0.0
      %501 = vmatpush2.xpose.msra.mxu0 0.0
      %502 = vmatprep.subr.mxu0 0.0
      %503 = vmatpush2.xpose.msra.mxu0 0.0
      %504 = vmatprep.subr.mxu0 0.0
      %505 = vmatpush2.xpose.msra.mxu0 0.0
      %506 = vmatprep.subr.mxu0 0.0
      %507 = vmatpush2.xpose.msra.mxu0 0.0
      %508 = vmatprep.subr.mxu0 0.0
      %509 = vmatpush2.xpose.msra.mxu0 0.0
      %510 = vmatprep.mubr.f32.mxu0 0.0
      %511 = vmatmul.mubr.f32.gmra.mxu0 %v442
      %v512 = vpop.f32.mrf.mxu0
      %v513 = vadd.f32 0.0, %v512
      %v514 = vpop.f32.mrf.mxu0
      %515 = vdwg.mxu0
      %516 = vrot.lane.b32.xlu0 %v360, 96
      %v517 = vpop.permute.xlu0 %516
      %v518 = vsel %vm365, %v360, 0
      %v520 = vsel %vm365, %v517, 0
      %522 = vmatprep.subr.mxu0 0.0
      %523 = vmatpush1.xpose.msra.mxu0 0.0
      %524 = vmatprep.subr.mxu0 0.0
      %525 = vmatpush1.xpose.msra.mxu0 0.0
      %526 = vmatprep.subr.mxu0 0.0
      %527 = vmatpush1.xpose.msra.mxu0 0.0
      %528 = vmatprep.subr.mxu0 0.0
      %529 = vmatpush1.xpose.msra.mxu0 0.0
      %530 = vmatprep.subr.mxu0 0.0
      %531 = vmatpush1.xpose.msra.mxu0 0.0
      %532 = vmatprep.subr.mxu0 0.0
      %533 = vmatpush1.xpose.msra.mxu0 0.0
      %534 = vmatprep.subr.mxu0 0.0
      %535 = vmatpush1.xpose.msra.mxu0 0.0
      %536 = vmatprep.subr.mxu0 0.0
      %537 = vmatpush1.xpose.msra.mxu0 0.0
      %538 = vmatprep.subr.mxu0 0.0
      %539 = vmatpush1.xpose.msra.mxu0 0.0
      %540 = vmatprep.subr.mxu0 0.0
      %541 = vmatpush1.xpose.msra.mxu0 0.0
      %542 = vmatprep.subr.mxu0 0.0
      %543 = vmatpush1.xpose.msra.mxu0 0.0
      %544 = vmatprep.subr.mxu0 0.0
      %545 = vmatpush1.xpose.msra.mxu0 0.0
      %546 = vmatprep.subr.mxu0 0.0
      %547 = vmatpush1.xpose.msra.mxu0 0.0
      %548 = vmatprep.subr.mxu0 0.0
      %549 = vmatpush1.xpose.msra.mxu0 0.0
      %550 = vmatprep.subr.mxu0 0.0
      %551 = vmatpush1.xpose.msra.mxu0 0.0
      %552 = vmatprep.subr.mxu0 0.0
      %553 = vmatpush1.xpose.msra.mxu0 %v520
      %554 = vmatprep.subr.mxu0 0.0
      %555 = vmatpush2.xpose.msra.mxu0 0.0
      %556 = vmatprep.subr.mxu0 0.0
      %557 = vmatpush2.xpose.msra.mxu0 0.0
      %558 = vmatprep.subr.mxu0 0.0
      %559 = vmatpush2.xpose.msra.mxu0 0.0
      %560 = vmatprep.subr.mxu0 0.0
      %561 = vmatpush2.xpose.msra.mxu0 0.0
      %562 = vmatprep.subr.mxu0 0.0
      %563 = vmatpush2.xpose.msra.mxu0 0.0
      %564 = vmatprep.subr.mxu0 0.0
      %565 = vmatpush2.xpose.msra.mxu0 0.0
      %566 = vmatprep.subr.mxu0 0.0
      %567 = vmatpush2.xpose.msra.mxu0 0.0
      %568 = vmatprep.subr.mxu0 0.0
      %569 = vmatpush2.xpose.msra.mxu0 0.0
      %570 = vmatprep.subr.mxu0 0.0
      %571 = vmatpush2.xpose.msra.mxu0 0.0
      %572 = vmatprep.subr.mxu0 0.0
      %573 = vmatpush2.xpose.msra.mxu0 0.0
      %574 = vmatprep.subr.mxu0 0.0
      %575 = vmatpush2.xpose.msra.mxu0 0.0
      %576 = vmatprep.subr.mxu0 0.0
      %577 = vmatpush2.xpose.msra.mxu0 0.0
      %578 = vmatprep.subr.mxu0 0.0
      %579 = vmatpush2.xpose.msra.mxu0 0.0
      %580 = vmatprep.subr.mxu0 0.0
      %581 = vmatpush2.xpose.msra.mxu0 0.0
      %582 = vmatprep.subr.mxu0 0.0
      %583 = vmatpush2.xpose.msra.mxu0 0.0
      %584 = vmatprep.subr.mxu0 0.0
      %585 = vmatpush2.xpose.msra.mxu0 0.0
      %586 = vmatprep.mubr.f32.mxu0 0.0
      %587 = vmatmul.mubr.f32.gmra.mxu0 %v518
      %v588 = vpop.f32.mrf.mxu0
      %v589 = vadd.f32 0.0, %v588
      %v590 = vpop.f32.mrf.mxu0
      %591 = vdwg.mxu0
      %592 = vrot.lane.b32.xlu0 %v362, 96
      %v593 = vpop.permute.xlu0 %592
      %v594 = vsel %vm365, %v362, 0
      %v596 = vsel %vm365, %v593, 0
      %598 = vmatprep.subr.mxu0 0.0
      %599 = vmatpush1.xpose.msra.mxu0 0.0
      %600 = vmatprep.subr.mxu0 0.0
      %601 = vmatpush1.xpose.msra.mxu0 0.0
      %602 = vmatprep.subr.mxu0 0.0
      %603 = vmatpush1.xpose.msra.mxu0 0.0
      %604 = vmatprep.subr.mxu0 0.0
      %605 = vmatpush1.xpose.msra.mxu0 0.0
      %606 = vmatprep.subr.mxu0 0.0
      %607 = vmatpush1.xpose.msra.mxu0 0.0
      %608 = vmatprep.subr.mxu0 0.0
      %609 = vmatpush1.xpose.msra.mxu0 0.0
      %610 = vmatprep.subr.mxu0 0.0
      %611 = vmatpush1.xpose.msra.mxu0 0.0
      %612 = vmatprep.subr.mxu0 0.0
      %613 = vmatpush1.xpose.msra.mxu0 0.0
      %614 = vmatprep.subr.mxu0 0.0
      %615 = vmatpush1.xpose.msra.mxu0 0.0
      %616 = vmatprep.subr.mxu0 0.0
      %617 = vmatpush1.xpose.msra.mxu0 0.0
      %618 = vmatprep.subr.mxu0 0.0
      %619 = vmatpush1.xpose.msra.mxu0 0.0
      %620 = vmatprep.subr.mxu0 0.0
      %621 = vmatpush1.xpose.msra.mxu0 0.0
      %622 = vmatprep.subr.mxu0 0.0
      %623 = vmatpush1.xpose.msra.mxu0 0.0
      %624 = vmatprep.subr.mxu0 0.0
      %625 = vmatpush1.xpose.msra.mxu0 0.0
      %626 = vmatprep.subr.mxu0 0.0
      %627 = vmatpush1.xpose.msra.mxu0 0.0
      %628 = vmatprep.subr.mxu0 0.0
      %629 = vmatpush1.xpose.msra.mxu0 %v596
      %630 = vmatprep.subr.mxu0 0.0
      %631 = vmatpush2.xpose.msra.mxu0 0.0
      %632 = vmatprep.subr.mxu0 0.0
      %633 = vmatpush2.xpose.msra.mxu0 0.0
      %634 = vmatprep.subr.mxu0 0.0
      %635 = vmatpush2.xpose.msra.mxu0 0.0
      %636 = vmatprep.subr.mxu0 0.0
      %637 = vmatpush2.xpose.msra.mxu0 0.0
      %638 = vmatprep.subr.mxu0 0.0
      %639 = vmatpush2.xpose.msra.mxu0 0.0
      %640 = vmatprep.subr.mxu0 0.0
      %641 = vmatpush2.xpose.msra.mxu0 0.0
      %642 = vmatprep.subr.mxu0 0.0
      %643 = vmatpush2.xpose.msra.mxu0 0.0
      %644 = vmatprep.subr.mxu0 0.0
      %645 = vmatpush2.xpose.msra.mxu0 0.0
      %646 = vmatprep.subr.mxu0 0.0
      %647 = vmatpush2.xpose.msra.mxu0 0.0
      %648 = vmatprep.subr.mxu0 0.0
      %649 = vmatpush2.xpose.msra.mxu0 0.0
      %650 = vmatprep.subr.mxu0 0.0
      %651 = vmatpush2.xpose.msra.mxu0 0.0
      %652 = vmatprep.subr.mxu0 0.0
      %653 = vmatpush2.xpose.msra.mxu0 0.0
      %654 = vmatprep.subr.mxu0 0.0
      %655 = vmatpush2.xpose.msra.mxu0 0.0
      %656 = vmatprep.subr.mxu0 0.0
      %657 = vmatpush2.xpose.msra.mxu0 0.0
      %658 = vmatprep.subr.mxu0 0.0
      %659 = vmatpush2.xpose.msra.mxu0 0.0
      %660 = vmatprep.subr.mxu0 0.0
      %661 = vmatpush2.xpose.msra.mxu0 0.0
      %662 = vmatprep.mubr.f32.mxu0 0.0
      %663 = vmatmul.mubr.f32.gmra.mxu0 %v594
      %v664 = vpop.f32.mrf.mxu0
      %v665 = vadd.f32 0.0, %v664
      %v666 = vpop.f32.mrf.mxu0
      %667 = vdwg.mxu0
      %v668 = vmul.f32 %v437, 0.35355338
      %v669 = vmul.f32 %v513, 0.35355338
      %v670 = vmul.f32 %v589, 0.35355338
      %v671 = vmul.f32 %v665, 0.35355338
      %vm672 = vcmask 36864
      %v673 = vsel %vm672, %v668, -inf
      %674 = vmax.xlane.f32.xlu0 %v673
      %v675 = vpop.xlane.xlu0 %674
      %v676 = vsel %vm672, %v669, -inf
      %677 = vmax.xlane.f32.xlu0 %v676
      %v678 = vpop.xlane.xlu0 %677
      %v679 = vsel %vm672, %v670, -inf
      %680 = vmax.xlane.f32.xlu0 %v679
      %v681 = vpop.xlane.xlu0 %680
      %v682 = vsel %vm672, %v671, -inf
      %683 = vmax.xlane.f32.xlu0 %v682
      %v684 = vpop.xlane.xlu0 %683
      %v685 = vsub.f32 %v668, %v675
      %v686 = vsub.f32 %v669, %v678
      %v687 = vsub.f32 %v670, %v681
      %v688 = vsub.f32 %v671, %v684
      %v689 = vmul.f32 %v685, 1.442695
      %v690 = vpow.pop %v689
      %v691 = vmul.f32 %v686, 1.442695
      %v692 = vpow.pop %v691
      %v693 = vmul.f32 %v687, 1.442695
      %v694 = vpow.pop %v693
      %v695 = vmul.f32 %v688, 1.442695
      %v696 = vpow.pop %v695
      %v697 = vsel %vm672, %v690, 0.0
      %698 = vadd.xlane.f32.xlu0 %v697
      %v699 = vpop.xlane.xlu0 %698
      %v700 = vsel %vm672, %v692, 0.0
      %701 = vadd.xlane.f32.xlu0 %v700
      %v702 = vpop.xlane.xlu0 %701
      %v703 = vsel %vm672, %v694, 0.0
      %704 = vadd.xlane.f32.xlu0 %v703
      %v705 = vpop.xlane.xlu0 %704
      %v706 = vsel %vm672, %v696, 0.0
      %707 = vadd.xlane.f32.xlu0 %v706
      %v708 = vpop.xlane.xlu0 %707
      %709 = vrot.lane.b32.xlu0 %v355, 64
      %v710 = vpop.permute.xlu0 %709
      %v712 = vsel %vm181, %v690, 0
      %v714 = vsel %vm185, %v710, 0
      %716 = vmatprep.subr.mxu0 0.0
      %717 = vmatpush1.msra.mxu0 0.0
      %718 = vmatprep.subr.mxu0 0.0
      %719 = vmatpush1.msra.mxu0 0.0
      %720 = vmatprep.subr.mxu0 0.0
      %721 = vmatpush1.msra.mxu0 0.0
      %722 = vmatprep.subr.mxu0 0.0
      %723 = vmatpush1.msra.mxu0 0.0
      %724 = vmatprep.subr.mxu0 0.0
      %725 = vmatpush1.msra.mxu0 0.0
      %726 = vmatprep.subr.mxu0 0.0
      %727 = vmatpush1.msra.mxu0 0.0
      %728 = vmatprep.subr.mxu0 0.0
      %729 = vmatpush1.msra.mxu0 0.0
      %730 = vmatprep.subr.mxu0 0.0
      %731 = vmatpush1.msra.mxu0 0.0
      %732 = vmatprep.subr.mxu0 0.0
      %733 = vmatpush1.msra.mxu0 0.0
      %734 = vmatprep.subr.mxu0 0.0
      %735 = vmatpush1.msra.mxu0 0.0
      %736 = vmatprep.subr.mxu0 0.0
      %737 = vmatpush1.msra.mxu0 0.0
      %738 = vmatprep.subr.mxu0 0.0
      %739 = vmatpush1.msra.mxu0 0.0
      %740 = vmatprep.subr.mxu0 0.0
      %741 = vmatpush1.msra.mxu0 0.0
      %742 = vmatprep.subr.mxu0 0.0
      %743 = vmatpush1.msra.mxu0 0.0
      %744 = vmatprep.subr.mxu0 0.0
      %745 = vmatpush1.msra.mxu0 0.0
      %746 = vmatprep.subr.mxu0 0.0
      %747 = vmatpush1.msra.mxu0 %v714
      %748 = vmatprep.subr.mxu0 0.0
      %749 = vmatpush2.msra.mxu0 0.0
      %750 = vmatprep.subr.mxu0 0.0
      %751 = vmatpush2.msra.mxu0 0.0
      %752 = vmatprep.subr.mxu0 0.0
      %753 = vmatpush2.msra.mxu0 0.0
      %754 = vmatprep.subr.mxu0 0.0
      %755 = vmatpush2.msra.mxu0 0.0
      %756 = vmatprep.subr.mxu0 0.0
      %757 = vmatpush2.msra.mxu0 0.0
      %758 = vmatprep.subr.mxu0 0.0
      %759 = vmatpush2.msra.mxu0 0.0
      %760 = vmatprep.subr.mxu0 0.0
      %761 = vmatpush2.msra.mxu0 0.0
      %762 = vmatprep.subr.mxu0 0.0
      %763 = vmatpush2.msra.mxu0 0.0
      %764 = vmatprep.subr.mxu0 0.0
      %765 = vmatpush2.msra.mxu0 0.0
      %766 = vmatprep.subr.mxu0 0.0
      %767 = vmatpush2.msra.mxu0 0.0
      %768 = vmatprep.subr.mxu0 0.0
      %769 = vmatpush2.msra.mxu0 0.0
      %770 = vmatprep.subr.mxu0 0.0
      %771 = vmatpush2.msra.mxu0 0.0
      %772 = vmatprep.subr.mxu0 0.0
      %773 = vmatpush2.msra.mxu0 0.0
      %774 = vmatprep.subr.mxu0 0.0
      %775 = vmatpush2.msra.mxu0 0.0
      %776 = vmatprep.subr.mxu0 0.0
      %777 = vmatpush2.msra.mxu0 0.0
      %778 = vmatprep.subr.mxu0 0.0
      %779 = vmatpush2.msra.mxu0 0.0
      %780 = vmatprep.mubr.f32.mxu0 0.0
      %781 = vmatmul.mubr.f32.gmra.mxu0 %v712
      %v782 = vpop.f32.mrf.mxu0
      %v783 = vadd.f32 0.0, %v782
      %v784 = vpop.f32.mrf.mxu0
      %785 = vdwg.mxu0
      %786 = vrot.lane.b32.xlu0 %v358, 64
      %v787 = vpop.permute.xlu0 %786
      %v789 = vsel %vm181, %v692, 0
      %v791 = vsel %vm185, %v787, 0
      %793 = vmatprep.subr.mxu0 0.0
      %794 = vmatpush1.msra.mxu0 0.0
      %795 = vmatprep.subr.mxu0 0.0
      %796 = vmatpush1.msra.mxu0 0.0
      %797 = vmatprep.subr.mxu0 0.0
      %798 = vmatpush1.msra.mxu0 0.0
      %799 = vmatprep.subr.mxu0 0.0
      %800 = vmatpush1.msra.mxu0 0.0
      %801 = vmatprep.subr.mxu0 0.0
      %802 = vmatpush1.msra.mxu0 0.0
      %803 = vmatprep.subr.mxu0 0.0
      %804 = vmatpush1.msra.mxu0 0.0
      %805 = vmatprep.subr.mxu0 0.0
      %806 = vmatpush1.msra.mxu0 0.0
      %807 = vmatprep.subr.mxu0 0.0
      %808 = vmatpush1.msra.mxu0 0.0
      %809 = vmatprep.subr.mxu0 0.0
      %810 = vmatpush1.msra.mxu0 0.0
      %811 = vmatprep.subr.mxu0 0.0
      %812 = vmatpush1.msra.mxu0 0.0
      %813 = vmatprep.subr.mxu0 0.0
      %814 = vmatpush1.msra.mxu0 0.0
      %815 = vmatprep.subr.mxu0 0.0
      %816 = vmatpush1.msra.mxu0 0.0
      %817 = vmatprep.subr.mxu0 0.0
      %818 = vmatpush1.msra.mxu0 0.0
      %819 = vmatprep.subr.mxu0 0.0
      %820 = vmatpush1.msra.mxu0 0.0
      %821 = vmatprep.subr.mxu0 0.0
      %822 = vmatpush1.msra.mxu0 0.0
      %823 = vmatprep.subr.mxu0 0.0
      %824 = vmatpush1.msra.mxu0 %v791
      %825 = vmatprep.subr.mxu0 0.0
      %826 = vmatpush2.msra.mxu0 0.0
      %827 = vmatprep.subr.mxu0 0.0
      %828 = vmatpush2.msra.mxu0 0.0
      %829 = vmatprep.subr.mxu0 0.0
      %830 = vmatpush2.msra.mxu0 0.0
      %831 = vmatprep.subr.mxu0 0.0
      %832 = vmatpush2.msra.mxu0 0.0
      %833 = vmatprep.subr.mxu0 0.0
      %834 = vmatpush2.msra.mxu0 0.0
      %835 = vmatprep.subr.mxu0 0.0
      %836 = vmatpush2.msra.mxu0 0.0
      %837 = vmatprep.subr.mxu0 0.0
      %838 = vmatpush2.msra.mxu0 0.0
      %839 = vmatprep.subr.mxu0 0.0
      %840 = vmatpush2.msra.mxu0 0.0
      %841 = vmatprep.subr.mxu0 0.0
      %842 = vmatpush2.msra.mxu0 0.0
      %843 = vmatprep.subr.mxu0 0.0
      %844 = vmatpush2.msra.mxu0 0.0
      %845 = vmatprep.subr.mxu0 0.0
      %846 = vmatpush2.msra.mxu0 0.0
      %847 = vmatprep.subr.mxu0 0.0
      %848 = vmatpush2.msra.mxu0 0.0
      %849 = vmatprep.subr.mxu0 0.0
      %850 = vmatpush2.msra.mxu0 0.0
      %851 = vmatprep.subr.mxu0 0.0
      %852 = vmatpush2.msra.mxu0 0.0
      %853 = vmatprep.subr.mxu0 0.0
      %854 = vmatpush2.msra.mxu0 0.0
      %855 = vmatprep.subr.mxu0 0.0
      %856 = vmatpush2.msra.mxu0 0.0
      %857 = vmatprep.mubr.f32.mxu0 0.0
      %858 = vmatmul.mubr.f32.gmra.mxu0 %v789
      %v859 = vpop.f32.mrf.mxu0
      %v860 = vadd.f32 0.0, %v859
      %v861 = vpop.f32.mrf.mxu0
      %862 = vdwg.mxu0
      %863 = vrot.lane.b32.xlu0 %v360, 64
      %v864 = vpop.permute.xlu0 %863
      %v866 = vsel %vm181, %v694, 0
      %v868 = vsel %vm185, %v864, 0
      %870 = vmatprep.subr.mxu0 0.0
      %871 = vmatpush1.msra.mxu0 0.0
      %872 = vmatprep.subr.mxu0 0.0
      %873 = vmatpush1.msra.mxu0 0.0
      %874 = vmatprep.subr.mxu0 0.0
      %875 = vmatpush1.msra.mxu0 0.0
      %876 = vmatprep.subr.mxu0 0.0
      %877 = vmatpush1.msra.mxu0 0.0
      %878 = vmatprep.subr.mxu0 0.0
      %879 = vmatpush1.msra.mxu0 0.0
      %880 = vmatprep.subr.mxu0 0.0
      %881 = vmatpush1.msra.mxu0 0.0
      %882 = vmatprep.subr.mxu0 0.0
      %883 = vmatpush1.msra.mxu0 0.0
      %884 = vmatprep.subr.mxu0 0.0
      %885 = vmatpush1.msra.mxu0 0.0
      %886 = vmatprep.subr.mxu0 0.0
      %887 = vmatpush1.msra.mxu0 0.0
      %888 = vmatprep.subr.mxu0 0.0
      %889 = vmatpush1.msra.mxu0 0.0
      %890 = vmatprep.subr.mxu0 0.0
      %891 = vmatpush1.msra.mxu0 0.0
      %892 = vmatprep.subr.mxu0 0.0
      %893 = vmatpush1.msra.mxu0 0.0
      %894 = vmatprep.subr.mxu0 0.0
      %895 = vmatpush1.msra.mxu0 0.0
      %896 = vmatprep.subr.mxu0 0.0
      %897 = vmatpush1.msra.mxu0 0.0
      %898 = vmatprep.subr.mxu0 0.0
      %899 = vmatpush1.msra.mxu0 0.0
      %900 = vmatprep.subr.mxu0 0.0
      %901 = vmatpush1.msra.mxu0 %v868
      %902 = vmatprep.subr.mxu0 0.0
      %903 = vmatpush2.msra.mxu0 0.0
      %904 = vmatprep.subr.mxu0 0.0
      %905 = vmatpush2.msra.mxu0 0.0
      %906 = vmatprep.subr.mxu0 0.0
      %907 = vmatpush2.msra.mxu0 0.0
      %908 = vmatprep.subr.mxu0 0.0
      %909 = vmatpush2.msra.mxu0 0.0
      %910 = vmatprep.subr.mxu0 0.0
      %911 = vmatpush2.msra.mxu0 0.0
      %912 = vmatprep.subr.mxu0 0.0
      %913 = vmatpush2.msra.mxu0 0.0
      %914 = vmatprep.subr.mxu0 0.0
      %915 = vmatpush2.msra.mxu0 0.0
      %916 = vmatprep.subr.mxu0 0.0
      %917 = vmatpush2.msra.mxu0 0.0
      %918 = vmatprep.subr.mxu0 0.0
      %919 = vmatpush2.msra.mxu0 0.0
      %920 = vmatprep.subr.mxu0 0.0
      %921 = vmatpush2.msra.mxu0 0.0
      %922 = vmatprep.subr.mxu0 0.0
      %923 = vmatpush2.msra.mxu0 0.0
      %924 = vmatprep.subr.mxu0 0.0
      %925 = vmatpush2.msra.mxu0 0.0
      %926 = vmatprep.subr.mxu0 0.0
      %927 = vmatpush2.msra.mxu0 0.0
      %928 = vmatprep.subr.mxu0 0.0
      %929 = vmatpush2.msra.mxu0 0.0
      %930 = vmatprep.subr.mxu0 0.0
      %931 = vmatpush2.msra.mxu0 0.0
      %932 = vmatprep.subr.mxu0 0.0
      %933 = vmatpush2.msra.mxu0 0.0
      %934 = vmatprep.mubr.f32.mxu0 0.0
      %935 = vmatmul.mubr.f32.gmra.mxu0 %v866
      %v936 = vpop.f32.mrf.mxu0
      %v937 = vadd.f32 0.0, %v936
      %v938 = vpop.f32.mrf.mxu0
      %939 = vdwg.mxu0
      %940 = vrot.lane.b32.xlu0 %v362, 64
      %v941 = vpop.permute.xlu0 %940
      %v943 = vsel %vm181, %v696, 0
      %v945 = vsel %vm185, %v941, 0
      %947 = vmatprep.subr.mxu0 0.0
      %948 = vmatpush1.msra.mxu0 0.0
      %949 = vmatprep.subr.mxu0 0.0
      %950 = vmatpush1.msra.mxu0 0.0
      %951 = vmatprep.subr.mxu0 0.0
      %952 = vmatpush1.msra.mxu0 0.0
      %953 = vmatprep.subr.mxu0 0.0
      %954 = vmatpush1.msra.mxu0 0.0
      %955 = vmatprep.subr.mxu0 0.0
      %956 = vmatpush1.msra.mxu0 0.0
      %957 = vmatprep.subr.mxu0 0.0
      %958 = vmatpush1.msra.mxu0 0.0
      %959 = vmatprep.subr.mxu0 0.0
      %960 = vmatpush1.msra.mxu0 0.0
      %961 = vmatprep.subr.mxu0 0.0
      %962 = vmatpush1.msra.mxu0 0.0
      %963 = vmatprep.subr.mxu0 0.0
      %964 = vmatpush1.msra.mxu0 0.0
      %965 = vmatprep.subr.mxu0 0.0
      %966 = vmatpush1.msra.mxu0 0.0
      %967 = vmatprep.subr.mxu0 0.0
      %968 = vmatpush1.msra.mxu0 0.0
      %969 = vmatprep.subr.mxu0 0.0
      %970 = vmatpush1.msra.mxu0 0.0
      %971 = vmatprep.subr.mxu0 0.0
      %972 = vmatpush1.msra.mxu0 0.0
      %973 = vmatprep.subr.mxu0 0.0
      %974 = vmatpush1.msra.mxu0 0.0
      %975 = vmatprep.subr.mxu0 0.0
      %976 = vmatpush1.msra.mxu0 0.0
      %977 = vmatprep.subr.mxu0 0.0
      %978 = vmatpush1.msra.mxu0 %v945
      %979 = vmatprep.subr.mxu0 0.0
      %980 = vmatpush2.msra.mxu0 0.0
      %981 = vmatprep.subr.mxu0 0.0
      %982 = vmatpush2.msra.mxu0 0.0
      %983 = vmatprep.subr.mxu0 0.0
      %984 = vmatpush2.msra.mxu0 0.0
      %985 = vmatprep.subr.mxu0 0.0
      %986 = vmatpush2.msra.mxu0 0.0
      %987 = vmatprep.subr.mxu0 0.0
      %988 = vmatpush2.msra.mxu0 0.0
      %989 = vmatprep.subr.mxu0 0.0
      %990 = vmatpush2.msra.mxu0 0.0
      %991 = vmatprep.subr.mxu0 0.0
      %992 = vmatpush2.msra.mxu0 0.0
      %993 = vmatprep.subr.mxu0 0.0
      %994 = vmatpush2.msra.mxu0 0.0
      %995 = vmatprep.subr.mxu0 0.0
      %996 = vmatpush2.msra.mxu0 0.0
      %997 = vmatprep.subr.mxu0 0.0
      %998 = vmatpush2.msra.mxu0 0.0
      %999 = vmatprep.subr.mxu0 0.0
      %1000 = vmatpush2.msra.mxu0 0.0
      %1001 = vmatprep.subr.mxu0 0.0
      %1002 = vmatpush2.msra.mxu0 0.0
      %1003 = vmatprep.subr.mxu0 0.0
      %1004 = vmatpush2.msra.mxu0 0.0
      %1005 = vmatprep.subr.mxu0 0.0
      %1006 = vmatpush2.msra.mxu0 0.0
      %1007 = vmatprep.subr.mxu0 0.0
      %1008 = vmatpush2.msra.mxu0 0.0
      %1009 = vmatprep.subr.mxu0 0.0
      %1010 = vmatpush2.msra.mxu0 0.0
      %1011 = vmatprep.mubr.f32.mxu0 0.0
      %1012 = vmatmul.mubr.f32.gmra.mxu0 %v943
      %v1013 = vpop.f32.mrf.mxu0
      %v1014 = vadd.f32 0.0, %v1013
      %v1015 = vpop.f32.mrf.mxu0
      %1016 = vdwg.mxu0
      %v1017 = vrcp.pop %v699
      %v1018 = vrcp.pop %v702
      %v1019 = vrcp.pop %v705
      %v1020 = vrcp.pop %v708
      %v1021 = vmul.f32 %v783, %v1017
      %v1022 = vmul.f32 %v860, %v1018
      %v1023 = vmul.f32 %v937, %v1019
      %v1024 = vmul.f32 %v1014, %v1020
      %vm1025 = vcmask 61440
      %1026 = vst.msk [vmem:[%s165] sm:$0x1f] %vm1025, %v1021
      %1028 = vrot.lane.b32.xlu0 %v1022, 8
      %v1029 = vpop.permute.xlu0 %1028
      %vm1031 = vcmask 127040
      %1032 = vst.msk [vmem:[%s165] sm:$0x1f] %vm1031, %v1029
      %1034 = vrot.lane.b32.xlu0 %v1023, 16
      %v1035 = vpop.permute.xlu0 %1034
      %vm1037 = vcmask 192640
      %1038 = vst.msk [vmem:[%s165] sm:$0x1f] %vm1037, %v1035
      %1040 = vrot.lane.b32.xlu0 %v1024, 24
      %v1041 = vpop.permute.xlu0 %1040
      %vm1043 = vcmask 258240
      %1044 = vst.msk [vmem:[%s165] sm:$0x1f] %vm1043, %v1041
      %p1045 = scmp.lt.s32.totalorder %s14, 1
      %s1046 = scalar_select %p1045, %s14, 1
      %s1047 = smul.addr %s1046, 8
      %s1048 = scalar_lea.vmem %s3, %s1047
      // Predicated region
      $region33: #{cross_attention_forward.45} parent=31 // pred_check
        %p1049 = pneg %p100
      $region34: #{cross_attention_forward.45} parent=31 // pred_check_branch
        %1051 = sbr.rel (%p1049) target = $region36
      $region35: #{cross_attention_forward.45} parent=31 // pred_region
        _
      $region36: #{cross_attention_forward.45} parent=31 // pred_fallthru
        _
    $region32: #{cross_attention_forward.45} parent=5 // pred_fallthru
      _
    %p1052 = scmp.le.s32.totalorder 2, %s9
    // Predicated region
    $region37: #{cross_attention_forward.45} parent=5 // pred_check
      %p1053 = pneg %p1052
    $region38: #{cross_attention_forward.45} parent=5 // pred_check_branch
      %1055 = sbr.rel (%p1053) target = $region40
    $region39: #{cross_attention_forward.45} parent=5 // pred_region
      %s1056 = ssub.s32 %s9, 2
      // Predicated region
      $region41: #{cross_attention_forward.45} parent=39 // pred_check
        %p1057 = pneg %p106
      $region42: #{cross_attention_forward.45} parent=39 // pred_check_branch
        %1059 = sbr.rel (%p1057) target = $region44
      $region43: #{cross_attention_forward.45} parent=39 // pred_region
        %p1060 = scmp.lt.s32.totalorder %s15, 1
        %s1061 = scalar_select %p1060, %s15, 1
        %s1062 = smul.addr %s1061, 8
        %s1063 = scalar_lea.vmem %s3, %s1062
      $region44: #{cross_attention_forward.45} parent=39 // pred_fallthru
        _
    $region40: #{cross_attention_forward.45} parent=5 // pred_fallthru
      _
  $region6: #{cross_attention_forward.45} parent=0 // loop_footer
    %s13 = sadd.s32 1, %s9
  $region7: #{cross_attention_forward.45} parent=0 // loop_footer_branch
    %8 = sbr.rel target = $region3
  $region8: #{cross_attention_forward.45} parent=0 // loop_exit
    _

// kernel: cross_attention_forward.44
$region0: #{cross_attention_forward.44}
  #allocation0 [shape = 'u32[]', space=smem, size = 0x4, offset = 0x4, fixed_abs, tag = 'smem constant byte address 0x4 - core index']
  #allocation1 [shape = 'u32[144,128]{1,0:T(1,128)}', space=vmem, size = 0x12000, scoped, tag = 'internal scratch']
  #allocation2 [shape = 'f32[10,96]{1,0:T(8,128)}', space=vmem, size = 0x2000, scoped, tag = 'scratch operand']
  %s0 = inlined_call_operand.vmem [shape: f32[10,32], index: 0, kind: input, shape index: {}]
  %s1 = inlined_call_operand.vmem [shape: f32[32,96], index: 1, kind: input, shape index: {}]
  %s2 = inlined_call_operand.vmem [shape: f32[1,96], index: 2, kind: input, shape index: {}]
  %s3 = inlined_call_operand.vmem [shape: f32[10,96], index: 3, kind: output, shape index: {}]
  %s4 = sld [smem:[#allocation0]]
  $region30: #{cross_attention_forward.44} parent=0
    _
  %s6 = ssub.s32 1, %s4
  %s7 = scalar_select 0, %s6, %s4
  // Predicated region
  $region2: #{cross_attention_forward.44} parent=0 // pred_check
    _
  $region3: #{cross_attention_forward.44} parent=0 // pred_check_branch
    %9 = sbr.rel (0) target = $region5
  $region4: #{cross_attention_forward.44} parent=0 // pred_region
    _
  $region5: #{cross_attention_forward.44} parent=0 // pred_fallthru
    _
  // Predicated region
  $region6: #{cross_attention_forward.44} parent=0 // pred_check
    _
  $region7: #{cross_attention_forward.44} parent=0 // pred_check_branch
    %11 = sbr.rel (0) target = $region9
  $region8: #{cross_attention_forward.44} parent=0 // pred_region
    _
  $region9: #{cross_attention_forward.44} parent=0 // pred_fallthru
    _
  // Predicated region
  $region10: #{cross_attention_forward.44} parent=0 // pred_check
    _
  $region11: #{cross_attention_forward.44} parent=0 // pred_check_branch
    %13 = sbr.rel (0) target = $region13
  $region12: #{cross_attention_forward.44} parent=0 // pred_region
    _
  $region13: #{cross_attention_forward.44} parent=0 // pred_fallthru
    _
  %p14 = scmp.eq.s32.totalorder 0, 0
  // Predicated region
  $region14: #{cross_attention_forward.44} parent=0 // pred_check
    %p15 = pneg %p14
  $region15: #{cross_attention_forward.44} parent=0 // pred_check_branch
    %17 = sbr.rel (%p15) target = $region17
  $region16: #{cross_attention_forward.44} parent=0 // pred_region
    %vm18 = vcmask 785408
    %19 = vst.msk [vmem:[#allocation2] sm:$0xff] %vm18, 0.0
    %vm20 = vcmask 779264
    %21 = vst.msk [vmem:[#allocation2 + $0x8] sm:$0x3] %vm20, 0.0
  $region17: #{cross_attention_forward.44} parent=0 // pred_fallthru
    _
  %v22 = vld [vmem:[#allocation2] sm:$0xff]
  %v23 = vld [vmem:[#allocation2 + $0x8] sm:$0x3]
  %v24 = vld [vmem:[%s0] sm:$0xff]
  %v25 = vld [vmem:[%s0 + $0x8] sm:$0x3]
  %v26 = vld [vmem:[%s1] sm:$0xff]
  %v27 = vld [vmem:[%s1 + $0x8] sm:$0xff]
  %v28 = vld [vmem:[%s1 + $0x10] sm:$0xff]
  %v29 = vld [vmem:[%s1 + $0x18] sm:$0xff]
  %vm30 = vcmask 261120
  %v32 = vsel %vm30, %v24, 0
  %v35 = vsel %vm30, %v25, 0
  %37 = vmatprep.subr.mxu0 0.0
  %38 = vmatpush1.msra.mxu0 0.0
  %39 = vmatprep.subr.mxu0 0.0
  %40 = vmatpush1.msra.mxu0 0.0
  %41 = vmatprep.subr.mxu0 0.0
  %42 = vmatpush1.msra.mxu0 0.0
  %43 = vmatprep.subr.mxu0 0.0
  %44 = vmatpush1.msra.mxu0 0.0
  %45 = vmatprep.subr.mxu0 0.0
  %46 = vmatpush1.msra.mxu0 0.0
  %47 = vmatprep.subr.mxu0 0.0
  %48 = vmatpush1.msra.mxu0 0.0
  %49 = vmatprep.subr.mxu0 0.0
  %50 = vmatpush1.msra.mxu0 0.0
  %51 = vmatprep.subr.mxu0 0.0
  %52 = vmatpush1.msra.mxu0 0.0
  %53 = vmatprep.subr.mxu0 0.0
  %54 = vmatpush1.msra.mxu0 0.0
  %55 = vmatprep.subr.mxu0 0.0
  %56 = vmatpush1.msra.mxu0 0.0
  %57 = vmatprep.subr.mxu0 0.0
  %58 = vmatpush1.msra.mxu0 0.0
  %59 = vmatprep.subr.mxu0 0.0
  %60 = vmatpush1.msra.mxu0 0.0
  %61 = vmatprep.subr.mxu0 0.0
  %62 = vmatpush1.msra.mxu0 %v29
  %63 = vmatprep.subr.mxu0 0.0
  %64 = vmatpush1.msra.mxu0 %v28
  %65 = vmatprep.subr.mxu0 0.0
  %66 = vmatpush1.msra.mxu0 %v27
  %67 = vmatprep.subr.mxu0 0.0
  %68 = vmatpush1.msra.mxu0 %v26
  %69 = vmatprep.subr.mxu0 0.0
  %70 = vmatpush2.msra.mxu0 0.0
  %71 = vmatprep.subr.mxu0 0.0
  %72 = vmatpush2.msra.mxu0 0.0
  %73 = vmatprep.subr.mxu0 0.0
  %74 = vmatpush2.msra.mxu0 0.0
  %75 = vmatprep.subr.mxu0 0.0
  %76 = vmatpush2.msra.mxu0 0.0
  %77 = vmatprep.subr.mxu0 0.0
  %78 = vmatpush2.msra.mxu0 0.0
  %79 = vmatprep.subr.mxu0 0.0
  %80 = vmatpush2.msra.mxu0 0.0
  %81 = vmatprep.subr.mxu0 0.0
  %82 = vmatpush2.msra.mxu0 0.0
  %83 = vmatprep.subr.mxu0 0.0
  %84 = vmatpush2.msra.mxu0 0.0
  %85 = vmatprep.subr.mxu0 0.0
  %86 = vmatpush2.msra.mxu0 0.0
  %87 = vmatprep.subr.mxu0 0.0
  %88 = vmatpush2.msra.mxu0 0.0
  %89 = vmatprep.subr.mxu0 0.0
  %90 = vmatpush2.msra.mxu0 0.0
  %91 = vmatprep.subr.mxu0 0.0
  %92 = vmatpush2.msra.mxu0 0.0
  %93 = vmatprep.subr.mxu0 0.0
  %94 = vmatpush2.msra.mxu0 0.0
  %95 = vmatprep.subr.mxu0 0.0
  %96 = vmatpush2.msra.mxu0 0.0
  %97 = vmatprep.subr.mxu0 0.0
  %98 = vmatpush2.msra.mxu0 0.0
  %99 = vmatprep.subr.mxu0 0.0
  %100 = vmatpush2.msra.mxu0 0.0
  %101 = vmatprep.mubr.f32.mxu0 0.0
  %102 = vmatmul.mubr.f32.gmra.mxu0 %v32
  %v103 = vpop.f32.mrf.mxu0
  %v104 = vadd.f32 0.0, %v103
  %v105 = vpop.f32.mrf.mxu0
  %106 = vmatprep.mubr.f32.mxu0 0.0
  %107 = vmatmul.mubr.f32.gmra.mxu0 %v35
  %v108 = vpop.f32.mrf.mxu0
  %v109 = vadd.f32 0.0, %v108
  %v110 = vpop.f32.mrf.mxu0
  %111 = vdwg.mxu0
  %v112 = vadd.f32 %v22, %v104
  %v113 = vadd.f32 %v23, %v109
  %vm114 = vcmask 785408
  %115 = vst.msk [vmem:[#allocation2] sm:$0xff] %vm114, %v112
  %vm116 = vcmask 779264
  %117 = vst.msk [vmem:[#allocation2 + $0x8] sm:$0x3] %vm116, %v113
  // Predicated region
  $region18: #{cross_attention_forward.44} parent=0 // pred_check
    %p118 = pneg %p14
  $region19: #{cross_attention_forward.44} parent=0 // pred_check_branch
    %120 = sbr.rel (%p118) target = $region21
  $region20: #{cross_attention_forward.44} parent=0 // pred_region
    %v121 = vld [vmem:[#allocation2] sm:$0xff]
    %v122 = vld [vmem:[#allocation2 + $0x8] sm:$0x3]
    %v123 = vld [vmem:[%s2] sm:$0x1]
    %v125 = vlaneseq
    %v126 = vshrl.u32 %v125, 7
    %v127 = vsub.s32 0, %v126
    %v128 = vrot.slane %v123, %v127
    %v130 = vadd.f32 %v121, %v128
    %v131 = vadd.f32 %v122, %v128
    %132 = vst.msk [vmem:[%s3] sm:$0xff] %vm114, %v130
    %133 = vst.msk [vmem:[%s3 + $0x8] sm:$0x3] %vm116, %v131
  $region21: #{cross_attention_forward.44} parent=0 // pred_fallthru
    _
  // Predicated region
  $region22: #{cross_attention_forward.44} parent=0 // pred_check
    _
  $region23: #{cross_attention_forward.44} parent=0 // pred_check_branch
    %135 = sbr.rel (0) target = $region25
  $region24: #{cross_attention_forward.44} parent=0 // pred_region
    _
  $region25: #{cross_attention_forward.44} parent=0 // pred_fallthru
    _
  // Predicated region
  $region26: #{cross_attention_forward.44} parent=0 // pred_check
    _
  $region27: #{cross_attention_forward.44} parent=0 // pred_check_branch
    %137 = sbr.rel (0) target = $region29
  $region28: #{cross_attention_forward.44} parent=0 // pred_region
    _
  $region29: #{cross_attention_forward.44} parent=0 // pred_fallthru
    _

// kernel: cross_attention_forward.47
$region0: #{cross_attention_forward.47}
  #allocation0 [shape = 'u32[]', space=smem, size = 0x4, offset = 0x4, fixed_abs, tag = 'smem constant byte address 0x4 - core index']
  #allocation1 [shape = 'u32[144,128]{1,0:T(1,128)}', space=vmem, size = 0x12000, scoped, tag = 'internal scratch']
  %s0 = inlined_call_operand.vmem [shape: f32[22,32], index: 0, kind: input, shape index: {}]
  %s1 = inlined_call_operand.vmem [shape: f32[1,32], index: 1, kind: input, shape index: {}]
  %s2 = inlined_call_operand.vmem [shape: f32[1,32], index: 2, kind: input, shape index: {}]
  %s3 = inlined_call_operand.vmem [shape: f32[22,32], index: 3, kind: output, shape index: {}]
  %s4 = sld [smem:[#allocation0]]
  $region22: #{cross_attention_forward.47} parent=0
    _
  %s6 = ssub.s32 1, %s4
  %s7 = scalar_select 0, %s6, %s4
  // Predicated region
  $region2: #{cross_attention_forward.47} parent=0 // pred_check
    _
  $region3: #{cross_attention_forward.47} parent=0 // pred_check_branch
    %9 = sbr.rel (0) target = $region5
  $region4: #{cross_attention_forward.47} parent=0 // pred_region
    _
  $region5: #{cross_attention_forward.47} parent=0 // pred_fallthru
    _
  // Predicated region
  $region6: #{cross_attention_forward.47} parent=0 // pred_check
    _
  $region7: #{cross_attention_forward.47} parent=0 // pred_check_branch
    %11 = sbr.rel (0) target = $region9
  $region8: #{cross_attention_forward.47} parent=0 // pred_region
    _
  $region9: #{cross_attention_forward.47} parent=0 // pred_fallthru
    _
  // Predicated region
  $region10: #{cross_attention_forward.47} parent=0 // pred_check
    _
  $region11: #{cross_attention_forward.47} parent=0 // pred_check_branch
    %13 = sbr.rel (0) target = $region13
  $region12: #{cross_attention_forward.47} parent=0 // pred_region
    _
  $region13: #{cross_attention_forward.47} parent=0 // pred_fallthru
    _
  %v14 = vld [vmem:[%s0] sm:$0xff]
  %v15 = vld [vmem:[%s0 + $0x8] sm:$0xff]
  %v16 = vld [vmem:[%s0 + $0x10] sm:$0x3f]
  %vm17 = vcmask 261120
  %v18 = vsel %vm17, %v14, 0.0
  %19 = vadd.xlane.f32.xlu0 %v18
  %v20 = vpop.xlane.xlu0 %19
  %v21 = vsel %vm17, %v15, 0.0
  %22 = vadd.xlane.f32.xlu0 %v21
  %v23 = vpop.xlane.xlu0 %22
  %vm24 = vcmask 259072
  %v25 = vsel %vm24, %v16, 0.0
  %26 = vadd.xlane.f32.xlu0 %v25
  %v27 = vpop.xlane.xlu0 %26
  %v28 = vrcp.pop 32.0
  %v29 = vmul.f32 %v20, %v28
  %v30 = vmul.f32 %v23, %v28
  %v31 = vmul.f32 %v27, %v28
  %v32 = vsub.f32 %v14, %v29
  %v33 = vsub.f32 %v15, %v30
  %v34 = vsub.f32 %v16, %v31
  %v35 = vmul.f32 %v32, %v32
  %v36 = vmul.f32 %v33, %v33
  %v37 = vmul.f32 %v34, %v34
  %v38 = vsel %vm17, %v35, 0.0
  %39 = vadd.xlane.f32.xlu0 %v38
  %v40 = vpop.xlane.xlu0 %39
  %v41 = vsel %vm17, %v36, 0.0
  %42 = vadd.xlane.f32.xlu0 %v41
  %v43 = vpop.xlane.xlu0 %42
  %v44 = vsel %vm24, %v37, 0.0
  %45 = vadd.xlane.f32.xlu0 %v44
  %v46 = vpop.xlane.xlu0 %45
  %v47 = vmul.f32 %v40, %v28
  %v48 = vmul.f32 %v43, %v28
  %v49 = vmul.f32 %v46, %v28
  %v50 = vadd.f32 %v47, 1e-05
  %v51 = vadd.f32 %v48, 1e-05
  %v52 = vadd.f32 %v49, 1e-05
  %v53 = vrsqrt.pop %v50
  %v54 = vrsqrt.pop %v51
  %v55 = vrsqrt.pop %v52
  %v56 = vmul.f32 %v32, %v53
  %v57 = vmul.f32 %v33, %v54
  %v58 = vmul.f32 %v34, %v55
  %v59 = vld [vmem:[%s1] sm:$0x1]
  %v61 = vlaneseq
  %v62 = vshrl.u32 %v61, 7
  %v63 = vsub.s32 0, %v62
  %v64 = vrot.slane %v59, %v63
  %v66 = vmul.f32 %v56, %v64
  %v67 = vmul.f32 %v57, %v64
  %v68 = vmul.f32 %v58, %v64
  %v69 = vld [vmem:[%s2] sm:$0x1]
  %v71 = vlaneseq
  %v72 = vshrl.u32 %v71, 7
  %v73 = vsub.s32 0, %v72
  %v74 = vrot.slane %v69, %v73
  %v76 = vadd.f32 %v66, %v74
  %v77 = vadd.f32 %v67, %v74
  %v78 = vadd.f32 %v68, %v74
  %79 = vst.msk [vmem:[%s3] sm:$0xff] %vm17, %v76
  %80 = vst.msk [vmem:[%s3 + $0x8] sm:$0xff] %vm17, %v77
  %81 = vst.msk [vmem:[%s3 + $0x10] sm:$0x3f] %vm24, %v78
  // Predicated region
  $region14: #{cross_attention_forward.47} parent=0 // pred_check
    _
  $region15: #{cross_attention_forward.47} parent=0 // pred_check_branch
    %83 = sbr.rel (0) target = $region17
  $region16: #{cross_attention_forward.47} parent=0 // pred_region
    _
  $region17: #{cross_attention_forward.47} parent=0 // pred_fallthru
    _
  // Predicated region
  $region18: #{cross_attention_forward.47} parent=0 // pred_check
    _
  $region19: #{cross_attention_forward.47} parent=0 // pred_check_branch
    %85 = sbr.rel (0) target = $region21
  $region20: #{cross_attention_forward.47} parent=0 // pred_region
    _
  $region21: #{cross_attention_forward.47} parent=0 // pred_fallthru
    _

// kernel: cross_attention_forward.48
$region0: #{cross_attention_forward.48}
  #allocation0 [shape = 'u32[]', space=smem, size = 0x4, offset = 0x4, fixed_abs, tag = 'smem constant byte address 0x4 - core index']
  #allocation1 [shape = 'u32[144,128]{1,0:T(1,128)}', space=vmem, size = 0x12000, scoped, tag = 'internal scratch']
  #allocation2 [shape = 'f32[22,96]{1,0:T(8,128)}', space=vmem, size = 0x3000, scoped, tag = 'scratch operand']
  %s0 = inlined_call_operand.vmem [shape: f32[22,32], index: 0, kind: input, shape index: {}]
  %s1 = inlined_call_operand.vmem [shape: f32[32,96], index: 1, kind: input, shape index: {}]
  %s2 = inlined_call_operand.vmem [shape: f32[1,96], index: 2, kind: input, shape index: {}]
  %s3 = inlined_call_operand.vmem [shape: f32[22,96], index: 3, kind: output, shape index: {}]
  %s4 = sld [smem:[#allocation0]]
  $region30: #{cross_attention_forward.48} parent=0
    _
  %s6 = ssub.s32 1, %s4
  %s7 = scalar_select 0, %s6, %s4
  // Predicated region
  $region2: #{cross_attention_forward.48} parent=0 // pred_check
    _
  $region3: #{cross_attention_forward.48} parent=0 // pred_check_branch
    %9 = sbr.rel (0) target = $region5
  $region4: #{cross_attention_forward.48} parent=0 // pred_region
    _
  $region5: #{cross_attention_forward.48} parent=0 // pred_fallthru
    _
  // Predicated region
  $region6: #{cross_attention_forward.48} parent=0 // pred_check
    _
  $region7: #{cross_attention_forward.48} parent=0 // pred_check_branch
    %11 = sbr.rel (0) target = $region9
  $region8: #{cross_attention_forward.48} parent=0 // pred_region
    _
  $region9: #{cross_attention_forward.48} parent=0 // pred_fallthru
    _
  // Predicated region
  $region10: #{cross_attention_forward.48} parent=0 // pred_check
    _
  $region11: #{cross_attention_forward.48} parent=0 // pred_check_branch
    %13 = sbr.rel (0) target = $region13
  $region12: #{cross_attention_forward.48} parent=0 // pred_region
    _
  $region13: #{cross_attention_forward.48} parent=0 // pred_fallthru
    _
  %p14 = scmp.eq.s32.totalorder 0, 0
  // Predicated region
  $region14: #{cross_attention_forward.48} parent=0 // pred_check
    %p15 = pneg %p14
  $region15: #{cross_attention_forward.48} parent=0 // pred_check_branch
    %17 = sbr.rel (%p15) target = $region17
  $region16: #{cross_attention_forward.48} parent=0 // pred_region
    %vm18 = vcmask 785408
    %19 = vst.msk [vmem:[#allocation2] sm:$0xff] %vm18, 0.0
    %20 = vst.msk [vmem:[#allocation2 + $0x8] sm:$0xff] %vm18, 0.0
    %vm21 = vcmask 783360
    %22 = vst.msk [vmem:[#allocation2 + $0x10] sm:$0x3f] %vm21, 0.0
  $region17: #{cross_attention_forward.48} parent=0 // pred_fallthru
    _
  %v23 = vld [vmem:[#allocation2] sm:$0xff]
  %v24 = vld [vmem:[#allocation2 + $0x8] sm:$0xff]
  %v25 = vld [vmem:[#allocation2 + $0x10] sm:$0x3f]
  %v26 = vld [vmem:[%s0] sm:$0xff]
  %v27 = vld [vmem:[%s0 + $0x8] sm:$0xff]
  %v28 = vld [vmem:[%s0 + $0x10] sm:$0x3f]
  %v29 = vld [vmem:[%s1] sm:$0xff]
  %v30 = vld [vmem:[%s1 + $0x8] sm:$0xff]
  %v31 = vld [vmem:[%s1 + $0x10] sm:$0xff]
  %v32 = vld [vmem:[%s1 + $0x18] sm:$0xff]
  %vm33 = vcmask 261120
  %v35 = vsel %vm33, %v26, 0
  %v38 = vsel %vm33, %v27, 0
  %v41 = vsel %vm33, %v28, 0
  %43 = vmatprep.subr.mxu0 0.0
  %44 = vmatpush1.msra.mxu0 0.0
  %45 = vmatprep.subr.mxu0 0.0
  %46 = vmatpush1.msra.mxu0 0.0
  %47 = vmatprep.subr.mxu0 0.0
  %48 = vmatpush1.msra.mxu0 0.0
  %49 = vmatprep.subr.mxu0 0.0
  %50 = vmatpush1.msra.mxu0 0.0
  %51 = vmatprep.subr.mxu0 0.0
  %52 = vmatpush1.msra.mxu0 0.0
  %53 = vmatprep.subr.mxu0 0.0
  %54 = vmatpush1.msra.mxu0 0.0
  %55 = vmatprep.subr.mxu0 0.0
  %56 = vmatpush1.msra.mxu0 0.0
  %57 = vmatprep.subr.mxu0 0.0
  %58 = vmatpush1.msra.mxu0 0.0
  %59 = vmatprep.subr.mxu0 0.0
  %60 = vmatpush1.msra.mxu0 0.0
  %61 = vmatprep.subr.mxu0 0.0
  %62 = vmatpush1.msra.mxu0 0.0
  %63 = vmatprep.subr.mxu0 0.0
  %64 = vmatpush1.msra.mxu0 0.0
  %65 = vmatprep.subr.mxu0 0.0
  %66 = vmatpush1.msra.mxu0 0.0
  %67 = vmatprep.subr.mxu0 0.0
  %68 = vmatpush1.msra.mxu0 %v32
  %69 = vmatprep.subr.mxu0 0.0
  %70 = vmatpush1.msra.mxu0 %v31
  %71 = vmatprep.subr.mxu0 0.0
  %72 = vmatpush1.msra.mxu0 %v30
  %73 = vmatprep.subr.mxu0 0.0
  %74 = vmatpush1.msra.mxu0 %v29
  %75 = vmatprep.subr.mxu0 0.0
  %76 = vmatpush2.msra.mxu0 0.0
  %77 = vmatprep.subr.mxu0 0.0
  %78 = vmatpush2.msra.mxu0 0.0
  %79 = vmatprep.subr.mxu0 0.0
  %80 = vmatpush2.msra.mxu0 0.0
  %81 = vmatprep.subr.mxu0 0.0
  %82 = vmatpush2.msra.mxu0 0.0
  %83 = vmatprep.subr.mxu0 0.0
  %84 = vmatpush2.msra.mxu0 0.0
  %85 = vmatprep.subr.mxu0 0.0
  %86 = vmatpush2.msra.mxu0 0.0
  %87 = vmatprep.subr.mxu0 0.0
  %88 = vmatpush2.msra.mxu0 0.0
  %89 = vmatprep.subr.mxu0 0.0
  %90 = vmatpush2.msra.mxu0 0.0
  %91 = vmatprep.subr.mxu0 0.0
  %92 = vmatpush2.msra.mxu0 0.0
  %93 = vmatprep.subr.mxu0 0.0
  %94 = vmatpush2.msra.mxu0 0.0
  %95 = vmatprep.subr.mxu0 0.0
  %96 = vmatpush2.msra.mxu0 0.0
  %97 = vmatprep.subr.mxu0 0.0
  %98 = vmatpush2.msra.mxu0 0.0
  %99 = vmatprep.subr.mxu0 0.0
  %100 = vmatpush2.msra.mxu0 0.0
  %101 = vmatprep.subr.mxu0 0.0
  %102 = vmatpush2.msra.mxu0 0.0
  %103 = vmatprep.subr.mxu0 0.0
  %104 = vmatpush2.msra.mxu0 0.0
  %105 = vmatprep.subr.mxu0 0.0
  %106 = vmatpush2.msra.mxu0 0.0
  %107 = vmatprep.mubr.f32.mxu0 0.0
  %108 = vmatmul.mubr.f32.gmra.mxu0 %v35
  %v109 = vpop.f32.mrf.mxu0
  %v110 = vadd.f32 0.0, %v109
  %v111 = vpop.f32.mrf.mxu0
  %112 = vmatprep.mubr.f32.mxu0 0.0
  %113 = vmatmul.mubr.f32.gmra.mxu0 %v38
  %v114 = vpop.f32.mrf.mxu0
  %v115 = vadd.f32 0.0, %v114
  %v116 = vpop.f32.mrf.mxu0
  %117 = vmatprep.mubr.f32.mxu0 0.0
  %118 = vmatmul.mubr.f32.gmra.mxu0 %v41
  %v119 = vpop.f32.mrf.mxu0
  %v120 = vadd.f32 0.0, %v119
  %v121 = vpop.f32.mrf.mxu0
  %122 = vdwg.mxu0
  %v123 = vadd.f32 %v23, %v110
  %v124 = vadd.f32 %v24, %v115
  %v125 = vadd.f32 %v25, %v120
  %vm126 = vcmask 785408
  %127 = vst.msk [vmem:[#allocation2] sm:$0xff] %vm126, %v123
  %128 = vst.msk [vmem:[#allocation2 + $0x8] sm:$0xff] %vm126, %v124
  %vm129 = vcmask 783360
  %130 = vst.msk [vmem:[#allocation2 + $0x10] sm:$0x3f] %vm129, %v125
  // Predicated region
  $region18: #{cross_attention_forward.48} parent=0 // pred_check
    %p131 = pneg %p14
  $region19: #{cross_attention_forward.48} parent=0 // pred_check_branch
    %133 = sbr.rel (%p131) target = $region21
  $region20: #{cross_attention_forward.48} parent=0 // pred_region
    %v134 = vld [vmem:[#allocation2] sm:$0xff]
    %v135 = vld [vmem:[#allocation2 + $0x8] sm:$0xff]
    %v136 = vld [vmem:[#allocation2 + $0x10] sm:$0x3f]
    %v137 = vld [vmem:[%s2] sm:$0x1]
    %v139 = vlaneseq
    %v140 = vshrl.u32 %v139, 7
    %v141 = vsub.s32 0, %v140
    %v142 = vrot.slane %v137, %v141
    %v144 = vadd.f32 %v134, %v142
    %v145 = vadd.f32 %v135, %v142
    %v146 = vadd.f32 %v136, %v142
    %147 = vst.msk [vmem:[%s3] sm:$0xff] %vm126, %v144
    %148 = vst.msk [vmem:[%s3 + $0x8] sm:$0xff] %vm126, %v145
    %149 = vst.msk [vmem:[%s3 + $0x10] sm:$0x3f] %vm129, %v146
  $region21: #{cross_attention_forward.48} parent=0 // pred_fallthru
    _
  // Predicated region
  $region22: #{cross_attention_forward.48} parent=0 // pred_check
    _
  $region23: #{cross_attention_forward.48} parent=0 // pred_check_branch
    %151 = sbr.rel (0) target = $region25
  $region24: #{cross_attention_forward.48} parent=0 // pred_region
    _
  $region25: #{cross_attention_forward.48} parent=0 // pred_fallthru
    _
  // Predicated region
  $region26: #{cross_attention_forward.48} parent=0 // pred_check
    _
  $region27: #{cross_attention_forward.48} parent=0 // pred_check_branch
    %153 = sbr.rel (0) target = $region29
  $region28: #{cross_attention_forward.48} parent=0 // pred_region
    _
  $region29: #{cross_attention_forward.48} parent=0 // pred_fallthru
    _

// kernel: cross_attention_forward.50
$region0: #{cross_attention_forward.50}
  #allocation0 [shape = 'u32[]', space=smem, size = 0x4, offset = 0x4, fixed_abs, tag = 'smem constant byte address 0x4 - core index']
  #allocation1 [shape = 'u32[144,128]{1,0:T(1,128)}', space=vmem, size = 0x12000, scoped, tag = 'internal scratch']
  #allocation2 [shape = 'f32[22,32]{1,0:T(8,128)}', space=vmem, size = 0x3000, scoped, tag = 'scratch operand']
  %s0 = inlined_call_operand.vmem [shape: f32[22,32], index: 0, kind: input, shape index: {}]
  %s1 = inlined_call_operand.vmem [shape: f32[32,32], index: 1, kind: input, shape index: {}]
  %s2 = inlined_call_operand.vmem [shape: f32[1,32], index: 2, kind: input, shape index: {}]
  %s3 = inlined_call_operand.vmem [shape: f32[22,32], index: 3, kind: output, shape index: {}]
  %s4 = sld [smem:[#allocation0]]
  $region30: #{cross_attention_forward.50} parent=0
    _
  %s6 = ssub.s32 1, %s4
  %s7 = scalar_select 0, %s6, %s4
  // Predicated region
  $region2: #{cross_attention_forward.50} parent=0 // pred_check
    _
  $region3: #{cross_attention_forward.50} parent=0 // pred_check_branch
    %9 = sbr.rel (0) target = $region5
  $region4: #{cross_attention_forward.50} parent=0 // pred_region
    _
  $region5: #{cross_attention_forward.50} parent=0 // pred_fallthru
    _
  // Predicated region
  $region6: #{cross_attention_forward.50} parent=0 // pred_check
    _
  $region7: #{cross_attention_forward.50} parent=0 // pred_check_branch
    %11 = sbr.rel (0) target = $region9
  $region8: #{cross_attention_forward.50} parent=0 // pred_region
    _
  $region9: #{cross_attention_forward.50} parent=0 // pred_fallthru
    _
  // Predicated region
  $region10: #{cross_attention_forward.50} parent=0 // pred_check
    _
  $region11: #{cross_attention_forward.50} parent=0 // pred_check_branch
    %13 = sbr.rel (0) target = $region13
  $region12: #{cross_attention_forward.50} parent=0 // pred_region
    _
  $region13: #{cross_attention_forward.50} parent=0 // pred_fallthru
    _
  %p14 = scmp.eq.s32.totalorder 0, 0
  // Predicated region
  $region14: #{cross_attention_forward.50} parent=0 // pred_check
    %p15 = pneg %p14
  $region15: #{cross_attention_forward.50} parent=0 // pred_check_branch
    %17 = sbr.rel (%p15) target = $region17
  $region16: #{cross_attention_forward.50} parent=0 // pred_region
    %vm18 = vcmask 261120
    %19 = vst.msk [vmem:[#allocation2] sm:$0xff] %vm18, 0.0
    %20 = vst.msk [vmem:[#allocation2 + $0x8] sm:$0xff] %vm18, 0.0
    %vm21 = vcmask 259072
    %22 = vst.msk [vmem:[#allocation2 + $0x10] sm:$0x3f] %vm21, 0.0
  $region17: #{cross_attention_forward.50} parent=0 // pred_fallthru
    _
  %v23 = vld [vmem:[#allocation2] sm:$0xff]
  %v24 = vld [vmem:[#allocation2 + $0x8] sm:$0xff]
  %v25 = vld [vmem:[#allocation2 + $0x10] sm:$0x3f]
  %v26 = vld [vmem:[%s0] sm:$0xff]
  %v27 = vld [vmem:[%s0 + $0x8] sm:$0xff]
  %v28 = vld [vmem:[%s0 + $0x10] sm:$0x3f]
  %v29 = vld [vmem:[%s1] sm:$0xff]
  %v30 = vld [vmem:[%s1 + $0x8] sm:$0xff]
  %v31 = vld [vmem:[%s1 + $0x10] sm:$0xff]
  %v32 = vld [vmem:[%s1 + $0x18] sm:$0xff]
  %vm33 = vcmask 261120
  %v35 = vsel %vm33, %v26, 0
  %v38 = vsel %vm33, %v27, 0
  %v41 = vsel %vm33, %v28, 0
  %43 = vmatprep.subr.mxu0 0.0
  %44 = vmatpush1.msra.mxu0 0.0
  %45 = vmatprep.subr.mxu0 0.0
  %46 = vmatpush1.msra.mxu0 0.0
  %47 = vmatprep.subr.mxu0 0.0
  %48 = vmatpush1.msra.mxu0 0.0
  %49 = vmatprep.subr.mxu0 0.0
  %50 = vmatpush1.msra.mxu0 0.0
  %51 = vmatprep.subr.mxu0 0.0
  %52 = vmatpush1.msra.mxu0 0.0
  %53 = vmatprep.subr.mxu0 0.0
  %54 = vmatpush1.msra.mxu0 0.0
  %55 = vmatprep.subr.mxu0 0.0
  %56 = vmatpush1.msra.mxu0 0.0
  %57 = vmatprep.subr.mxu0 0.0
  %58 = vmatpush1.msra.mxu0 0.0
  %59 = vmatprep.subr.mxu0 0.0
  %60 = vmatpush1.msra.mxu0 0.0
  %61 = vmatprep.subr.mxu0 0.0
  %62 = vmatpush1.msra.mxu0 0.0
  %63 = vmatprep.subr.mxu0 0.0
  %64 = vmatpush1.msra.mxu0 0.0
  %65 = vmatprep.subr.mxu0 0.0
  %66 = vmatpush1.msra.mxu0 0.0
  %67 = vmatprep.subr.mxu0 0.0
  %68 = vmatpush1.msra.mxu0 %v32
  %69 = vmatprep.subr.mxu0 0.0
  %70 = vmatpush1.msra.mxu0 %v31
  %71 = vmatprep.subr.mxu0 0.0
  %72 = vmatpush1.msra.mxu0 %v30
  %73 = vmatprep.subr.mxu0 0.0
  %74 = vmatpush1.msra.mxu0 %v29
  %75 = vmatprep.subr.mxu0 0.0
  %76 = vmatpush2.msra.mxu0 0.0
  %77 = vmatprep.subr.mxu0 0.0
  %78 = vmatpush2.msra.mxu0 0.0
  %79 = vmatprep.subr.mxu0 0.0
  %80 = vmatpush2.msra.mxu0 0.0
  %81 = vmatprep.subr.mxu0 0.0
  %82 = vmatpush2.msra.mxu0 0.0
  %83 = vmatprep.subr.mxu0 0.0
  %84 = vmatpush2.msra.mxu0 0.0
  %85 = vmatprep.subr.mxu0 0.0
  %86 = vmatpush2.msra.mxu0 0.0
  %87 = vmatprep.subr.mxu0 0.0
  %88 = vmatpush2.msra.mxu0 0.0
  %89 = vmatprep.subr.mxu0 0.0
  %90 = vmatpush2.msra.mxu0 0.0
  %91 = vmatprep.subr.mxu0 0.0
  %92 = vmatpush2.msra.mxu0 0.0
  %93 = vmatprep.subr.mxu0 0.0
  %94 = vmatpush2.msra.mxu0 0.0
  %95 = vmatprep.subr.mxu0 0.0
  %96 = vmatpush2.msra.mxu0 0.0
  %97 = vmatprep.subr.mxu0 0.0
  %98 = vmatpush2.msra.mxu0 0.0
  %99 = vmatprep.subr.mxu0 0.0
  %100 = vmatpush2.msra.mxu0 0.0
  %101 = vmatprep.subr.mxu0 0.0
  %102 = vmatpush2.msra.mxu0 0.0
  %103 = vmatprep.subr.mxu0 0.0
  %104 = vmatpush2.msra.mxu0 0.0
  %105 = vmatprep.subr.mxu0 0.0
  %106 = vmatpush2.msra.mxu0 0.0
  %107 = vmatprep.mubr.f32.mxu0 0.0
  %108 = vmatmul.mubr.f32.gmra.mxu0 %v35
  %v109 = vpop.f32.mrf.mxu0
  %v110 = vadd.f32 0.0, %v109
  %v111 = vpop.f32.mrf.mxu0
  %112 = vmatprep.mubr.f32.mxu0 0.0
  %113 = vmatmul.mubr.f32.gmra.mxu0 %v38
  %v114 = vpop.f32.mrf.mxu0
  %v115 = vadd.f32 0.0, %v114
  %v116 = vpop.f32.mrf.mxu0
  %117 = vmatprep.mubr.f32.mxu0 0.0
  %118 = vmatmul.mubr.f32.gmra.mxu0 %v41
  %v119 = vpop.f32.mrf.mxu0
  %v120 = vadd.f32 0.0, %v119
  %v121 = vpop.f32.mrf.mxu0
  %122 = vdwg.mxu0
  %v123 = vadd.f32 %v23, %v110
  %v124 = vadd.f32 %v24, %v115
  %v125 = vadd.f32 %v25, %v120
  %126 = vst.msk [vmem:[#allocation2] sm:$0xff] %vm33, %v123
  %127 = vst.msk [vmem:[#allocation2 + $0x8] sm:$0xff] %vm33, %v124
  %vm128 = vcmask 259072
  %129 = vst.msk [vmem:[#allocation2 + $0x10] sm:$0x3f] %vm128, %v125
  // Predicated region
  $region18: #{cross_attention_forward.50} parent=0 // pred_check
    %p130 = pneg %p14
  $region19: #{cross_attention_forward.50} parent=0 // pred_check_branch
    %132 = sbr.rel (%p130) target = $region21
  $region20: #{cross_attention_forward.50} parent=0 // pred_region
    %v133 = vld [vmem:[#allocation2] sm:$0xff]
    %v134 = vld [vmem:[#allocation2 + $0x8] sm:$0xff]
    %v135 = vld [vmem:[#allocation2 + $0x10] sm:$0x3f]
    %v136 = vld [vmem:[%s2] sm:$0x1]
    %v138 = vlaneseq
    %v139 = vshrl.u32 %v138, 7
    %v140 = vsub.s32 0, %v139
    %v141 = vrot.slane %v136, %v140
    %v143 = vadd.f32 %v133, %v141
    %v144 = vadd.f32 %v134, %v141
    %v145 = vadd.f32 %v135, %v141
    %146 = vst.msk [vmem:[%s3] sm:$0xff] %vm33, %v143
    %147 = vst.msk [vmem:[%s3 + $0x8] sm:$0xff] %vm33, %v144
    %148 = vst.msk [vmem:[%s3 + $0x10] sm:$0x3f] %vm128, %v145
  $region21: #{cross_attention_forward.50} parent=0 // pred_fallthru
    _
  // Predicated region
  $region22: #{cross_attention_forward.50} parent=0 // pred_check
    _
  $region23: #{cross_attention_forward.50} parent=0 // pred_check_branch
    %150 = sbr.rel (0) target = $region25
  $region24: #{cross_attention_forward.50} parent=0 // pred_region
    _
  $region25: #{cross_attention_forward.50} parent=0 // pred_fallthru
    _
  // Predicated region
  $region26: #{cross_attention_forward.50} parent=0 // pred_check
    _
  $region27: #{cross_attention_forward.50} parent=0 // pred_check_branch
    %152 = sbr.rel (0) target = $region29
  $region28: #{cross_attention_forward.50} parent=0 // pred_region
    _
  $region29: #{cross_attention_forward.50} parent=0 // pred_fallthru
    _

// kernel: cross_attention_forward.49
$region0: #{cross_attention_forward.49}
  #allocation0 [shape = 'u32[]', space=smem, size = 0x4, offset = 0x4, fixed_abs, tag = 'smem constant byte address 0x4 - core index']
  #allocation1 [shape = 'u32[144,128]{1,0:T(1,128)}', space=vmem, size = 0x12000, scoped, tag = 'internal scratch']
  %s0 = inlined_call_operand.vmem [shape: f32[2,11,96], index: 0, kind: input, shape index: {}]
  %s1 = inlined_call_operand.vmem [shape: f32[3,96], index: 1, kind: input, shape index: {}]
  %s2 = inlined_call_operand.vmem [shape: f32[1,96], index: 2, kind: input, shape index: {}]
  %s3 = inlined_call_operand.vmem [shape: f32[2,11,32], index: 3, kind: output, shape index: {}]
  %s4 = sld [smem:[#allocation0]]
  $region45: #{cross_attention_forward.49} parent=0
    _
  %s6 = ssub.s32 1, %s4
  %s7 = scalar_select 0, %s6, %s4
  loop: start=0, step=1, limit=4
  $region2: #{cross_attention_forward.49} parent=0 // loop_pre_header
    _
  $region3: #{cross_attention_forward.49} parent=0 // loop_header
    %s9 = sphi 0, %s13
    %p10 = scmp.ge.s32.totalorder %s9, 4
    %s19 = sphi 0, %s21
    %s22 = sphi 0, %s19
    %s23 = sphi 0, %s22
    %s39 = sphi 0, %s23
    %s43 = sphi 0, %s43
    %s45 = sphi 0, %s43
    %s46 = sphi 0, %s45
    %s60 = sphi 0, %s46
    %s64 = sphi 0, %s64
    %s66 = sphi 0, %s64
    %s67 = sphi 0, %s66
    %s81 = sphi 0, %s67
    %s87 = sphi 0, %s89
    %s90 = sphi 0, %s87
    %s91 = sphi 0, %s90
    %s107 = sphi 0, %s91
  $region4: #{cross_attention_forward.49} parent=0 // loop_header_branch
    %12 = sbr.rel (%p10) target = $region8
  $region5: #{cross_attention_forward.49} parent=0 // loop_body
    %s14 = ssub.s32 %s9, 1
    %s15 = ssub.s32 %s9, 2
    %s16 = sadd.s32 %s9, 1
    %s17 = ssub.s32 %s9, %s16
    %p18 = scmp.eq.s32.totalorder %s17, 0
    %s20 = sadd.s32 %s19, 1
    %s21 = scalar_select %p18, %s19, %s20
    %p24 = pneg %p18
    %p25 = scmp.eq.s32.totalorder %s9, 1
    %p26 = por %p24, %p25
    %p27 = scmp.ne.s32.totalorder %s19, %s22
    %p28 = scmp.eq.s32.totalorder %s9, 0
    %p29 = por %p27, %p28
    %p30 = scmp.ne.s32.totalorder %s19, %s22
    %p31 = scmp.eq.s32.totalorder %s14, 1
    %p32 = por %p30, %p31
    %p33 = scmp.ne.s32.totalorder %s22, %s23
    %p34 = scmp.eq.s32.totalorder %s14, 0
    %p35 = por %p33, %p34
    %p36 = scmp.ne.s32.totalorder %s22, %s23
    %p37 = scmp.eq.s32.totalorder %s15, 1
    %p38 = por %p36, %p37
    %p40 = scmp.ne.s32.totalorder %s23, %s39
    %p41 = scmp.eq.s32.totalorder %s15, 0
    %p42 = por %p40, %p41
    %s44 = sadd.s32 %s43, 1
    %p47 = scmp.eq.s32.totalorder %s9, 1
    %p48 = scmp.ne.s32.totalorder %s43, %s45
    %p49 = scmp.eq.s32.totalorder %s9, 0
    %p50 = por %p48, %p49
    %p51 = scmp.ne.s32.totalorder %s43, %s45
    %p52 = scmp.eq.s32.totalorder %s14, 1
    %p53 = por %p51, %p52
    %p54 = scmp.ne.s32.totalorder %s45, %s46
    %p55 = scmp.eq.s32.totalorder %s14, 0
    %p56 = por %p54, %p55
    %p57 = scmp.ne.s32.totalorder %s45, %s46
    %p58 = scmp.eq.s32.totalorder %s15, 1
    %p59 = por %p57, %p58
    %p61 = scmp.ne.s32.totalorder %s46, %s60
    %p62 = scmp.eq.s32.totalorder %s15, 0
    %p63 = por %p61, %p62
    %s65 = sadd.s32 %s64, 1
    %p68 = scmp.eq.s32.totalorder %s9, 1
    %p69 = scmp.ne.s32.totalorder %s64, %s66
    %p70 = scmp.eq.s32.totalorder %s9, 0
    %p71 = por %p69, %p70
    %p72 = scmp.ne.s32.totalorder %s64, %s66
    %p73 = scmp.eq.s32.totalorder %s14, 1
    %p74 = por %p72, %p73
    %p75 = scmp.ne.s32.totalorder %s66, %s67
    %p76 = scmp.eq.s32.totalorder %s14, 0
    %p77 = por %p75, %p76
    %p78 = scmp.ne.s32.totalorder %s66, %s67
    %p79 = scmp.eq.s32.totalorder %s15, 1
    %p80 = por %p78, %p79
    %p82 = scmp.ne.s32.totalorder %s67, %s81
    %p83 = scmp.eq.s32.totalorder %s15, 0
    %p84 = por %p82, %p83
    %s85 = ssub.s32 %s9, %s16
    %p86 = scmp.eq.s32.totalorder %s85, 0
    %s88 = sadd.s32 %s87, 1
    %s89 = scalar_select %p86, %s87, %s88
    %p92 = pneg %p86
    %p93 = scmp.eq.s32.totalorder %s9, 1
    %p94 = por %p92, %p93
    %p95 = scmp.ne.s32.totalorder %s87, %s90
    %p96 = scmp.eq.s32.totalorder %s9, 0
    %p97 = por %p95, %p96
    %p98 = scmp.ne.s32.totalorder %s87, %s90
    %p99 = scmp.eq.s32.totalorder %s14, 1
    %p100 = por %p98, %p99
    %p101 = scmp.ne.s32.totalorder %s90, %s91
    %p102 = scmp.eq.s32.totalorder %s14, 0
    %p103 = por %p101, %p102
    %p104 = scmp.ne.s32.totalorder %s90, %s91
    %p105 = scmp.eq.s32.totalorder %s15, 1
    %p106 = por %p104, %p105
    %p108 = scmp.ne.s32.totalorder %s91, %s107
    %p109 = scmp.eq.s32.totalorder %s15, 0
    %p110 = por %p108, %p109
    %p111 = scmp.le.s32.totalorder 1, %s9
    %p112 = scmp.lt.s32.totalorder %s9, 3
    %p113 = pnand %p111, %p112
    %p114 = pneg %p113
    // Predicated region
    $region9: #{cross_attention_forward.49} parent=5 // pred_check
      _
    $region10: #{cross_attention_forward.49} parent=5 // pred_check_branch
      %116 = sbr.rel (%p113) target = $region12
    $region11: #{cross_attention_forward.49} parent=5 // pred_region
      %s117 = ssub.s32 %s9, 1
      // Predicated region
      $region13: #{cross_attention_forward.49} parent=11 // pred_check
        %p118 = pneg %p56
      $region14: #{cross_attention_forward.49} parent=11 // pred_check_branch
        %120 = sbr.rel (%p118) target = $region16
      $region15: #{cross_attention_forward.49} parent=11 // pred_region
        _
      $region16: #{cross_attention_forward.49} parent=11 // pred_fallthru
        _
      // Predicated region
      $region17: #{cross_attention_forward.49} parent=11 // pred_check
        %p121 = pneg %p77
      $region18: #{cross_attention_forward.49} parent=11 // pred_check_branch
        %123 = sbr.rel (%p121) target = $region20
      $region19: #{cross_attention_forward.49} parent=11 // pred_region
        _
      $region20: #{cross_attention_forward.49} parent=11 // pred_fallthru
        _
    $region12: #{cross_attention_forward.49} parent=5 // pred_fallthru
      _
    %p124 = scmp.lt.s32.totalorder %s9, 2
    // Predicated region
    $region21: #{cross_attention_forward.49} parent=5 // pred_check
      %p125 = pneg %p124
    $region22: #{cross_attention_forward.49} parent=5 // pred_check_branch
      %127 = sbr.rel (%p125) target = $region24
    $region23: #{cross_attention_forward.49} parent=5 // pred_region
      // Predicated region
      $region25: #{cross_attention_forward.49} parent=23 // pred_check
        %p128 = pneg %p29
      $region26: #{cross_attention_forward.49} parent=23 // pred_check_branch
        %130 = sbr.rel (%p128) target = $region28
      $region27: #{cross_attention_forward.49} parent=23 // pred_region
        %p131 = scmp.lt.s32.totalorder %s9, 1
        %s132 = scalar_select %p131, %s9, 1
        %s133 = smul.addr %s132, 2
        %s134 = smul.addr %s133, 8
        %s135 = scalar_lea.vmem %s0, %s134
      $region28: #{cross_attention_forward.49} parent=23 // pred_fallthru
        _
    $region24: #{cross_attention_forward.49} parent=5 // pred_fallthru
      _
    %p136 = scmp.le.s32.totalorder 1, %s9
    %p137 = scmp.lt.s32.totalorder %s9, 3
    %p138 = pnand %p136, %p137
    %p139 = pneg %p138
    // Predicated region
    $region29: #{cross_attention_forward.49} parent=5 // pred_check
      _
    $region30: #{cross_attention_forward.49} parent=5 // pred_check_branch
      %141 = sbr.rel (%p138) target = $region32
    $region31: #{cross_attention_forward.49} parent=5 // pred_region
      %s142 = ssub.s32 %s9, 1
      %p143 = scmp.lt.s32.totalorder %s14, 1
      %s144 = scalar_select %p143, %s14, 1
      %s145 = smul.addr %s144, 2
      %s146 = smul.addr %s145, 8
      %s147 = scalar_lea.vmem %s0, %s146
      %p148 = pneg %p35
      %p149 = pneg %p32
      %p150 = pneg %p56
      %p151 = pneg %p53
      %p152 = pneg %p77
      %p153 = pneg %p74
      %p154 = pneg %p103
      %p155 = pneg %p100
      %p156 = scmp.lt.s32.totalorder %s14, 1
      %s157 = scalar_select %p156, %s14, 1
      %s158 = smul.addr %s157, 2
      %s159 = smul.addr %s158, 8
      %s160 = scalar_lea.vmem %s3, %s159
      %p161 = scmp.lt.s32.totalorder %s14, 1
      %s162 = scalar_select %p161, %s14, 1
      %s163 = smul.addr %s162, 2
      %s164 = smul.addr %s163, 8
      %s165 = scalar_lea.vmem %s0, %s164
      %p166 = scmp.lt.s32.totalorder %s14, 1
      %s167 = scalar_select %p166, %s14, 1
      %s168 = smul.addr %s167, 2
      %s169 = smul.addr %s168, 8
      %s170 = scalar_lea.vmem %s3, %s169
      %v171 = vld [vmem:[%s165] sm:$0xff]
      %v172 = vld [vmem:[%s165 + $0x8] sm:$0x7]
      %v173 = vld [vmem:[%s1] sm:$0x7]
      %v174 = vld [vmem:[%s2] sm:$0x1]
      %v175 = vlaneseq
      %v176 = vshrl.u32 %v175, 7
      %v177 = vadd.s32 %v176, 8
      %v178 = vlaneseq
      %v179 = vand.u32 %v178, 127
      %v180 = vadd.s32 %v179, 1
      %vm181 = vcmp.eq.s32.totalorder %v176, %v180
      %vm182 = vcmp.eq.s32.totalorder %v177, %v180
      %v183 = vsel %vm181, 1, 0
      %v184 = vsel %vm182, 1, 0
      %v185 = vcvt.s32.f32 %v183
      %v186 = vcvt.s32.f32 %v184
      %v187 = vadd.s32 %v179, 2
      %vm188 = vcmp.eq.s32.totalorder %v176, %v187
      %vm189 = vcmp.eq.s32.totalorder %v177, %v187
      %v190 = vsel %vm188, 1, 0
      %v191 = vsel %vm189, 1, 0
      %v192 = vcvt.s32.f32 %v190
      %v193 = vcvt.s32.f32 %v191
      %vm194 = vcmask 89088
      %v196 = vsel %vm194, %v185, 0
      %v199 = vsel %vm194, %v186, 0
      %vm201 = vcmask 1042432
      %v203 = vsel %vm201, %v172, 0
      %205 = vmatprep.subr.mxu0 0.0
      %206 = vmatpush1.msra.mxu0 0.0
      %207 = vmatprep.subr.mxu0 0.0
      %208 = vmatpush1.msra.mxu0 0.0
      %209 = vmatprep.subr.mxu0 0.0
      %210 = vmatpush1.msra.mxu0 0.0
      %211 = vmatprep.subr.mxu0 0.0
      %212 = vmatpush1.msra.mxu0 0.0
      %213 = vmatprep.subr.mxu0 0.0
      %214 = vmatpush1.msra.mxu0 0.0
      %215 = vmatprep.subr.mxu0 0.0
      %216 = vmatpush1.msra.mxu0 0.0
      %217 = vmatprep.subr.mxu0 0.0
      %218 = vmatpush1.msra.mxu0 0.0
      %219 = vmatprep.subr.mxu0 0.0
      %220 = vmatpush1.msra.mxu0 0.0
      %221 = vmatprep.subr.mxu0 0.0
      %222 = vmatpush1.msra.mxu0 0.0
      %223 = vmatprep.subr.mxu0 0.0
      %224 = vmatpush1.msra.mxu0 0.0
      %225 = vmatprep.subr.mxu0 0.0
      %226 = vmatpush1.msra.mxu0 0.0
      %227 = vmatprep.subr.mxu0 0.0
      %228 = vmatpush1.msra.mxu0 0.0
      %229 = vmatprep.subr.mxu0 0.0
      %230 = vmatpush1.msra.mxu0 0.0
      %231 = vmatprep.subr.mxu0 0.0
      %232 = vmatpush1.msra.mxu0 0.0
      %233 = vmatprep.subr.mxu0 0.0
      %234 = vmatpush1.msra.mxu0 %v203
      %235 = vmatprep.subr.mxu0 0.0
      %236 = vmatpush1.msra.mxu0 %v171
      %237 = vmatprep.subr.mxu0 0.0
      %238 = vmatpush2.msra.mxu0 0.0
      %239 = vmatprep.subr.mxu0 0.0
      %240 = vmatpush2.msra.mxu0 0.0
      %241 = vmatprep.subr.mxu0 0.0
      %242 = vmatpush2.msra.mxu0 0.0
      %243 = vmatprep.subr.mxu0 0.0
      %244 = vmatpush2.msra.mxu0 0.0
      %245 = vmatprep.subr.mxu0 0.0
      %246 = vmatpush2.msra.mxu0 0.0
      %247 = vmatprep.subr.mxu0 0.0
      %248 = vmatpush2.msra.mxu0 0.0
      %249 = vmatprep.subr.mxu0 0.0
      %250 = vmatpush2.msra.mxu0 0.0
      %251 = vmatprep.subr.mxu0 0.0
      %252 = vmatpush2.msra.mxu0 0.0
      %253 = vmatprep.subr.mxu0 0.0
      %254 = vmatpush2.msra.mxu0 0.0
      %255 = vmatprep.subr.mxu0 0.0
      %256 = vmatpush2.msra.mxu0 0.0
      %257 = vmatprep.subr.mxu0 0.0
      %258 = vmatpush2.msra.mxu0 0.0
      %259 = vmatprep.subr.mxu0 0.0
      %260 = vmatpush2.msra.mxu0 0.0
      %261 = vmatprep.subr.mxu0 0.0
      %262 = vmatpush2.msra.mxu0 0.0
      %263 = vmatprep.subr.mxu0 0.0
      %264 = vmatpush2.msra.mxu0 0.0
      %265 = vmatprep.subr.mxu0 0.0
      %266 = vmatpush2.msra.mxu0 0.0
      %267 = vmatprep.subr.mxu0 0.0
      %268 = vmatpush2.msra.mxu0 0.0
      %269 = vmatprep.mubr.f32.mxu0 0.0
      %270 = vmatmul.mubr.f32.gmra.mxu0 %v196
      %v271 = vpop.f32.mrf.mxu0
      %v272 = vadd.f32 0.0, %v271
      %v273 = vpop.f32.mrf.mxu0
      %274 = vmatprep.mubr.f32.mxu0 0.0
      %275 = vmatmul.mubr.f32.gmra.mxu0 %v199
      %v276 = vpop.f32.mrf.mxu0
      %v277 = vadd.f32 0.0, %v276
      %v278 = vpop.f32.mrf.mxu0
      %279 = vdwg.mxu0
      %v281 = vsel %vm194, %v192, 0
      %v284 = vsel %vm194, %v193, 0
      %286 = vmatprep.subr.mxu0 0.0
      %287 = vmatpush1.msra.mxu0 0.0
      %288 = vmatprep.subr.mxu0 0.0
      %289 = vmatpush1.msra.mxu0 0.0
      %290 = vmatprep.subr.mxu0 0.0
      %291 = vmatpush1.msra.mxu0 0.0
      %292 = vmatprep.subr.mxu0 0.0
      %293 = vmatpush1.msra.mxu0 0.0
      %294 = vmatprep.subr.mxu0 0.0
      %295 = vmatpush1.msra.mxu0 0.0
      %296 = vmatprep.subr.mxu0 0.0
      %297 = vmatpush1.msra.mxu0 0.0
      %298 = vmatprep.subr.mxu0 0.0
      %299 = vmatpush1.msra.mxu0 0.0
      %300 = vmatprep.subr.mxu0 0.0
      %301 = vmatpush1.msra.mxu0 0.0
      %302 = vmatprep.subr.mxu0 0.0
      %303 = vmatpush1.msra.mxu0 0.0
      %304 = vmatprep.subr.mxu0 0.0
      %305 = vmatpush1.msra.mxu0 0.0
      %306 = vmatprep.subr.mxu0 0.0
      %307 = vmatpush1.msra.mxu0 0.0
      %308 = vmatprep.subr.mxu0 0.0
      %309 = vmatpush1.msra.mxu0 0.0
      %310 = vmatprep.subr.mxu0 0.0
      %311 = vmatpush1.msra.mxu0 0.0
      %312 = vmatprep.subr.mxu0 0.0
      %313 = vmatpush1.msra.mxu0 0.0
      %314 = vmatprep.subr.mxu0 0.0
      %315 = vmatpush1.msra.mxu0 %v203
      %316 = vmatprep.subr.mxu0 0.0
      %317 = vmatpush1.msra.mxu0 %v171
      %318 = vmatprep.subr.mxu0 0.0
      %319 = vmatpush2.msra.mxu0 0.0
      %320 = vmatprep.subr.mxu0 0.0
      %321 = vmatpush2.msra.mxu0 0.0
      %322 = vmatprep.subr.mxu0 0.0
      %323 = vmatpush2.msra.mxu0 0.0
      %324 = vmatprep.subr.mxu0 0.0
      %325 = vmatpush2.msra.mxu0 0.0
      %326 = vmatprep.subr.mxu0 0.0
      %327 = vmatpush2.msra.mxu0 0.0
      %328 = vmatprep.subr.mxu0 0.0
      %329 = vmatpush2.msra.mxu0 0.0
      %330 = vmatprep.subr.mxu0 0.0
      %331 = vmatpush2.msra.mxu0 0.0
      %332 = vmatprep.subr.mxu0 0.0
      %333 = vmatpush2.msra.mxu0 0.0
      %334 = vmatprep.subr.mxu0 0.0
      %335 = vmatpush2.msra.mxu0 0.0
      %336 = vmatprep.subr.mxu0 0.0
      %337 = vmatpush2.msra.mxu0 0.0
      %338 = vmatprep.subr.mxu0 0.0
      %339 = vmatpush2.msra.mxu0 0.0
      %340 = vmatprep.subr.mxu0 0.0
      %341 = vmatpush2.msra.mxu0 0.0
      %342 = vmatprep.subr.mxu0 0.0
      %343 = vmatpush2.msra.mxu0 0.0
      %344 = vmatprep.subr.mxu0 0.0
      %345 = vmatpush2.msra.mxu0 0.0
      %346 = vmatprep.subr.mxu0 0.0
      %347 = vmatpush2.msra.mxu0 0.0
      %348 = vmatprep.subr.mxu0 0.0
      %349 = vmatpush2.msra.mxu0 0.0
      %350 = vmatprep.mubr.f32.mxu0 0.0
      %351 = vmatmul.mubr.f32.gmra.mxu0 %v281
      %v352 = vpop.f32.mrf.mxu0
      %v353 = vadd.f32 0.0, %v352
      %v354 = vpop.f32.mrf.mxu0
      %355 = vmatprep.mubr.f32.mxu0 0.0
      %356 = vmatmul.mubr.f32.gmra.mxu0 %v284
      %v357 = vpop.f32.mrf.mxu0
      %v358 = vadd.f32 0.0, %v357
      %v359 = vpop.f32.mrf.mxu0
      %360 = vdwg.mxu0
      %v361 = vlaneseq
      %v362 = vshrl.u32 %v361, 7
      %v363 = vsub.s32 2, %v362
      %v364 = vrot.slane %v173, %v363
      %v365 = vmul.f32 %v364, %v171
      %v366 = vmul.f32 %v364, %v172
      %v367 = vlaneseq
      %v368 = vshrl.u32 %v367, 7
      %v369 = vsub.s32 1, %v368
      %v370 = vrot.slane %v173, %v369
      %v371 = vmul.f32 %v370, %v272
      %v372 = vmul.f32 %v370, %v277
      %v373 = vadd.f32 %v365, %v371
      %v374 = vadd.f32 %v366, %v372
      %v375 = vlaneseq
      %v376 = vshrl.u32 %v375, 7
      %v377 = vsub.s32 0, %v376
      %v378 = vrot.slane %v173, %v377
      %v379 = vmul.f32 %v378, %v353
      %v380 = vmul.f32 %v378, %v358
      %v381 = vadd.f32 %v373, %v379
      %v382 = vadd.f32 %v374, %v380
      %v384 = vlaneseq
      %v385 = vshrl.u32 %v384, 7
      %v386 = vsub.s32 0, %v385
      %v387 = vrot.slane %v174, %v386
      %v389 = vadd.f32 %v381, %v387
      %v390 = vadd.f32 %v382, %v387
      %393 = vrot.lane.b32.xlu0 %v389, 120
      %v394 = vpop.permute.xlu0 %393
      %395 = vrot.lane.b32.xlu0 %v390, 120
      %v396 = vpop.permute.xlu0 %395
      %397 = vrot.lane.b32.xlu0 %v389, 112
      %v398 = vpop.permute.xlu0 %397
      %399 = vrot.lane.b32.xlu0 %v390, 112
      %v400 = vpop.permute.xlu0 %399
      %401 = vrot.lane.b32.xlu0 %v389, 104
      %v402 = vpop.permute.xlu0 %401
      %403 = vrot.lane.b32.xlu0 %v390, 104
      %v404 = vpop.permute.xlu0 %403
      %405 = vrot.lane.b32.xlu0 %v389, 96
      %v406 = vpop.permute.xlu0 %405
      %407 = vrot.lane.b32.xlu0 %v390, 96
      %v408 = vpop.permute.xlu0 %407
      %vm409 = vcmask 64512
      %v410 = vsel %vm409, %v389, 0
      %v412 = vsel %vm409, %v390, 0
      %v414 = vsel %vm409, %v406, 0
      %v416 = vsel %vm409, %v408, 0
      %418 = vmatprep.subr.mxu0 0.0
      %419 = vmatpush1.xpose.msra.mxu0 0.0
      %420 = vmatprep.subr.mxu0 0.0
      %421 = vmatpush1.xpose.msra.mxu0 0.0
      %422 = vmatprep.subr.mxu0 0.0
      %423 = vmatpush1.xpose.msra.mxu0 0.0
      %424 = vmatprep.subr.mxu0 0.0
      %425 = vmatpush1.xpose.msra.mxu0 0.0
      %426 = vmatprep.subr.mxu0 0.0
      %427 = vmatpush1.xpose.msra.mxu0 0.0
      %428 = vmatprep.subr.mxu0 0.0
      %429 = vmatpush1.xpose.msra.mxu0 0.0
      %430 = vmatprep.subr.mxu0 0.0
      %431 = vmatpush1.xpose.msra.mxu0 0.0
      %432 = vmatprep.subr.mxu0 0.0
      %433 = vmatpush1.xpose.msra.mxu0 0.0
      %434 = vmatprep.subr.mxu0 0.0
      %435 = vmatpush1.xpose.msra.mxu0 0.0
      %436 = vmatprep.subr.mxu0 0.0
      %437 = vmatpush1.xpose.msra.mxu0 0.0
      %438 = vmatprep.subr.mxu0 0.0
      %439 = vmatpush1.xpose.msra.mxu0 0.0
      %440 = vmatprep.subr.mxu0 0.0
      %441 = vmatpush1.xpose.msra.mxu0 0.0
      %442 = vmatprep.subr.mxu0 0.0
      %443 = vmatpush1.xpose.msra.mxu0 0.0
      %444 = vmatprep.subr.mxu0 0.0
      %445 = vmatpush1.xpose.msra.mxu0 0.0
      %446 = vmatprep.subr.mxu0 0.0
      %447 = vmatpush1.xpose.msra.mxu0 %v416
      %448 = vmatprep.subr.mxu0 0.0
      %449 = vmatpush1.xpose.msra.mxu0 %v414
      %450 = vmatprep.subr.mxu0 0.0
      %451 = vmatpush2.xpose.msra.mxu0 0.0
      %452 = vmatprep.subr.mxu0 0.0
      %453 = vmatpush2.xpose.msra.mxu0 0.0
      %454 = vmatprep.subr.mxu0 0.0
      %455 = vmatpush2.xpose.msra.mxu0 0.0
      %456 = vmatprep.subr.mxu0 0.0
      %457 = vmatpush2.xpose.msra.mxu0 0.0
      %458 = vmatprep.subr.mxu0 0.0
      %459 = vmatpush2.xpose.msra.mxu0 0.0
      %460 = vmatprep.subr.mxu0 0.0
      %461 = vmatpush2.xpose.msra.mxu0 0.0
      %462 = vmatprep.subr.mxu0 0.0
      %463 = vmatpush2.xpose.msra.mxu0 0.0
      %464 = vmatprep.subr.mxu0 0.0
      %465 = vmatpush2.xpose.msra.mxu0 0.0
      %466 = vmatprep.subr.mxu0 0.0
      %467 = vmatpush2.xpose.msra.mxu0 0.0
      %468 = vmatprep.subr.mxu0 0.0
      %469 = vmatpush2.xpose.msra.mxu0 0.0
      %470 = vmatprep.subr.mxu0 0.0
      %471 = vmatpush2.xpose.msra.mxu0 0.0
      %472 = vmatprep.subr.mxu0 0.0
      %473 = vmatpush2.xpose.msra.mxu0 0.0
      %474 = vmatprep.subr.mxu0 0.0
      %475 = vmatpush2.xpose.msra.mxu0 0.0
      %476 = vmatprep.subr.mxu0 0.0
      %477 = vmatpush2.xpose.msra.mxu0 0.0
      %478 = vmatprep.subr.mxu0 0.0
      %479 = vmatpush2.xpose.msra.mxu0 0.0
      %480 = vmatprep.subr.mxu0 0.0
      %481 = vmatpush2.xpose.msra.mxu0 0.0
      %482 = vmatprep.mubr.f32.mxu0 0.0
      %483 = vmatmul.mubr.f32.gmra.mxu0 %v410
      %v484 = vpop.f32.mrf.mxu0
      %v485 = vadd.f32 0.0, %v484
      %v486 = vpop.f32.mrf.mxu0
      %487 = vmatprep.mubr.f32.mxu0 0.0
      %488 = vmatmul.mubr.f32.gmra.mxu0 %v412
      %v489 = vpop.f32.mrf.mxu0
      %v490 = vadd.f32 0.0, %v489
      %v491 = vpop.f32.mrf.mxu0
      %492 = vdwg.mxu0
      %493 = vrot.lane.b32.xlu0 %v394, 96
      %v494 = vpop.permute.xlu0 %493
      %495 = vrot.lane.b32.xlu0 %v396, 96
      %v496 = vpop.permute.xlu0 %495
      %v497 = vsel %vm409, %v394, 0
      %v499 = vsel %vm409, %v396, 0
      %v501 = vsel %vm409, %v494, 0
      %v503 = vsel %vm409, %v496, 0
      %505 = vmatprep.subr.mxu0 0.0
      %506 = vmatpush1.xpose.msra.mxu0 0.0
      %507 = vmatprep.subr.mxu0 0.0
      %508 = vmatpush1.xpose.msra.mxu0 0.0
      %509 = vmatprep.subr.mxu0 0.0
      %510 = vmatpush1.xpose.msra.mxu0 0.0
      %511 = vmatprep.subr.mxu0 0.0
      %512 = vmatpush1.xpose.msra.mxu0 0.0
      %513 = vmatprep.subr.mxu0 0.0
      %514 = vmatpush1.xpose.msra.mxu0 0.0
      %515 = vmatprep.subr.mxu0 0.0
      %516 = vmatpush1.xpose.msra.mxu0 0.0
      %517 = vmatprep.subr.mxu0 0.0
      %518 = vmatpush1.xpose.msra.mxu0 0.0
      %519 = vmatprep.subr.mxu0 0.0
      %520 = vmatpush1.xpose.msra.mxu0 0.0
      %521 = vmatprep.subr.mxu0 0.0
      %522 = vmatpush1.xpose.msra.mxu0 0.0
      %523 = vmatprep.subr.mxu0 0.0
      %524 = vmatpush1.xpose.msra.mxu0 0.0
      %525 = vmatprep.subr.mxu0 0.0
      %526 = vmatpush1.xpose.msra.mxu0 0.0
      %527 = vmatprep.subr.mxu0 0.0
      %528 = vmatpush1.xpose.msra.mxu0 0.0
      %529 = vmatprep.subr.mxu0 0.0
      %530 = vmatpush1.xpose.msra.mxu0 0.0
      %531 = vmatprep.subr.mxu0 0.0
      %532 = vmatpush1.xpose.msra.mxu0 0.0
      %533 = vmatprep.subr.mxu0 0.0
      %534 = vmatpush1.xpose.msra.mxu0 %v503
      %535 = vmatprep.subr.mxu0 0.0
      %536 = vmatpush1.xpose.msra.mxu0 %v501
      %537 = vmatprep.subr.mxu0 0.0
      %538 = vmatpush2.xpose.msra.mxu0 0.0
      %539 = vmatprep.subr.mxu0 0.0
      %540 = vmatpush2.xpose.msra.mxu0 0.0
      %541 = vmatprep.subr.mxu0 0.0
      %542 = vmatpush2.xpose.msra.mxu0 0.0
      %543 = vmatprep.subr.mxu0 0.0
      %544 = vmatpush2.xpose.msra.mxu0 0.0
      %545 = vmatprep.subr.mxu0 0.0
      %546 = vmatpush2.xpose.msra.mxu0 0.0
      %547 = vmatprep.subr.mxu0 0.0
      %548 = vmatpush2.xpose.msra.mxu0 0.0
      %549 = vmatprep.subr.mxu0 0.0
      %550 = vmatpush2.xpose.msra.mxu0 0.0
      %551 = vmatprep.subr.mxu0 0.0
      %552 = vmatpush2.xpose.msra.mxu0 0.0
      %553 = vmatprep.subr.mxu0 0.0
      %554 = vmatpush2.xpose.msra.mxu0 0.0
      %555 = vmatprep.subr.mxu0 0.0
      %556 = vmatpush2.xpose.msra.mxu0 0.0
      %557 = vmatprep.subr.mxu0 0.0
      %558 = vmatpush2.xpose.msra.mxu0 0.0
      %559 = vmatprep.subr.mxu0 0.0
      %560 = vmatpush2.xpose.msra.mxu0 0.0
      %561 = vmatprep.subr.mxu0 0.0
      %562 = vmatpush2.xpose.msra.mxu0 0.0
      %563 = vmatprep.subr.mxu0 0.0
      %564 = vmatpush2.xpose.msra.mxu0 0.0
      %565 = vmatprep.subr.mxu0 0.0
      %566 = vmatpush2.xpose.msra.mxu0 0.0
      %567 = vmatprep.subr.mxu0 0.0
      %568 = vmatpush2.xpose.msra.mxu0 0.0
      %569 = vmatprep.mubr.f32.mxu0 0.0
      %570 = vmatmul.mubr.f32.gmra.mxu0 %v497
      %v571 = vpop.f32.mrf.mxu0
      %v572 = vadd.f32 0.0, %v571
      %v573 = vpop.f32.mrf.mxu0
      %574 = vmatprep.mubr.f32.mxu0 0.0
      %575 = vmatmul.mubr.f32.gmra.mxu0 %v499
      %v576 = vpop.f32.mrf.mxu0
      %v577 = vadd.f32 0.0, %v576
      %v578 = vpop.f32.mrf.mxu0
      %579 = vdwg.mxu0
      %580 = vrot.lane.b32.xlu0 %v398, 96
      %v581 = vpop.permute.xlu0 %580
      %582 = vrot.lane.b32.xlu0 %v400, 96
      %v583 = vpop.permute.xlu0 %582
      %v584 = vsel %vm409, %v398, 0
      %v586 = vsel %vm409, %v400, 0
      %v588 = vsel %vm409, %v581, 0
      %v590 = vsel %vm409, %v583, 0
      %592 = vmatprep.subr.mxu0 0.0
      %593 = vmatpush1.xpose.msra.mxu0 0.0
      %594 = vmatprep.subr.mxu0 0.0
      %595 = vmatpush1.xpose.msra.mxu0 0.0
      %596 = vmatprep.subr.mxu0 0.0
      %597 = vmatpush1.xpose.msra.mxu0 0.0
      %598 = vmatprep.subr.mxu0 0.0
      %599 = vmatpush1.xpose.msra.mxu0 0.0
      %600 = vmatprep.subr.mxu0 0.0
      %601 = vmatpush1.xpose.msra.mxu0 0.0
      %602 = vmatprep.subr.mxu0 0.0
      %603 = vmatpush1.xpose.msra.mxu0 0.0
      %604 = vmatprep.subr.mxu0 0.0
      %605 = vmatpush1.xpose.msra.mxu0 0.0
      %606 = vmatprep.subr.mxu0 0.0
      %607 = vmatpush1.xpose.msra.mxu0 0.0
      %608 = vmatprep.subr.mxu0 0.0
      %609 = vmatpush1.xpose.msra.mxu0 0.0
      %610 = vmatprep.subr.mxu0 0.0
      %611 = vmatpush1.xpose.msra.mxu0 0.0
      %612 = vmatprep.subr.mxu0 0.0
      %613 = vmatpush1.xpose.msra.mxu0 0.0
      %614 = vmatprep.subr.mxu0 0.0
      %615 = vmatpush1.xpose.msra.mxu0 0.0
      %616 = vmatprep.subr.mxu0 0.0
      %617 = vmatpush1.xpose.msra.mxu0 0.0
      %618 = vmatprep.subr.mxu0 0.0
      %619 = vmatpush1.xpose.msra.mxu0 0.0
      %620 = vmatprep.subr.mxu0 0.0
      %621 = vmatpush1.xpose.msra.mxu0 %v590
      %622 = vmatprep.subr.mxu0 0.0
      %623 = vmatpush1.xpose.msra.mxu0 %v588
      %624 = vmatprep.subr.mxu0 0.0
      %625 = vmatpush2.xpose.msra.mxu0 0.0
      %626 = vmatprep.subr.mxu0 0.0
      %627 = vmatpush2.xpose.msra.mxu0 0.0
      %628 = vmatprep.subr.mxu0 0.0
      %629 = vmatpush2.xpose.msra.mxu0 0.0
      %630 = vmatprep.subr.mxu0 0.0
      %631 = vmatpush2.xpose.msra.mxu0 0.0
      %632 = vmatprep.subr.mxu0 0.0
      %633 = vmatpush2.xpose.msra.mxu0 0.0
      %634 = vmatprep.subr.mxu0 0.0
      %635 = vmatpush2.xpose.msra.mxu0 0.0
      %636 = vmatprep.subr.mxu0 0.0
      %637 = vmatpush2.xpose.msra.mxu0 0.0
      %638 = vmatprep.subr.mxu0 0.0
      %639 = vmatpush2.xpose.msra.mxu0 0.0
      %640 = vmatprep.subr.mxu0 0.0
      %641 = vmatpush2.xpose.msra.mxu0 0.0
      %642 = vmatprep.subr.mxu0 0.0
      %643 = vmatpush2.xpose.msra.mxu0 0.0
      %644 = vmatprep.subr.mxu0 0.0
      %645 = vmatpush2.xpose.msra.mxu0 0.0
      %646 = vmatprep.subr.mxu0 0.0
      %647 = vmatpush2.xpose.msra.mxu0 0.0
      %648 = vmatprep.subr.mxu0 0.0
      %649 = vmatpush2.xpose.msra.mxu0 0.0
      %650 = vmatprep.subr.mxu0 0.0
      %651 = vmatpush2.xpose.msra.mxu0 0.0
      %652 = vmatprep.subr.mxu0 0.0
      %653 = vmatpush2.xpose.msra.mxu0 0.0
      %654 = vmatprep.subr.mxu0 0.0
      %655 = vmatpush2.xpose.msra.mxu0 0.0
      %656 = vmatprep.mubr.f32.mxu0 0.0
      %657 = vmatmul.mubr.f32.gmra.mxu0 %v584
      %v658 = vpop.f32.mrf.mxu0
      %v659 = vadd.f32 0.0, %v658
      %v660 = vpop.f32.mrf.mxu0
      %661 = vmatprep.mubr.f32.mxu0 0.0
      %662 = vmatmul.mubr.f32.gmra.mxu0 %v586
      %v663 = vpop.f32.mrf.mxu0
      %v664 = vadd.f32 0.0, %v663
      %v665 = vpop.f32.mrf.mxu0
      %666 = vdwg.mxu0
      %667 = vrot.lane.b32.xlu0 %v402, 96
      %v668 = vpop.permute.xlu0 %667
      %669 = vrot.lane.b32.xlu0 %v404, 96
      %v670 = vpop.permute.xlu0 %669
      %v671 = vsel %vm409, %v402, 0
      %v673 = vsel %vm409, %v404, 0
      %v675 = vsel %vm409, %v668, 0
      %v677 = vsel %vm409, %v670, 0
      %679 = vmatprep.subr.mxu0 0.0
      %680 = vmatpush1.xpose.msra.mxu0 0.0
      %681 = vmatprep.subr.mxu0 0.0
      %682 = vmatpush1.xpose.msra.mxu0 0.0
      %683 = vmatprep.subr.mxu0 0.0
      %684 = vmatpush1.xpose.msra.mxu0 0.0
      %685 = vmatprep.subr.mxu0 0.0
      %686 = vmatpush1.xpose.msra.mxu0 0.0
      %687 = vmatprep.subr.mxu0 0.0
      %688 = vmatpush1.xpose.msra.mxu0 0.0
      %689 = vmatprep.subr.mxu0 0.0
      %690 = vmatpush1.xpose.msra.mxu0 0.0
      %691 = vmatprep.subr.mxu0 0.0
      %692 = vmatpush1.xpose.msra.mxu0 0.0
      %693 = vmatprep.subr.mxu0 0.0
      %694 = vmatpush1.xpose.msra.mxu0 0.0
      %695 = vmatprep.subr.mxu0 0.0
      %696 = vmatpush1.xpose.msra.mxu0 0.0
      %697 = vmatprep.subr.mxu0 0.0
      %698 = vmatpush1.xpose.msra.mxu0 0.0
      %699 = vmatprep.subr.mxu0 0.0
      %700 = vmatpush1.xpose.msra.mxu0 0.0
      %701 = vmatprep.subr.mxu0 0.0
      %702 = vmatpush1.xpose.msra.mxu0 0.0
      %703 = vmatprep.subr.mxu0 0.0
      %704 = vmatpush1.xpose.msra.mxu0 0.0
      %705 = vmatprep.subr.mxu0 0.0
      %706 = vmatpush1.xpose.msra.mxu0 0.0
      %707 = vmatprep.subr.mxu0 0.0
      %708 = vmatpush1.xpose.msra.mxu0 %v677
      %709 = vmatprep.subr.mxu0 0.0
      %710 = vmatpush1.xpose.msra.mxu0 %v675
      %711 = vmatprep.subr.mxu0 0.0
      %712 = vmatpush2.xpose.msra.mxu0 0.0
      %713 = vmatprep.subr.mxu0 0.0
      %714 = vmatpush2.xpose.msra.mxu0 0.0
      %715 = vmatprep.subr.mxu0 0.0
      %716 = vmatpush2.xpose.msra.mxu0 0.0
      %717 = vmatprep.subr.mxu0 0.0
      %718 = vmatpush2.xpose.msra.mxu0 0.0
      %719 = vmatprep.subr.mxu0 0.0
      %720 = vmatpush2.xpose.msra.mxu0 0.0
      %721 = vmatprep.subr.mxu0 0.0
      %722 = vmatpush2.xpose.msra.mxu0 0.0
      %723 = vmatprep.subr.mxu0 0.0
      %724 = vmatpush2.xpose.msra.mxu0 0.0
      %725 = vmatprep.subr.mxu0 0.0
      %726 = vmatpush2.xpose.msra.mxu0 0.0
      %727 = vmatprep.subr.mxu0 0.0
      %728 = vmatpush2.xpose.msra.mxu0 0.0
      %729 = vmatprep.subr.mxu0 0.0
      %730 = vmatpush2.xpose.msra.mxu0 0.0
      %731 = vmatprep.subr.mxu0 0.0
      %732 = vmatpush2.xpose.msra.mxu0 0.0
      %733 = vmatprep.subr.mxu0 0.0
      %734 = vmatpush2.xpose.msra.mxu0 0.0
      %735 = vmatprep.subr.mxu0 0.0
      %736 = vmatpush2.xpose.msra.mxu0 0.0
      %737 = vmatprep.subr.mxu0 0.0
      %738 = vmatpush2.xpose.msra.mxu0 0.0
      %739 = vmatprep.subr.mxu0 0.0
      %740 = vmatpush2.xpose.msra.mxu0 0.0
      %741 = vmatprep.subr.mxu0 0.0
      %742 = vmatpush2.xpose.msra.mxu0 0.0
      %743 = vmatprep.mubr.f32.mxu0 0.0
      %744 = vmatmul.mubr.f32.gmra.mxu0 %v671
      %v745 = vpop.f32.mrf.mxu0
      %v746 = vadd.f32 0.0, %v745
      %v747 = vpop.f32.mrf.mxu0
      %748 = vmatprep.mubr.f32.mxu0 0.0
      %749 = vmatmul.mubr.f32.gmra.mxu0 %v673
      %v750 = vpop.f32.mrf.mxu0
      %v751 = vadd.f32 0.0, %v750
      %v752 = vpop.f32.mrf.mxu0
      %753 = vdwg.mxu0
      %v754 = vmul.f32 %v485, 0.35355338
      %v755 = vmul.f32 %v490, 0.35355338
      %v756 = vmul.f32 %v572, 0.35355338
      %v757 = vmul.f32 %v577, 0.35355338
      %v758 = vmul.f32 %v659, 0.35355338
      %v759 = vmul.f32 %v664, 0.35355338
      %v760 = vmul.f32 %v746, 0.35355338
      %v761 = vmul.f32 %v751, 0.35355338
      %v762 = vsel %vm194, %v754, -inf
      %763 = vmax.xlane.f32.xlu0 %v762
      %v764 = vpop.xlane.xlu0 %763
      %vm765 = vcmask 83968
      %v766 = vsel %vm765, %v755, -inf
      %767 = vmax.xlane.f32.xlu0 %v766
      %v768 = vpop.xlane.xlu0 %767
      %v769 = vsel %vm194, %v756, -inf
      %770 = vmax.xlane.f32.xlu0 %v769
      %v771 = vpop.xlane.xlu0 %770
      %v772 = vsel %vm765, %v757, -inf
      %773 = vmax.xlane.f32.xlu0 %v772
      %v774 = vpop.xlane.xlu0 %773
      %v775 = vsel %vm194, %v758, -inf
      %776 = vmax.xlane.f32.xlu0 %v775
      %v777 = vpop.xlane.xlu0 %776
      %v778 = vsel %vm765, %v759, -inf
      %779 = vmax.xlane.f32.xlu0 %v778
      %v780 = vpop.xlane.xlu0 %779
      %v781 = vsel %vm194, %v760, -inf
      %782 = vmax.xlane.f32.xlu0 %v781
      %v783 = vpop.xlane.xlu0 %782
      %v784 = vsel %vm765, %v761, -inf
      %785 = vmax.xlane.f32.xlu0 %v784
      %v786 = vpop.xlane.xlu0 %785
      %v787 = vsub.f32 %v754, %v764
      %v788 = vsub.f32 %v755, %v768
      %v789 = vsub.f32 %v756, %v771
      %v790 = vsub.f32 %v757, %v774
      %v791 = vsub.f32 %v758, %v777
      %v792 = vsub.f32 %v759, %v780
      %v793 = vsub.f32 %v760, %v783
      %v794 = vsub.f32 %v761, %v786
      %v795 = vmul.f32 %v787, 1.442695
      %v796 = vpow.pop %v795
      %v797 = vmul.f32 %v788, 1.442695
      %v798 = vpow.pop %v797
      %v799 = vmul.f32 %v789, 1.442695
      %v800 = vpow.pop %v799
      %v801 = vmul.f32 %v790, 1.442695
      %v802 = vpow.pop %v801
      %v803 = vmul.f32 %v791, 1.442695
      %v804 = vpow.pop %v803
      %v805 = vmul.f32 %v792, 1.442695
      %v806 = vpow.pop %v805
      %v807 = vmul.f32 %v793, 1.442695
      %v808 = vpow.pop %v807
      %v809 = vmul.f32 %v794, 1.442695
      %v810 = vpow.pop %v809
      %v811 = vsel %vm194, %v796, 0.0
      %812 = vadd.xlane.f32.xlu0 %v811
      %v813 = vpop.xlane.xlu0 %812
      %v814 = vsel %vm765, %v798, 0.0
      %815 = vadd.xlane.f32.xlu0 %v814
      %v816 = vpop.xlane.xlu0 %815
      %v817 = vsel %vm194, %v800, 0.0
      %818 = vadd.xlane.f32.xlu0 %v817
      %v819 = vpop.xlane.xlu0 %818
      %v820 = vsel %vm765, %v802, 0.0
      %821 = vadd.xlane.f32.xlu0 %v820
      %v822 = vpop.xlane.xlu0 %821
      %v823 = vsel %vm194, %v804, 0.0
      %824 = vadd.xlane.f32.xlu0 %v823
      %v825 = vpop.xlane.xlu0 %824
      %v826 = vsel %vm765, %v806, 0.0
      %827 = vadd.xlane.f32.xlu0 %v826
      %v828 = vpop.xlane.xlu0 %827
      %v829 = vsel %vm194, %v808, 0.0
      %830 = vadd.xlane.f32.xlu0 %v829
      %v831 = vpop.xlane.xlu0 %830
      %v832 = vsel %vm765, %v810, 0.0
      %833 = vadd.xlane.f32.xlu0 %v832
      %v834 = vpop.xlane.xlu0 %833
      %835 = vrot.lane.b32.xlu0 %v389, 64
      %v836 = vpop.permute.xlu0 %835
      %837 = vrot.lane.b32.xlu0 %v390, 64
      %v838 = vpop.permute.xlu0 %837
      %v841 = vsel %vm194, %v796, 0
      %v844 = vsel %vm194, %v798, 0
      %v846 = vsel %vm201, %v838, 0
      %848 = vmatprep.subr.mxu0 0.0
      %849 = vmatpush1.msra.mxu0 0.0
      %850 = vmatprep.subr.mxu0 0.0
      %851 = vmatpush1.msra.mxu0 0.0
      %852 = vmatprep.subr.mxu0 0.0
      %853 = vmatpush1.msra.mxu0 0.0
      %854 = vmatprep.subr.mxu0 0.0
      %855 = vmatpush1.msra.mxu0 0.0
      %856 = vmatprep.subr.mxu0 0.0
      %857 = vmatpush1.msra.mxu0 0.0
      %858 = vmatprep.subr.mxu0 0.0
      %859 = vmatpush1.msra.mxu0 0.0
      %860 = vmatprep.subr.mxu0 0.0
      %861 = vmatpush1.msra.mxu0 0.0
      %862 = vmatprep.subr.mxu0 0.0
      %863 = vmatpush1.msra.mxu0 0.0
      %864 = vmatprep.subr.mxu0 0.0
      %865 = vmatpush1.msra.mxu0 0.0
      %866 = vmatprep.subr.mxu0 0.0
      %867 = vmatpush1.msra.mxu0 0.0
      %868 = vmatprep.subr.mxu0 0.0
      %869 = vmatpush1.msra.mxu0 0.0
      %870 = vmatprep.subr.mxu0 0.0
      %871 = vmatpush1.msra.mxu0 0.0
      %872 = vmatprep.subr.mxu0 0.0
      %873 = vmatpush1.msra.mxu0 0.0
      %874 = vmatprep.subr.mxu0 0.0
      %875 = vmatpush1.msra.mxu0 0.0
      %876 = vmatprep.subr.mxu0 0.0
      %877 = vmatpush1.msra.mxu0 %v846
      %878 = vmatprep.subr.mxu0 0.0
      %879 = vmatpush1.msra.mxu0 %v836
      %880 = vmatprep.subr.mxu0 0.0
      %881 = vmatpush2.msra.mxu0 0.0
      %882 = vmatprep.subr.mxu0 0.0
      %883 = vmatpush2.msra.mxu0 0.0
      %884 = vmatprep.subr.mxu0 0.0
      %885 = vmatpush2.msra.mxu0 0.0
      %886 = vmatprep.subr.mxu0 0.0
      %887 = vmatpush2.msra.mxu0 0.0
      %888 = vmatprep.subr.mxu0 0.0
      %889 = vmatpush2.msra.mxu0 0.0
      %890 = vmatprep.subr.mxu0 0.0
      %891 = vmatpush2.msra.mxu0 0.0
      %892 = vmatprep.subr.mxu0 0.0
      %893 = vmatpush2.msra.mxu0 0.0
      %894 = vmatprep.subr.mxu0 0.0
      %895 = vmatpush2.msra.mxu0 0.0
      %896 = vmatprep.subr.mxu0 0.0
      %897 = vmatpush2.msra.mxu0 0.0
      %898 = vmatprep.subr.mxu0 0.0
      %899 = vmatpush2.msra.mxu0 0.0
      %900 = vmatprep.subr.mxu0 0.0
      %901 = vmatpush2.msra.mxu0 0.0
      %902 = vmatprep.subr.mxu0 0.0
      %903 = vmatpush2.msra.mxu0 0.0
      %904 = vmatprep.subr.mxu0 0.0
      %905 = vmatpush2.msra.mxu0 0.0
      %906 = vmatprep.subr.mxu0 0.0
      %907 = vmatpush2.msra.mxu0 0.0
      %908 = vmatprep.subr.mxu0 0.0
      %909 = vmatpush2.msra.mxu0 0.0
      %910 = vmatprep.subr.mxu0 0.0
      %911 = vmatpush2.msra.mxu0 0.0
      %912 = vmatprep.mubr.f32.mxu0 0.0
      %913 = vmatmul.mubr.f32.gmra.mxu0 %v841
      %v914 = vpop.f32.mrf.mxu0
      %v915 = vadd.f32 0.0, %v914
      %v916 = vpop.f32.mrf.mxu0
      %917 = vmatprep.mubr.f32.mxu0 0.0
      %918 = vmatmul.mubr.f32.gmra.mxu0 %v844
      %v919 = vpop.f32.mrf.mxu0
      %v920 = vadd.f32 0.0, %v919
      %v921 = vpop.f32.mrf.mxu0
      %922 = vdwg.mxu0
      %923 = vrot.lane.b32.xlu0 %v394, 64
      %v924 = vpop.permute.xlu0 %923
      %925 = vrot.lane.b32.xlu0 %v396, 64
      %v926 = vpop.permute.xlu0 %925
      %v929 = vsel %vm194, %v800, 0
      %v932 = vsel %vm194, %v802, 0
      %v934 = vsel %vm201, %v926, 0
      %936 = vmatprep.subr.mxu0 0.0
      %937 = vmatpush1.msra.mxu0 0.0
      %938 = vmatprep.subr.mxu0 0.0
      %939 = vmatpush1.msra.mxu0 0.0
      %940 = vmatprep.subr.mxu0 0.0
      %941 = vmatpush1.msra.mxu0 0.0
      %942 = vmatprep.subr.mxu0 0.0
      %943 = vmatpush1.msra.mxu0 0.0
      %944 = vmatprep.subr.mxu0 0.0
      %945 = vmatpush1.msra.mxu0 0.0
      %946 = vmatprep.subr.mxu0 0.0
      %947 = vmatpush1.msra.mxu0 0.0
      %948 = vmatprep.subr.mxu0 0.0
      %949 = vmatpush1.msra.mxu0 0.0
      %950 = vmatprep.subr.mxu0 0.0
      %951 = vmatpush1.msra.mxu0 0.0
      %952 = vmatprep.subr.mxu0 0.0
      %953 = vmatpush1.msra.mxu0 0.0
      %954 = vmatprep.subr.mxu0 0.0
      %955 = vmatpush1.msra.mxu0 0.0
      %956 = vmatprep.subr.mxu0 0.0
      %957 = vmatpush1.msra.mxu0 0.0
      %958 = vmatprep.subr.mxu0 0.0
      %959 = vmatpush1.msra.mxu0 0.0
      %960 = vmatprep.subr.mxu0 0.0
      %961 = vmatpush1.msra.mxu0 0.0
      %962 = vmatprep.subr.mxu0 0.0
      %963 = vmatpush1.msra.mxu0 0.0
      %964 = vmatprep.subr.mxu0 0.0
      %965 = vmatpush1.msra.mxu0 %v934
      %966 = vmatprep.subr.mxu0 0.0
      %967 = vmatpush1.msra.mxu0 %v924
      %968 = vmatprep.subr.mxu0 0.0
      %969 = vmatpush2.msra.mxu0 0.0
      %970 = vmatprep.subr.mxu0 0.0
      %971 = vmatpush2.msra.mxu0 0.0
      %972 = vmatprep.subr.mxu0 0.0
      %973 = vmatpush2.msra.mxu0 0.0
      %974 = vmatprep.subr.mxu0 0.0
      %975 = vmatpush2.msra.mxu0 0.0
      %976 = vmatprep.subr.mxu0 0.0
      %977 = vmatpush2.msra.mxu0 0.0
      %978 = vmatprep.subr.mxu0 0.0
      %979 = vmatpush2.msra.mxu0 0.0
      %980 = vmatprep.subr.mxu0 0.0
      %981 = vmatpush2.msra.mxu0 0.0
      %982 = vmatprep.subr.mxu0 0.0
      %983 = vmatpush2.msra.mxu0 0.0
      %984 = vmatprep.subr.mxu0 0.0
      %985 = vmatpush2.msra.mxu0 0.0
      %986 = vmatprep.subr.mxu0 0.0
      %987 = vmatpush2.msra.mxu0 0.0
      %988 = vmatprep.subr.mxu0 0.0
      %989 = vmatpush2.msra.mxu0 0.0
      %990 = vmatprep.subr.mxu0 0.0
      %991 = vmatpush2.msra.mxu0 0.0
      %992 = vmatprep.subr.mxu0 0.0
      %993 = vmatpush2.msra.mxu0 0.0
      %994 = vmatprep.subr.mxu0 0.0
      %995 = vmatpush2.msra.mxu0 0.0
      %996 = vmatprep.subr.mxu0 0.0
      %997 = vmatpush2.msra.mxu0 0.0
      %998 = vmatprep.subr.mxu0 0.0
      %999 = vmatpush2.msra.mxu0 0.0
      %1000 = vmatprep.mubr.f32.mxu0 0.0
      %1001 = vmatmul.mubr.f32.gmra.mxu0 %v929
      %v1002 = vpop.f32.mrf.mxu0
      %v1003 = vadd.f32 0.0, %v1002
      %v1004 = vpop.f32.mrf.mxu0
      %1005 = vmatprep.mubr.f32.mxu0 0.0
      %1006 = vmatmul.mubr.f32.gmra.mxu0 %v932
      %v1007 = vpop.f32.mrf.mxu0
      %v1008 = vadd.f32 0.0, %v1007
      %v1009 = vpop.f32.mrf.mxu0
      %1010 = vdwg.mxu0
      %1011 = vrot.lane.b32.xlu0 %v398, 64
      %v1012 = vpop.permute.xlu0 %1011
      %1013 = vrot.lane.b32.xlu0 %v400, 64
      %v1014 = vpop.permute.xlu0 %1013
      %v1017 = vsel %vm194, %v804, 0
      %v1020 = vsel %vm194, %v806, 0
      %v1022 = vsel %vm201, %v1014, 0
      %1024 = vmatprep.subr.mxu0 0.0
      %1025 = vmatpush1.msra.mxu0 0.0
      %1026 = vmatprep.subr.mxu0 0.0
      %1027 = vmatpush1.msra.mxu0 0.0
      %1028 = vmatprep.subr.mxu0 0.0
      %1029 = vmatpush1.msra.mxu0 0.0
      %1030 = vmatprep.subr.mxu0 0.0
      %1031 = vmatpush1.msra.mxu0 0.0
      %1032 = vmatprep.subr.mxu0 0.0
      %1033 = vmatpush1.msra.mxu0 0.0
      %1034 = vmatprep.subr.mxu0 0.0
      %1035 = vmatpush1.msra.mxu0 0.0
      %1036 = vmatprep.subr.mxu0 0.0
      %1037 = vmatpush1.msra.mxu0 0.0
      %1038 = vmatprep.subr.mxu0 0.0
      %1039 = vmatpush1.msra.mxu0 0.0
      %1040 = vmatprep.subr.mxu0 0.0
      %1041 = vmatpush1.msra.mxu0 0.0
      %1042 = vmatprep.subr.mxu0 0.0
      %1043 = vmatpush1.msra.mxu0 0.0
      %1044 = vmatprep.subr.mxu0 0.0
      %1045 = vmatpush1.msra.mxu0 0.0
      %1046 = vmatprep.subr.mxu0 0.0
      %1047 = vmatpush1.msra.mxu0 0.0
      %1048 = vmatprep.subr.mxu0 0.0
      %1049 = vmatpush1.msra.mxu0 0.0
      %1050 = vmatprep.subr.mxu0 0.0
      %1051 = vmatpush1.msra.mxu0 0.0
      %1052 = vmatprep.subr.mxu0 0.0
      %1053 = vmatpush1.msra.mxu0 %v1022
      %1054 = vmatprep.subr.mxu0 0.0
      %1055 = vmatpush1.msra.mxu0 %v1012
      %1056 = vmatprep.subr.mxu0 0.0
      %1057 = vmatpush2.msra.mxu0 0.0
      %1058 = vmatprep.subr.mxu0 0.0
      %1059 = vmatpush2.msra.mxu0 0.0
      %1060 = vmatprep.subr.mxu0 0.0
      %1061 = vmatpush2.msra.mxu0 0.0
      %1062 = vmatprep.subr.mxu0 0.0
      %1063 = vmatpush2.msra.mxu0 0.0
      %1064 = vmatprep.subr.mxu0 0.0
      %1065 = vmatpush2.msra.mxu0 0.0
      %1066 = vmatprep.subr.mxu0 0.0
      %1067 = vmatpush2.msra.mxu0 0.0
      %1068 = vmatprep.subr.mxu0 0.0
      %1069 = vmatpush2.msra.mxu0 0.0
      %1070 = vmatprep.subr.mxu0 0.0
      %1071 = vmatpush2.msra.mxu0 0.0
      %1072 = vmatprep.subr.mxu0 0.0
      %1073 = vmatpush2.msra.mxu0 0.0
      %1074 = vmatprep.subr.mxu0 0.0
      %1075 = vmatpush2.msra.mxu0 0.0
      %1076 = vmatprep.subr.mxu0 0.0
      %1077 = vmatpush2.msra.mxu0 0.0
      %1078 = vmatprep.subr.mxu0 0.0
      %1079 = vmatpush2.msra.mxu0 0.0
      %1080 = vmatprep.subr.mxu0 0.0
      %1081 = vmatpush2.msra.mxu0 0.0
      %1082 = vmatprep.subr.mxu0 0.0
      %1083 = vmatpush2.msra.mxu0 0.0
      %1084 = vmatprep.subr.mxu0 0.0
      %1085 = vmatpush2.msra.mxu0 0.0
      %1086 = vmatprep.subr.mxu0 0.0
      %1087 = vmatpush2.msra.mxu0 0.0
      %1088 = vmatprep.mubr.f32.mxu0 0.0
      %1089 = vmatmul.mubr.f32.gmra.mxu0 %v1017
      %v1090 = vpop.f32.mrf.mxu0
      %v1091 = vadd.f32 0.0, %v1090
      %v1092 = vpop.f32.mrf.mxu0
      %1093 = vmatprep.mubr.f32.mxu0 0.0
      %1094 = vmatmul.mubr.f32.gmra.mxu0 %v1020
      %v1095 = vpop.f32.mrf.mxu0
      %v1096 = vadd.f32 0.0, %v1095
      %v1097 = vpop.f32.mrf.mxu0
      %1098 = vdwg.mxu0
      %1099 = vrot.lane.b32.xlu0 %v402, 64
      %v1100 = vpop.permute.xlu0 %1099
      %1101 = vrot.lane.b32.xlu0 %v404, 64
      %v1102 = vpop.permute.xlu0 %1101
      %v1105 = vsel %vm194, %v808, 0
      %v1108 = vsel %vm194, %v810, 0
      %v1110 = vsel %vm201, %v1102, 0
      %1112 = vmatprep.subr.mxu0 0.0
      %1113 = vmatpush1.msra.mxu0 0.0
      %1114 = vmatprep.subr.mxu0 0.0
      %1115 = vmatpush1.msra.mxu0 0.0
      %1116 = vmatprep.subr.mxu0 0.0
      %1117 = vmatpush1.msra.mxu0 0.0
      %1118 = vmatprep.subr.mxu0 0.0
      %1119 = vmatpush1.msra.mxu0 0.0
      %1120 = vmatprep.subr.mxu0 0.0
      %1121 = vmatpush1.msra.mxu0 0.0
      %1122 = vmatprep.subr.mxu0 0.0
      %1123 = vmatpush1.msra.mxu0 0.0
      %1124 = vmatprep.subr.mxu0 0.0
      %1125 = vmatpush1.msra.mxu0 0.0
      %1126 = vmatprep.subr.mxu0 0.0
      %1127 = vmatpush1.msra.mxu0 0.0
      %1128 = vmatprep.subr.mxu0 0.0
      %1129 = vmatpush1.msra.mxu0 0.0
      %1130 = vmatprep.subr.mxu0 0.0
      %1131 = vmatpush1.msra.mxu0 0.0
      %1132 = vmatprep.subr.mxu0 0.0
      %1133 = vmatpush1.msra.mxu0 0.0
      %1134 = vmatprep.subr.mxu0 0.0
      %1135 = vmatpush1.msra.mxu0 0.0
      %1136 = vmatprep.subr.mxu0 0.0
      %1137 = vmatpush1.msra.mxu0 0.0
      %1138 = vmatprep.subr.mxu0 0.0
      %1139 = vmatpush1.msra.mxu0 0.0
      %1140 = vmatprep.subr.mxu0 0.0
      %1141 = vmatpush1.msra.mxu0 %v1110
      %1142 = vmatprep.subr.mxu0 0.0
      %1143 = vmatpush1.msra.mxu0 %v1100
      %1144 = vmatprep.subr.mxu0 0.0
      %1145 = vmatpush2.msra.mxu0 0.0
      %1146 = vmatprep.subr.mxu0 0.0
      %1147 = vmatpush2.msra.mxu0 0.0
      %1148 = vmatprep.subr.mxu0 0.0
      %1149 = vmatpush2.msra.mxu0 0.0
      %1150 = vmatprep.subr.mxu0 0.0
      %1151 = vmatpush2.msra.mxu0 0.0
      %1152 = vmatprep.subr.mxu0 0.0
      %1153 = vmatpush2.msra.mxu0 0.0
      %1154 = vmatprep.subr.mxu0 0.0
      %1155 = vmatpush2.msra.mxu0 0.0
      %1156 = vmatprep.subr.mxu0 0.0
      %1157 = vmatpush2.msra.mxu0 0.0
      %1158 = vmatprep.subr.mxu0 0.0
      %1159 = vmatpush2.msra.mxu0 0.0
      %1160 = vmatprep.subr.mxu0 0.0
      %1161 = vmatpush2.msra.mxu0 0.0
      %1162 = vmatprep.subr.mxu0 0.0
      %1163 = vmatpush2.msra.mxu0 0.0
      %1164 = vmatprep.subr.mxu0 0.0
      %1165 = vmatpush2.msra.mxu0 0.0
      %1166 = vmatprep.subr.mxu0 0.0
      %1167 = vmatpush2.msra.mxu0 0.0
      %1168 = vmatprep.subr.mxu0 0.0
      %1169 = vmatpush2.msra.mxu0 0.0
      %1170 = vmatprep.subr.mxu0 0.0
      %1171 = vmatpush2.msra.mxu0 0.0
      %1172 = vmatprep.subr.mxu0 0.0
      %1173 = vmatpush2.msra.mxu0 0.0
      %1174 = vmatprep.subr.mxu0 0.0
      %1175 = vmatpush2.msra.mxu0 0.0
      %1176 = vmatprep.mubr.f32.mxu0 0.0
      %1177 = vmatmul.mubr.f32.gmra.mxu0 %v1105
      %v1178 = vpop.f32.mrf.mxu0
      %v1179 = vadd.f32 0.0, %v1178
      %v1180 = vpop.f32.mrf.mxu0
      %1181 = vmatprep.mubr.f32.mxu0 0.0
      %1182 = vmatmul.mubr.f32.gmra.mxu0 %v1108
      %v1183 = vpop.f32.mrf.mxu0
      %v1184 = vadd.f32 0.0, %v1183
      %v1185 = vpop.f32.mrf.mxu0
      %1186 = vdwg.mxu0
      %v1187 = vrcp.pop %v813
      %v1188 = vrcp.pop %v816
      %v1189 = vrcp.pop %v819
      %v1190 = vrcp.pop %v822
      %v1191 = vrcp.pop %v825
      %v1192 = vrcp.pop %v828
      %v1193 = vrcp.pop %v831
      %v1194 = vrcp.pop %v834
      %v1195 = vmul.f32 %v915, %v1187
      %v1196 = vmul.f32 %v920, %v1188
      %v1197 = vmul.f32 %v1003, %v1189
      %v1198 = vmul.f32 %v1008, %v1190
      %v1199 = vmul.f32 %v1091, %v1191
      %v1200 = vmul.f32 %v1096, %v1192
      %v1201 = vmul.f32 %v1179, %v1193
      %v1202 = vmul.f32 %v1184, %v1194
      %1203 = vst.msk [vmem:[%s170] sm:$0xff] %vm409, %v1195
      %vm1204 = vcmask 59392
      %1205 = vst.msk [vmem:[%s170 + $0x8] sm:$0x7] %vm1204, %v1196
      %1208 = vrot.lane.b32.xlu0 %v1197, 8
      %v1209 = vpop.permute.xlu0 %1208
      %1210 = vrot.lane.b32.xlu0 %v1198, 8
      %v1211 = vpop.permute.xlu0 %1210
      %vm1214 = vcmask 130112
      %1215 = vst.msk [vmem:[%s170] sm:$0xff] %vm1214, %v1209
      %vm1216 = vcmask 124992
      %1217 = vst.msk [vmem:[%s170 + $0x8] sm:$0x7] %vm1216, %v1211
      %1220 = vrot.lane.b32.xlu0 %v1199, 16
      %v1221 = vpop.permute.xlu0 %1220
      %1222 = vrot.lane.b32.xlu0 %v1200, 16
      %v1223 = vpop.permute.xlu0 %1222
      %vm1226 = vcmask 195712
      %1227 = vst.msk [vmem:[%s170] sm:$0xff] %vm1226, %v1221
      %vm1228 = vcmask 190592
      %1229 = vst.msk [vmem:[%s170 + $0x8] sm:$0x7] %vm1228, %v1223
      %1232 = vrot.lane.b32.xlu0 %v1201, 24
      %v1233 = vpop.permute.xlu0 %1232
      %1234 = vrot.lane.b32.xlu0 %v1202, 24
      %v1235 = vpop.permute.xlu0 %1234
      %vm1238 = vcmask 261312
      %1239 = vst.msk [vmem:[%s170] sm:$0xff] %vm1238, %v1233
      %vm1240 = vcmask 256192
      %1241 = vst.msk [vmem:[%s170 + $0x8] sm:$0x7] %vm1240, %v1235
      %p1242 = scmp.lt.s32.totalorder %s14, 1
      %s1243 = scalar_select %p1242, %s14, 1
      %s1244 = smul.addr %s1243, 2
      %s1245 = smul.addr %s1244, 8
      %s1246 = scalar_lea.vmem %s3, %s1245
      // Predicated region
      $region33: #{cross_attention_forward.49} parent=31 // pred_check
        %p1247 = pneg %p100
      $region34: #{cross_attention_forward.49} parent=31 // pred_check_branch
        %1249 = sbr.rel (%p1247) target = $region36
      $region35: #{cross_attention_forward.49} parent=31 // pred_region
        _
      $region36: #{cross_attention_forward.49} parent=31 // pred_fallthru
        _
    $region32: #{cross_attention_forward.49} parent=5 // pred_fallthru
      _
    %p1250 = scmp.le.s32.totalorder 2, %s9
    // Predicated region
    $region37: #{cross_attention_forward.49} parent=5 // pred_check
      %p1251 = pneg %p1250
    $region38: #{cross_attention_forward.49} parent=5 // pred_check_branch
      %1253 = sbr.rel (%p1251) target = $region40
    $region39: #{cross_attention_forward.49} parent=5 // pred_region
      %s1254 = ssub.s32 %s9, 2
      // Predicated region
      $region41: #{cross_attention_forward.49} parent=39 // pred_check
        %p1255 = pneg %p106
      $region42: #{cross_attention_forward.49} parent=39 // pred_check_branch
        %1257 = sbr.rel (%p1255) target = $region44
      $region43: #{cross_attention_forward.49} parent=39 // pred_region
        %p1258 = scmp.lt.s32.totalorder %s15, 1
        %s1259 = scalar_select %p1258, %s15, 1
        %s1260 = smul.addr %s1259, 2
        %s1261 = smul.addr %s1260, 8
        %s1262 = scalar_lea.vmem %s3, %s1261
      $region44: #{cross_attention_forward.49} parent=39 // pred_fallthru
        _
    $region40: #{cross_attention_forward.49} parent=5 // pred_fallthru
      _
  $region6: #{cross_attention_forward.49} parent=0 // loop_footer
    %s13 = sadd.s32 1, %s9
  $region7: #{cross_attention_forward.49} parent=0 // loop_footer_branch
    %8 = sbr.rel target = $region3
  $region8: #{cross_attention_forward.49} parent=0 // loop_exit
    _

// kernel: cross_attention_forward.55
$region0: #{cross_attention_forward.55}
  #allocation0 [shape = 'u32[]', space=smem, size = 0x4, offset = 0x4, fixed_abs, tag = 'smem constant byte address 0x4 - core index']
  #allocation1 [shape = 'u32[144,128]{1,0:T(1,128)}', space=vmem, size = 0x12000, scoped, tag = 'internal scratch']
  #allocation2 [shape = 'f32[10,128]{1,0:T(8,128)}', space=vmem, size = 0x2000, scoped, tag = 'scratch operand']
  %s0 = inlined_call_operand.vmem [shape: f32[10,32], index: 0, kind: input, shape index: {}]
  %s1 = inlined_call_operand.vmem [shape: f32[32,128], index: 1, kind: input, shape index: {}]
  %s2 = inlined_call_operand.vmem [shape: f32[1,128], index: 2, kind: input, shape index: {}]
  %s3 = inlined_call_operand.vmem [shape: f32[10,128], index: 3, kind: output, shape index: {}]
  %s4 = sld [smem:[#allocation0]]
  $region30: #{cross_attention_forward.55} parent=0
    _
  %s6 = ssub.s32 1, %s4
  %s7 = scalar_select 0, %s6, %s4
  // Predicated region
  $region2: #{cross_attention_forward.55} parent=0 // pred_check
    _
  $region3: #{cross_attention_forward.55} parent=0 // pred_check_branch
    %9 = sbr.rel (0) target = $region5
  $region4: #{cross_attention_forward.55} parent=0 // pred_region
    _
  $region5: #{cross_attention_forward.55} parent=0 // pred_fallthru
    _
  // Predicated region
  $region6: #{cross_attention_forward.55} parent=0 // pred_check
    _
  $region7: #{cross_attention_forward.55} parent=0 // pred_check_branch
    %11 = sbr.rel (0) target = $region9
  $region8: #{cross_attention_forward.55} parent=0 // pred_region
    _
  $region9: #{cross_attention_forward.55} parent=0 // pred_fallthru
    _
  // Predicated region
  $region10: #{cross_attention_forward.55} parent=0 // pred_check
    _
  $region11: #{cross_attention_forward.55} parent=0 // pred_check_branch
    %13 = sbr.rel (0) target = $region13
  $region12: #{cross_attention_forward.55} parent=0 // pred_region
    _
  $region13: #{cross_attention_forward.55} parent=0 // pred_fallthru
    _
  %p14 = scmp.eq.s32.totalorder 0, 0
  // Predicated region
  $region14: #{cross_attention_forward.55} parent=0 // pred_check
    %p15 = pneg %p14
  $region15: #{cross_attention_forward.55} parent=0 // pred_check_branch
    %17 = sbr.rel (%p15) target = $region17
  $region16: #{cross_attention_forward.55} parent=0 // pred_region
    %18 = vst [vmem:[#allocation2] sm:$0xff] 0.0
    %19 = vst [vmem:[#allocation2 + $0x8] sm:$0x3] 0.0
  $region17: #{cross_attention_forward.55} parent=0 // pred_fallthru
    _
  %v20 = vld [vmem:[#allocation2] sm:$0xff]
  %v21 = vld [vmem:[#allocation2 + $0x8] sm:$0x3]
  %v22 = vld [vmem:[%s0] sm:$0xff]
  %v23 = vld [vmem:[%s0 + $0x8] sm:$0x3]
  %v24 = vld [vmem:[%s1] sm:$0xff]
  %v25 = vld [vmem:[%s1 + $0x8] sm:$0xff]
  %v26 = vld [vmem:[%s1 + $0x10] sm:$0xff]
  %v27 = vld [vmem:[%s1 + $0x18] sm:$0xff]
  %vm28 = vcmask 261120
  %v30 = vsel %vm28, %v22, 0
  %v33 = vsel %vm28, %v23, 0
  %35 = vmatprep.subr.mxu0 0.0
  %36 = vmatpush1.msra.mxu0 0.0
  %37 = vmatprep.subr.mxu0 0.0
  %38 = vmatpush1.msra.mxu0 0.0
  %39 = vmatprep.subr.mxu0 0.0
  %40 = vmatpush1.msra.mxu0 0.0
  %41 = vmatprep.subr.mxu0 0.0
  %42 = vmatpush1.msra.mxu0 0.0
  %43 = vmatprep.subr.mxu0 0.0
  %44 = vmatpush1.msra.mxu0 0.0
  %45 = vmatprep.subr.mxu0 0.0
  %46 = vmatpush1.msra.mxu0 0.0
  %47 = vmatprep.subr.mxu0 0.0
  %48 = vmatpush1.msra.mxu0 0.0
  %49 = vmatprep.subr.mxu0 0.0
  %50 = vmatpush1.msra.mxu0 0.0
  %51 = vmatprep.subr.mxu0 0.0
  %52 = vmatpush1.msra.mxu0 0.0
  %53 = vmatprep.subr.mxu0 0.0
  %54 = vmatpush1.msra.mxu0 0.0
  %55 = vmatprep.subr.mxu0 0.0
  %56 = vmatpush1.msra.mxu0 0.0
  %57 = vmatprep.subr.mxu0 0.0
  %58 = vmatpush1.msra.mxu0 0.0
  %59 = vmatprep.subr.mxu0 0.0
  %60 = vmatpush1.msra.mxu0 %v27
  %61 = vmatprep.subr.mxu0 0.0
  %62 = vmatpush1.msra.mxu0 %v26
  %63 = vmatprep.subr.mxu0 0.0
  %64 = vmatpush1.msra.mxu0 %v25
  %65 = vmatprep.subr.mxu0 0.0
  %66 = vmatpush1.msra.mxu0 %v24
  %67 = vmatprep.subr.mxu0 0.0
  %68 = vmatpush2.msra.mxu0 0.0
  %69 = vmatprep.subr.mxu0 0.0
  %70 = vmatpush2.msra.mxu0 0.0
  %71 = vmatprep.subr.mxu0 0.0
  %72 = vmatpush2.msra.mxu0 0.0
  %73 = vmatprep.subr.mxu0 0.0
  %74 = vmatpush2.msra.mxu0 0.0
  %75 = vmatprep.subr.mxu0 0.0
  %76 = vmatpush2.msra.mxu0 0.0
  %77 = vmatprep.subr.mxu0 0.0
  %78 = vmatpush2.msra.mxu0 0.0
  %79 = vmatprep.subr.mxu0 0.0
  %80 = vmatpush2.msra.mxu0 0.0
  %81 = vmatprep.subr.mxu0 0.0
  %82 = vmatpush2.msra.mxu0 0.0
  %83 = vmatprep.subr.mxu0 0.0
  %84 = vmatpush2.msra.mxu0 0.0
  %85 = vmatprep.subr.mxu0 0.0
  %86 = vmatpush2.msra.mxu0 0.0
  %87 = vmatprep.subr.mxu0 0.0
  %88 = vmatpush2.msra.mxu0 0.0
  %89 = vmatprep.subr.mxu0 0.0
  %90 = vmatpush2.msra.mxu0 0.0
  %91 = vmatprep.subr.mxu0 0.0
  %92 = vmatpush2.msra.mxu0 0.0
  %93 = vmatprep.subr.mxu0 0.0
  %94 = vmatpush2.msra.mxu0 0.0
  %95 = vmatprep.subr.mxu0 0.0
  %96 = vmatpush2.msra.mxu0 0.0
  %97 = vmatprep.subr.mxu0 0.0
  %98 = vmatpush2.msra.mxu0 0.0
  %99 = vmatprep.mubr.f32.mxu0 0.0
  %100 = vmatmul.mubr.f32.gmra.mxu0 %v30
  %v101 = vpop.f32.mrf.mxu0
  %v102 = vadd.f32 0.0, %v101
  %v103 = vpop.f32.mrf.mxu0
  %104 = vmatprep.mubr.f32.mxu0 0.0
  %105 = vmatmul.mubr.f32.gmra.mxu0 %v33
  %v106 = vpop.f32.mrf.mxu0
  %v107 = vadd.f32 0.0, %v106
  %v108 = vpop.f32.mrf.mxu0
  %109 = vdwg.mxu0
  %v110 = vadd.f32 %v20, %v102
  %v111 = vadd.f32 %v21, %v107
  %112 = vst [vmem:[#allocation2] sm:$0xff] %v110
  %113 = vst [vmem:[#allocation2 + $0x8] sm:$0x3] %v111
  // Predicated region
  $region18: #{cross_attention_forward.55} parent=0 // pred_check
    %p114 = pneg %p14
  $region19: #{cross_attention_forward.55} parent=0 // pred_check_branch
    %116 = sbr.rel (%p114) target = $region21
  $region20: #{cross_attention_forward.55} parent=0 // pred_region
    %v117 = vld [vmem:[#allocation2] sm:$0xff]
    %v118 = vld [vmem:[#allocation2 + $0x8] sm:$0x3]
    %v119 = vld [vmem:[%s2] sm:$0x1]
    %v121 = vlaneseq
    %v122 = vshrl.u32 %v121, 7
    %v123 = vsub.s32 0, %v122
    %v124 = vrot.slane %v119, %v123
    %v126 = vadd.f32 %v117, %v124
    %v127 = vadd.f32 %v118, %v124
    %v128 = vmax.f32 %v126, 0.0
    %v129 = vmax.f32 %v127, 0.0
    %v130 = vmul.f32 %v128, %v128
    %v131 = vmul.f32 %v129, %v129
    %132 = vst [vmem:[%s3] sm:$0xff] %v130
    %133 = vst [vmem:[%s3 + $0x8] sm:$0x3] %v131
  $region21: #{cross_attention_forward.55} parent=0 // pred_fallthru
    _
  // Predicated region
  $region22: #{cross_attention_forward.55} parent=0 // pred_check
    _
  $region23: #{cross_attention_forward.55} parent=0 // pred_check_branch
    %135 = sbr.rel (0) target = $region25
  $region24: #{cross_attention_forward.55} parent=0 // pred_region
    _
  $region25: #{cross_attention_forward.55} parent=0 // pred_fallthru
    _
  // Predicated region
  $region26: #{cross_attention_forward.55} parent=0 // pred_check
    _
  $region27: #{cross_attention_forward.55} parent=0 // pred_check_branch
    %137 = sbr.rel (0) target = $region29
  $region28: #{cross_attention_forward.55} parent=0 // pred_region
    _
  $region29: #{cross_attention_forward.55} parent=0 // pred_fallthru
    _

// kernel: cross_attention_forward.56
$region0: #{cross_attention_forward.56}
  #allocation0 [shape = 'u32[]', space=smem, size = 0x4, offset = 0x4, fixed_abs, tag = 'smem constant byte address 0x4 - core index']
  #allocation1 [shape = 'u32[144,128]{1,0:T(1,128)}', space=vmem, size = 0x12000, scoped, tag = 'internal scratch']
  #allocation2 [shape = 'f32[10,32]{1,0:T(8,128)}', space=vmem, size = 0x2000, scoped, tag = 'scratch operand']
  %s0 = inlined_call_operand.vmem [shape: f32[10,128], index: 0, kind: input, shape index: {}]
  %s1 = inlined_call_operand.vmem [shape: f32[128,32], index: 1, kind: input, shape index: {}]
  %s2 = inlined_call_operand.vmem [shape: f32[1,32], index: 2, kind: input, shape index: {}]
  %s3 = inlined_call_operand.vmem [shape: f32[10,32], index: 3, kind: output, shape index: {}]
  %s4 = sld [smem:[#allocation0]]
  $region30: #{cross_attention_forward.56} parent=0
    _
  %s6 = ssub.s32 1, %s4
  %s7 = scalar_select 0, %s6, %s4
  // Predicated region
  $region2: #{cross_attention_forward.56} parent=0 // pred_check
    _
  $region3: #{cross_attention_forward.56} parent=0 // pred_check_branch
    %9 = sbr.rel (0) target = $region5
  $region4: #{cross_attention_forward.56} parent=0 // pred_region
    _
  $region5: #{cross_attention_forward.56} parent=0 // pred_fallthru
    _
  // Predicated region
  $region6: #{cross_attention_forward.56} parent=0 // pred_check
    _
  $region7: #{cross_attention_forward.56} parent=0 // pred_check_branch
    %11 = sbr.rel (0) target = $region9
  $region8: #{cross_attention_forward.56} parent=0 // pred_region
    _
  $region9: #{cross_attention_forward.56} parent=0 // pred_fallthru
    _
  // Predicated region
  $region10: #{cross_attention_forward.56} parent=0 // pred_check
    _
  $region11: #{cross_attention_forward.56} parent=0 // pred_check_branch
    %13 = sbr.rel (0) target = $region13
  $region12: #{cross_attention_forward.56} parent=0 // pred_region
    _
  $region13: #{cross_attention_forward.56} parent=0 // pred_fallthru
    _
  %p14 = scmp.eq.s32.totalorder 0, 0
  // Predicated region
  $region14: #{cross_attention_forward.56} parent=0 // pred_check
    %p15 = pneg %p14
  $region15: #{cross_attention_forward.56} parent=0 // pred_check_branch
    %17 = sbr.rel (%p15) target = $region17
  $region16: #{cross_attention_forward.56} parent=0 // pred_region
    %vm18 = vcmask 261120
    %19 = vst.msk [vmem:[#allocation2] sm:$0xff] %vm18, 0.0
    %vm20 = vcmask 254976
    %21 = vst.msk [vmem:[#allocation2 + $0x8] sm:$0x3] %vm20, 0.0
  $region17: #{cross_attention_forward.56} parent=0 // pred_fallthru
    _
  %v22 = vld [vmem:[#allocation2] sm:$0xff]
  %v23 = vld [vmem:[#allocation2 + $0x8] sm:$0x3]
  %v24 = vld [vmem:[%s0] sm:$0xff]
  %v25 = vld [vmem:[%s0 + $0x8] sm:$0x3]
  %v26 = vld [vmem:[%s1] sm:$0xff]
  %v27 = vld [vmem:[%s1 + $0x8] sm:$0xff]
  %v28 = vld [vmem:[%s1 + $0x10] sm:$0xff]
  %v29 = vld [vmem:[%s1 + $0x18] sm:$0xff]
  %v30 = vld [vmem:[%s1 + $0x20] sm:$0xff]
  %v31 = vld [vmem:[%s1 + $0x28] sm:$0xff]
  %v32 = vld [vmem:[%s1 + $0x30] sm:$0xff]
  %v33 = vld [vmem:[%s1 + $0x38] sm:$0xff]
  %v34 = vld [vmem:[%s1 + $0x40] sm:$0xff]
  %v35 = vld [vmem:[%s1 + $0x48] sm:$0xff]
  %v36 = vld [vmem:[%s1 + $0x50] sm:$0xff]
  %v37 = vld [vmem:[%s1 + $0x58] sm:$0xff]
  %v38 = vld [vmem:[%s1 + $0x60] sm:$0xff]
  %v39 = vld [vmem:[%s1 + $0x68] sm:$0xff]
  %v40 = vld [vmem:[%s1 + $0x70] sm:$0xff]
  %v41 = vld [vmem:[%s1 + $0x78] sm:$0xff]
  %42 = vmatprep.subr.mxu0 0.0
  %43 = vmatpush1.msra.mxu0 %v41
  %44 = vmatprep.subr.mxu0 0.0
  %45 = vmatpush1.msra.mxu0 %v40
  %46 = vmatprep.subr.mxu0 0.0
  %47 = vmatpush1.msra.mxu0 %v39
  %48 = vmatprep.subr.mxu0 0.0
  %49 = vmatpush1.msra.mxu0 %v38
  %50 = vmatprep.subr.mxu0 0.0
  %51 = vmatpush1.msra.mxu0 %v37
  %52 = vmatprep.subr.mxu0 0.0
  %53 = vmatpush1.msra.mxu0 %v36
  %54 = vmatprep.subr.mxu0 0.0
  %55 = vmatpush1.msra.mxu0 %v35
  %56 = vmatprep.subr.mxu0 0.0
  %57 = vmatpush1.msra.mxu0 %v34
  %58 = vmatprep.subr.mxu0 0.0
  %59 = vmatpush1.msra.mxu0 %v33
  %60 = vmatprep.subr.mxu0 0.0
  %61 = vmatpush1.msra.mxu0 %v32
  %62 = vmatprep.subr.mxu0 0.0
  %63 = vmatpush1.msra.mxu0 %v31
  %64 = vmatprep.subr.mxu0 0.0
  %65 = vmatpush1.msra.mxu0 %v30
  %66 = vmatprep.subr.mxu0 0.0
  %67 = vmatpush1.msra.mxu0 %v29
  %68 = vmatprep.subr.mxu0 0.0
  %69 = vmatpush1.msra.mxu0 %v28
  %70 = vmatprep.subr.mxu0 0.0
  %71 = vmatpush1.msra.mxu0 %v27
  %72 = vmatprep.subr.mxu0 0.0
  %73 = vmatpush1.msra.mxu0 %v26
  %74 = vmatprep.subr.mxu0 0.0
  %75 = vmatpush2.msra.mxu0 0.0
  %76 = vmatprep.subr.mxu0 0.0
  %77 = vmatpush2.msra.mxu0 0.0
  %78 = vmatprep.subr.mxu0 0.0
  %79 = vmatpush2.msra.mxu0 0.0
  %80 = vmatprep.subr.mxu0 0.0
  %81 = vmatpush2.msra.mxu0 0.0
  %82 = vmatprep.subr.mxu0 0.0
  %83 = vmatpush2.msra.mxu0 0.0
  %84 = vmatprep.subr.mxu0 0.0
  %85 = vmatpush2.msra.mxu0 0.0
  %86 = vmatprep.subr.mxu0 0.0
  %87 = vmatpush2.msra.mxu0 0.0
  %88 = vmatprep.subr.mxu0 0.0
  %89 = vmatpush2.msra.mxu0 0.0
  %90 = vmatprep.subr.mxu0 0.0
  %91 = vmatpush2.msra.mxu0 0.0
  %92 = vmatprep.subr.mxu0 0.0
  %93 = vmatpush2.msra.mxu0 0.0
  %94 = vmatprep.subr.mxu0 0.0
  %95 = vmatpush2.msra.mxu0 0.0
  %96 = vmatprep.subr.mxu0 0.0
  %97 = vmatpush2.msra.mxu0 0.0
  %98 = vmatprep.subr.mxu0 0.0
  %99 = vmatpush2.msra.mxu0 0.0
  %100 = vmatprep.subr.mxu0 0.0
  %101 = vmatpush2.msra.mxu0 0.0
  %102 = vmatprep.subr.mxu0 0.0
  %103 = vmatpush2.msra.mxu0 0.0
  %104 = vmatprep.subr.mxu0 0.0
  %105 = vmatpush2.msra.mxu0 0.0
  %106 = vmatprep.mubr.f32.mxu0 0.0
  %107 = vmatmul.mubr.f32.gmra.mxu0 %v24
  %v108 = vpop.f32.mrf.mxu0
  %v109 = vadd.f32 0.0, %v108
  %v110 = vpop.f32.mrf.mxu0
  %111 = vmatprep.mubr.f32.mxu0 0.0
  %112 = vmatmul.mubr.f32.gmra.mxu0 %v25
  %v113 = vpop.f32.mrf.mxu0
  %v114 = vadd.f32 0.0, %v113
  %v115 = vpop.f32.mrf.mxu0
  %116 = vdwg.mxu0
  %v117 = vadd.f32 %v22, %v109
  %v118 = vadd.f32 %v23, %v114
  %vm119 = vcmask 261120
  %120 = vst.msk [vmem:[#allocation2] sm:$0xff] %vm119, %v117
  %vm121 = vcmask 254976
  %122 = vst.msk [vmem:[#allocation2 + $0x8] sm:$0x3] %vm121, %v118
  // Predicated region
  $region18: #{cross_attention_forward.56} parent=0 // pred_check
    %p123 = pneg %p14
  $region19: #{cross_attention_forward.56} parent=0 // pred_check_branch
    %125 = sbr.rel (%p123) target = $region21
  $region20: #{cross_attention_forward.56} parent=0 // pred_region
    %v126 = vld [vmem:[#allocation2] sm:$0xff]
    %v127 = vld [vmem:[#allocation2 + $0x8] sm:$0x3]
    %v128 = vld [vmem:[%s2] sm:$0x1]
    %v130 = vlaneseq
    %v131 = vshrl.u32 %v130, 7
    %v132 = vsub.s32 0, %v131
    %v133 = vrot.slane %v128, %v132
    %v135 = vadd.f32 %v126, %v133
    %v136 = vadd.f32 %v127, %v133
    %137 = vst.msk [vmem:[%s3] sm:$0xff] %vm119, %v135
    %138 = vst.msk [vmem:[%s3 + $0x8] sm:$0x3] %vm121, %v136
  $region21: #{cross_attention_forward.56} parent=0 // pred_fallthru
    _
  // Predicated region
  $region22: #{cross_attention_forward.56} parent=0 // pred_check
    _
  $region23: #{cross_attention_forward.56} parent=0 // pred_check_branch
    %140 = sbr.rel (0) target = $region25
  $region24: #{cross_attention_forward.56} parent=0 // pred_region
    _
  $region25: #{cross_attention_forward.56} parent=0 // pred_fallthru
    _
  // Predicated region
  $region26: #{cross_attention_forward.56} parent=0 // pred_check
    _
  $region27: #{cross_attention_forward.56} parent=0 // pred_check_branch
    %142 = sbr.rel (0) target = $region29
  $region28: #{cross_attention_forward.56} parent=0 // pred_region
    _
  $region29: #{cross_attention_forward.56} parent=0 // pred_fallthru
    _

// kernel: cross_attention_forward.52
$region0: #{cross_attention_forward.52}
  #allocation0 [shape = 'u32[]', space=smem, size = 0x4, offset = 0x4, fixed_abs, tag = 'smem constant byte address 0x4 - core index']
  #allocation1 [shape = 'u32[144,128]{1,0:T(1,128)}', space=vmem, size = 0x12000, scoped, tag = 'internal scratch']
  #allocation2 [shape = 'f32[12,128]{1,0:T(8,128)}', space=vmem, size = 0x2000, scoped, tag = 'scratch operand']
  %s0 = inlined_call_operand.vmem [shape: f32[12,32], index: 0, kind: input, shape index: {}]
  %s1 = inlined_call_operand.vmem [shape: f32[32,128], index: 1, kind: input, shape index: {}]
  %s2 = inlined_call_operand.vmem [shape: f32[1,128], index: 2, kind: input, shape index: {}]
  %s3 = inlined_call_operand.vmem [shape: f32[12,128], index: 3, kind: output, shape index: {}]
  %s4 = sld [smem:[#allocation0]]
  $region30: #{cross_attention_forward.52} parent=0
    _
  %s6 = ssub.s32 1, %s4
  %s7 = scalar_select 0, %s6, %s4
  // Predicated region
  $region2: #{cross_attention_forward.52} parent=0 // pred_check
    _
  $region3: #{cross_attention_forward.52} parent=0 // pred_check_branch
    %9 = sbr.rel (0) target = $region5
  $region4: #{cross_attention_forward.52} parent=0 // pred_region
    _
  $region5: #{cross_attention_forward.52} parent=0 // pred_fallthru
    _
  // Predicated region
  $region6: #{cross_attention_forward.52} parent=0 // pred_check
    _
  $region7: #{cross_attention_forward.52} parent=0 // pred_check_branch
    %11 = sbr.rel (0) target = $region9
  $region8: #{cross_attention_forward.52} parent=0 // pred_region
    _
  $region9: #{cross_attention_forward.52} parent=0 // pred_fallthru
    _
  // Predicated region
  $region10: #{cross_attention_forward.52} parent=0 // pred_check
    _
  $region11: #{cross_attention_forward.52} parent=0 // pred_check_branch
    %13 = sbr.rel (0) target = $region13
  $region12: #{cross_attention_forward.52} parent=0 // pred_region
    _
  $region13: #{cross_attention_forward.52} parent=0 // pred_fallthru
    _
  %p14 = scmp.eq.s32.totalorder 0, 0
  // Predicated region
  $region14: #{cross_attention_forward.52} parent=0 // pred_check
    %p15 = pneg %p14
  $region15: #{cross_attention_forward.52} parent=0 // pred_check_branch
    %17 = sbr.rel (%p15) target = $region17
  $region16: #{cross_attention_forward.52} parent=0 // pred_region
    %18 = vst [vmem:[#allocation2] sm:$0xff] 0.0
    %19 = vst [vmem:[#allocation2 + $0x8] sm:$0xf] 0.0
  $region17: #{cross_attention_forward.52} parent=0 // pred_fallthru
    _
  %v20 = vld [vmem:[#allocation2] sm:$0xff]
  %v21 = vld [vmem:[#allocation2 + $0x8] sm:$0xf]
  %v22 = vld [vmem:[%s0] sm:$0xff]
  %v23 = vld [vmem:[%s0 + $0x8] sm:$0xf]
  %v24 = vld [vmem:[%s1] sm:$0xff]
  %v25 = vld [vmem:[%s1 + $0x8] sm:$0xff]
  %v26 = vld [vmem:[%s1 + $0x10] sm:$0xff]
  %v27 = vld [vmem:[%s1 + $0x18] sm:$0xff]
  %vm28 = vcmask 261120
  %v30 = vsel %vm28, %v22, 0
  %v33 = vsel %vm28, %v23, 0
  %35 = vmatprep.subr.mxu0 0.0
  %36 = vmatpush1.msra.mxu0 0.0
  %37 = vmatprep.subr.mxu0 0.0
  %38 = vmatpush1.msra.mxu0 0.0
  %39 = vmatprep.subr.mxu0 0.0
  %40 = vmatpush1.msra.mxu0 0.0
  %41 = vmatprep.subr.mxu0 0.0
  %42 = vmatpush1.msra.mxu0 0.0
  %43 = vmatprep.subr.mxu0 0.0
  %44 = vmatpush1.msra.mxu0 0.0
  %45 = vmatprep.subr.mxu0 0.0
  %46 = vmatpush1.msra.mxu0 0.0
  %47 = vmatprep.subr.mxu0 0.0
  %48 = vmatpush1.msra.mxu0 0.0
  %49 = vmatprep.subr.mxu0 0.0
  %50 = vmatpush1.msra.mxu0 0.0
  %51 = vmatprep.subr.mxu0 0.0
  %52 = vmatpush1.msra.mxu0 0.0
  %53 = vmatprep.subr.mxu0 0.0
  %54 = vmatpush1.msra.mxu0 0.0
  %55 = vmatprep.subr.mxu0 0.0
  %56 = vmatpush1.msra.mxu0 0.0
  %57 = vmatprep.subr.mxu0 0.0
  %58 = vmatpush1.msra.mxu0 0.0
  %59 = vmatprep.subr.mxu0 0.0
  %60 = vmatpush1.msra.mxu0 %v27
  %61 = vmatprep.subr.mxu0 0.0
  %62 = vmatpush1.msra.mxu0 %v26
  %63 = vmatprep.subr.mxu0 0.0
  %64 = vmatpush1.msra.mxu0 %v25
  %65 = vmatprep.subr.mxu0 0.0
  %66 = vmatpush1.msra.mxu0 %v24
  %67 = vmatprep.subr.mxu0 0.0
  %68 = vmatpush2.msra.mxu0 0.0
  %69 = vmatprep.subr.mxu0 0.0
  %70 = vmatpush2.msra.mxu0 0.0
  %71 = vmatprep.subr.mxu0 0.0
  %72 = vmatpush2.msra.mxu0 0.0
  %73 = vmatprep.subr.mxu0 0.0
  %74 = vmatpush2.msra.mxu0 0.0
  %75 = vmatprep.subr.mxu0 0.0
  %76 = vmatpush2.msra.mxu0 0.0
  %77 = vmatprep.subr.mxu0 0.0
  %78 = vmatpush2.msra.mxu0 0.0
  %79 = vmatprep.subr.mxu0 0.0
  %80 = vmatpush2.msra.mxu0 0.0
  %81 = vmatprep.subr.mxu0 0.0
  %82 = vmatpush2.msra.mxu0 0.0
  %83 = vmatprep.subr.mxu0 0.0
  %84 = vmatpush2.msra.mxu0 0.0
  %85 = vmatprep.subr.mxu0 0.0
  %86 = vmatpush2.msra.mxu0 0.0
  %87 = vmatprep.subr.mxu0 0.0
  %88 = vmatpush2.msra.mxu0 0.0
  %89 = vmatprep.subr.mxu0 0.0
  %90 = vmatpush2.msra.mxu0 0.0
  %91 = vmatprep.subr.mxu0 0.0
  %92 = vmatpush2.msra.mxu0 0.0
  %93 = vmatprep.subr.mxu0 0.0
  %94 = vmatpush2.msra.mxu0 0.0
  %95 = vmatprep.subr.mxu0 0.0
  %96 = vmatpush2.msra.mxu0 0.0
  %97 = vmatprep.subr.mxu0 0.0
  %98 = vmatpush2.msra.mxu0 0.0
  %99 = vmatprep.mubr.f32.mxu0 0.0
  %100 = vmatmul.mubr.f32.gmra.mxu0 %v30
  %v101 = vpop.f32.mrf.mxu0
  %v102 = vadd.f32 0.0, %v101
  %v103 = vpop.f32.mrf.mxu0
  %104 = vmatprep.mubr.f32.mxu0 0.0
  %105 = vmatmul.mubr.f32.gmra.mxu0 %v33
  %v106 = vpop.f32.mrf.mxu0
  %v107 = vadd.f32 0.0, %v106
  %v108 = vpop.f32.mrf.mxu0
  %109 = vdwg.mxu0
  %v110 = vadd.f32 %v20, %v102
  %v111 = vadd.f32 %v21, %v107
  %112 = vst [vmem:[#allocation2] sm:$0xff] %v110
  %113 = vst [vmem:[#allocation2 + $0x8] sm:$0xf] %v111
  // Predicated region
  $region18: #{cross_attention_forward.52} parent=0 // pred_check
    %p114 = pneg %p14
  $region19: #{cross_attention_forward.52} parent=0 // pred_check_branch
    %116 = sbr.rel (%p114) target = $region21
  $region20: #{cross_attention_forward.52} parent=0 // pred_region
    %v117 = vld [vmem:[#allocation2] sm:$0xff]
    %v118 = vld [vmem:[#allocation2 + $0x8] sm:$0xf]
    %v119 = vld [vmem:[%s2] sm:$0x1]
    %v121 = vlaneseq
    %v122 = vshrl.u32 %v121, 7
    %v123 = vsub.s32 0, %v122
    %v124 = vrot.slane %v119, %v123
    %v126 = vadd.f32 %v117, %v124
    %v127 = vadd.f32 %v118, %v124
    %v128 = vmax.f32 %v126, 0.0
    %v129 = vmax.f32 %v127, 0.0
    %v130 = vmul.f32 %v128, %v128
    %v131 = vmul.f32 %v129, %v129
    %132 = vst [vmem:[%s3] sm:$0xff] %v130
    %133 = vst [vmem:[%s3 + $0x8] sm:$0xf] %v131
  $region21: #{cross_attention_forward.52} parent=0 // pred_fallthru
    _
  // Predicated region
  $region22: #{cross_attention_forward.52} parent=0 // pred_check
    _
  $region23: #{cross_attention_forward.52} parent=0 // pred_check_branch
    %135 = sbr.rel (0) target = $region25
  $region24: #{cross_attention_forward.52} parent=0 // pred_region
    _
  $region25: #{cross_attention_forward.52} parent=0 // pred_fallthru
    _
  // Predicated region
  $region26: #{cross_attention_forward.52} parent=0 // pred_check
    _
  $region27: #{cross_attention_forward.52} parent=0 // pred_check_branch
    %137 = sbr.rel (0) target = $region29
  $region28: #{cross_attention_forward.52} parent=0 // pred_region
    _
  $region29: #{cross_attention_forward.52} parent=0 // pred_fallthru
    _

// kernel: cross_attention_forward.53
$region0: #{cross_attention_forward.53}
  #allocation0 [shape = 'u32[]', space=smem, size = 0x4, offset = 0x4, fixed_abs, tag = 'smem constant byte address 0x4 - core index']
  #allocation1 [shape = 'u32[144,128]{1,0:T(1,128)}', space=vmem, size = 0x12000, scoped, tag = 'internal scratch']
  #allocation2 [shape = 'f32[12,32]{1,0:T(8,128)}', space=vmem, size = 0x2000, scoped, tag = 'scratch operand']
  %s0 = inlined_call_operand.vmem [shape: f32[12,128], index: 0, kind: input, shape index: {}]
  %s1 = inlined_call_operand.vmem [shape: f32[128,32], index: 1, kind: input, shape index: {}]
  %s2 = inlined_call_operand.vmem [shape: f32[1,32], index: 2, kind: input, shape index: {}]
  %s3 = inlined_call_operand.vmem [shape: f32[12,32], index: 3, kind: output, shape index: {}]
  %s4 = sld [smem:[#allocation0]]
  $region30: #{cross_attention_forward.53} parent=0
    _
  %s6 = ssub.s32 1, %s4
  %s7 = scalar_select 0, %s6, %s4
  // Predicated region
  $region2: #{cross_attention_forward.53} parent=0 // pred_check
    _
  $region3: #{cross_attention_forward.53} parent=0 // pred_check_branch
    %9 = sbr.rel (0) target = $region5
  $region4: #{cross_attention_forward.53} parent=0 // pred_region
    _
  $region5: #{cross_attention_forward.53} parent=0 // pred_fallthru
    _
  // Predicated region
  $region6: #{cross_attention_forward.53} parent=0 // pred_check
    _
  $region7: #{cross_attention_forward.53} parent=0 // pred_check_branch
    %11 = sbr.rel (0) target = $region9
  $region8: #{cross_attention_forward.53} parent=0 // pred_region
    _
  $region9: #{cross_attention_forward.53} parent=0 // pred_fallthru
    _
  // Predicated region
  $region10: #{cross_attention_forward.53} parent=0 // pred_check
    _
  $region11: #{cross_attention_forward.53} parent=0 // pred_check_branch
    %13 = sbr.rel (0) target = $region13
  $region12: #{cross_attention_forward.53} parent=0 // pred_region
    _
  $region13: #{cross_attention_forward.53} parent=0 // pred_fallthru
    _
  %p14 = scmp.eq.s32.totalorder 0, 0
  // Predicated region
  $region14: #{cross_attention_forward.53} parent=0 // pred_check
    %p15 = pneg %p14
  $region15: #{cross_attention_forward.53} parent=0 // pred_check_branch
    %17 = sbr.rel (%p15) target = $region17
  $region16: #{cross_attention_forward.53} parent=0 // pred_region
    %vm18 = vcmask 261120
    %19 = vst.msk [vmem:[#allocation2] sm:$0xff] %vm18, 0.0
    %vm20 = vcmask 257024
    %21 = vst.msk [vmem:[#allocation2 + $0x8] sm:$0xf] %vm20, 0.0
  $region17: #{cross_attention_forward.53} parent=0 // pred_fallthru
    _
  %v22 = vld [vmem:[#allocation2] sm:$0xff]
  %v23 = vld [vmem:[#allocation2 + $0x8] sm:$0xf]
  %v24 = vld [vmem:[%s0] sm:$0xff]
  %v25 = vld [vmem:[%s0 + $0x8] sm:$0xf]
  %v26 = vld [vmem:[%s1] sm:$0xff]
  %v27 = vld [vmem:[%s1 + $0x8] sm:$0xff]
  %v28 = vld [vmem:[%s1 + $0x10] sm:$0xff]
  %v29 = vld [vmem:[%s1 + $0x18] sm:$0xff]
  %v30 = vld [vmem:[%s1 + $0x20] sm:$0xff]
  %v31 = vld [vmem:[%s1 + $0x28] sm:$0xff]
  %v32 = vld [vmem:[%s1 + $0x30] sm:$0xff]
  %v33 = vld [vmem:[%s1 + $0x38] sm:$0xff]
  %v34 = vld [vmem:[%s1 + $0x40] sm:$0xff]
  %v35 = vld [vmem:[%s1 + $0x48] sm:$0xff]
  %v36 = vld [vmem:[%s1 + $0x50] sm:$0xff]
  %v37 = vld [vmem:[%s1 + $0x58] sm:$0xff]
  %v38 = vld [vmem:[%s1 + $0x60] sm:$0xff]
  %v39 = vld [vmem:[%s1 + $0x68] sm:$0xff]
  %v40 = vld [vmem:[%s1 + $0x70] sm:$0xff]
  %v41 = vld [vmem:[%s1 + $0x78] sm:$0xff]
  %42 = vmatprep.subr.mxu0 0.0
  %43 = vmatpush1.msra.mxu0 %v41
  %44 = vmatprep.subr.mxu0 0.0
  %45 = vmatpush1.msra.mxu0 %v40
  %46 = vmatprep.subr.mxu0 0.0
  %47 = vmatpush1.msra.mxu0 %v39
  %48 = vmatprep.subr.mxu0 0.0
  %49 = vmatpush1.msra.mxu0 %v38
  %50 = vmatprep.subr.mxu0 0.0
  %51 = vmatpush1.msra.mxu0 %v37
  %52 = vmatprep.subr.mxu0 0.0
  %53 = vmatpush1.msra.mxu0 %v36
  %54 = vmatprep.subr.mxu0 0.0
  %55 = vmatpush1.msra.mxu0 %v35
  %56 = vmatprep.subr.mxu0 0.0
  %57 = vmatpush1.msra.mxu0 %v34
  %58 = vmatprep.subr.mxu0 0.0
  %59 = vmatpush1.msra.mxu0 %v33
  %60 = vmatprep.subr.mxu0 0.0
  %61 = vmatpush1.msra.mxu0 %v32
  %62 = vmatprep.subr.mxu0 0.0
  %63 = vmatpush1.msra.mxu0 %v31
  %64 = vmatprep.subr.mxu0 0.0
  %65 = vmatpush1.msra.mxu0 %v30
  %66 = vmatprep.subr.mxu0 0.0
  %67 = vmatpush1.msra.mxu0 %v29
  %68 = vmatprep.subr.mxu0 0.0
  %69 = vmatpush1.msra.mxu0 %v28
  %70 = vmatprep.subr.mxu0 0.0
  %71 = vmatpush1.msra.mxu0 %v27
  %72 = vmatprep.subr.mxu0 0.0
  %73 = vmatpush1.msra.mxu0 %v26
  %74 = vmatprep.subr.mxu0 0.0
  %75 = vmatpush2.msra.mxu0 0.0
  %76 = vmatprep.subr.mxu0 0.0
  %77 = vmatpush2.msra.mxu0 0.0
  %78 = vmatprep.subr.mxu0 0.0
  %79 = vmatpush2.msra.mxu0 0.0
  %80 = vmatprep.subr.mxu0 0.0
  %81 = vmatpush2.msra.mxu0 0.0
  %82 = vmatprep.subr.mxu0 0.0
  %83 = vmatpush2.msra.mxu0 0.0
  %84 = vmatprep.subr.mxu0 0.0
  %85 = vmatpush2.msra.mxu0 0.0
  %86 = vmatprep.subr.mxu0 0.0
  %87 = vmatpush2.msra.mxu0 0.0
  %88 = vmatprep.subr.mxu0 0.0
  %89 = vmatpush2.msra.mxu0 0.0
  %90 = vmatprep.subr.mxu0 0.0
  %91 = vmatpush2.msra.mxu0 0.0
  %92 = vmatprep.subr.mxu0 0.0
  %93 = vmatpush2.msra.mxu0 0.0
  %94 = vmatprep.subr.mxu0 0.0
  %95 = vmatpush2.msra.mxu0 0.0
  %96 = vmatprep.subr.mxu0 0.0
  %97 = vmatpush2.msra.mxu0 0.0
  %98 = vmatprep.subr.mxu0 0.0
  %99 = vmatpush2.msra.mxu0 0.0
  %100 = vmatprep.subr.mxu0 0.0
  %101 = vmatpush2.msra.mxu0 0.0
  %102 = vmatprep.subr.mxu0 0.0
  %103 = vmatpush2.msra.mxu0 0.0
  %104 = vmatprep.subr.mxu0 0.0
  %105 = vmatpush2.msra.mxu0 0.0
  %106 = vmatprep.mubr.f32.mxu0 0.0
  %107 = vmatmul.mubr.f32.gmra.mxu0 %v24
  %v108 = vpop.f32.mrf.mxu0
  %v109 = vadd.f32 0.0, %v108
  %v110 = vpop.f32.mrf.mxu0
  %111 = vmatprep.mubr.f32.mxu0 0.0
  %112 = vmatmul.mubr.f32.gmra.mxu0 %v25
  %v113 = vpop.f32.mrf.mxu0
  %v114 = vadd.f32 0.0, %v113
  %v115 = vpop.f32.mrf.mxu0
  %116 = vdwg.mxu0
  %v117 = vadd.f32 %v22, %v109
  %v118 = vadd.f32 %v23, %v114
  %vm119 = vcmask 261120
  %120 = vst.msk [vmem:[#allocation2] sm:$0xff] %vm119, %v117
  %vm121 = vcmask 257024
  %122 = vst.msk [vmem:[#allocation2 + $0x8] sm:$0xf] %vm121, %v118
  // Predicated region
  $region18: #{cross_attention_forward.53} parent=0 // pred_check
    %p123 = pneg %p14
  $region19: #{cross_attention_forward.53} parent=0 // pred_check_branch
    %125 = sbr.rel (%p123) target = $region21
  $region20: #{cross_attention_forward.53} parent=0 // pred_region
    %v126 = vld [vmem:[#allocation2] sm:$0xff]
    %v127 = vld [vmem:[#allocation2 + $0x8] sm:$0xf]
    %v128 = vld [vmem:[%s2] sm:$0x1]
    %v130 = vlaneseq
    %v131 = vshrl.u32 %v130, 7
    %v132 = vsub.s32 0, %v131
    %v133 = vrot.slane %v128, %v132
    %v135 = vadd.f32 %v126, %v133
    %v136 = vadd.f32 %v127, %v133
    %137 = vst.msk [vmem:[%s3] sm:$0xff] %vm119, %v135
    %138 = vst.msk [vmem:[%s3 + $0x8] sm:$0xf] %vm121, %v136
  $region21: #{cross_attention_forward.53} parent=0 // pred_fallthru
    _
  // Predicated region
  $region22: #{cross_attention_forward.53} parent=0 // pred_check
    _
  $region23: #{cross_attention_forward.53} parent=0 // pred_check_branch
    %140 = sbr.rel (0) target = $region25
  $region24: #{cross_attention_forward.53} parent=0 // pred_region
    _
  $region25: #{cross_attention_forward.53} parent=0 // pred_fallthru
    _
  // Predicated region
  $region26: #{cross_attention_forward.53} parent=0 // pred_check
    _
  $region27: #{cross_attention_forward.53} parent=0 // pred_check_branch
    %142 = sbr.rel (0) target = $region29
  $region28: #{cross_attention_forward.53} parent=0 // pred_region
    _
  $region29: #{cross_attention_forward.53} parent=0 // pred_fallthru
    _

// kernel: cross_attention_forward.73
$region0: #{cross_attention_forward.73}
  #allocation0 [shape = 'u32[]', space=smem, size = 0x4, offset = 0x4, fixed_abs, tag = 'smem constant byte address 0x4 - core index']
  #allocation1 [shape = 'u32[144,128]{1,0:T(1,128)}', space=vmem, size = 0x12000, scoped, tag = 'internal scratch']
  #allocation2 [shape = 'f32[12,16]{1,0:T(8,128)}', space=vmem, size = 0x2000, scoped, tag = 'scratch operand']
  %s0 = inlined_call_operand.vmem [shape: f32[12,32], index: 0, kind: input, shape index: {}]
  %s1 = inlined_call_operand.vmem [shape: f32[32,16], index: 1, kind: input, shape index: {}]
  %s2 = inlined_call_operand.vmem [shape: f32[1,16], index: 2, kind: input, shape index: {}]
  %s3 = inlined_call_operand.vmem [shape: f32[12,16], index: 3, kind: output, shape index: {}]
  %s4 = sld [smem:[#allocation0]]
  $region30: #{cross_attention_forward.73} parent=0
    _
  %s6 = ssub.s32 1, %s4
  %s7 = scalar_select 0, %s6, %s4
  // Predicated region
  $region2: #{cross_attention_forward.73} parent=0 // pred_check
    _
  $region3: #{cross_attention_forward.73} parent=0 // pred_check_branch
    %9 = sbr.rel (0) target = $region5
  $region4: #{cross_attention_forward.73} parent=0 // pred_region
    _
  $region5: #{cross_attention_forward.73} parent=0 // pred_fallthru
    _
  // Predicated region
  $region6: #{cross_attention_forward.73} parent=0 // pred_check
    _
  $region7: #{cross_attention_forward.73} parent=0 // pred_check_branch
    %11 = sbr.rel (0) target = $region9
  $region8: #{cross_attention_forward.73} parent=0 // pred_region
    _
  $region9: #{cross_attention_forward.73} parent=0 // pred_fallthru
    _
  // Predicated region
  $region10: #{cross_attention_forward.73} parent=0 // pred_check
    _
  $region11: #{cross_attention_forward.73} parent=0 // pred_check_branch
    %13 = sbr.rel (0) target = $region13
  $region12: #{cross_attention_forward.73} parent=0 // pred_region
    _
  $region13: #{cross_attention_forward.73} parent=0 // pred_fallthru
    _
  %p14 = scmp.eq.s32.totalorder 0, 0
  // Predicated region
  $region14: #{cross_attention_forward.73} parent=0 // pred_check
    %p15 = pneg %p14
  $region15: #{cross_attention_forward.73} parent=0 // pred_check_branch
    %17 = sbr.rel (%p15) target = $region17
  $region16: #{cross_attention_forward.73} parent=0 // pred_region
    %vm18 = vcmask 130048
    %19 = vst.msk [vmem:[#allocation2] sm:$0xff] %vm18, 0.0
    %vm20 = vcmask 125952
    %21 = vst.msk [vmem:[#allocation2 + $0x8] sm:$0xf] %vm20, 0.0
  $region17: #{cross_attention_forward.73} parent=0 // pred_fallthru
    _
  %v22 = vld [vmem:[#allocation2] sm:$0xff]
  %v23 = vld [vmem:[#allocation2 + $0x8] sm:$0xf]
  %v24 = vld [vmem:[%s0] sm:$0xff]
  %v25 = vld [vmem:[%s0 + $0x8] sm:$0xf]
  %v26 = vld [vmem:[%s1] sm:$0xff]
  %v27 = vld [vmem:[%s1 + $0x8] sm:$0xff]
  %v28 = vld [vmem:[%s1 + $0x10] sm:$0xff]
  %v29 = vld [vmem:[%s1 + $0x18] sm:$0xff]
  %vm30 = vcmask 261120
  %v32 = vsel %vm30, %v24, 0
  %v35 = vsel %vm30, %v25, 0
  %37 = vmatprep.subr.mxu0 0.0
  %38 = vmatpush1.msra.mxu0 0.0
  %39 = vmatprep.subr.mxu0 0.0
  %40 = vmatpush1.msra.mxu0 0.0
  %41 = vmatprep.subr.mxu0 0.0
  %42 = vmatpush1.msra.mxu0 0.0
  %43 = vmatprep.subr.mxu0 0.0
  %44 = vmatpush1.msra.mxu0 0.0
  %45 = vmatprep.subr.mxu0 0.0
  %46 = vmatpush1.msra.mxu0 0.0
  %47 = vmatprep.subr.mxu0 0.0
  %48 = vmatpush1.msra.mxu0 0.0
  %49 = vmatprep.subr.mxu0 0.0
  %50 = vmatpush1.msra.mxu0 0.0
  %51 = vmatprep.subr.mxu0 0.0
  %52 = vmatpush1.msra.mxu0 0.0
  %53 = vmatprep.subr.mxu0 0.0
  %54 = vmatpush1.msra.mxu0 0.0
  %55 = vmatprep.subr.mxu0 0.0
  %56 = vmatpush1.msra.mxu0 0.0
  %57 = vmatprep.subr.mxu0 0.0
  %58 = vmatpush1.msra.mxu0 0.0
  %59 = vmatprep.subr.mxu0 0.0
  %60 = vmatpush1.msra.mxu0 0.0
  %61 = vmatprep.subr.mxu0 0.0
  %62 = vmatpush1.msra.mxu0 %v29
  %63 = vmatprep.subr.mxu0 0.0
  %64 = vmatpush1.msra.mxu0 %v28
  %65 = vmatprep.subr.mxu0 0.0
  %66 = vmatpush1.msra.mxu0 %v27
  %67 = vmatprep.subr.mxu0 0.0
  %68 = vmatpush1.msra.mxu0 %v26
  %69 = vmatprep.subr.mxu0 0.0
  %70 = vmatpush2.msra.mxu0 0.0
  %71 = vmatprep.subr.mxu0 0.0
  %72 = vmatpush2.msra.mxu0 0.0
  %73 = vmatprep.subr.mxu0 0.0
  %74 = vmatpush2.msra.mxu0 0.0
  %75 = vmatprep.subr.mxu0 0.0
  %76 = vmatpush2.msra.mxu0 0.0
  %77 = vmatprep.subr.mxu0 0.0
  %78 = vmatpush2.msra.mxu0 0.0
  %79 = vmatprep.subr.mxu0 0.0
  %80 = vmatpush2.msra.mxu0 0.0
  %81 = vmatprep.subr.mxu0 0.0
  %82 = vmatpush2.msra.mxu0 0.0
  %83 = vmatprep.subr.mxu0 0.0
  %84 = vmatpush2.msra.mxu0 0.0
  %85 = vmatprep.subr.mxu0 0.0
  %86 = vmatpush2.msra.mxu0 0.0
  %87 = vmatprep.subr.mxu0 0.0
  %88 = vmatpush2.msra.mxu0 0.0
  %89 = vmatprep.subr.mxu0 0.0
  %90 = vmatpush2.msra.mxu0 0.0
  %91 = vmatprep.subr.mxu0 0.0
  %92 = vmatpush2.msra.mxu0 0.0
  %93 = vmatprep.subr.mxu0 0.0
  %94 = vmatpush2.msra.mxu0 0.0
  %95 = vmatprep.subr.mxu0 0.0
  %96 = vmatpush2.msra.mxu0 0.0
  %97 = vmatprep.subr.mxu0 0.0
  %98 = vmatpush2.msra.mxu0 0.0
  %99 = vmatprep.subr.mxu0 0.0
  %100 = vmatpush2.msra.mxu0 0.0
  %101 = vmatprep.mubr.f32.mxu0 0.0
  %102 = vmatmul.mubr.f32.gmra.mxu0 %v32
  %v103 = vpop.f32.mrf.mxu0
  %v104 = vadd.f32 0.0, %v103
  %v105 = vpop.f32.mrf.mxu0
  %106 = vmatprep.mubr.f32.mxu0 0.0
  %107 = vmatmul.mubr.f32.gmra.mxu0 %v35
  %v108 = vpop.f32.mrf.mxu0
  %v109 = vadd.f32 0.0, %v108
  %v110 = vpop.f32.mrf.mxu0
  %111 = vdwg.mxu0
  %v112 = vadd.f32 %v22, %v104
  %v113 = vadd.f32 %v23, %v109
  %vm114 = vcmask 130048
  %115 = vst.msk [vmem:[#allocation2] sm:$0xff] %vm114, %v112
  %vm116 = vcmask 125952
  %117 = vst.msk [vmem:[#allocation2 + $0x8] sm:$0xf] %vm116, %v113
  // Predicated region
  $region18: #{cross_attention_forward.73} parent=0 // pred_check
    %p118 = pneg %p14
  $region19: #{cross_attention_forward.73} parent=0 // pred_check_branch
    %120 = sbr.rel (%p118) target = $region21
  $region20: #{cross_attention_forward.73} parent=0 // pred_region
    %v121 = vld [vmem:[#allocation2] sm:$0xff]
    %v122 = vld [vmem:[#allocation2 + $0x8] sm:$0xf]
    %v123 = vld [vmem:[%s2] sm:$0x1]
    %v125 = vlaneseq
    %v126 = vshrl.u32 %v125, 7
    %v127 = vsub.s32 0, %v126
    %v128 = vrot.slane %v123, %v127
    %v130 = vadd.f32 %v121, %v128
    %v131 = vadd.f32 %v122, %v128
    %132 = vst.msk [vmem:[%s3] sm:$0xff] %vm114, %v130
    %133 = vst.msk [vmem:[%s3 + $0x8] sm:$0xf] %vm116, %v131
  $region21: #{cross_attention_forward.73} parent=0 // pred_fallthru
    _
  // Predicated region
  $region22: #{cross_attention_forward.73} parent=0 // pred_check
    _
  $region23: #{cross_attention_forward.73} parent=0 // pred_check_branch
    %135 = sbr.rel (0) target = $region25
  $region24: #{cross_attention_forward.73} parent=0 // pred_region
    _
  $region25: #{cross_attention_forward.73} parent=0 // pred_fallthru
    _
  // Predicated region
  $region26: #{cross_attention_forward.73} parent=0 // pred_check
    _
  $region27: #{cross_attention_forward.73} parent=0 // pred_check_branch
    %137 = sbr.rel (0) target = $region29
  $region28: #{cross_attention_forward.73} parent=0 // pred_region
    _
  $region29: #{cross_attention_forward.73} parent=0 // pred_fallthru
    _

</llo_original>
